<compile_context>
chip_gen: v7x
topology: tpu7x:2x2x1
jax: 0.10.0
libtpu: 0.0.40
codegen_flags: <defaults>
</compile_context>

<pallas_src>
import functools
import math

import jax
import jax.numpy as jnp
import numpy as np
from jax.experimental import pallas as pl
from jax.experimental.pallas import tpu as pltpu

EPS = 1e-6


# ---------------------------------------------------------------------------
# In-kernel helpers
# ---------------------------------------------------------------------------
def _vn_act_flat(q, k):
    """Vector-neuron ReLU on flat (C, 3*seg) slabs (lane = d*seg + j).

    q, k are f32 matmul outputs; the <q,k>/||k||^2 math stays in f32 even when
    the MXU operands are bf16.  seg is a multiple of 128 whenever the wrapper
    found an aligned batch block, so every d-slab slice is lane aligned and
    the only lane concat is the final reassembly.
    """
    seg = q.shape[-1] // 3
    qs = [q[:, d * seg:(d + 1) * seg] for d in range(3)]
    ks = [k[:, d * seg:(d + 1) * seg] for d in range(3)]
    qk = qs[0] * ks[0] + qs[1] * ks[1] + qs[2] * ks[2]
    knsq = ks[0] * ks[0] + ks[1] * ks[1] + ks[2] * ks[2]
    # divide -> EUP approx reciprocal (keeps the VALU slots free)
    coef = jnp.minimum(qk, 0.0) * pl.reciprocal(jnp.maximum(knsq, EPS),
                                                approx=True)
    return jnp.concatenate([qs[d] - coef * ks[d] for d in range(3)], axis=-1)


def _backbone_kernel(gf_ref, mavg_ref, win_ref, lw_ref, ga_ref, gb_ref,
                     wout_ref, xpp_ref, *, knn, inv_n):
    """Fused VecPointNet backbone for one packed group of Bb samples.

    Layouts (W = 3*Bb*N, lane index = d*(Bb*N) + b*N + n):
      gf_ref  : (1, 3*K, W)   graph feature, row = k*3 + cin          (bf16)
      mavg_ref: (W, W)        block-diag ones: per-(d,b) sum over N   (bf16)
      win_ref : (2*K*h, 3*K)  conv_in  [blockdiag(w); blockdiag(wd@w)]
      lw_ref  : (L, 2h, h)    per-layer local  [w; wd@w]
      ga_ref  : (L, 2h, h)    global layer, local half  [gw_l; gwd@gw_l]
      gb_ref  : (L, 2h, h)    global layer, mean  half  [gw_g; gwd@gw_g]
      wout_ref: (L, c, h)     conv_out, one (c,h) block per layer
      xpp_ref : (1, c, W)     per-point so3 features (f32, lane dense)
    """
    cdt = gf_ref.dtype                       # MXU operand dtype (bf16 or f32)
    h = lw_ref.shape[2]
    kh = knn * h
    num_layers = lw_ref.shape[0]
    c_dim = wout_ref.shape[1]
    w_lane = gf_ref.shape[-1]

    # ---- conv_in: q and kd for all K neighbors from ONE matmul ------------
    gf = gf_ref[0]                                                  # (3K, W)
    qkd = jnp.dot(win_ref[...], gf, preferred_element_type=jnp.float32)
    y_kn = _vn_act_flat(qkd[:kh], qkd[kh:])                         # (K*h, W)

    # ---- mean pool over K: K sublane-slab adds on the VPU ------------------
    y = y_kn[:h, :]
    for k in range(1, knn):
        y = y + y_kn[k * h:(k + 1) * h, :]
    y = y * (1.0 / knn)                                             # (h, W) f32

    xpp = jnp.zeros((c_dim, w_lane), jnp.float32)
    for layer in range(num_layers):
        # local VecLNA: q and (wd@w)@y from a single stacked matmul
        yb = y.astype(cdt)
        qkd = jnp.dot(lw_ref[layer], yb, preferred_element_type=jnp.float32)
        y = _vn_act_flat(qkd[:h], qkd[h:])

        # global VecLNA: mean-over-N branch as a second independent matmul
        # against the block-diag ones matrix (no channel concat / broadcast)
        yb = y.astype(cdt)
        sum_n = jnp.dot(yb, mavg_ref[...], preferred_element_type=jnp.float32)
        qkd = (jnp.dot(ga_ref[layer], yb, preferred_element_type=jnp.float32)
               + inv_n * jnp.dot(gb_ref[layer], sum_n.astype(cdt),
                                 preferred_element_type=jnp.float32))
        y = _vn_act_flat(qkd[:h], qkd[h:])

        # conv_out accumulated per layer (no (h*L, W) channel concat)
        xpp = xpp + jnp.dot(wout_ref[layer], y.astype(cdt),
                            preferred_element_type=jnp.float32)

    xpp_ref[0] = xpp


# ---------------------------------------------------------------------------
# Wrapper-side packing helpers
# ---------------------------------------------------------------------------
def _choose_batch_block(bt, n):
    """Pick Bb samples per grid step so the packed lane width 3*Bb*n is a
    multiple of 128 (lane-dense stores, aligned d-slabs) while keeping >= 2
    grid steps when possible (v7x has two TensorCores)."""
    divisors = [d for d in range(1, bt + 1) if bt % d == 0]
    aligned = [d for d in divisors if (d * n) % 128 == 0]
    if aligned:
        multi = [d for d in aligned if bt // d >= 2]
        return max(multi) if multi else min(aligned)
    wide = [d for d in divisors if bt // d >= 2 and 3 * d * n >= 128]
    return max(wide) if wide else max(divisors)


def knn_graph_feature(x, k):
    """equibot get_graph_feature (cross=True): channels
    [cross(x_dir, neighbor), neighbor - x, x].  Returns (BT, Cin=3, 3, K, N).
    """
    # TODO(synk): KNN top-k + neighbor gather is data-dependent indexing and
    # stays in plain JAX glue (a Pallas version would need a manual DMA gather).
    bt, _, n = x.shape
    pts = jnp.transpose(x, (0, 2, 1))                               # (BT, N, 3)
    d2 = jnp.sum((pts[:, :, None, :] - pts[:, None, :, :]) ** 2, axis=-1)
    _, idx = jax.lax.top_k(-d2, k)                                  # (BT, N, K)
    idx_flat = jnp.transpose(idx, (0, 2, 1)).reshape(bt, 1, k * n)  # k-major
    nb = jnp.take_along_axis(x, jnp.broadcast_to(idx_flat, (bt, 3, k * n)),
                             axis=2).reshape(bt, 3, k, n)           # (BT,3,K,N)
    ctr = jnp.broadcast_to(x[:, :, None, :], (bt, 3, k, n))
    xdir = x / jnp.maximum(jnp.linalg.norm(x, axis=1, keepdims=True), 1e-12)
    xdir = jnp.broadcast_to(xdir[:, :, None, :], (bt, 3, k, n))
    cross = jnp.cross(xdir, nb, axis=1)
    return jnp.stack([cross, nb - ctr, ctr], axis=1)                # (BT,3,3,K,N)


def pack_graph_feature(feats, bb):
    """(BT, Cin, 3, K, N) -> (G, 3K, 3*Bb*N), row = k*3 + cin and
    lane = d*(Bb*N) + b*N + n (the kernel's packed layout)."""
    bt, cin, three, k, n = feats.shape
    g = bt // bb
    f = feats.reshape(g, bb, cin, three, k, n)
    f = jnp.transpose(f, (0, 4, 2, 3, 1, 5))        # (G, K, Cin, 3, Bb, N)
    return f.reshape(g, k * cin, three * bb * n)


def pack_backbone_weights(params, knn, mxu_dtype):
    """Precompose VN-direction weights (wd@w) and pack everything the fused
    kernel needs; block-diagonalise conv_in over K so it is a single matmul."""
    h = params["conv_in_w"].shape[0]
    num_layers = len(params["layer_w"])
    c_dim = params["conv_out_w"].shape[0]

    win = params["conv_in_w"]                                       # (h, 3)
    win_d = params["conv_in_wd"] @ win                              # (h, 3)
    eye_k = jnp.eye(knn, dtype=win.dtype)
    win_big = jnp.concatenate([jnp.kron(eye_k, win),
                               jnp.kron(eye_k, win_d)], axis=0)     # (2Kh, 3K)

    lw, ga, gb = [], [], []
    for w, wd, gw, gwd in zip(params["layer_w"], params["layer_wd"],
                              params["glayer_w"], params["glayer_wd"]):
        lw.append(jnp.concatenate([w, wd @ w], axis=0))             # (2h, h)
        gl, gg = gw[:, :h], gw[:, h:]
        ga.append(jnp.concatenate([gl, gwd @ gl], axis=0))          # (2h, h)
        gb.append(jnp.concatenate([gg, gwd @ gg], axis=0))          # (2h, h)
    wout = params["conv_out_w"].reshape(c_dim, num_layers, h)
    wout = jnp.transpose(wout, (1, 0, 2))                           # (L, c, h)

    return dict(win_big=win_big.astype(mxu_dtype),
                lw=jnp.stack(lw).astype(mxu_dtype),
                ga=jnp.stack(ga).astype(mxu_dtype),
                gb=jnp.stack(gb).astype(mxu_dtype),
                wout=wout.astype(mxu_dtype))


def make_mean_bcast_matrix(bb, n, mxu_dtype):
    """(W, W) block-diag of (N x N) ones: one MXU matmul yields the per-sample
    per-component sum over N already broadcast back to every point.  Entries
    are exact in bf16; the 1/N scale is applied in f32 inside the kernel."""
    m = np.kron(np.eye(3 * bb, dtype=np.float32), np.ones((n, n), np.float32))
    return jnp.asarray(m, dtype=mxu_dtype)


# ---------------------------------------------------------------------------
# pallas_call wrapper
# ---------------------------------------------------------------------------
def backbone_fused(gf_packed, weights, mavg, *, knn, n_pts):
    g, rows, w_lane = gf_packed.shape
    c_dim = weights["wout"].shape[1]
    kern = functools.partial(_backbone_kernel, knn=knn, inv_n=1.0 / n_pts)
    w_list = [mavg, weights["win_big"], weights["lw"], weights["ga"],
              weights["gb"], weights["wout"]]

    def build(single_buffer_weights):
        def const_spec(arr):
            nd = arr.ndim
            idx_map = lambda i, _nd=nd: (0,) * _nd
            if single_buffer_weights:
                # grid-invariant operands: no point double-buffering them
                return pl.BlockSpec(arr.shape, idx_map,
                                    pipeline_mode=pl.Buffered(1))
            return pl.BlockSpec(arr.shape, idx_map)

        return pl.pallas_call(
            kern,
            grid=(g,),
            in_specs=[pl.BlockSpec((1, rows, w_lane), lambda i: (i, 0, 0))]
                     + [const_spec(a) for a in w_list],
            out_specs=pl.BlockSpec((1, c_dim, w_lane), lambda i: (i, 0, 0)),
            out_shape=jax.ShapeDtypeStruct((g, c_dim, w_lane), jnp.float32),
            compiler_params=pltpu.CompilerParams(
                dimension_semantics=("parallel",),   # batch groups -> v7x TCs
                vmem_limit_bytes=48 * 1024 * 1024),
        )

    try:
        return build(True)(gf_packed, *w_list)
    except Exception:
        # TODO(synk): pl.Buffered(1) single-buffering unavailable in this jax
        # version; fall back to the default double-buffered weight specs.
        return build(False)(gf_packed, *w_list)


# ---------------------------------------------------------------------------
# Parameter init (matches the PyTorch module's linear layers, no bias)
# ---------------------------------------------------------------------------
def init_params(key, h_dim, c_dim, num_layers):
    keys = iter(jax.random.split(key, 4 + 4 * num_layers))

    def lin(out_c, in_c):
        bound = 1.0 / math.sqrt(in_c)
        return jax.random.uniform(next(keys), (out_c, in_c), jnp.float32,
                                  minval=-bound, maxval=bound)

    params = {
        "conv_in_w": lin(h_dim, 3),        # VecLNA(3 -> h)
        "conv_in_wd": lin(h_dim, h_dim),   # its VN-activation direction linear
        "layer_w": [], "layer_wd": [], "glayer_w": [], "glayer_wd": [],
    }
    for _ in range(num_layers):
        params["layer_w"].append(lin(h_dim, h_dim))
        params["layer_wd"].append(lin(h_dim, h_dim))
        params["glayer_w"].append(lin(h_dim, 2 * h_dim))
        params["glayer_wd"].append(lin(h_dim, h_dim))
    params["conv_out_w"] = lin(c_dim, h_dim * num_layers)  # VecLinear(h*L -> c)
    params["fc_inv_w"] = lin(c_dim, c_dim)                 # SIM3Vec4Latent.fc_inv
    return params


# ---------------------------------------------------------------------------
# Full forward (SIM3Vec4Latent, mode='so3', flow=False)
# ---------------------------------------------------------------------------
def sim3vec4latent_forward(pcl, params, *, knn, target_norm=1.0,
                           ret_perpoint_feat=True, batch_block=None,
                           mxu_dtype=jnp.bfloat16):
    B, T, N, H = pcl.shape
    BT = B * T
    _pcl = jnp.transpose(pcl.reshape(BT, N, H), (0, 2, 1))          # (BT, H, N)
    xyz = _pcl[:, :3, :].astype(jnp.float32)

    # SIM(3) preprocess in plain jnp (review: XLA fuses it into the graph
    # feature step; no narrow-lane Pallas outputs / extra HBM round trip).
    centroid = jnp.mean(xyz, axis=-1, keepdims=True)                # (BT, 3, 1)
    centered = xyz - centroid
    z_scale = (jnp.sqrt(jnp.sum(centered * centered, axis=1)).mean(-1)
               / target_norm)                                       # (BT,)
    inp = centered / z_scale[:, None, None]
    z_center = jnp.transpose(centroid, (0, 2, 1))                   # (BT, 1, 3)

    bb = _choose_batch_block(BT, N) if batch_block is None else batch_block
    assert BT % bb == 0, "batch block must divide B*T"
    g = BT // bb

    feats = knn_graph_feature(inp, knn)                             # (BT,3,3,K,N)
    gf_packed = pack_graph_feature(feats.astype(mxu_dtype), bb)     # (G, 3K, W)
    weights = pack_backbone_weights(params, knn, mxu_dtype)
    mavg = make_mean_bcast_matrix(bb, N, mxu_dtype)

    # ---- fused VecPointNet backbone + conv_out: one pallas_call -----------
    xpp_flat = backbone_fused(gf_packed, weights, mavg, knn=knn, n_pts=N)
    c_dim = xpp_flat.shape[1]
    xpp = (xpp_flat.reshape(g, c_dim, 3, bb, N)
           .transpose(0, 3, 1, 2, 4).reshape(BT, c_dim, 3, N))

    # Tiny (c, 3) epilogue in the wrapper (avoid width-1-lane kernel outputs).
    z_so3 = jnp.mean(xpp, axis=-1)                                  # (BT, c, 3)
    zdual = jnp.einsum("oi,bid->bod", params["fc_inv_w"], z_so3)    # fc_inv
    z_inv = jnp.sum(zdual * z_so3, axis=-1)                         # (BT, c)

    ret = {"inv": z_inv, "so3": z_so3, "scale": z_scale, "center": z_center}
    if ret_perpoint_feat:
        ret["per_point_so3"] = xpp                                  # (BT,c,3,N)
    return ret


# ---------------------------------------------------------------------------
# Pure-JAX f32 reference (same math as the PyTorch module) for checking
# ---------------------------------------------------------------------------
def _lna_ref(x, w, wd):
    q = jnp.einsum("oi,bdim->bdom", w, x)
    k = jnp.einsum("oi,bdim->bdom", wd, q)
    qk = jnp.sum(q * k, axis=1, keepdims=True)
    knsq = jnp.sum(k * k, axis=1, keepdims=True)
    coef = jnp.minimum(qk, 0.0) / jnp.maximum(knsq, EPS)
    return q - coef * k


def reference_forward(pcl, params, *, knn, target_norm=1.0):
    B, T, N, H = pcl.shape
    BT = B * T
    _pcl = jnp.transpose(pcl.reshape(BT, N, H), (0, 2, 1))
    xyz = _pcl[:, :3, :]
    centroid = xyz.mean(-1, keepdims=True)
    centered = xyz - centroid
    z_scale = jnp.sqrt(jnp.sum(centered ** 2, axis=1)).mean(-1) / target_norm
    inp = centered / z_scale[:, None, None]
    z_center = jnp.transpose(centroid, (0, 2, 1))

    feats = knn_graph_feature(inp, knn)                        # (BT, 3, 3, K, N)
    x = jnp.transpose(feats, (0, 2, 1, 3, 4)).reshape(BT, 3, 3, knn * N)
    y = _lna_ref(x, params["conv_in_w"], params["conv_in_wd"])
    h = y.shape[2]
    y = y.reshape(BT, 3, h, knn, N).mean(axis=3)
    feats_l = []
    for w, wd, gw, gwd in zip(params["layer_w"], params["layer_wd"],
                              params["glayer_w"], params["glayer_wd"]):
        y = _lna_ref(y, w, wd)
        ym = jnp.broadcast_to(y.mean(-1, keepdims=True), y.shape)
        y = _lna_ref(jnp.concatenate([y, ym], axis=2), gw, gwd)
        feats_l.append(y)
    feat = jnp.concatenate(feats_l, axis=2)
    xpp = jnp.einsum("oi,bdim->bdom", params["conv_out_w"], feat)
    z_so3_l = xpp.mean(-1)                                     # (BT, 3, c)
    zdual = jnp.einsum("oi,bdi->bdo", params["fc_inv_w"], z_so3_l)
    z_inv = jnp.sum(zdual * z_so3_l, axis=1)
    return {"inv": z_inv,
            "so3": jnp.transpose(z_so3_l, (0, 2, 1)),
            "scale": z_scale,
            "center": z_center,
            "per_point_so3": jnp.transpose(xpp, (0, 2, 1, 3))}


if __name__ == "__main__":
    B, T, N, H = 2, 2, 64, 3
    h_dim, c_dim, num_layers, knn = 32, 32, 2, 8

    key = jax.random.PRNGKey(0)
    kp, kx = jax.random.split(key)
    params = init_params(kp, h_dim, c_dim, num_layers)
    pcl = jax.random.normal(kx, (B, T, N, H), jnp.float32)

    out = sim3vec4latent_forward(pcl, params, knn=knn, target_norm=1.0)
    out = jax.block_until_ready(out)

    BT = B * T
    assert out["inv"].shape == (BT, c_dim)
    assert out["so3"].shape == (BT, c_dim, 3)
    assert out["scale"].shape == (BT,)
    assert out["center"].shape == (BT, 1, 3)
    assert out["per_point_so3"].shape == (BT, c_dim, 3, N)

    ref = jax.block_until_ready(reference_forward(pcl, params, knn=knn))
    # bf16 MXU operands (per perf review) vs. the pure-f32 reference -> allow
    # a slightly looser tolerance than an all-f32 kernel would need.
    for name in ("inv", "so3", "scale", "center", "per_point_so3"):
        np.testing.assert_allclose(np.asarray(out[name]), np.asarray(ref[name]),
                                   rtol=3e-2, atol=3e-2)

    print("KERNEL_OK")
</pallas_src>

<mosaic_0001>
module attributes {stable_mosaic.version = 11 : i64} {
  func.func @_backbone_kernel(%arg0: i32, %arg1: memref<1x24x384xbf16, #tpu.memory_space<vmem>>, %arg2: memref<384x384xbf16, #tpu.memory_space<vmem>>, %arg3: memref<512x24xbf16, #tpu.memory_space<vmem>>, %arg4: memref<2x64x32xbf16, #tpu.memory_space<vmem>>, %arg5: memref<2x64x32xbf16, #tpu.memory_space<vmem>>, %arg6: memref<2x64x32xbf16, #tpu.memory_space<vmem>>, %arg7: memref<2x32x32xbf16, #tpu.memory_space<vmem>>, %arg8: memref<1x32x384xf32, #tpu.memory_space<vmem>>) attributes {dimension_semantics = [#tpu.dimension_semantics<parallel>], iteration_bounds = array<i64: 2>, scalar_prefetch = 0 : i64, scratch_operands = 0 : i64, tpu.core_type = #tpu.core_type<tc>, window_params = [{transform_indices = @transform_0, window_bounds = array<i64: 1, 24, 384>}, {pipeline_mode = #tpu.pipeline_mode<synchronous>, transform_indices = @transform_1, window_bounds = array<i64: 384, 384>}, {pipeline_mode = #tpu.pipeline_mode<synchronous>, transform_indices = @transform_2, window_bounds = array<i64: 512, 24>}, {pipeline_mode = #tpu.pipeline_mode<synchronous>, transform_indices = @transform_3, window_bounds = array<i64: 2, 64, 32>}, {pipeline_mode = #tpu.pipeline_mode<synchronous>, transform_indices = @transform_4, window_bounds = array<i64: 2, 64, 32>}, {pipeline_mode = #tpu.pipeline_mode<synchronous>, transform_indices = @transform_5, window_bounds = array<i64: 2, 64, 32>}, {pipeline_mode = #tpu.pipeline_mode<synchronous>, transform_indices = @transform_6, window_bounds = array<i64: 2, 32, 32>}, {transform_indices = @transform_7, window_bounds = array<i64: 1, 32, 384>}]} {
    %c0 = arith.constant 0 : index
    %c0_0 = arith.constant 0 : index
    %c0_1 = arith.constant 0 : index
    %0 = vector.load %arg1[%c0, %c0_0, %c0_1] : memref<1x24x384xbf16, #tpu.memory_space<vmem>>, vector<1x24x384xbf16>
    %1 = vector.shape_cast %0 : vector<1x24x384xbf16> to vector<24x384xbf16>
    %c0_2 = arith.constant 0 : index
    %c0_3 = arith.constant 0 : index
    %2 = vector.load %arg3[%c0_2, %c0_3] : memref<512x24xbf16, #tpu.memory_space<vmem>>, vector<512x24xbf16>
    %cst = arith.constant dense<0.000000e+00> : vector<512x384xf32>
    %3 = tpu.matmul %2, %1, %cst {dimension_numbers = #tpu.dot_dimension_numbers<[1], [0], [0], [1], [0, 0, 1, 1], [], []>} : vector<512x24xbf16>, vector<24x384xbf16>, vector<512x384xf32> -> vector<512x384xf32>
    %4 = vector.extract_strided_slice %3 {offsets = [0, 0], sizes = [256, 384], strides = [1, 1]} : vector<512x384xf32> to vector<256x384xf32>
    %5 = vector.extract_strided_slice %3 {offsets = [256, 0], sizes = [256, 384], strides = [1, 1]} : vector<512x384xf32> to vector<256x384xf32>
    %6 = vector.extract_strided_slice %4 {offsets = [0, 0], sizes = [256, 128], strides = [1, 1]} : vector<256x384xf32> to vector<256x128xf32>
    %7 = vector.extract_strided_slice %4 {offsets = [0, 128], sizes = [256, 128], strides = [1, 1]} : vector<256x384xf32> to vector<256x128xf32>
    %8 = vector.extract_strided_slice %4 {offsets = [0, 256], sizes = [256, 128], strides = [1, 1]} : vector<256x384xf32> to vector<256x128xf32>
    %9 = vector.extract_strided_slice %5 {offsets = [0, 0], sizes = [256, 128], strides = [1, 1]} : vector<256x384xf32> to vector<256x128xf32>
    %10 = vector.extract_strided_slice %5 {offsets = [0, 128], sizes = [256, 128], strides = [1, 1]} : vector<256x384xf32> to vector<256x128xf32>
    %11 = vector.extract_strided_slice %5 {offsets = [0, 256], sizes = [256, 128], strides = [1, 1]} : vector<256x384xf32> to vector<256x128xf32>
    %12 = arith.mulf %6, %9 : vector<256x128xf32>
    %13 = arith.mulf %7, %10 : vector<256x128xf32>
    %14 = arith.addf %12, %13 : vector<256x128xf32>
    %15 = arith.mulf %8, %11 : vector<256x128xf32>
    %16 = arith.addf %14, %15 : vector<256x128xf32>
    %17 = arith.mulf %9, %9 : vector<256x128xf32>
    %18 = arith.mulf %10, %10 : vector<256x128xf32>
    %19 = arith.addf %17, %18 : vector<256x128xf32>
    %20 = arith.mulf %11, %11 : vector<256x128xf32>
    %21 = arith.addf %19, %20 : vector<256x128xf32>
    %cst_4 = arith.constant 0.000000e+00 : f32
    %22 = vector.broadcast %cst_4 : f32 to vector<256x128xf32>
    %23 = arith.minimumf %16, %22 : vector<256x128xf32>
    %cst_5 = arith.constant 9.99999997E-7 : f32
    %24 = vector.broadcast %cst_5 : f32 to vector<256x128xf32>
    %25 = arith.maximumf %21, %24 : vector<256x128xf32>
    %26 = tpu.reciprocal %25 {approx = true} : vector<256x128xf32> -> vector<256x128xf32>
    %27 = arith.mulf %23, %26 : vector<256x128xf32>
    %28 = arith.mulf %27, %9 : vector<256x128xf32>
    %29 = arith.subf %6, %28 : vector<256x128xf32>
    %30 = arith.mulf %27, %10 : vector<256x128xf32>
    %31 = arith.subf %7, %30 : vector<256x128xf32>
    %32 = arith.mulf %27, %11 : vector<256x128xf32>
    %33 = arith.subf %8, %32 : vector<256x128xf32>
    %34 = tpu.concatenate %29, %31, %33 in 1 : vector<256x128xf32>, vector<256x128xf32>, vector<256x128xf32> -> vector<256x384xf32>
    %35 = vector.extract_strided_slice %34 {offsets = [0, 0], sizes = [32, 384], strides = [1, 1]} : vector<256x384xf32> to vector<32x384xf32>
    %36 = vector.extract_strided_slice %34 {offsets = [32, 0], sizes = [32, 384], strides = [1, 1]} : vector<256x384xf32> to vector<32x384xf32>
    %37 = arith.addf %35, %36 : vector<32x384xf32>
    %38 = vector.extract_strided_slice %34 {offsets = [64, 0], sizes = [32, 384], strides = [1, 1]} : vector<256x384xf32> to vector<32x384xf32>
    %39 = arith.addf %37, %38 : vector<32x384xf32>
    %40 = vector.extract_strided_slice %34 {offsets = [96, 0], sizes = [32, 384], strides = [1, 1]} : vector<256x384xf32> to vector<32x384xf32>
    %41 = arith.addf %39, %40 : vector<32x384xf32>
    %42 = vector.extract_strided_slice %34 {offsets = [128, 0], sizes = [32, 384], strides = [1, 1]} : vector<256x384xf32> to vector<32x384xf32>
    %43 = arith.addf %41, %42 : vector<32x384xf32>
    %44 = vector.extract_strided_slice %34 {offsets = [160, 0], sizes = [32, 384], strides = [1, 1]} : vector<256x384xf32> to vector<32x384xf32>
    %45 = arith.addf %43, %44 : vector<32x384xf32>
    %46 = vector.extract_strided_slice %34 {offsets = [192, 0], sizes = [32, 384], strides = [1, 1]} : vector<256x384xf32> to vector<32x384xf32>
    %47 = arith.addf %45, %46 : vector<32x384xf32>
    %48 = vector.extract_strided_slice %34 {offsets = [224, 0], sizes = [32, 384], strides = [1, 1]} : vector<256x384xf32> to vector<32x384xf32>
    %49 = arith.addf %47, %48 : vector<32x384xf32>
    %cst_6 = arith.constant 1.250000e-01 : f32
    %50 = vector.broadcast %cst_6 : f32 to vector<32x384xf32>
    %51 = arith.mulf %49, %50 : vector<32x384xf32>
    %cst_7 = arith.constant 0.000000e+00 : f32
    %52 = vector.broadcast %cst_7 : f32 to vector<32x384xf32>
    %53 = arith.truncf %51 : vector<32x384xf32> to vector<32x384xbf16>
    %c0_8 = arith.constant 0 : index
    %c0_9 = arith.constant 0 : index
    %c0_10 = arith.constant 0 : index
    %54 = vector.load %arg4[%c0_8, %c0_9, %c0_10] : memref<2x64x32xbf16, #tpu.memory_space<vmem>>, vector<1x64x32xbf16>
    %55 = vector.shape_cast %54 : vector<1x64x32xbf16> to vector<64x32xbf16>
    %cst_11 = arith.constant dense<0.000000e+00> : vector<64x384xf32>
    %56 = tpu.matmul %55, %53, %cst_11 {dimension_numbers = #tpu.dot_dimension_numbers<[1], [0], [0], [1], [0, 0, 1, 1], [], []>} : vector<64x32xbf16>, vector<32x384xbf16>, vector<64x384xf32> -> vector<64x384xf32>
    %57 = vector.extract_strided_slice %56 {offsets = [0, 0], sizes = [32, 384], strides = [1, 1]} : vector<64x384xf32> to vector<32x384xf32>
    %58 = vector.extract_strided_slice %56 {offsets = [32, 0], sizes = [32, 384], strides = [1, 1]} : vector<64x384xf32> to vector<32x384xf32>
    %59 = vector.extract_strided_slice %57 {offsets = [0, 0], sizes = [32, 128], strides = [1, 1]} : vector<32x384xf32> to vector<32x128xf32>
    %60 = vector.extract_strided_slice %57 {offsets = [0, 128], sizes = [32, 128], strides = [1, 1]} : vector<32x384xf32> to vector<32x128xf32>
    %61 = vector.extract_strided_slice %57 {offsets = [0, 256], sizes = [32, 128], strides = [1, 1]} : vector<32x384xf32> to vector<32x128xf32>
    %62 = vector.extract_strided_slice %58 {offsets = [0, 0], sizes = [32, 128], strides = [1, 1]} : vector<32x384xf32> to vector<32x128xf32>
    %63 = vector.extract_strided_slice %58 {offsets = [0, 128], sizes = [32, 128], strides = [1, 1]} : vector<32x384xf32> to vector<32x128xf32>
    %64 = vector.extract_strided_slice %58 {offsets = [0, 256], sizes = [32, 128], strides = [1, 1]} : vector<32x384xf32> to vector<32x128xf32>
    %65 = arith.mulf %59, %62 : vector<32x128xf32>
    %66 = arith.mulf %60, %63 : vector<32x128xf32>
    %67 = arith.addf %65, %66 : vector<32x128xf32>
    %68 = arith.mulf %61, %64 : vector<32x128xf32>
    %69 = arith.addf %67, %68 : vector<32x128xf32>
    %70 = arith.mulf %62, %62 : vector<32x128xf32>
    %71 = arith.mulf %63, %63 : vector<32x128xf32>
    %72 = arith.addf %70, %71 : vector<32x128xf32>
    %73 = arith.mulf %64, %64 : vector<32x128xf32>
    %74 = arith.addf %72, %73 : vector<32x128xf32>
    %cst_12 = arith.constant 0.000000e+00 : f32
    %75 = vector.broadcast %cst_12 : f32 to vector<32x128xf32>
    %76 = arith.minimumf %69, %75 : vector<32x128xf32>
    %cst_13 = arith.constant 9.99999997E-7 : f32
    %77 = vector.broadcast %cst_13 : f32 to vector<32x128xf32>
    %78 = arith.maximumf %74, %77 : vector<32x128xf32>
    %79 = tpu.reciprocal %78 {approx = true} : vector<32x128xf32> -> vector<32x128xf32>
    %80 = arith.mulf %76, %79 : vector<32x128xf32>
    %81 = arith.mulf %80, %62 : vector<32x128xf32>
    %82 = arith.subf %59, %81 : vector<32x128xf32>
    %83 = arith.mulf %80, %63 : vector<32x128xf32>
    %84 = arith.subf %60, %83 : vector<32x128xf32>
    %85 = arith.mulf %80, %64 : vector<32x128xf32>
    %86 = arith.subf %61, %85 : vector<32x128xf32>
    %87 = tpu.concatenate %82, %84, %86 in 1 : vector<32x128xf32>, vector<32x128xf32>, vector<32x128xf32> -> vector<32x384xf32>
    %88 = arith.truncf %87 : vector<32x384xf32> to vector<32x384xbf16>
    %c0_14 = arith.constant 0 : index
    %c0_15 = arith.constant 0 : index
    %89 = vector.load %arg2[%c0_14, %c0_15] : memref<384x384xbf16, #tpu.memory_space<vmem>>, vector<384x384xbf16>
    %cst_16 = arith.constant dense<0.000000e+00> : vector<32x384xf32>
    %90 = tpu.matmul %88, %89, %cst_16 {dimension_numbers = #tpu.dot_dimension_numbers<[1], [0], [0], [1], [0, 0, 1, 1], [], []>} : vector<32x384xbf16>, vector<384x384xbf16>, vector<32x384xf32> -> vector<32x384xf32>
    %c0_17 = arith.constant 0 : index
    %c0_18 = arith.constant 0 : index
    %c0_19 = arith.constant 0 : index
    %91 = vector.load %arg5[%c0_17, %c0_18, %c0_19] : memref<2x64x32xbf16, #tpu.memory_space<vmem>>, vector<1x64x32xbf16>
    %92 = vector.shape_cast %91 : vector<1x64x32xbf16> to vector<64x32xbf16>
    %cst_20 = arith.constant dense<0.000000e+00> : vector<64x384xf32>
    %93 = tpu.matmul %92, %88, %cst_20 {dimension_numbers = #tpu.dot_dimension_numbers<[1], [0], [0], [1], [0, 0, 1, 1], [], []>} : vector<64x32xbf16>, vector<32x384xbf16>, vector<64x384xf32> -> vector<64x384xf32>
    %c0_21 = arith.constant 0 : index
    %c0_22 = arith.constant 0 : index
    %c0_23 = arith.constant 0 : index
    %94 = vector.load %arg6[%c0_21, %c0_22, %c0_23] : memref<2x64x32xbf16, #tpu.memory_space<vmem>>, vector<1x64x32xbf16>
    %95 = vector.shape_cast %94 : vector<1x64x32xbf16> to vector<64x32xbf16>
    %96 = arith.truncf %90 : vector<32x384xf32> to vector<32x384xbf16>
    %cst_24 = arith.constant dense<0.000000e+00> : vector<64x384xf32>
    %97 = tpu.matmul %95, %96, %cst_24 {dimension_numbers = #tpu.dot_dimension_numbers<[1], [0], [0], [1], [0, 0, 1, 1], [], []>} : vector<64x32xbf16>, vector<32x384xbf16>, vector<64x384xf32> -> vector<64x384xf32>
    %cst_25 = arith.constant 1.562500e-02 : f32
    %98 = vector.broadcast %cst_25 : f32 to vector<64x384xf32>
    %99 = arith.mulf %98, %97 : vector<64x384xf32>
    %100 = arith.addf %93, %99 : vector<64x384xf32>
    %101 = vector.extract_strided_slice %100 {offsets = [0, 0], sizes = [32, 384], strides = [1, 1]} : vector<64x384xf32> to vector<32x384xf32>
    %102 = vector.extract_strided_slice %100 {offsets = [32, 0], sizes = [32, 384], strides = [1, 1]} : vector<64x384xf32> to vector<32x384xf32>
    %103 = vector.extract_strided_slice %101 {offsets = [0, 0], sizes = [32, 128], strides = [1, 1]} : vector<32x384xf32> to vector<32x128xf32>
    %104 = vector.extract_strided_slice %101 {offsets = [0, 128], sizes = [32, 128], strides = [1, 1]} : vector<32x384xf32> to vector<32x128xf32>
    %105 = vector.extract_strided_slice %101 {offsets = [0, 256], sizes = [32, 128], strides = [1, 1]} : vector<32x384xf32> to vector<32x128xf32>
    %106 = vector.extract_strided_slice %102 {offsets = [0, 0], sizes = [32, 128], strides = [1, 1]} : vector<32x384xf32> to vector<32x128xf32>
    %107 = vector.extract_strided_slice %102 {offsets = [0, 128], sizes = [32, 128], strides = [1, 1]} : vector<32x384xf32> to vector<32x128xf32>
    %108 = vector.extract_strided_slice %102 {offsets = [0, 256], sizes = [32, 128], strides = [1, 1]} : vector<32x384xf32> to vector<32x128xf32>
    %109 = arith.mulf %103, %106 : vector<32x128xf32>
    %110 = arith.mulf %104, %107 : vector<32x128xf32>
    %111 = arith.addf %109, %110 : vector<32x128xf32>
    %112 = arith.mulf %105, %108 : vector<32x128xf32>
    %113 = arith.addf %111, %112 : vector<32x128xf32>
    %114 = arith.mulf %106, %106 : vector<32x128xf32>
    %115 = arith.mulf %107, %107 : vector<32x128xf32>
    %116 = arith.addf %114, %115 : vector<32x128xf32>
    %117 = arith.mulf %108, %108 : vector<32x128xf32>
    %118 = arith.addf %116, %117 : vector<32x128xf32>
    %cst_26 = arith.constant 0.000000e+00 : f32
    %119 = vector.broadcast %cst_26 : f32 to vector<32x128xf32>
    %120 = arith.minimumf %113, %119 : vector<32x128xf32>
    %cst_27 = arith.constant 9.99999997E-7 : f32
    %121 = vector.broadcast %cst_27 : f32 to vector<32x128xf32>
    %122 = arith.maximumf %118, %121 : vector<32x128xf32>
    %123 = tpu.reciprocal %122 {approx = true} : vector<32x128xf32> -> vector<32x128xf32>
    %124 = arith.mulf %120, %123 : vector<32x128xf32>
    %125 = arith.mulf %124, %106 : vector<32x128xf32>
    %126 = arith.subf %103, %125 : vector<32x128xf32>
    %127 = arith.mulf %124, %107 : vector<32x128xf32>
    %128 = arith.subf %104, %127 : vector<32x128xf32>
    %129 = arith.mulf %124, %108 : vector<32x128xf32>
    %130 = arith.subf %105, %129 : vector<32x128xf32>
    %131 = tpu.concatenate %126, %128, %130 in 1 : vector<32x128xf32>, vector<32x128xf32>, vector<32x128xf32> -> vector<32x384xf32>
    %c0_28 = arith.constant 0 : index
    %c0_29 = arith.constant 0 : index
    %c0_30 = arith.constant 0 : index
    %132 = vector.load %arg7[%c0_28, %c0_29, %c0_30] : memref<2x32x32xbf16, #tpu.memory_space<vmem>>, vector<1x32x32xbf16>
    %133 = vector.shape_cast %132 : vector<1x32x32xbf16> to vector<32x32xbf16>
    %134 = arith.truncf %131 : vector<32x384xf32> to vector<32x384xbf16>
    %cst_31 = arith.constant dense<0.000000e+00> : vector<32x384xf32>
    %135 = tpu.matmul %133, %134, %cst_31 {dimension_numbers = #tpu.dot_dimension_numbers<[1], [0], [0], [1], [0, 0, 1, 1], [], []>} : vector<32x32xbf16>, vector<32x384xbf16>, vector<32x384xf32> -> vector<32x384xf32>
    %136 = arith.addf %52, %135 : vector<32x384xf32>
    %137 = arith.truncf %131 : vector<32x384xf32> to vector<32x384xbf16>
    %c1 = arith.constant 1 : index
    %c0_32 = arith.constant 0 : index
    %c0_33 = arith.constant 0 : index
    %138 = vector.load %arg4[%c1, %c0_32, %c0_33] : memref<2x64x32xbf16, #tpu.memory_space<vmem>>, vector<1x64x32xbf16>
    %139 = vector.shape_cast %138 : vector<1x64x32xbf16> to vector<64x32xbf16>
    %cst_34 = arith.constant dense<0.000000e+00> : vector<64x384xf32>
    %140 = tpu.matmul %139, %137, %cst_34 {dimension_numbers = #tpu.dot_dimension_numbers<[1], [0], [0], [1], [0, 0, 1, 1], [], []>} : vector<64x32xbf16>, vector<32x384xbf16>, vector<64x384xf32> -> vector<64x384xf32>
    %141 = vector.extract_strided_slice %140 {offsets = [0, 0], sizes = [32, 384], strides = [1, 1]} : vector<64x384xf32> to vector<32x384xf32>
    %142 = vector.extract_strided_slice %140 {offsets = [32, 0], sizes = [32, 384], strides = [1, 1]} : vector<64x384xf32> to vector<32x384xf32>
    %143 = vector.extract_strided_slice %141 {offsets = [0, 0], sizes = [32, 128], strides = [1, 1]} : vector<32x384xf32> to vector<32x128xf32>
    %144 = vector.extract_strided_slice %141 {offsets = [0, 128], sizes = [32, 128], strides = [1, 1]} : vector<32x384xf32> to vector<32x128xf32>
    %145 = vector.extract_strided_slice %141 {offsets = [0, 256], sizes = [32, 128], strides = [1, 1]} : vector<32x384xf32> to vector<32x128xf32>
    %146 = vector.extract_strided_slice %142 {offsets = [0, 0], sizes = [32, 128], strides = [1, 1]} : vector<32x384xf32> to vector<32x128xf32>
    %147 = vector.extract_strided_slice %142 {offsets = [0, 128], sizes = [32, 128], strides = [1, 1]} : vector<32x384xf32> to vector<32x128xf32>
    %148 = vector.extract_strided_slice %142 {offsets = [0, 256], sizes = [32, 128], strides = [1, 1]} : vector<32x384xf32> to vector<32x128xf32>
    %149 = arith.mulf %143, %146 : vector<32x128xf32>
    %150 = arith.mulf %144, %147 : vector<32x128xf32>
    %151 = arith.addf %149, %150 : vector<32x128xf32>
    %152 = arith.mulf %145, %148 : vector<32x128xf32>
    %153 = arith.addf %151, %152 : vector<32x128xf32>
    %154 = arith.mulf %146, %146 : vector<32x128xf32>
    %155 = arith.mulf %147, %147 : vector<32x128xf32>
    %156 = arith.addf %154, %155 : vector<32x128xf32>
    %157 = arith.mulf %148, %148 : vector<32x128xf32>
    %158 = arith.addf %156, %157 : vector<32x128xf32>
    %cst_35 = arith.constant 0.000000e+00 : f32
    %159 = vector.broadcast %cst_35 : f32 to vector<32x128xf32>
    %160 = arith.minimumf %153, %159 : vector<32x128xf32>
    %cst_36 = arith.constant 9.99999997E-7 : f32
    %161 = vector.broadcast %cst_36 : f32 to vector<32x128xf32>
    %162 = arith.maximumf %158, %161 : vector<32x128xf32>
    %163 = tpu.reciprocal %162 {approx = true} : vector<32x128xf32> -> vector<32x128xf32>
    %164 = arith.mulf %160, %163 : vector<32x128xf32>
    %165 = arith.mulf %164, %146 : vector<32x128xf32>
    %166 = arith.subf %143, %165 : vector<32x128xf32>
    %167 = arith.mulf %164, %147 : vector<32x128xf32>
    %168 = arith.subf %144, %167 : vector<32x128xf32>
    %169 = arith.mulf %164, %148 : vector<32x128xf32>
    %170 = arith.subf %145, %169 : vector<32x128xf32>
    %171 = tpu.concatenate %166, %168, %170 in 1 : vector<32x128xf32>, vector<32x128xf32>, vector<32x128xf32> -> vector<32x384xf32>
    %172 = arith.truncf %171 : vector<32x384xf32> to vector<32x384xbf16>
    %c0_37 = arith.constant 0 : index
    %c0_38 = arith.constant 0 : index
    %173 = vector.load %arg2[%c0_37, %c0_38] : memref<384x384xbf16, #tpu.memory_space<vmem>>, vector<384x384xbf16>
    %cst_39 = arith.constant dense<0.000000e+00> : vector<32x384xf32>
    %174 = tpu.matmul %172, %173, %cst_39 {dimension_numbers = #tpu.dot_dimension_numbers<[1], [0], [0], [1], [0, 0, 1, 1], [], []>} : vector<32x384xbf16>, vector<384x384xbf16>, vector<32x384xf32> -> vector<32x384xf32>
    %c1_40 = arith.constant 1 : index
    %c0_41 = arith.constant 0 : index
    %c0_42 = arith.constant 0 : index
    %175 = vector.load %arg5[%c1_40, %c0_41, %c0_42] : memref<2x64x32xbf16, #tpu.memory_space<vmem>>, vector<1x64x32xbf16>
    %176 = vector.shape_cast %175 : vector<1x64x32xbf16> to vector<64x32xbf16>
    %cst_43 = arith.constant dense<0.000000e+00> : vector<64x384xf32>
    %177 = tpu.matmul %176, %172, %cst_43 {dimension_numbers = #tpu.dot_dimension_numbers<[1], [0], [0], [1], [0, 0, 1, 1], [], []>} : vector<64x32xbf16>, vector<32x384xbf16>, vector<64x384xf32> -> vector<64x384xf32>
    %c1_44 = arith.constant 1 : index
    %c0_45 = arith.constant 0 : index
    %c0_46 = arith.constant 0 : index
    %178 = vector.load %arg6[%c1_44, %c0_45, %c0_46] : memref<2x64x32xbf16, #tpu.memory_space<vmem>>, vector<1x64x32xbf16>
    %179 = vector.shape_cast %178 : vector<1x64x32xbf16> to vector<64x32xbf16>
    %180 = arith.truncf %174 : vector<32x384xf32> to vector<32x384xbf16>
    %cst_47 = arith.constant dense<0.000000e+00> : vector<64x384xf32>
    %181 = tpu.matmul %179, %180, %cst_47 {dimension_numbers = #tpu.dot_dimension_numbers<[1], [0], [0], [1], [0, 0, 1, 1], [], []>} : vector<64x32xbf16>, vector<32x384xbf16>, vector<64x384xf32> -> vector<64x384xf32>
    %cst_48 = arith.constant 1.562500e-02 : f32
    %182 = vector.broadcast %cst_48 : f32 to vector<64x384xf32>
    %183 = arith.mulf %182, %181 : vector<64x384xf32>
    %184 = arith.addf %177, %183 : vector<64x384xf32>
    %185 = vector.extract_strided_slice %184 {offsets = [0, 0], sizes = [32, 384], strides = [1, 1]} : vector<64x384xf32> to vector<32x384xf32>
    %186 = vector.extract_strided_slice %184 {offsets = [32, 0], sizes = [32, 384], strides = [1, 1]} : vector<64x384xf32> to vector<32x384xf32>
    %187 = vector.extract_strided_slice %185 {offsets = [0, 0], sizes = [32, 128], strides = [1, 1]} : vector<32x384xf32> to vector<32x128xf32>
    %188 = vector.extract_strided_slice %185 {offsets = [0, 128], sizes = [32, 128], strides = [1, 1]} : vector<32x384xf32> to vector<32x128xf32>
    %189 = vector.extract_strided_slice %185 {offsets = [0, 256], sizes = [32, 128], strides = [1, 1]} : vector<32x384xf32> to vector<32x128xf32>
    %190 = vector.extract_strided_slice %186 {offsets = [0, 0], sizes = [32, 128], strides = [1, 1]} : vector<32x384xf32> to vector<32x128xf32>
    %191 = vector.extract_strided_slice %186 {offsets = [0, 128], sizes = [32, 128], strides = [1, 1]} : vector<32x384xf32> to vector<32x128xf32>
    %192 = vector.extract_strided_slice %186 {offsets = [0, 256], sizes = [32, 128], strides = [1, 1]} : vector<32x384xf32> to vector<32x128xf32>
    %193 = arith.mulf %187, %190 : vector<32x128xf32>
    %194 = arith.mulf %188, %191 : vector<32x128xf32>
    %195 = arith.addf %193, %194 : vector<32x128xf32>
    %196 = arith.mulf %189, %192 : vector<32x128xf32>
    %197 = arith.addf %195, %196 : vector<32x128xf32>
    %198 = arith.mulf %190, %190 : vector<32x128xf32>
    %199 = arith.mulf %191, %191 : vector<32x128xf32>
    %200 = arith.addf %198, %199 : vector<32x128xf32>
    %201 = arith.mulf %192, %192 : vector<32x128xf32>
    %202 = arith.addf %200, %201 : vector<32x128xf32>
    %cst_49 = arith.constant 0.000000e+00 : f32
    %203 = vector.broadcast %cst_49 : f32 to vector<32x128xf32>
    %204 = arith.minimumf %197, %203 : vector<32x128xf32>
    %cst_50 = arith.constant 9.99999997E-7 : f32
    %205 = vector.broadcast %cst_50 : f32 to vector<32x128xf32>
    %206 = arith.maximumf %202, %205 : vector<32x128xf32>
    %207 = tpu.reciprocal %206 {approx = true} : vector<32x128xf32> -> vector<32x128xf32>
    %208 = arith.mulf %204, %207 : vector<32x128xf32>
    %209 = arith.mulf %208, %190 : vector<32x128xf32>
    %210 = arith.subf %187, %209 : vector<32x128xf32>
    %211 = arith.mulf %208, %191 : vector<32x128xf32>
    %212 = arith.subf %188, %211 : vector<32x128xf32>
    %213 = arith.mulf %208, %192 : vector<32x128xf32>
    %214 = arith.subf %189, %213 : vector<32x128xf32>
    %215 = tpu.concatenate %210, %212, %214 in 1 : vector<32x128xf32>, vector<32x128xf32>, vector<32x128xf32> -> vector<32x384xf32>
    %c1_51 = arith.constant 1 : index
    %c0_52 = arith.constant 0 : index
    %c0_53 = arith.constant 0 : index
    %216 = vector.load %arg7[%c1_51, %c0_52, %c0_53] : memref<2x32x32xbf16, #tpu.memory_space<vmem>>, vector<1x32x32xbf16>
    %217 = vector.shape_cast %216 : vector<1x32x32xbf16> to vector<32x32xbf16>
    %218 = arith.truncf %215 : vector<32x384xf32> to vector<32x384xbf16>
    %cst_54 = arith.constant dense<0.000000e+00> : vector<32x384xf32>
    %219 = tpu.matmul %217, %218, %cst_54 {dimension_numbers = #tpu.dot_dimension_numbers<[1], [0], [0], [1], [0, 0, 1, 1], [], []>} : vector<32x32xbf16>, vector<32x384xbf16>, vector<32x384xf32> -> vector<32x384xf32>
    %220 = arith.addf %136, %219 : vector<32x384xf32>
    %c0_55 = arith.constant 0 : index
    %c0_56 = arith.constant 0 : index
    %c0_57 = arith.constant 0 : index
    %221 = vector.load %arg8[%c0_55, %c0_56, %c0_57] : memref<1x32x384xf32, #tpu.memory_space<vmem>>, vector<1x32x384xf32>
    %222 = vector.shape_cast %221 : vector<1x32x384xf32> to vector<32x384xf32>
    %223 = vector.shape_cast %220 : vector<32x384xf32> to vector<1x32x384xf32>
    tpu.vector_store %arg8[%c0_55, %c0_56, %c0_57], %223 {strides = array<i32>} : memref<1x32x384xf32, #tpu.memory_space<vmem>>, vector<1x32x384xf32>,
    return
  }
  func.func @transform_0(%arg0: i32) -> (i32, i32, i32) {
    %c0_i32 = arith.constant 0 : i32
    %c0_i32_0 = arith.constant 0 : i32
    %c0_i32_1 = arith.constant 0 : i32
    return %arg0, %c0_i32, %c0_i32_0 : i32, i32, i32
  }
  func.func @transform_1(%arg0: i32) -> (i32, i32) {
    %c0_i32 = arith.constant 0 : i32
    %c0_i32_0 = arith.constant 0 : i32
    %c0_i32_1 = arith.constant 0 : i32
    return %c0_i32, %c0_i32_0 : i32, i32
  }
  func.func @transform_2(%arg0: i32) -> (i32, i32) {
    %c0_i32 = arith.constant 0 : i32
    %c0_i32_0 = arith.constant 0 : i32
    %c0_i32_1 = arith.constant 0 : i32
    return %c0_i32, %c0_i32_0 : i32, i32
  }
  func.func @transform_3(%arg0: i32) -> (i32, i32, i32) {
    %c0_i32 = arith.constant 0 : i32
    %c0_i32_0 = arith.constant 0 : i32
    %c0_i32_1 = arith.constant 0 : i32
    %c0_i32_2 = arith.constant 0 : i32
    return %c0_i32, %c0_i32_0, %c0_i32_1 : i32, i32, i32
  }
  func.func @transform_4(%arg0: i32) -> (i32, i32, i32) {
    %c0_i32 = arith.constant 0 : i32
    %c0_i32_0 = arith.constant 0 : i32
    %c0_i32_1 = arith.constant 0 : i32
    %c0_i32_2 = arith.constant 0 : i32
    return %c0_i32, %c0_i32_0, %c0_i32_1 : i32, i32, i32
  }
  func.func @transform_5(%arg0: i32) -> (i32, i32, i32) {
    %c0_i32 = arith.constant 0 : i32
    %c0_i32_0 = arith.constant 0 : i32
    %c0_i32_1 = arith.constant 0 : i32
    %c0_i32_2 = arith.constant 0 : i32
    return %c0_i32, %c0_i32_0, %c0_i32_1 : i32, i32, i32
  }
  func.func @transform_6(%arg0: i32) -> (i32, i32, i32) {
    %c0_i32 = arith.constant 0 : i32
    %c0_i32_0 = arith.constant 0 : i32
    %c0_i32_1 = arith.constant 0 : i32
    %c0_i32_2 = arith.constant 0 : i32
    return %c0_i32, %c0_i32_0, %c0_i32_1 : i32, i32, i32
  }
  func.func @transform_7(%arg0: i32) -> (i32, i32, i32) {
    %c0_i32 = arith.constant 0 : i32
    %c0_i32_0 = arith.constant 0 : i32
    %c0_i32_1 = arith.constant 0 : i32
    return %arg0, %c0_i32, %c0_i32_0 : i32, i32, i32
  }
}

module attributes {stable_mosaic.version = 11 : i64} {
  func.func @_backbone_kernel(%arg0: i32, %arg1: memref<1x24x384xbf16, #tpu.memory_space<vmem>>, %arg2: memref<384x384xbf16, #tpu.memory_space<vmem>>, %arg3: memref<512x24xbf16, #tpu.memory_space<vmem>>, %arg4: memref<2x64x32xbf16, #tpu.memory_space<vmem>>, %arg5: memref<2x64x32xbf16, #tpu.memory_space<vmem>>, %arg6: memref<2x64x32xbf16, #tpu.memory_space<vmem>>, %arg7: memref<2x32x32xbf16, #tpu.memory_space<vmem>>, %arg8: memref<1x32x384xf32, #tpu.memory_space<vmem>>) attributes {dimension_semantics = [#tpu.dimension_semantics<parallel>], iteration_bounds = array<i64: 2>, scalar_prefetch = 0 : i64, scratch_operands = 0 : i64, tpu.core_type = #tpu.core_type<tc>, window_params = [{transform_indices = @transform_0, window_bounds = array<i64: 1, 24, 384>}, {pipeline_mode = #tpu.pipeline_mode<synchronous>, transform_indices = @transform_1, window_bounds = array<i64: 384, 384>}, {pipeline_mode = #tpu.pipeline_mode<synchronous>, transform_indices = @transform_2, window_bounds = array<i64: 512, 24>}, {pipeline_mode = #tpu.pipeline_mode<synchronous>, transform_indices = @transform_3, window_bounds = array<i64: 2, 64, 32>}, {pipeline_mode = #tpu.pipeline_mode<synchronous>, transform_indices = @transform_4, window_bounds = array<i64: 2, 64, 32>}, {pipeline_mode = #tpu.pipeline_mode<synchronous>, transform_indices = @transform_5, window_bounds = array<i64: 2, 64, 32>}, {pipeline_mode = #tpu.pipeline_mode<synchronous>, transform_indices = @transform_6, window_bounds = array<i64: 2, 32, 32>}, {transform_indices = @transform_7, window_bounds = array<i64: 1, 32, 384>}]} {
    %c0 = arith.constant 0 : index
    %c0_0 = arith.constant 0 : index
    %c0_1 = arith.constant 0 : index
    %0 = vector.load %arg1[%c0, %c0_0, %c0_1] : memref<1x24x384xbf16, #tpu.memory_space<vmem>>, vector<1x24x384xbf16>
    %1 = vector.shape_cast %0 : vector<1x24x384xbf16> to vector<24x384xbf16>
    %c0_2 = arith.constant 0 : index
    %c0_3 = arith.constant 0 : index
    %2 = vector.load %arg3[%c0_2, %c0_3] : memref<512x24xbf16, #tpu.memory_space<vmem>>, vector<512x24xbf16>
    %cst = arith.constant dense<0.000000e+00> : vector<512x384xf32>
    %3 = tpu.matmul %2, %1, %cst {dimension_numbers = #tpu.dot_dimension_numbers<[1], [0], [0], [1], [0, 0, 1, 1], [], []>} : vector<512x24xbf16>, vector<24x384xbf16>, vector<512x384xf32> -> vector<512x384xf32>
    %4 = vector.extract_strided_slice %3 {offsets = [0, 0], sizes = [256, 384], strides = [1, 1]} : vector<512x384xf32> to vector<256x384xf32>
    %5 = vector.extract_strided_slice %3 {offsets = [256, 0], sizes = [256, 384], strides = [1, 1]} : vector<512x384xf32> to vector<256x384xf32>
    %6 = vector.extract_strided_slice %4 {offsets = [0, 0], sizes = [256, 128], strides = [1, 1]} : vector<256x384xf32> to vector<256x128xf32>
    %7 = vector.extract_strided_slice %4 {offsets = [0, 128], sizes = [256, 128], strides = [1, 1]} : vector<256x384xf32> to vector<256x128xf32>
    %8 = vector.extract_strided_slice %4 {offsets = [0, 256], sizes = [256, 128], strides = [1, 1]} : vector<256x384xf32> to vector<256x128xf32>
    %9 = vector.extract_strided_slice %5 {offsets = [0, 0], sizes = [256, 128], strides = [1, 1]} : vector<256x384xf32> to vector<256x128xf32>
    %10 = vector.extract_strided_slice %5 {offsets = [0, 128], sizes = [256, 128], strides = [1, 1]} : vector<256x384xf32> to vector<256x128xf32>
    %11 = vector.extract_strided_slice %5 {offsets = [0, 256], sizes = [256, 128], strides = [1, 1]} : vector<256x384xf32> to vector<256x128xf32>
    %12 = arith.mulf %6, %9 : vector<256x128xf32>
    %13 = arith.mulf %7, %10 : vector<256x128xf32>
    %14 = arith.addf %12, %13 : vector<256x128xf32>
    %15 = arith.mulf %8, %11 : vector<256x128xf32>
    %16 = arith.addf %14, %15 : vector<256x128xf32>
    %17 = arith.mulf %9, %9 : vector<256x128xf32>
    %18 = arith.mulf %10, %10 : vector<256x128xf32>
    %19 = arith.addf %17, %18 : vector<256x128xf32>
    %20 = arith.mulf %11, %11 : vector<256x128xf32>
    %21 = arith.addf %19, %20 : vector<256x128xf32>
    %cst_4 = arith.constant 0.000000e+00 : f32
    %22 = vector.broadcast %cst_4 : f32 to vector<256x128xf32>
    %23 = arith.minimumf %16, %22 : vector<256x128xf32>
    %cst_5 = arith.constant 9.99999997E-7 : f32
    %24 = vector.broadcast %cst_5 : f32 to vector<256x128xf32>
    %25 = arith.maximumf %21, %24 : vector<256x128xf32>
    %26 = tpu.reciprocal %25 {approx = true} : vector<256x128xf32> -> vector<256x128xf32>
    %27 = arith.mulf %23, %26 : vector<256x128xf32>
    %28 = arith.mulf %27, %9 : vector<256x128xf32>
    %29 = arith.subf %6, %28 : vector<256x128xf32>
    %30 = arith.mulf %27, %10 : vector<256x128xf32>
    %31 = arith.subf %7, %30 : vector<256x128xf32>
    %32 = arith.mulf %27, %11 : vector<256x128xf32>
    %33 = arith.subf %8, %32 : vector<256x128xf32>
    %34 = tpu.concatenate %29, %31, %33 in 1 : vector<256x128xf32>, vector<256x128xf32>, vector<256x128xf32> -> vector<256x384xf32>
    %35 = vector.extract_strided_slice %34 {offsets = [0, 0], sizes = [32, 384], strides = [1, 1]} : vector<256x384xf32> to vector<32x384xf32>
    %36 = vector.extract_strided_slice %34 {offsets = [32, 0], sizes = [32, 384], strides = [1, 1]} : vector<256x384xf32> to vector<32x384xf32>
    %37 = arith.addf %35, %36 : vector<32x384xf32>
    %38 = vector.extract_strided_slice %34 {offsets = [64, 0], sizes = [32, 384], strides = [1, 1]} : vector<256x384xf32> to vector<32x384xf32>
    %39 = arith.addf %37, %38 : vector<32x384xf32>
    %40 = vector.extract_strided_slice %34 {offsets = [96, 0], sizes = [32, 384], strides = [1, 1]} : vector<256x384xf32> to vector<32x384xf32>
    %41 = arith.addf %39, %40 : vector<32x384xf32>
    %42 = vector.extract_strided_slice %34 {offsets = [128, 0], sizes = [32, 384], strides = [1, 1]} : vector<256x384xf32> to vector<32x384xf32>
    %43 = arith.addf %41, %42 : vector<32x384xf32>
    %44 = vector.extract_strided_slice %34 {offsets = [160, 0], sizes = [32, 384], strides = [1, 1]} : vector<256x384xf32> to vector<32x384xf32>
    %45 = arith.addf %43, %44 : vector<32x384xf32>
    %46 = vector.extract_strided_slice %34 {offsets = [192, 0], sizes = [32, 384], strides = [1, 1]} : vector<256x384xf32> to vector<32x384xf32>
    %47 = arith.addf %45, %46 : vector<32x384xf32>
    %48 = vector.extract_strided_slice %34 {offsets = [224, 0], sizes = [32, 384], strides = [1, 1]} : vector<256x384xf32> to vector<32x384xf32>
    %49 = arith.addf %47, %48 : vector<32x384xf32>
    %cst_6 = arith.constant 1.250000e-01 : f32
    %50 = vector.broadcast %cst_6 : f32 to vector<32x384xf32>
    %51 = arith.mulf %49, %50 : vector<32x384xf32>
    %cst_7 = arith.constant 0.000000e+00 : f32
    %52 = vector.broadcast %cst_7 : f32 to vector<32x384xf32>
    %53 = arith.truncf %51 : vector<32x384xf32> to vector<32x384xbf16>
    %c0_8 = arith.constant 0 : index
    %c0_9 = arith.constant 0 : index
    %c0_10 = arith.constant 0 : index
    %54 = vector.load %arg4[%c0_8, %c0_9, %c0_10] : memref<2x64x32xbf16, #tpu.memory_space<vmem>>, vector<1x64x32xbf16>
    %55 = vector.shape_cast %54 : vector<1x64x32xbf16> to vector<64x32xbf16>
    %cst_11 = arith.constant dense<0.000000e+00> : vector<64x384xf32>
    %56 = tpu.matmul %55, %53, %cst_11 {dimension_numbers = #tpu.dot_dimension_numbers<[1], [0], [0], [1], [0, 0, 1, 1], [], []>} : vector<64x32xbf16>, vector<32x384xbf16>, vector<64x384xf32> -> vector<64x384xf32>
    %57 = vector.extract_strided_slice %56 {offsets = [0, 0], sizes = [32, 384], strides = [1, 1]} : vector<64x384xf32> to vector<32x384xf32>
    %58 = vector.extract_strided_slice %56 {offsets = [32, 0], sizes = [32, 384], strides = [1, 1]} : vector<64x384xf32> to vector<32x384xf32>
    %59 = vector.extract_strided_slice %57 {offsets = [0, 0], sizes = [32, 128], strides = [1, 1]} : vector<32x384xf32> to vector<32x128xf32>
    %60 = vector.extract_strided_slice %57 {offsets = [0, 128], sizes = [32, 128], strides = [1, 1]} : vector<32x384xf32> to vector<32x128xf32>
    %61 = vector.extract_strided_slice %57 {offsets = [0, 256], sizes = [32, 128], strides = [1, 1]} : vector<32x384xf32> to vector<32x128xf32>
    %62 = vector.extract_strided_slice %58 {offsets = [0, 0], sizes = [32, 128], strides = [1, 1]} : vector<32x384xf32> to vector<32x128xf32>
    %63 = vector.extract_strided_slice %58 {offsets = [0, 128], sizes = [32, 128], strides = [1, 1]} : vector<32x384xf32> to vector<32x128xf32>
    %64 = vector.extract_strided_slice %58 {offsets = [0, 256], sizes = [32, 128], strides = [1, 1]} : vector<32x384xf32> to vector<32x128xf32>
    %65 = arith.mulf %59, %62 : vector<32x128xf32>
    %66 = arith.mulf %60, %63 : vector<32x128xf32>
    %67 = arith.addf %65, %66 : vector<32x128xf32>
    %68 = arith.mulf %61, %64 : vector<32x128xf32>
    %69 = arith.addf %67, %68 : vector<32x128xf32>
    %70 = arith.mulf %62, %62 : vector<32x128xf32>
    %71 = arith.mulf %63, %63 : vector<32x128xf32>
    %72 = arith.addf %70, %71 : vector<32x128xf32>
    %73 = arith.mulf %64, %64 : vector<32x128xf32>
    %74 = arith.addf %72, %73 : vector<32x128xf32>
    %cst_12 = arith.constant 0.000000e+00 : f32
    %75 = vector.broadcast %cst_12 : f32 to vector<32x128xf32>
    %76 = arith.minimumf %69, %75 : vector<32x128xf32>
    %cst_13 = arith.constant 9.99999997E-7 : f32
    %77 = vector.broadcast %cst_13 : f32 to vector<32x128xf32>
    %78 = arith.maximumf %74, %77 : vector<32x128xf32>
    %79 = tpu.reciprocal %78 {approx = true} : vector<32x128xf32> -> vector<32x128xf32>
    %80 = arith.mulf %76, %79 : vector<32x128xf32>
    %81 = arith.mulf %80, %62 : vector<32x128xf32>
    %82 = arith.subf %59, %81 : vector<32x128xf32>
    %83 = arith.mulf %80, %63 : vector<32x128xf32>
    %84 = arith.subf %60, %83 : vector<32x128xf32>
    %85 = arith.mulf %80, %64 : vector<32x128xf32>
    %86 = arith.subf %61, %85 : vector<32x128xf32>
    %87 = tpu.concatenate %82, %84, %86 in 1 : vector<32x128xf32>, vector<32x128xf32>, vector<32x128xf32> -> vector<32x384xf32>
    %88 = arith.truncf %87 : vector<32x384xf32> to vector<32x384xbf16>
    %c0_14 = arith.constant 0 : index
    %c0_15 = arith.constant 0 : index
    %89 = vector.load %arg2[%c0_14, %c0_15] : memref<384x384xbf16, #tpu.memory_space<vmem>>, vector<384x384xbf16>
    %cst_16 = arith.constant dense<0.000000e+00> : vector<32x384xf32>
    %90 = tpu.matmul %88, %89, %cst_16 {dimension_numbers = #tpu.dot_dimension_numbers<[1], [0], [0], [1], [0, 0, 1, 1], [], []>} : vector<32x384xbf16>, vector<384x384xbf16>, vector<32x384xf32> -> vector<32x384xf32>
    %c0_17 = arith.constant 0 : index
    %c0_18 = arith.constant 0 : index
    %c0_19 = arith.constant 0 : index
    %91 = vector.load %arg5[%c0_17, %c0_18, %c0_19] : memref<2x64x32xbf16, #tpu.memory_space<vmem>>, vector<1x64x32xbf16>
    %92 = vector.shape_cast %91 : vector<1x64x32xbf16> to vector<64x32xbf16>
    %cst_20 = arith.constant dense<0.000000e+00> : vector<64x384xf32>
    %93 = tpu.matmul %92, %88, %cst_20 {dimension_numbers = #tpu.dot_dimension_numbers<[1], [0], [0], [1], [0, 0, 1, 1], [], []>} : vector<64x32xbf16>, vector<32x384xbf16>, vector<64x384xf32> -> vector<64x384xf32>
    %c0_21 = arith.constant 0 : index
    %c0_22 = arith.constant 0 : index
    %c0_23 = arith.constant 0 : index
    %94 = vector.load %arg6[%c0_21, %c0_22, %c0_23] : memref<2x64x32xbf16, #tpu.memory_space<vmem>>, vector<1x64x32xbf16>
    %95 = vector.shape_cast %94 : vector<1x64x32xbf16> to vector<64x32xbf16>
    %96 = arith.truncf %90 : vector<32x384xf32> to vector<32x384xbf16>
    %cst_24 = arith.constant dense<0.000000e+00> : vector<64x384xf32>
    %97 = tpu.matmul %95, %96, %cst_24 {dimension_numbers = #tpu.dot_dimension_numbers<[1], [0], [0], [1], [0, 0, 1, 1], [], []>} : vector<64x32xbf16>, vector<32x384xbf16>, vector<64x384xf32> -> vector<64x384xf32>
    %cst_25 = arith.constant 1.562500e-02 : f32
    %98 = vector.broadcast %cst_25 : f32 to vector<64x384xf32>
    %99 = arith.mulf %98, %97 : vector<64x384xf32>
    %100 = arith.addf %93, %99 : vector<64x384xf32>
    %101 = vector.extract_strided_slice %100 {offsets = [0, 0], sizes = [32, 384], strides = [1, 1]} : vector<64x384xf32> to vector<32x384xf32>
    %102 = vector.extract_strided_slice %100 {offsets = [32, 0], sizes = [32, 384], strides = [1, 1]} : vector<64x384xf32> to vector<32x384xf32>
    %103 = vector.extract_strided_slice %101 {offsets = [0, 0], sizes = [32, 128], strides = [1, 1]} : vector<32x384xf32> to vector<32x128xf32>
    %104 = vector.extract_strided_slice %101 {offsets = [0, 128], sizes = [32, 128], strides = [1, 1]} : vector<32x384xf32> to vector<32x128xf32>
    %105 = vector.extract_strided_slice %101 {offsets = [0, 256], sizes = [32, 128], strides = [1, 1]} : vector<32x384xf32> to vector<32x128xf32>
    %106 = vector.extract_strided_slice %102 {offsets = [0, 0], sizes = [32, 128], strides = [1, 1]} : vector<32x384xf32> to vector<32x128xf32>
    %107 = vector.extract_strided_slice %102 {offsets = [0, 128], sizes = [32, 128], strides = [1, 1]} : vector<32x384xf32> to vector<32x128xf32>
    %108 = vector.extract_strided_slice %102 {offsets = [0, 256], sizes = [32, 128], strides = [1, 1]} : vector<32x384xf32> to vector<32x128xf32>
    %109 = arith.mulf %103, %106 : vector<32x128xf32>
    %110 = arith.mulf %104, %107 : vector<32x128xf32>
    %111 = arith.addf %109, %110 : vector<32x128xf32>
    %112 = arith.mulf %105, %108 : vector<32x128xf32>
    %113 = arith.addf %111, %112 : vector<32x128xf32>
    %114 = arith.mulf %106, %106 : vector<32x128xf32>
    %115 = arith.mulf %107, %107 : vector<32x128xf32>
    %116 = arith.addf %114, %115 : vector<32x128xf32>
    %117 = arith.mulf %108, %108 : vector<32x128xf32>
    %118 = arith.addf %116, %117 : vector<32x128xf32>
    %cst_26 = arith.constant 0.000000e+00 : f32
    %119 = vector.broadcast %cst_26 : f32 to vector<32x128xf32>
    %120 = arith.minimumf %113, %119 : vector<32x128xf32>
    %cst_27 = arith.constant 9.99999997E-7 : f32
    %121 = vector.broadcast %cst_27 : f32 to vector<32x128xf32>
    %122 = arith.maximumf %118, %121 : vector<32x128xf32>
    %123 = tpu.reciprocal %122 {approx = true} : vector<32x128xf32> -> vector<32x128xf32>
    %124 = arith.mulf %120, %123 : vector<32x128xf32>
    %125 = arith.mulf %124, %106 : vector<32x128xf32>
    %126 = arith.subf %103, %125 : vector<32x128xf32>
    %127 = arith.mulf %124, %107 : vector<32x128xf32>
    %128 = arith.subf %104, %127 : vector<32x128xf32>
    %129 = arith.mulf %124, %108 : vector<32x128xf32>
    %130 = arith.subf %105, %129 : vector<32x128xf32>
    %131 = tpu.concatenate %126, %128, %130 in 1 : vector<32x128xf32>, vector<32x128xf32>, vector<32x128xf32> -> vector<32x384xf32>
    %c0_28 = arith.constant 0 : index
    %c0_29 = arith.constant 0 : index
    %c0_30 = arith.constant 0 : index
    %132 = vector.load %arg7[%c0_28, %c0_29, %c0_30] : memref<2x32x32xbf16, #tpu.memory_space<vmem>>, vector<1x32x32xbf16>
    %133 = vector.shape_cast %132 : vector<1x32x32xbf16> to vector<32x32xbf16>
    %134 = arith.truncf %131 : vector<32x384xf32> to vector<32x384xbf16>
    %cst_31 = arith.constant dense<0.000000e+00> : vector<32x384xf32>
    %135 = tpu.matmul %133, %134, %cst_31 {dimension_numbers = #tpu.dot_dimension_numbers<[1], [0], [0], [1], [0, 0, 1, 1], [], []>} : vector<32x32xbf16>, vector<32x384xbf16>, vector<32x384xf32> -> vector<32x384xf32>
    %136 = arith.addf %52, %135 : vector<32x384xf32>
    %137 = arith.truncf %131 : vector<32x384xf32> to vector<32x384xbf16>
    %c1 = arith.constant 1 : index
    %c0_32 = arith.constant 0 : index
    %c0_33 = arith.constant 0 : index
    %138 = vector.load %arg4[%c1, %c0_32, %c0_33] : memref<2x64x32xbf16, #tpu.memory_space<vmem>>, vector<1x64x32xbf16>
    %139 = vector.shape_cast %138 : vector<1x64x32xbf16> to vector<64x32xbf16>
    %cst_34 = arith.constant dense<0.000000e+00> : vector<64x384xf32>
    %140 = tpu.matmul %139, %137, %cst_34 {dimension_numbers = #tpu.dot_dimension_numbers<[1], [0], [0], [1], [0, 0, 1, 1], [], []>} : vector<64x32xbf16>, vector<32x384xbf16>, vector<64x384xf32> -> vector<64x384xf32>
    %141 = vector.extract_strided_slice %140 {offsets = [0, 0], sizes = [32, 384], strides = [1, 1]} : vector<64x384xf32> to vector<32x384xf32>
    %142 = vector.extract_strided_slice %140 {offsets = [32, 0], sizes = [32, 384], strides = [1, 1]} : vector<64x384xf32> to vector<32x384xf32>
    %143 = vector.extract_strided_slice %141 {offsets = [0, 0], sizes = [32, 128], strides = [1, 1]} : vector<32x384xf32> to vector<32x128xf32>
    %144 = vector.extract_strided_slice %141 {offsets = [0, 128], sizes = [32, 128], strides = [1, 1]} : vector<32x384xf32> to vector<32x128xf32>
    %145 = vector.extract_strided_slice %141 {offsets = [0, 256], sizes = [32, 128], strides = [1, 1]} : vector<32x384xf32> to vector<32x128xf32>
    %146 = vector.extract_strided_slice %142 {offsets = [0, 0], sizes = [32, 128], strides = [1, 1]} : vector<32x384xf32> to vector<32x128xf32>
    %147 = vector.extract_strided_slice %142 {offsets = [0, 128], sizes = [32, 128], strides = [1, 1]} : vector<32x384xf32> to vector<32x128xf32>
    %148 = vector.extract_strided_slice %142 {offsets = [0, 256], sizes = [32, 128], strides = [1, 1]} : vector<32x384xf32> to vector<32x128xf32>
    %149 = arith.mulf %143, %146 : vector<32x128xf32>
    %150 = arith.mulf %144, %147 : vector<32x128xf32>
    %151 = arith.addf %149, %150 : vector<32x128xf32>
    %152 = arith.mulf %145, %148 : vector<32x128xf32>
    %153 = arith.addf %151, %152 : vector<32x128xf32>
    %154 = arith.mulf %146, %146 : vector<32x128xf32>
    %155 = arith.mulf %147, %147 : vector<32x128xf32>
    %156 = arith.addf %154, %155 : vector<32x128xf32>
    %157 = arith.mulf %148, %148 : vector<32x128xf32>
    %158 = arith.addf %156, %157 : vector<32x128xf32>
    %cst_35 = arith.constant 0.000000e+00 : f32
    %159 = vector.broadcast %cst_35 : f32 to vector<32x128xf32>
    %160 = arith.minimumf %153, %159 : vector<32x128xf32>
    %cst_36 = arith.constant 9.99999997E-7 : f32
    %161 = vector.broadcast %cst_36 : f32 to vector<32x128xf32>
    %162 = arith.maximumf %158, %161 : vector<32x128xf32>
    %163 = tpu.reciprocal %162 {approx = true} : vector<32x128xf32> -> vector<32x128xf32>
    %164 = arith.mulf %160, %163 : vector<32x128xf32>
    %165 = arith.mulf %164, %146 : vector<32x128xf32>
    %166 = arith.subf %143, %165 : vector<32x128xf32>
    %167 = arith.mulf %164, %147 : vector<32x128xf32>
    %168 = arith.subf %144, %167 : vector<32x128xf32>
    %169 = arith.mulf %164, %148 : vector<32x128xf32>
    %170 = arith.subf %145, %169 : vector<32x128xf32>
    %171 = tpu.concatenate %166, %168, %170 in 1 : vector<32x128xf32>, vector<32x128xf32>, vector<32x128xf32> -> vector<32x384xf32>
    %172 = arith.truncf %171 : vector<32x384xf32> to vector<32x384xbf16>
    %c0_37 = arith.constant 0 : index
    %c0_38 = arith.constant 0 : index
    %173 = vector.load %arg2[%c0_37, %c0_38] : memref<384x384xbf16, #tpu.memory_space<vmem>>, vector<384x384xbf16>
    %cst_39 = arith.constant dense<0.000000e+00> : vector<32x384xf32>
    %174 = tpu.matmul %172, %173, %cst_39 {dimension_numbers = #tpu.dot_dimension_numbers<[1], [0], [0], [1], [0, 0, 1, 1], [], []>} : vector<32x384xbf16>, vector<384x384xbf16>, vector<32x384xf32> -> vector<32x384xf32>
    %c1_40 = arith.constant 1 : index
    %c0_41 = arith.constant 0 : index
    %c0_42 = arith.constant 0 : index
    %175 = vector.load %arg5[%c1_40, %c0_41, %c0_42] : memref<2x64x32xbf16, #tpu.memory_space<vmem>>, vector<1x64x32xbf16>
    %176 = vector.shape_cast %175 : vector<1x64x32xbf16> to vector<64x32xbf16>
    %cst_43 = arith.constant dense<0.000000e+00> : vector<64x384xf32>
    %177 = tpu.matmul %176, %172, %cst_43 {dimension_numbers = #tpu.dot_dimension_numbers<[1], [0], [0], [1], [0, 0, 1, 1], [], []>} : vector<64x32xbf16>, vector<32x384xbf16>, vector<64x384xf32> -> vector<64x384xf32>
    %c1_44 = arith.constant 1 : index
    %c0_45 = arith.constant 0 : index
    %c0_46 = arith.constant 0 : index
    %178 = vector.load %arg6[%c1_44, %c0_45, %c0_46] : memref<2x64x32xbf16, #tpu.memory_space<vmem>>, vector<1x64x32xbf16>
    %179 = vector.shape_cast %178 : vector<1x64x32xbf16> to vector<64x32xbf16>
    %180 = arith.truncf %174 : vector<32x384xf32> to vector<32x384xbf16>
    %cst_47 = arith.constant dense<0.000000e+00> : vector<64x384xf32>
    %181 = tpu.matmul %179, %180, %cst_47 {dimension_numbers = #tpu.dot_dimension_numbers<[1], [0], [0], [1], [0, 0, 1, 1], [], []>} : vector<64x32xbf16>, vector<32x384xbf16>, vector<64x384xf32> -> vector<64x384xf32>
    %cst_48 = arith.constant 1.562500e-02 : f32
    %182 = vector.broadcast %cst_48 : f32 to vector<64x384xf32>
    %183 = arith.mulf %182, %181 : vector<64x384xf32>
    %184 = arith.addf %177, %183 : vector<64x384xf32>
    %185 = vector.extract_strided_slice %184 {offsets = [0, 0], sizes = [32, 384], strides = [1, 1]} : vector<64x384xf32> to vector<32x384xf32>
    %186 = vector.extract_strided_slice %184 {offsets = [32, 0], sizes = [32, 384], strides = [1, 1]} : vector<64x384xf32> to vector<32x384xf32>
    %187 = vector.extract_strided_slice %185 {offsets = [0, 0], sizes = [32, 128], strides = [1, 1]} : vector<32x384xf32> to vector<32x128xf32>
    %188 = vector.extract_strided_slice %185 {offsets = [0, 128], sizes = [32, 128], strides = [1, 1]} : vector<32x384xf32> to vector<32x128xf32>
    %189 = vector.extract_strided_slice %185 {offsets = [0, 256], sizes = [32, 128], strides = [1, 1]} : vector<32x384xf32> to vector<32x128xf32>
    %190 = vector.extract_strided_slice %186 {offsets = [0, 0], sizes = [32, 128], strides = [1, 1]} : vector<32x384xf32> to vector<32x128xf32>
    %191 = vector.extract_strided_slice %186 {offsets = [0, 128], sizes = [32, 128], strides = [1, 1]} : vector<32x384xf32> to vector<32x128xf32>
    %192 = vector.extract_strided_slice %186 {offsets = [0, 256], sizes = [32, 128], strides = [1, 1]} : vector<32x384xf32> to vector<32x128xf32>
    %193 = arith.mulf %187, %190 : vector<32x128xf32>
    %194 = arith.mulf %188, %191 : vector<32x128xf32>
    %195 = arith.addf %193, %194 : vector<32x128xf32>
    %196 = arith.mulf %189, %192 : vector<32x128xf32>
    %197 = arith.addf %195, %196 : vector<32x128xf32>
    %198 = arith.mulf %190, %190 : vector<32x128xf32>
    %199 = arith.mulf %191, %191 : vector<32x128xf32>
    %200 = arith.addf %198, %199 : vector<32x128xf32>
    %201 = arith.mulf %192, %192 : vector<32x128xf32>
    %202 = arith.addf %200, %201 : vector<32x128xf32>
    %cst_49 = arith.constant 0.000000e+00 : f32
    %203 = vector.broadcast %cst_49 : f32 to vector<32x128xf32>
    %204 = arith.minimumf %197, %203 : vector<32x128xf32>
    %cst_50 = arith.constant 9.99999997E-7 : f32
    %205 = vector.broadcast %cst_50 : f32 to vector<32x128xf32>
    %206 = arith.maximumf %202, %205 : vector<32x128xf32>
    %207 = tpu.reciprocal %206 {approx = true} : vector<32x128xf32> -> vector<32x128xf32>
    %208 = arith.mulf %204, %207 : vector<32x128xf32>
    %209 = arith.mulf %208, %190 : vector<32x128xf32>
    %210 = arith.subf %187, %209 : vector<32x128xf32>
    %211 = arith.mulf %208, %191 : vector<32x128xf32>
    %212 = arith.subf %188, %211 : vector<32x128xf32>
    %213 = arith.mulf %208, %192 : vector<32x128xf32>
    %214 = arith.subf %189, %213 : vector<32x128xf32>
    %215 = tpu.concatenate %210, %212, %214 in 1 : vector<32x128xf32>, vector<32x128xf32>, vector<32x128xf32> -> vector<32x384xf32>
    %c1_51 = arith.constant 1 : index
    %c0_52 = arith.constant 0 : index
    %c0_53 = arith.constant 0 : index
    %216 = vector.load %arg7[%c1_51, %c0_52, %c0_53] : memref<2x32x32xbf16, #tpu.memory_space<vmem>>, vector<1x32x32xbf16>
    %217 = vector.shape_cast %216 : vector<1x32x32xbf16> to vector<32x32xbf16>
    %218 = arith.truncf %215 : vector<32x384xf32> to vector<32x384xbf16>
    %cst_54 = arith.constant dense<0.000000e+00> : vector<32x384xf32>
    %219 = tpu.matmul %217, %218, %cst_54 {dimension_numbers = #tpu.dot_dimension_numbers<[1], [0], [0], [1], [0, 0, 1, 1], [], []>} : vector<32x32xbf16>, vector<32x384xbf16>, vector<32x384xf32> -> vector<32x384xf32>
    %220 = arith.addf %136, %219 : vector<32x384xf32>
    %c0_55 = arith.constant 0 : index
    %c0_56 = arith.constant 0 : index
    %c0_57 = arith.constant 0 : index
    %221 = vector.load %arg8[%c0_55, %c0_56, %c0_57] : memref<1x32x384xf32, #tpu.memory_space<vmem>>, vector<1x32x384xf32>
    %222 = vector.shape_cast %221 : vector<1x32x384xf32> to vector<32x384xf32>
    %223 = vector.shape_cast %220 : vector<32x384xf32> to vector<1x32x384xf32>
    tpu.vector_store %arg8[%c0_55, %c0_56, %c0_57], %223 {strides = array<i32>} : memref<1x32x384xf32, #tpu.memory_space<vmem>>, vector<1x32x384xf32>,
    return
  }
  func.func @transform_0(%arg0: i32) -> (i32, i32, i32) {
    %c0_i32 = arith.constant 0 : i32
    %c0_i32_0 = arith.constant 0 : i32
    %c0_i32_1 = arith.constant 0 : i32
    return %arg0, %c0_i32, %c0_i32_0 : i32, i32, i32
  }
  func.func @transform_1(%arg0: i32) -> (i32, i32) {
    %c0_i32 = arith.constant 0 : i32
    %c0_i32_0 = arith.constant 0 : i32
    %c0_i32_1 = arith.constant 0 : i32
    return %c0_i32, %c0_i32_0 : i32, i32
  }
  func.func @transform_2(%arg0: i32) -> (i32, i32) {
    %c0_i32 = arith.constant 0 : i32
    %c0_i32_0 = arith.constant 0 : i32
    %c0_i32_1 = arith.constant 0 : i32
    return %c0_i32, %c0_i32_0 : i32, i32
  }
  func.func @transform_3(%arg0: i32) -> (i32, i32, i32) {
    %c0_i32 = arith.constant 0 : i32
    %c0_i32_0 = arith.constant 0 : i32
    %c0_i32_1 = arith.constant 0 : i32
    %c0_i32_2 = arith.constant 0 : i32
    return %c0_i32, %c0_i32_0, %c0_i32_1 : i32, i32, i32
  }
  func.func @transform_4(%arg0: i32) -> (i32, i32, i32) {
    %c0_i32 = arith.constant 0 : i32
    %c0_i32_0 = arith.constant 0 : i32
    %c0_i32_1 = arith.constant 0 : i32
    %c0_i32_2 = arith.constant 0 : i32
    return %c0_i32, %c0_i32_0, %c0_i32_1 : i32, i32, i32
  }
  func.func @transform_5(%arg0: i32) -> (i32, i32, i32) {
    %c0_i32 = arith.constant 0 : i32
    %c0_i32_0 = arith.constant 0 : i32
    %c0_i32_1 = arith.constant 0 : i32
    %c0_i32_2 = arith.constant 0 : i32
    return %c0_i32, %c0_i32_0, %c0_i32_1 : i32, i32, i32
  }
  func.func @transform_6(%arg0: i32) -> (i32, i32, i32) {
    %c0_i32 = arith.constant 0 : i32
    %c0_i32_0 = arith.constant 0 : i32
    %c0_i32_1 = arith.constant 0 : i32
    %c0_i32_2 = arith.constant 0 : i32
    return %c0_i32, %c0_i32_0, %c0_i32_1 : i32, i32, i32
  }
  func.func @transform_7(%arg0: i32) -> (i32, i32, i32) {
    %c0_i32 = arith.constant 0 : i32
    %c0_i32_0 = arith.constant 0 : i32
    %c0_i32_1 = arith.constant 0 : i32
    return %arg0, %c0_i32, %c0_i32_0 : i32, i32, i32
  }
}

</mosaic_0001>

<llo_original>
// kernel: tpu_custom_call.1
$region0: #{tpu_custom_call.1}
  #allocation0 [shape = 'u32[]', space=smem, size = 0x4, offset = 0x4, fixed_abs, tag = 'smem constant byte address 0x4 - core index']
  #allocation1 [shape = 'u32[144,128]{1,0:T(1,128)}', space=vmem, size = 0x12000, scoped, tag = 'internal scratch']
  %s0 = inlined_call_operand.hbm [shape: bf16[2,24,384], index: 0, kind: input, shape index: {}]
  %s1 = inlined_call_operand.vmem [shape: bf16[384,384], index: 1, kind: input, shape index: {}]
  %s2 = inlined_call_operand.vmem [shape: bf16[512,24], index: 2, kind: input, shape index: {}]
  %s3 = inlined_call_operand.vmem [shape: bf16[2,64,32], index: 3, kind: input, shape index: {}]
  %s4 = inlined_call_operand.vmem [shape: bf16[2,64,32], index: 4, kind: input, shape index: {}]
  %s5 = inlined_call_operand.vmem [shape: bf16[2,64,32], index: 5, kind: input, shape index: {}]
  %s6 = inlined_call_operand.hbm [shape: bf16[2,32,32], index: 6, kind: input, shape index: {}]
  %s7 = inlined_call_operand.hbm [shape: f32[2,32,384], index: 7, kind: output, shape index: {}]
  %s8 = sld [smem:[#allocation0]]
  $region69: #{tpu_custom_call.1} parent=0
    _
  %s10 = ssub.s32 1, %s8
  %s11 = scalar_select 0, %s10, %s8
  $region1: #{tpu_custom_call.1} parent=0
    #allocation2 [shape = 'u8[36864]{0}', space=vmem, size = 0x9000, scoped, tag = 'input window, operand 0']
    #allocation3 [shape = 's32[2]{0}', space=sflag, size = 0x8, scoped, tag = 'scoped memory for tpu_custom_call.1']
    #allocation4 [shape = 's32[2]{0}', space=sflag, size = 0x8, scoped, tag = 'scoped memory for tpu_custom_call.1']
    #allocation5 [shape = 'u8[16384]{0}', space=vmem, size = 0x4000, scoped, tag = 'input window, operand 6, single buffered']
    #allocation6 [shape = 's32[1]{0}', space=sflag, size = 0x4, scoped, tag = 'scoped memory for tpu_custom_call.1']
    #allocation7 [shape = 'u8[98304]{0}', space=vmem, size = 0x18000, scoped, tag = 'output window, operand 0']
    %12 = vsyncpa [#allocation3], 0
    %s13 = scalar_lea.sflag [#allocation3], 1
    %14 = vsyncpa %s13, 0
    %15 = vsyncpa [#allocation6], 0
    %16 = vsyncpa [#allocation4], 0
    %s17 = scalar_lea.sflag [#allocation4], 1
    %18 = vsyncpa %s17, 0
    loop: start=0, step=1, limit=4
    $region2: #{tpu_custom_call.1} parent=1 // loop_pre_header
      _
    $region3: #{tpu_custom_call.1} parent=1 // loop_header
      %s20 = sphi 0, %s24
      %p21 = scmp.ge.s32.totalorder %s20, 4
      %s30 = sphi 0, %s32
      %s33 = sphi 0, %s30
      %s34 = sphi 0, %s33
      %s50 = sphi 0, %s34
      %s54 = sphi 0, %s54
      %s56 = sphi 0, %s54
      %s57 = sphi 0, %s56
      %s71 = sphi 0, %s57
      %s75 = sphi 0, %s75
      %s77 = sphi 0, %s75
      %s78 = sphi 0, %s77
      %s92 = sphi 0, %s78
      %s96 = sphi 0, %s96
      %s98 = sphi 0, %s96
      %s99 = sphi 0, %s98
      %s113 = sphi 0, %s99
      %s117 = sphi 0, %s117
      %s119 = sphi 0, %s117
      %s120 = sphi 0, %s119
      %s134 = sphi 0, %s120
      %s138 = sphi 0, %s138
      %s140 = sphi 0, %s138
      %s141 = sphi 0, %s140
      %s155 = sphi 0, %s141
      %s159 = sphi 0, %s159
      %s161 = sphi 0, %s159
      %s162 = sphi 0, %s161
      %s176 = sphi 0, %s162
      %s182 = sphi 0, %s184
      %s185 = sphi 0, %s182
      %s186 = sphi 0, %s185
      %s202 = sphi 0, %s186
    $region4: #{tpu_custom_call.1} parent=1 // loop_header_branch
      %23 = sbr.rel (%p21) target = $region8
    $region5: #{tpu_custom_call.1} parent=1 // loop_body
      %s25 = ssub.s32 %s20, 1
      %s26 = ssub.s32 %s20, 2
      %s27 = sadd.s32 %s20, 1
      %s28 = ssub.s32 %s20, %s27
      %p29 = scmp.eq.s32.totalorder %s28, 0
      %s31 = sadd.s32 %s30, 1
      %s32 = scalar_select %p29, %s30, %s31
      %p35 = pneg %p29
      %p36 = scmp.eq.s32.totalorder %s20, 1
      %p37 = por %p35, %p36
      %p38 = scmp.ne.s32.totalorder %s30, %s33
      %p39 = scmp.eq.s32.totalorder %s20, 0
      %p40 = por %p38, %p39
      %p41 = scmp.ne.s32.totalorder %s30, %s33
      %p42 = scmp.eq.s32.totalorder %s25, 1
      %p43 = por %p41, %p42
      %p44 = scmp.ne.s32.totalorder %s33, %s34
      %p45 = scmp.eq.s32.totalorder %s25, 0
      %p46 = por %p44, %p45
      %p47 = scmp.ne.s32.totalorder %s33, %s34
      %p48 = scmp.eq.s32.totalorder %s26, 1
      %p49 = por %p47, %p48
      %p51 = scmp.ne.s32.totalorder %s34, %s50
      %p52 = scmp.eq.s32.totalorder %s26, 0
      %p53 = por %p51, %p52
      %s55 = sadd.s32 %s54, 1
      %p58 = scmp.eq.s32.totalorder %s20, 1
      %p59 = scmp.ne.s32.totalorder %s54, %s56
      %p60 = scmp.eq.s32.totalorder %s20, 0
      %p61 = por %p59, %p60
      %p62 = scmp.ne.s32.totalorder %s54, %s56
      %p63 = scmp.eq.s32.totalorder %s25, 1
      %p64 = por %p62, %p63
      %p65 = scmp.ne.s32.totalorder %s56, %s57
      %p66 = scmp.eq.s32.totalorder %s25, 0
      %p67 = por %p65, %p66
      %p68 = scmp.ne.s32.totalorder %s56, %s57
      %p69 = scmp.eq.s32.totalorder %s26, 1
      %p70 = por %p68, %p69
      %p72 = scmp.ne.s32.totalorder %s57, %s71
      %p73 = scmp.eq.s32.totalorder %s26, 0
      %p74 = por %p72, %p73
      %s76 = sadd.s32 %s75, 1
      %p79 = scmp.eq.s32.totalorder %s20, 1
      %p80 = scmp.ne.s32.totalorder %s75, %s77
      %p81 = scmp.eq.s32.totalorder %s20, 0
      %p82 = por %p80, %p81
      %p83 = scmp.ne.s32.totalorder %s75, %s77
      %p84 = scmp.eq.s32.totalorder %s25, 1
      %p85 = por %p83, %p84
      %p86 = scmp.ne.s32.totalorder %s77, %s78
      %p87 = scmp.eq.s32.totalorder %s25, 0
      %p88 = por %p86, %p87
      %p89 = scmp.ne.s32.totalorder %s77, %s78
      %p90 = scmp.eq.s32.totalorder %s26, 1
      %p91 = por %p89, %p90
      %p93 = scmp.ne.s32.totalorder %s78, %s92
      %p94 = scmp.eq.s32.totalorder %s26, 0
      %p95 = por %p93, %p94
      %s97 = sadd.s32 %s96, 1
      %p100 = scmp.eq.s32.totalorder %s20, 1
      %p101 = scmp.ne.s32.totalorder %s96, %s98
      %p102 = scmp.eq.s32.totalorder %s20, 0
      %p103 = por %p101, %p102
      %p104 = scmp.ne.s32.totalorder %s96, %s98
      %p105 = scmp.eq.s32.totalorder %s25, 1
      %p106 = por %p104, %p105
      %p107 = scmp.ne.s32.totalorder %s98, %s99
      %p108 = scmp.eq.s32.totalorder %s25, 0
      %p109 = por %p107, %p108
      %p110 = scmp.ne.s32.totalorder %s98, %s99
      %p111 = scmp.eq.s32.totalorder %s26, 1
      %p112 = por %p110, %p111
      %p114 = scmp.ne.s32.totalorder %s99, %s113
      %p115 = scmp.eq.s32.totalorder %s26, 0
      %p116 = por %p114, %p115
      %s118 = sadd.s32 %s117, 1
      %p121 = scmp.eq.s32.totalorder %s20, 1
      %p122 = scmp.ne.s32.totalorder %s117, %s119
      %p123 = scmp.eq.s32.totalorder %s20, 0
      %p124 = por %p122, %p123
      %p125 = scmp.ne.s32.totalorder %s117, %s119
      %p126 = scmp.eq.s32.totalorder %s25, 1
      %p127 = por %p125, %p126
      %p128 = scmp.ne.s32.totalorder %s119, %s120
      %p129 = scmp.eq.s32.totalorder %s25, 0
      %p130 = por %p128, %p129
      %p131 = scmp.ne.s32.totalorder %s119, %s120
      %p132 = scmp.eq.s32.totalorder %s26, 1
      %p133 = por %p131, %p132
      %p135 = scmp.ne.s32.totalorder %s120, %s134
      %p136 = scmp.eq.s32.totalorder %s26, 0
      %p137 = por %p135, %p136
      %s139 = sadd.s32 %s138, 1
      %p142 = scmp.eq.s32.totalorder %s20, 1
      %p143 = scmp.ne.s32.totalorder %s138, %s140
      %p144 = scmp.eq.s32.totalorder %s20, 0
      %p145 = por %p143, %p144
      %p146 = scmp.ne.s32.totalorder %s138, %s140
      %p147 = scmp.eq.s32.totalorder %s25, 1
      %p148 = por %p146, %p147
      %p149 = scmp.ne.s32.totalorder %s140, %s141
      %p150 = scmp.eq.s32.totalorder %s25, 0
      %p151 = por %p149, %p150
      %p152 = scmp.ne.s32.totalorder %s140, %s141
      %p153 = scmp.eq.s32.totalorder %s26, 1
      %p154 = por %p152, %p153
      %p156 = scmp.ne.s32.totalorder %s141, %s155
      %p157 = scmp.eq.s32.totalorder %s26, 0
      %p158 = por %p156, %p157
      %s160 = sadd.s32 %s159, 1
      %p163 = scmp.eq.s32.totalorder %s20, 1
      %p164 = scmp.ne.s32.totalorder %s159, %s161
      %p165 = scmp.eq.s32.totalorder %s20, 0
      %p166 = por %p164, %p165
      %p167 = scmp.ne.s32.totalorder %s159, %s161
      %p168 = scmp.eq.s32.totalorder %s25, 1
      %p169 = por %p167, %p168
      %p170 = scmp.ne.s32.totalorder %s161, %s162
      %p171 = scmp.eq.s32.totalorder %s25, 0
      %p172 = por %p170, %p171
      %p173 = scmp.ne.s32.totalorder %s161, %s162
      %p174 = scmp.eq.s32.totalorder %s26, 1
      %p175 = por %p173, %p174
      %p177 = scmp.ne.s32.totalorder %s162, %s176
      %p178 = scmp.eq.s32.totalorder %s26, 0
      %p179 = por %p177, %p178
      %s180 = ssub.s32 %s20, %s27
      %p181 = scmp.eq.s32.totalorder %s180, 0
      %s183 = sadd.s32 %s182, 1
      %s184 = scalar_select %p181, %s182, %s183
      %p187 = pneg %p181
      %p188 = scmp.eq.s32.totalorder %s20, 1
      %p189 = por %p187, %p188
      %p190 = scmp.ne.s32.totalorder %s182, %s185
      %p191 = scmp.eq.s32.totalorder %s20, 0
      %p192 = por %p190, %p191
      %p193 = scmp.ne.s32.totalorder %s182, %s185
      %p194 = scmp.eq.s32.totalorder %s25, 1
      %p195 = por %p193, %p194
      %p196 = scmp.ne.s32.totalorder %s185, %s186
      %p197 = scmp.eq.s32.totalorder %s25, 0
      %p198 = por %p196, %p197
      %p199 = scmp.ne.s32.totalorder %s185, %s186
      %p200 = scmp.eq.s32.totalorder %s26, 1
      %p201 = por %p199, %p200
      %p203 = scmp.ne.s32.totalorder %s186, %s202
      %p204 = scmp.eq.s32.totalorder %s26, 0
      %p205 = por %p203, %p204
      %p206 = scmp.le.s32.totalorder 1, %s20
      %p207 = scmp.lt.s32.totalorder %s20, 3
      %p208 = pnand %p206, %p207
      %p209 = pneg %p208
      // Predicated region
      $region9: #{tpu_custom_call.1} parent=5 // pred_check
        _
      $region10: #{tpu_custom_call.1} parent=5 // pred_check_branch
        %211 = sbr.rel (%p208) target = $region12
      $region11: #{tpu_custom_call.1} parent=5 // pred_region
        %s212 = ssub.s32 %s20, 1
        // Predicated region
        $region13: #{tpu_custom_call.1} parent=11 // pred_check
          %p213 = pneg %p67
        $region14: #{tpu_custom_call.1} parent=11 // pred_check_branch
          %215 = sbr.rel (%p213) target = $region16
        $region15: #{tpu_custom_call.1} parent=11 // pred_region
          _
        $region16: #{tpu_custom_call.1} parent=11 // pred_fallthru
          _
        // Predicated region
        $region17: #{tpu_custom_call.1} parent=11 // pred_check
          %p216 = pneg %p88
        $region18: #{tpu_custom_call.1} parent=11 // pred_check_branch
          %218 = sbr.rel (%p216) target = $region20
        $region19: #{tpu_custom_call.1} parent=11 // pred_region
          _
        $region20: #{tpu_custom_call.1} parent=11 // pred_fallthru
          _
        // Predicated region
        $region21: #{tpu_custom_call.1} parent=11 // pred_check
          %p219 = pneg %p109
        $region22: #{tpu_custom_call.1} parent=11 // pred_check_branch
          %221 = sbr.rel (%p219) target = $region24
        $region23: #{tpu_custom_call.1} parent=11 // pred_region
          _
        $region24: #{tpu_custom_call.1} parent=11 // pred_fallthru
          _
        // Predicated region
        $region25: #{tpu_custom_call.1} parent=11 // pred_check
          %p222 = pneg %p130
        $region26: #{tpu_custom_call.1} parent=11 // pred_check_branch
          %224 = sbr.rel (%p222) target = $region28
        $region27: #{tpu_custom_call.1} parent=11 // pred_region
          _
        $region28: #{tpu_custom_call.1} parent=11 // pred_fallthru
          _
        // Predicated region
        $region29: #{tpu_custom_call.1} parent=11 // pred_check
          %p225 = pneg %p151
        $region30: #{tpu_custom_call.1} parent=11 // pred_check_branch
          %227 = sbr.rel (%p225) target = $region32
        $region31: #{tpu_custom_call.1} parent=11 // pred_region
          _
        $region32: #{tpu_custom_call.1} parent=11 // pred_fallthru
          _
        // Predicated region
        $region33: #{tpu_custom_call.1} parent=11 // pred_check
          %p228 = pneg %p172
        $region34: #{tpu_custom_call.1} parent=11 // pred_check_branch
          %230 = sbr.rel (%p228) target = $region36
        $region35: #{tpu_custom_call.1} parent=11 // pred_region
          %s232 = ssub.s32 512, 512
          %233 = vsyncadd [#allocation6], %s232
          %s234 = sshll.u32 [#allocation5], 4
          %s235 = int_to_ptr.vmem [resolvable:$true] %s234
          %240 = dma.hbm_to_vmem [thread:$0]  %s6, 512, %s235, [#allocation6], 64, 64, 4
        $region36: #{tpu_custom_call.1} parent=11 // pred_fallthru
          _
      $region12: #{tpu_custom_call.1} parent=5 // pred_fallthru
        _
      %p241 = scmp.lt.s32.totalorder %s20, 2
      // Predicated region
      $region37: #{tpu_custom_call.1} parent=5 // pred_check
        %p242 = pneg %p241
      $region38: #{tpu_custom_call.1} parent=5 // pred_check_branch
        %244 = sbr.rel (%p242) target = $region40
      $region39: #{tpu_custom_call.1} parent=5 // pred_region
        // Predicated region
        $region41: #{tpu_custom_call.1} parent=39 // pred_check
          %p245 = pneg %p40
        $region42: #{tpu_custom_call.1} parent=39 // pred_check_branch
          %247 = sbr.rel (%p245) target = $region44
        $region43: #{tpu_custom_call.1} parent=39 // pred_region
          %s248 = sand.u32 %s30, 1
          %s249 = scalar_lea.sflag [#allocation3], %s248
          %s250 = sand.u32 %s30, 1
          %s251 = smul.addr %s250, 36
          %s252 = scalar_lea.vmem [#allocation2], %s251
          %s254 = ssub.s32 576, 576
          %255 = vsyncadd %s249, %s254
          %s256 = smul.addr %s20, 9
          %s257 = smul.addr %s256, 64
          %s258 = scalar_lea.hbm %s0, %s257
          %s259 = sshll.u32 %s252, 4
          %s260 = int_to_ptr.vmem [resolvable:$true] %s259
          %265 = dma.hbm_to_vmem [thread:$0]  %s258, 576, %s260, %s249, 192, 192, 12
        $region44: #{tpu_custom_call.1} parent=39 // pred_fallthru
          _
      $region40: #{tpu_custom_call.1} parent=5 // pred_fallthru
        _
      %p266 = scmp.le.s32.totalorder 1, %s20
      %p267 = scmp.lt.s32.totalorder %s20, 3
      %p268 = pnand %p266, %p267
      %p269 = pneg %p268
      // Predicated region
      $region45: #{tpu_custom_call.1} parent=5 // pred_check
        _
      $region46: #{tpu_custom_call.1} parent=5 // pred_check_branch
        %271 = sbr.rel (%p268) target = $region48
      $region47: #{tpu_custom_call.1} parent=5 // pred_region
        %s272 = ssub.s32 %s20, 1
        %s273 = sand.u32 %s33, 1
        %s274 = scalar_lea.sflag [#allocation3], %s273
        %s275 = sand.u32 %s33, 1
        %s276 = smul.addr %s275, 36
        %s277 = scalar_lea.vmem [#allocation2], %s276
        // Predicated region
        $region49: #{tpu_custom_call.1} parent=47 // pred_check
          %p278 = pneg %p46
        $region50: #{tpu_custom_call.1} parent=47 // pred_check_branch
          %280 = sbr.rel (%p278) target = $region52
        $region51: #{tpu_custom_call.1} parent=47 // pred_region
          %281 = dma.done %s274, 576
        $region52: #{tpu_custom_call.1} parent=47 // pred_fallthru
          _
        // Predicated region
        $region53: #{tpu_custom_call.1} parent=47 // pred_check
          %p282 = pneg %p172
        $region54: #{tpu_custom_call.1} parent=47 // pred_check_branch
          %284 = sbr.rel (%p282) target = $region56
        $region55: #{tpu_custom_call.1} parent=47 // pred_region
          %285 = dma.done [#allocation6], 512
        $region56: #{tpu_custom_call.1} parent=47 // pred_fallthru
          _
        %s286 = sand.u32 %s33, 1
        %s287 = scalar_lea.sflag [#allocation3], %s286
        %s288 = sand.u32 %s33, 1
        %s289 = smul.addr %s288, 36
        %s290 = scalar_lea.vmem [#allocation2], %s289
        %p291 = pneg %p46
        %p292 = pneg %p43
        %p293 = pneg %p67
        %p294 = pneg %p64
        %p295 = pneg %p88
        %p296 = pneg %p85
        %p297 = pneg %p109
        %p298 = pneg %p106
        %p299 = pneg %p130
        %p300 = pneg %p127
        %p301 = pneg %p151
        %p302 = pneg %p148
        %p303 = pneg %p172
        %p304 = pneg %p169
        %p305 = pneg %p198
        %p306 = pneg %p195
        %s307 = sand.u32 %s185, 1
        %s308 = scalar_lea.sflag [#allocation4], %s307
        %s309 = sand.u32 %s185, 1
        %s310 = smul.addr %s309, 96
        %s311 = scalar_lea.vmem [#allocation7], %s310
        %v313 = vld [vmem:[%s277] sm:$0xff]
        %v314 = vld [vmem:[%s277 + $0x8] sm:$0xf]
        %v315 = vld [vmem:[%s277 + $0xc] sm:$0xff]
        %v316 = vld [vmem:[%s277 + $0x14] sm:$0xf]
        %v317 = vld [vmem:[%s277 + $0x18] sm:$0xff]
        %v318 = vld [vmem:[%s277 + $0x20] sm:$0xf]
        %v319 = vld [vmem:[%s2] sm:$0xf]
        %v320 = vld [vmem:[%s2 + $0x4] sm:$0xf]
        %v321 = vld [vmem:[%s2 + $0x8] sm:$0xf]
        %v322 = vld [vmem:[%s2 + $0xc] sm:$0xf]
        %v323 = vld [vmem:[%s2 + $0x10] sm:$0xf]
        %v324 = vld [vmem:[%s2 + $0x14] sm:$0xf]
        %v325 = vld [vmem:[%s2 + $0x18] sm:$0xf]
        %v326 = vld [vmem:[%s2 + $0x1c] sm:$0xf]
        %v327 = vld [vmem:[%s2 + $0x20] sm:$0xf]
        %v328 = vld [vmem:[%s2 + $0x24] sm:$0xf]
        %v329 = vld [vmem:[%s2 + $0x28] sm:$0xf]
        %v330 = vld [vmem:[%s2 + $0x2c] sm:$0xf]
        %v331 = vld [vmem:[%s2 + $0x30] sm:$0xf]
        %v332 = vld [vmem:[%s2 + $0x34] sm:$0xf]
        %v333 = vld [vmem:[%s2 + $0x38] sm:$0xf]
        %v334 = vld [vmem:[%s2 + $0x3c] sm:$0xf]
        %v335 = vld [vmem:[%s2 + $0x40] sm:$0xf]
        %v336 = vld [vmem:[%s2 + $0x44] sm:$0xf]
        %v337 = vld [vmem:[%s2 + $0x48] sm:$0xf]
        %v338 = vld [vmem:[%s2 + $0x4c] sm:$0xf]
        %v339 = vld [vmem:[%s2 + $0x50] sm:$0xf]
        %v340 = vld [vmem:[%s2 + $0x54] sm:$0xf]
        %v341 = vld [vmem:[%s2 + $0x58] sm:$0xf]
        %v342 = vld [vmem:[%s2 + $0x5c] sm:$0xf]
        %v343 = vld [vmem:[%s2 + $0x60] sm:$0xf]
        %v344 = vld [vmem:[%s2 + $0x64] sm:$0xf]
        %v345 = vld [vmem:[%s2 + $0x68] sm:$0xf]
        %v346 = vld [vmem:[%s2 + $0x6c] sm:$0xf]
        %v347 = vld [vmem:[%s2 + $0x70] sm:$0xf]
        %v348 = vld [vmem:[%s2 + $0x74] sm:$0xf]
        %v349 = vld [vmem:[%s2 + $0x78] sm:$0xf]
        %v350 = vld [vmem:[%s2 + $0x7c] sm:$0xf]
        %v351 = vld [vmem:[%s2 + $0x80] sm:$0xf]
        %v352 = vld [vmem:[%s2 + $0x84] sm:$0xf]
        %v353 = vld [vmem:[%s2 + $0x88] sm:$0xf]
        %v354 = vld [vmem:[%s2 + $0x8c] sm:$0xf]
        %v355 = vld [vmem:[%s2 + $0x90] sm:$0xf]
        %v356 = vld [vmem:[%s2 + $0x94] sm:$0xf]
        %v357 = vld [vmem:[%s2 + $0x98] sm:$0xf]
        %v358 = vld [vmem:[%s2 + $0x9c] sm:$0xf]
        %v359 = vld [vmem:[%s2 + $0xa0] sm:$0xf]
        %v360 = vld [vmem:[%s2 + $0xa4] sm:$0xf]
        %v361 = vld [vmem:[%s2 + $0xa8] sm:$0xf]
        %v362 = vld [vmem:[%s2 + $0xac] sm:$0xf]
        %v363 = vld [vmem:[%s2 + $0xb0] sm:$0xf]
        %v364 = vld [vmem:[%s2 + $0xb4] sm:$0xf]
        %v365 = vld [vmem:[%s2 + $0xb8] sm:$0xf]
        %v366 = vld [vmem:[%s2 + $0xbc] sm:$0xf]
        %v367 = vld [vmem:[%s2 + $0xc0] sm:$0xf]
        %v368 = vld [vmem:[%s2 + $0xc4] sm:$0xf]
        %v369 = vld [vmem:[%s2 + $0xc8] sm:$0xf]
        %v370 = vld [vmem:[%s2 + $0xcc] sm:$0xf]
        %v371 = vld [vmem:[%s2 + $0xd0] sm:$0xf]
        %v372 = vld [vmem:[%s2 + $0xd4] sm:$0xf]
        %v373 = vld [vmem:[%s2 + $0xd8] sm:$0xf]
        %v374 = vld [vmem:[%s2 + $0xdc] sm:$0xf]
        %v375 = vld [vmem:[%s2 + $0xe0] sm:$0xf]
        %v376 = vld [vmem:[%s2 + $0xe4] sm:$0xf]
        %v377 = vld [vmem:[%s2 + $0xe8] sm:$0xf]
        %v378 = vld [vmem:[%s2 + $0xec] sm:$0xf]
        %v379 = vld [vmem:[%s2 + $0xf0] sm:$0xf]
        %v380 = vld [vmem:[%s2 + $0xf4] sm:$0xf]
        %v381 = vld [vmem:[%s2 + $0xf8] sm:$0xf]
        %v382 = vld [vmem:[%s2 + $0xfc] sm:$0xf]
        %v447 = vunpack.c.l.b16 %v319
        %v448 = vunpack.c.l.b16 %v320
        %v449 = vunpack.c.l.b16 %v321
        %v450 = vunpack.c.l.b16 %v322
        %v451 = vunpack.c.l.b16 %v323
        %v452 = vunpack.c.l.b16 %v324
        %v453 = vunpack.c.l.b16 %v325
        %v454 = vunpack.c.l.b16 %v326
        %v455 = vunpack.c.l.b16 %v327
        %v456 = vunpack.c.l.b16 %v328
        %v457 = vunpack.c.l.b16 %v329
        %v458 = vunpack.c.l.b16 %v330
        %v459 = vunpack.c.l.b16 %v331
        %v460 = vunpack.c.l.b16 %v332
        %v461 = vunpack.c.l.b16 %v333
        %v462 = vunpack.c.l.b16 %v334
        %v463 = vunpack.c.l.b16 %v335
        %v464 = vunpack.c.l.b16 %v336
        %v465 = vunpack.c.l.b16 %v337
        %v466 = vunpack.c.l.b16 %v338
        %v467 = vunpack.c.l.b16 %v339
        %v468 = vunpack.c.l.b16 %v340
        %v469 = vunpack.c.l.b16 %v341
        %v470 = vunpack.c.l.b16 %v342
        %v471 = vunpack.c.l.b16 %v343
        %v472 = vunpack.c.l.b16 %v344
        %v473 = vunpack.c.l.b16 %v345
        %v474 = vunpack.c.l.b16 %v346
        %v475 = vunpack.c.l.b16 %v347
        %v476 = vunpack.c.l.b16 %v348
        %v477 = vunpack.c.l.b16 %v349
        %v478 = vunpack.c.l.b16 %v350
        %v479 = vunpack.c.l.b16 %v351
        %v480 = vunpack.c.l.b16 %v352
        %v481 = vunpack.c.l.b16 %v353
        %v482 = vunpack.c.l.b16 %v354
        %v483 = vunpack.c.l.b16 %v355
        %v484 = vunpack.c.l.b16 %v356
        %v485 = vunpack.c.l.b16 %v357
        %v486 = vunpack.c.l.b16 %v358
        %v487 = vunpack.c.l.b16 %v359
        %v488 = vunpack.c.l.b16 %v360
        %v489 = vunpack.c.l.b16 %v361
        %v490 = vunpack.c.l.b16 %v362
        %v491 = vunpack.c.l.b16 %v363
        %v492 = vunpack.c.l.b16 %v364
        %v493 = vunpack.c.l.b16 %v365
        %v494 = vunpack.c.l.b16 %v366
        %v495 = vunpack.c.l.b16 %v367
        %v496 = vunpack.c.l.b16 %v368
        %v497 = vunpack.c.l.b16 %v369
        %v498 = vunpack.c.l.b16 %v370
        %v499 = vunpack.c.l.b16 %v371
        %v500 = vunpack.c.l.b16 %v372
        %v501 = vunpack.c.l.b16 %v373
        %v502 = vunpack.c.l.b16 %v374
        %v503 = vunpack.c.l.b16 %v375
        %v504 = vunpack.c.l.b16 %v376
        %v505 = vunpack.c.l.b16 %v377
        %v506 = vunpack.c.l.b16 %v378
        %v507 = vunpack.c.l.b16 %v379
        %v508 = vunpack.c.l.b16 %v380
        %v509 = vunpack.c.l.b16 %v381
        %v510 = vunpack.c.l.b16 %v382
        %v511 = vpack.c.b16 %v448, %v447
        %v512 = vpack.c.b16 %v450, %v449
        %v513 = vpack.c.b16 %v452, %v451
        %v514 = vpack.c.b16 %v454, %v453
        %v515 = vpack.c.b16 %v456, %v455
        %v516 = vpack.c.b16 %v458, %v457
        %v517 = vpack.c.b16 %v460, %v459
        %v518 = vpack.c.b16 %v462, %v461
        %v519 = vpack.c.b16 %v464, %v463
        %v520 = vpack.c.b16 %v466, %v465
        %v521 = vpack.c.b16 %v468, %v467
        %v522 = vpack.c.b16 %v470, %v469
        %v523 = vpack.c.b16 %v472, %v471
        %v524 = vpack.c.b16 %v474, %v473
        %v525 = vpack.c.b16 %v476, %v475
        %v526 = vpack.c.b16 %v478, %v477
        %v527 = vpack.c.b16 %v480, %v479
        %v528 = vpack.c.b16 %v482, %v481
        %v529 = vpack.c.b16 %v484, %v483
        %v530 = vpack.c.b16 %v486, %v485
        %v531 = vpack.c.b16 %v488, %v487
        %v532 = vpack.c.b16 %v490, %v489
        %v533 = vpack.c.b16 %v492, %v491
        %v534 = vpack.c.b16 %v494, %v493
        %v535 = vpack.c.b16 %v496, %v495
        %v536 = vpack.c.b16 %v498, %v497
        %v537 = vpack.c.b16 %v500, %v499
        %v538 = vpack.c.b16 %v502, %v501
        %v539 = vpack.c.b16 %v504, %v503
        %v540 = vpack.c.b16 %v506, %v505
        %v541 = vpack.c.b16 %v508, %v507
        %v542 = vpack.c.b16 %v510, %v509
        %v549 = vunpack.c.l.b16 %v313
        %v550 = vunpack.c.h.b16 %v313
        %v551 = vunpack.c.l.b16 %v314
        %v552 = vunpack.c.l.b16 %v315
        %v553 = vunpack.c.h.b16 %v315
        %v554 = vunpack.c.l.b16 %v316
        %v555 = vunpack.c.l.b16 %v317
        %v556 = vunpack.c.h.b16 %v317
        %v557 = vunpack.c.l.b16 %v318
        %v558 = vpack.c.b16 %v552, %v549
        %v559 = vpack.c.b16 %v553, %v550
        %v560 = vpack.c.b16 %v554, %v551
        %v561 = vpack.c.b16 %v555, %v555
        %v562 = vpack.c.b16 %v556, %v556
        %v563 = vpack.c.b16 %v557, %v557
        %vm567 = vcmask 195584
        %v569 = vsel %vm567, %v511, 0
        %v572 = vsel %vm567, %v512, 0
        %v575 = vsel %vm567, %v513, 0
        %v578 = vsel %vm567, %v514, 0
        %v581 = vsel %vm567, %v515, 0
        %v584 = vsel %vm567, %v516, 0
        %v587 = vsel %vm567, %v517, 0
        %v590 = vsel %vm567, %v518, 0
        %v593 = vsel %vm567, %v519, 0
        %v596 = vsel %vm567, %v520, 0
        %v599 = vsel %vm567, %v521, 0
        %v602 = vsel %vm567, %v522, 0
        %v605 = vsel %vm567, %v523, 0
        %v608 = vsel %vm567, %v524, 0
        %v611 = vsel %vm567, %v525, 0
        %v614 = vsel %vm567, %v526, 0
        %v617 = vsel %vm567, %v527, 0
        %v620 = vsel %vm567, %v528, 0
        %v623 = vsel %vm567, %v529, 0
        %v626 = vsel %vm567, %v530, 0
        %v629 = vsel %vm567, %v531, 0
        %v632 = vsel %vm567, %v532, 0
        %v635 = vsel %vm567, %v533, 0
        %v638 = vsel %vm567, %v534, 0
        %v641 = vsel %vm567, %v535, 0
        %v644 = vsel %vm567, %v536, 0
        %v647 = vsel %vm567, %v537, 0
        %v650 = vsel %vm567, %v538, 0
        %v653 = vsel %vm567, %v539, 0
        %v656 = vsel %vm567, %v540, 0
        %v659 = vsel %vm567, %v541, 0
        %v662 = vsel %vm567, %v542, 0
        %vm664 = vcmask 1043456
        %v666 = vsel %vm664, %v561, 0
        %v669 = vsel %vm664, %v562, 0
        %v672 = vsel %vm664, %v563, 0
        %674 = vmatprep.subr.bf16.mxu0 %v559
        %675 = vmatpush1.bf16.msra.mxu0 %v558
        %676 = vmatprep.subr.bf16.mxu0 %v669
        %677 = vmatpush1.bf16.msra.mxu0 %v666
        %678 = vmatprep.subr.bf16.mxu0 0
        %679 = vmatpush1.bf16.msra.mxu0 0
        %680 = vmatprep.subr.bf16.mxu0 0
        %681 = vmatpush1.bf16.msra.mxu0 0
        %682 = vmatprep.subr.bf16.mxu0 0
        %683 = vmatpush1.bf16.msra.mxu0 0
        %684 = vmatprep.subr.bf16.mxu0 0
        %685 = vmatpush1.bf16.msra.mxu0 0
        %686 = vmatprep.subr.bf16.mxu0 0
        %687 = vmatpush1.bf16.msra.mxu0 0
        %688 = vmatprep.subr.bf16.mxu0 0
        %689 = vmatpush1.bf16.msra.mxu0 0
        %690 = vmatprep.subr.bf16.mxu0 0
        %691 = vmatpush1.bf16.msra.mxu0 0
        %692 = vmatprep.subr.bf16.mxu0 0
        %693 = vmatpush1.bf16.msra.mxu0 0
        %694 = vmatprep.subr.bf16.mxu0 0
        %695 = vmatpush1.bf16.msra.mxu0 0
        %696 = vmatprep.subr.bf16.mxu0 0
        %697 = vmatpush1.bf16.msra.mxu0 0
        %698 = vmatprep.subr.bf16.mxu0 0
        %699 = vmatpush1.bf16.msra.mxu0 0
        %700 = vmatprep.subr.bf16.mxu0 0
        %701 = vmatpush1.bf16.msra.mxu0 0
        %702 = vmatprep.subr.bf16.mxu0 0
        %703 = vmatpush1.bf16.msra.mxu0 0
        %704 = vmatprep.subr.bf16.mxu0 0
        %705 = vmatpush1.bf16.msra.mxu0 0
        %706 = vmatprep.mubr.bf16.mxu0 0
        %707 = vmatmul.mubr.bf16.gmra.mrb[0].mxu0 %v569
        %v708 = vpop.f32.mrb[0].mxu0
        %v709 = vadd.f32 0.0, %v708
        %v710 = vpop.f32.mrb[0].mxu0
        %v711 = vadd.f32 0.0, %v710
        %v712 = vpop.f32.mrb[0].mxu0
        %v713 = vadd.f32 0.0, %v712
        %v714 = vpop.f32.mrb[0].mxu0
        %v715 = vadd.f32 0.0, %v714
        %716 = vmatprep.mubr.bf16.mxu0 0
        %717 = vmatmul.mubr.bf16.gmra.mrb[0].mxu0 %v572
        %v718 = vpop.f32.mrb[0].mxu0
        %v719 = vadd.f32 0.0, %v718
        %v720 = vpop.f32.mrb[0].mxu0
        %v721 = vadd.f32 0.0, %v720
        %v722 = vpop.f32.mrb[0].mxu0
        %v723 = vadd.f32 0.0, %v722
        %v724 = vpop.f32.mrb[0].mxu0
        %v725 = vadd.f32 0.0, %v724
        %726 = vmatprep.mubr.bf16.mxu0 0
        %727 = vmatmul.mubr.bf16.gmra.mrb[0].mxu0 %v575
        %v728 = vpop.f32.mrb[0].mxu0
        %v729 = vadd.f32 0.0, %v728
        %v730 = vpop.f32.mrb[0].mxu0
        %v731 = vadd.f32 0.0, %v730
        %v732 = vpop.f32.mrb[0].mxu0
        %v733 = vadd.f32 0.0, %v732
        %v734 = vpop.f32.mrb[0].mxu0
        %v735 = vadd.f32 0.0, %v734
        %736 = vmatprep.mubr.bf16.mxu0 0
        %737 = vmatmul.mubr.bf16.gmra.mrb[0].mxu0 %v578
        %v738 = vpop.f32.mrb[0].mxu0
        %v739 = vadd.f32 0.0, %v738
        %v740 = vpop.f32.mrb[0].mxu0
        %v741 = vadd.f32 0.0, %v740
        %v742 = vpop.f32.mrb[0].mxu0
        %v743 = vadd.f32 0.0, %v742
        %v744 = vpop.f32.mrb[0].mxu0
        %v745 = vadd.f32 0.0, %v744
        %746 = vmatprep.mubr.bf16.mxu0 0
        %747 = vmatmul.mubr.bf16.gmra.mrb[0].mxu0 %v581
        %v748 = vpop.f32.mrb[0].mxu0
        %v749 = vadd.f32 0.0, %v748
        %v750 = vpop.f32.mrb[0].mxu0
        %v751 = vadd.f32 0.0, %v750
        %v752 = vpop.f32.mrb[0].mxu0
        %v753 = vadd.f32 0.0, %v752
        %v754 = vpop.f32.mrb[0].mxu0
        %v755 = vadd.f32 0.0, %v754
        %756 = vmatprep.mubr.bf16.mxu0 0
        %757 = vmatmul.mubr.bf16.gmra.mrb[0].mxu0 %v584
        %v758 = vpop.f32.mrb[0].mxu0
        %v759 = vadd.f32 0.0, %v758
        %v760 = vpop.f32.mrb[0].mxu0
        %v761 = vadd.f32 0.0, %v760
        %v762 = vpop.f32.mrb[0].mxu0
        %v763 = vadd.f32 0.0, %v762
        %v764 = vpop.f32.mrb[0].mxu0
        %v765 = vadd.f32 0.0, %v764
        %766 = vmatprep.mubr.bf16.mxu0 0
        %767 = vmatmul.mubr.bf16.gmra.mrb[0].mxu0 %v587
        %v768 = vpop.f32.mrb[0].mxu0
        %v769 = vadd.f32 0.0, %v768
        %v770 = vpop.f32.mrb[0].mxu0
        %v771 = vadd.f32 0.0, %v770
        %v772 = vpop.f32.mrb[0].mxu0
        %v773 = vadd.f32 0.0, %v772
        %v774 = vpop.f32.mrb[0].mxu0
        %v775 = vadd.f32 0.0, %v774
        %776 = vmatprep.mubr.bf16.mxu0 0
        %777 = vmatmul.mubr.bf16.gmra.mrb[0].mxu0 %v590
        %v778 = vpop.f32.mrb[0].mxu0
        %v779 = vadd.f32 0.0, %v778
        %v780 = vpop.f32.mrb[0].mxu0
        %v781 = vadd.f32 0.0, %v780
        %v782 = vpop.f32.mrb[0].mxu0
        %v783 = vadd.f32 0.0, %v782
        %v784 = vpop.f32.mrb[0].mxu0
        %v785 = vadd.f32 0.0, %v784
        %786 = vmatprep.mubr.bf16.mxu0 0
        %787 = vmatmul.mubr.bf16.gmra.mrb[0].mxu0 %v593
        %v788 = vpop.f32.mrb[0].mxu0
        %v789 = vadd.f32 0.0, %v788
        %v790 = vpop.f32.mrb[0].mxu0
        %v791 = vadd.f32 0.0, %v790
        %v792 = vpop.f32.mrb[0].mxu0
        %v793 = vadd.f32 0.0, %v792
        %v794 = vpop.f32.mrb[0].mxu0
        %v795 = vadd.f32 0.0, %v794
        %796 = vmatprep.mubr.bf16.mxu0 0
        %797 = vmatmul.mubr.bf16.gmra.mrb[0].mxu0 %v596
        %v798 = vpop.f32.mrb[0].mxu0
        %v799 = vadd.f32 0.0, %v798
        %v800 = vpop.f32.mrb[0].mxu0
        %v801 = vadd.f32 0.0, %v800
        %v802 = vpop.f32.mrb[0].mxu0
        %v803 = vadd.f32 0.0, %v802
        %v804 = vpop.f32.mrb[0].mxu0
        %v805 = vadd.f32 0.0, %v804
        %806 = vmatprep.mubr.bf16.mxu0 0
        %807 = vmatmul.mubr.bf16.gmra.mrb[0].mxu0 %v599
        %v808 = vpop.f32.mrb[0].mxu0
        %v809 = vadd.f32 0.0, %v808
        %v810 = vpop.f32.mrb[0].mxu0
        %v811 = vadd.f32 0.0, %v810
        %v812 = vpop.f32.mrb[0].mxu0
        %v813 = vadd.f32 0.0, %v812
        %v814 = vpop.f32.mrb[0].mxu0
        %v815 = vadd.f32 0.0, %v814
        %816 = vmatprep.mubr.bf16.mxu0 0
        %817 = vmatmul.mubr.bf16.gmra.mrb[0].mxu0 %v602
        %v818 = vpop.f32.mrb[0].mxu0
        %v819 = vadd.f32 0.0, %v818
        %v820 = vpop.f32.mrb[0].mxu0
        %v821 = vadd.f32 0.0, %v820
        %v822 = vpop.f32.mrb[0].mxu0
        %v823 = vadd.f32 0.0, %v822
        %v824 = vpop.f32.mrb[0].mxu0
        %v825 = vadd.f32 0.0, %v824
        %826 = vmatprep.mubr.bf16.mxu0 0
        %827 = vmatmul.mubr.bf16.gmra.mrb[0].mxu0 %v605
        %v828 = vpop.f32.mrb[0].mxu0
        %v829 = vadd.f32 0.0, %v828
        %v830 = vpop.f32.mrb[0].mxu0
        %v831 = vadd.f32 0.0, %v830
        %v832 = vpop.f32.mrb[0].mxu0
        %v833 = vadd.f32 0.0, %v832
        %v834 = vpop.f32.mrb[0].mxu0
        %v835 = vadd.f32 0.0, %v834
        %836 = vmatprep.mubr.bf16.mxu0 0
        %837 = vmatmul.mubr.bf16.gmra.mrb[0].mxu0 %v608
        %v838 = vpop.f32.mrb[0].mxu0
        %v839 = vadd.f32 0.0, %v838
        %v840 = vpop.f32.mrb[0].mxu0
        %v841 = vadd.f32 0.0, %v840
        %v842 = vpop.f32.mrb[0].mxu0
        %v843 = vadd.f32 0.0, %v842
        %v844 = vpop.f32.mrb[0].mxu0
        %v845 = vadd.f32 0.0, %v844
        %846 = vmatprep.mubr.bf16.mxu0 0
        %847 = vmatmul.mubr.bf16.gmra.mrb[0].mxu0 %v611
        %v848 = vpop.f32.mrb[0].mxu0
        %v849 = vadd.f32 0.0, %v848
        %v850 = vpop.f32.mrb[0].mxu0
        %v851 = vadd.f32 0.0, %v850
        %v852 = vpop.f32.mrb[0].mxu0
        %v853 = vadd.f32 0.0, %v852
        %v854 = vpop.f32.mrb[0].mxu0
        %v855 = vadd.f32 0.0, %v854
        %856 = vmatprep.mubr.bf16.mxu0 0
        %857 = vmatmul.mubr.bf16.gmra.mrb[0].mxu0 %v614
        %v858 = vpop.f32.mrb[0].mxu0
        %v859 = vadd.f32 0.0, %v858
        %v860 = vpop.f32.mrb[0].mxu0
        %v861 = vadd.f32 0.0, %v860
        %v862 = vpop.f32.mrb[0].mxu0
        %v863 = vadd.f32 0.0, %v862
        %v864 = vpop.f32.mrb[0].mxu0
        %v865 = vadd.f32 0.0, %v864
        %866 = vmatprep.mubr.bf16.mxu0 0
        %867 = vmatmul.mubr.bf16.gmra.mrb[0].mxu0 %v617
        %v868 = vpop.f32.mrb[0].mxu0
        %v869 = vadd.f32 0.0, %v868
        %v870 = vpop.f32.mrb[0].mxu0
        %v871 = vadd.f32 0.0, %v870
        %v872 = vpop.f32.mrb[0].mxu0
        %v873 = vadd.f32 0.0, %v872
        %v874 = vpop.f32.mrb[0].mxu0
        %v875 = vadd.f32 0.0, %v874
        %876 = vmatprep.mubr.bf16.mxu0 0
        %877 = vmatmul.mubr.bf16.gmra.mrb[0].mxu0 %v620
        %v878 = vpop.f32.mrb[0].mxu0
        %v879 = vadd.f32 0.0, %v878
        %v880 = vpop.f32.mrb[0].mxu0
        %v881 = vadd.f32 0.0, %v880
        %v882 = vpop.f32.mrb[0].mxu0
        %v883 = vadd.f32 0.0, %v882
        %v884 = vpop.f32.mrb[0].mxu0
        %v885 = vadd.f32 0.0, %v884
        %886 = vmatprep.mubr.bf16.mxu0 0
        %887 = vmatmul.mubr.bf16.gmra.mrb[0].mxu0 %v623
        %v888 = vpop.f32.mrb[0].mxu0
        %v889 = vadd.f32 0.0, %v888
        %v890 = vpop.f32.mrb[0].mxu0
        %v891 = vadd.f32 0.0, %v890
        %v892 = vpop.f32.mrb[0].mxu0
        %v893 = vadd.f32 0.0, %v892
        %v894 = vpop.f32.mrb[0].mxu0
        %v895 = vadd.f32 0.0, %v894
        %896 = vmatprep.mubr.bf16.mxu0 0
        %897 = vmatmul.mubr.bf16.gmra.mrb[0].mxu0 %v626
        %v898 = vpop.f32.mrb[0].mxu0
        %v899 = vadd.f32 0.0, %v898
        %v900 = vpop.f32.mrb[0].mxu0
        %v901 = vadd.f32 0.0, %v900
        %v902 = vpop.f32.mrb[0].mxu0
        %v903 = vadd.f32 0.0, %v902
        %v904 = vpop.f32.mrb[0].mxu0
        %v905 = vadd.f32 0.0, %v904
        %906 = vmatprep.mubr.bf16.mxu0 0
        %907 = vmatmul.mubr.bf16.gmra.mrb[0].mxu0 %v629
        %v908 = vpop.f32.mrb[0].mxu0
        %v909 = vadd.f32 0.0, %v908
        %v910 = vpop.f32.mrb[0].mxu0
        %v911 = vadd.f32 0.0, %v910
        %v912 = vpop.f32.mrb[0].mxu0
        %v913 = vadd.f32 0.0, %v912
        %v914 = vpop.f32.mrb[0].mxu0
        %v915 = vadd.f32 0.0, %v914
        %916 = vmatprep.mubr.bf16.mxu0 0
        %917 = vmatmul.mubr.bf16.gmra.mrb[0].mxu0 %v632
        %v918 = vpop.f32.mrb[0].mxu0
        %v919 = vadd.f32 0.0, %v918
        %v920 = vpop.f32.mrb[0].mxu0
        %v921 = vadd.f32 0.0, %v920
        %v922 = vpop.f32.mrb[0].mxu0
        %v923 = vadd.f32 0.0, %v922
        %v924 = vpop.f32.mrb[0].mxu0
        %v925 = vadd.f32 0.0, %v924
        %926 = vmatprep.mubr.bf16.mxu0 0
        %927 = vmatmul.mubr.bf16.gmra.mrb[0].mxu0 %v635
        %v928 = vpop.f32.mrb[0].mxu0
        %v929 = vadd.f32 0.0, %v928
        %v930 = vpop.f32.mrb[0].mxu0
        %v931 = vadd.f32 0.0, %v930
        %v932 = vpop.f32.mrb[0].mxu0
        %v933 = vadd.f32 0.0, %v932
        %v934 = vpop.f32.mrb[0].mxu0
        %v935 = vadd.f32 0.0, %v934
        %936 = vmatprep.mubr.bf16.mxu0 0
        %937 = vmatmul.mubr.bf16.gmra.mrb[0].mxu0 %v638
        %v938 = vpop.f32.mrb[0].mxu0
        %v939 = vadd.f32 0.0, %v938
        %v940 = vpop.f32.mrb[0].mxu0
        %v941 = vadd.f32 0.0, %v940
        %v942 = vpop.f32.mrb[0].mxu0
        %v943 = vadd.f32 0.0, %v942
        %v944 = vpop.f32.mrb[0].mxu0
        %v945 = vadd.f32 0.0, %v944
        %946 = vmatprep.mubr.bf16.mxu0 0
        %947 = vmatmul.mubr.bf16.gmra.mrb[0].mxu0 %v641
        %v948 = vpop.f32.mrb[0].mxu0
        %v949 = vadd.f32 0.0, %v948
        %v950 = vpop.f32.mrb[0].mxu0
        %v951 = vadd.f32 0.0, %v950
        %v952 = vpop.f32.mrb[0].mxu0
        %v953 = vadd.f32 0.0, %v952
        %v954 = vpop.f32.mrb[0].mxu0
        %v955 = vadd.f32 0.0, %v954
        %956 = vmatprep.mubr.bf16.mxu0 0
        %957 = vmatmul.mubr.bf16.gmra.mrb[0].mxu0 %v644
        %v958 = vpop.f32.mrb[0].mxu0
        %v959 = vadd.f32 0.0, %v958
        %v960 = vpop.f32.mrb[0].mxu0
        %v961 = vadd.f32 0.0, %v960
        %v962 = vpop.f32.mrb[0].mxu0
        %v963 = vadd.f32 0.0, %v962
        %v964 = vpop.f32.mrb[0].mxu0
        %v965 = vadd.f32 0.0, %v964
        %966 = vmatprep.mubr.bf16.mxu0 0
        %967 = vmatmul.mubr.bf16.gmra.mrb[0].mxu0 %v647
        %v968 = vpop.f32.mrb[0].mxu0
        %v969 = vadd.f32 0.0, %v968
        %v970 = vpop.f32.mrb[0].mxu0
        %v971 = vadd.f32 0.0, %v970
        %v972 = vpop.f32.mrb[0].mxu0
        %v973 = vadd.f32 0.0, %v972
        %v974 = vpop.f32.mrb[0].mxu0
        %v975 = vadd.f32 0.0, %v974
        %976 = vmatprep.mubr.bf16.mxu0 0
        %977 = vmatmul.mubr.bf16.gmra.mrb[0].mxu0 %v650
        %v978 = vpop.f32.mrb[0].mxu0
        %v979 = vadd.f32 0.0, %v978
        %v980 = vpop.f32.mrb[0].mxu0
        %v981 = vadd.f32 0.0, %v980
        %v982 = vpop.f32.mrb[0].mxu0
        %v983 = vadd.f32 0.0, %v982
        %v984 = vpop.f32.mrb[0].mxu0
        %v985 = vadd.f32 0.0, %v984
        %986 = vmatprep.mubr.bf16.mxu0 0
        %987 = vmatmul.mubr.bf16.gmra.mrb[0].mxu0 %v653
        %v988 = vpop.f32.mrb[0].mxu0
        %v989 = vadd.f32 0.0, %v988
        %v990 = vpop.f32.mrb[0].mxu0
        %v991 = vadd.f32 0.0, %v990
        %v992 = vpop.f32.mrb[0].mxu0
        %v993 = vadd.f32 0.0, %v992
        %v994 = vpop.f32.mrb[0].mxu0
        %v995 = vadd.f32 0.0, %v994
        %996 = vmatprep.mubr.bf16.mxu0 0
        %997 = vmatmul.mubr.bf16.gmra.mrb[0].mxu0 %v656
        %v998 = vpop.f32.mrb[0].mxu0
        %v999 = vadd.f32 0.0, %v998
        %v1000 = vpop.f32.mrb[0].mxu0
        %v1001 = vadd.f32 0.0, %v1000
        %v1002 = vpop.f32.mrb[0].mxu0
        %v1003 = vadd.f32 0.0, %v1002
        %v1004 = vpop.f32.mrb[0].mxu0
        %v1005 = vadd.f32 0.0, %v1004
        %1006 = vmatprep.mubr.bf16.mxu0 0
        %1007 = vmatmul.mubr.bf16.gmra.mrb[0].mxu0 %v659
        %v1008 = vpop.f32.mrb[0].mxu0
        %v1009 = vadd.f32 0.0, %v1008
        %v1010 = vpop.f32.mrb[0].mxu0
        %v1011 = vadd.f32 0.0, %v1010
        %v1012 = vpop.f32.mrb[0].mxu0
        %v1013 = vadd.f32 0.0, %v1012
        %v1014 = vpop.f32.mrb[0].mxu0
        %v1015 = vadd.f32 0.0, %v1014
        %1016 = vmatprep.mubr.bf16.mxu0 0
        %1017 = vmatmul.mubr.bf16.gmra.mrb[0].mxu0 %v662
        %v1018 = vpop.f32.mrb[0].mxu0
        %v1019 = vadd.f32 0.0, %v1018
        %v1020 = vpop.f32.mrb[0].mxu0
        %v1021 = vadd.f32 0.0, %v1020
        %v1022 = vpop.f32.mrb[0].mxu0
        %v1023 = vadd.f32 0.0, %v1022
        %v1024 = vpop.f32.mrb[0].mxu0
        %v1025 = vadd.f32 0.0, %v1024
        %1026 = vdwg.mxu0
        %1027 = vmatprep.subr.bf16.mxu0 0
        %1028 = vmatpush1.bf16.msra.mxu0 %v560
        %1029 = vmatprep.subr.bf16.mxu0 0
        %1030 = vmatpush1.bf16.msra.mxu0 %v672
        %1031 = vmatprep.subr.bf16.mxu0 0
        %1032 = vmatpush1.bf16.msra.mxu0 0
        %1033 = vmatprep.subr.bf16.mxu0 0
        %1034 = vmatpush1.bf16.msra.mxu0 0
        %1035 = vmatprep.subr.bf16.mxu0 0
        %1036 = vmatpush1.bf16.msra.mxu0 0
        %1037 = vmatprep.subr.bf16.mxu0 0
        %1038 = vmatpush1.bf16.msra.mxu0 0
        %1039 = vmatprep.subr.bf16.mxu0 0
        %1040 = vmatpush1.bf16.msra.mxu0 0
        %1041 = vmatprep.subr.bf16.mxu0 0
        %1042 = vmatpush1.bf16.msra.mxu0 0
        %1043 = vmatprep.subr.bf16.mxu0 0
        %1044 = vmatpush1.bf16.msra.mxu0 0
        %1045 = vmatprep.subr.bf16.mxu0 0
        %1046 = vmatpush1.bf16.msra.mxu0 0
        %1047 = vmatprep.subr.bf16.mxu0 0
        %1048 = vmatpush1.bf16.msra.mxu0 0
        %1049 = vmatprep.subr.bf16.mxu0 0
        %1050 = vmatpush1.bf16.msra.mxu0 0
        %1051 = vmatprep.subr.bf16.mxu0 0
        %1052 = vmatpush1.bf16.msra.mxu0 0
        %1053 = vmatprep.subr.bf16.mxu0 0
        %1054 = vmatpush1.bf16.msra.mxu0 0
        %1055 = vmatprep.subr.bf16.mxu0 0
        %1056 = vmatpush1.bf16.msra.mxu0 0
        %1057 = vmatprep.subr.bf16.mxu0 0
        %1058 = vmatpush1.bf16.msra.mxu0 0
        %1059 = vmatprep.mubr.bf16.mxu0 0
        %1060 = vmatmul.mubr.bf16.gmra.mrb[0].mxu0 %v569
        %v1061 = vpop.f32.mrb[0].mxu0
        %v1062 = vadd.f32 0.0, %v1061
        %v1063 = vpop.f32.mrb[0].mxu0
        %v1064 = vpop.f32.mrb[0].mxu0
        %v1065 = vadd.f32 0.0, %v1064
        %v1066 = vpop.f32.mrb[0].mxu0
        %1067 = vmatprep.mubr.bf16.mxu0 0
        %1068 = vmatmul.mubr.bf16.gmra.mrb[0].mxu0 %v572
        %v1069 = vpop.f32.mrb[0].mxu0
        %v1070 = vadd.f32 0.0, %v1069
        %v1071 = vpop.f32.mrb[0].mxu0
        %v1072 = vpop.f32.mrb[0].mxu0
        %v1073 = vadd.f32 0.0, %v1072
        %v1074 = vpop.f32.mrb[0].mxu0
        %1075 = vmatprep.mubr.bf16.mxu0 0
        %1076 = vmatmul.mubr.bf16.gmra.mrb[0].mxu0 %v575
        %v1077 = vpop.f32.mrb[0].mxu0
        %v1078 = vadd.f32 0.0, %v1077
        %v1079 = vpop.f32.mrb[0].mxu0
        %v1080 = vpop.f32.mrb[0].mxu0
        %v1081 = vadd.f32 0.0, %v1080
        %v1082 = vpop.f32.mrb[0].mxu0
        %1083 = vmatprep.mubr.bf16.mxu0 0
        %1084 = vmatmul.mubr.bf16.gmra.mrb[0].mxu0 %v578
        %v1085 = vpop.f32.mrb[0].mxu0
        %v1086 = vadd.f32 0.0, %v1085
        %v1087 = vpop.f32.mrb[0].mxu0
        %v1088 = vpop.f32.mrb[0].mxu0
        %v1089 = vadd.f32 0.0, %v1088
        %v1090 = vpop.f32.mrb[0].mxu0
        %1091 = vmatprep.mubr.bf16.mxu0 0
        %1092 = vmatmul.mubr.bf16.gmra.mrb[0].mxu0 %v581
        %v1093 = vpop.f32.mrb[0].mxu0
        %v1094 = vadd.f32 0.0, %v1093
        %v1095 = vpop.f32.mrb[0].mxu0
        %v1096 = vpop.f32.mrb[0].mxu0
        %v1097 = vadd.f32 0.0, %v1096
        %v1098 = vpop.f32.mrb[0].mxu0
        %1099 = vmatprep.mubr.bf16.mxu0 0
        %1100 = vmatmul.mubr.bf16.gmra.mrb[0].mxu0 %v584
        %v1101 = vpop.f32.mrb[0].mxu0
        %v1102 = vadd.f32 0.0, %v1101
        %v1103 = vpop.f32.mrb[0].mxu0
        %v1104 = vpop.f32.mrb[0].mxu0
        %v1105 = vadd.f32 0.0, %v1104
        %v1106 = vpop.f32.mrb[0].mxu0
        %1107 = vmatprep.mubr.bf16.mxu0 0
        %1108 = vmatmul.mubr.bf16.gmra.mrb[0].mxu0 %v587
        %v1109 = vpop.f32.mrb[0].mxu0
        %v1110 = vadd.f32 0.0, %v1109
        %v1111 = vpop.f32.mrb[0].mxu0
        %v1112 = vpop.f32.mrb[0].mxu0
        %v1113 = vadd.f32 0.0, %v1112
        %v1114 = vpop.f32.mrb[0].mxu0
        %1115 = vmatprep.mubr.bf16.mxu0 0
        %1116 = vmatmul.mubr.bf16.gmra.mrb[0].mxu0 %v590
        %v1117 = vpop.f32.mrb[0].mxu0
        %v1118 = vadd.f32 0.0, %v1117
        %v1119 = vpop.f32.mrb[0].mxu0
        %v1120 = vpop.f32.mrb[0].mxu0
        %v1121 = vadd.f32 0.0, %v1120
        %v1122 = vpop.f32.mrb[0].mxu0
        %1123 = vmatprep.mubr.bf16.mxu0 0
        %1124 = vmatmul.mubr.bf16.gmra.mrb[0].mxu0 %v593
        %v1125 = vpop.f32.mrb[0].mxu0
        %v1126 = vadd.f32 0.0, %v1125
        %v1127 = vpop.f32.mrb[0].mxu0
        %v1128 = vpop.f32.mrb[0].mxu0
        %v1129 = vadd.f32 0.0, %v1128
        %v1130 = vpop.f32.mrb[0].mxu0
        %1131 = vmatprep.mubr.bf16.mxu0 0
        %1132 = vmatmul.mubr.bf16.gmra.mrb[0].mxu0 %v596
        %v1133 = vpop.f32.mrb[0].mxu0
        %v1134 = vadd.f32 0.0, %v1133
        %v1135 = vpop.f32.mrb[0].mxu0
        %v1136 = vpop.f32.mrb[0].mxu0
        %v1137 = vadd.f32 0.0, %v1136
        %v1138 = vpop.f32.mrb[0].mxu0
        %1139 = vmatprep.mubr.bf16.mxu0 0
        %1140 = vmatmul.mubr.bf16.gmra.mrb[0].mxu0 %v599
        %v1141 = vpop.f32.mrb[0].mxu0
        %v1142 = vadd.f32 0.0, %v1141
        %v1143 = vpop.f32.mrb[0].mxu0
        %v1144 = vpop.f32.mrb[0].mxu0
        %v1145 = vadd.f32 0.0, %v1144
        %v1146 = vpop.f32.mrb[0].mxu0
        %1147 = vmatprep.mubr.bf16.mxu0 0
        %1148 = vmatmul.mubr.bf16.gmra.mrb[0].mxu0 %v602
        %v1149 = vpop.f32.mrb[0].mxu0
        %v1150 = vadd.f32 0.0, %v1149
        %v1151 = vpop.f32.mrb[0].mxu0
        %v1152 = vpop.f32.mrb[0].mxu0
        %v1153 = vadd.f32 0.0, %v1152
        %v1154 = vpop.f32.mrb[0].mxu0
        %1155 = vmatprep.mubr.bf16.mxu0 0
        %1156 = vmatmul.mubr.bf16.gmra.mrb[0].mxu0 %v605
        %v1157 = vpop.f32.mrb[0].mxu0
        %v1158 = vadd.f32 0.0, %v1157
        %v1159 = vpop.f32.mrb[0].mxu0
        %v1160 = vpop.f32.mrb[0].mxu0
        %v1161 = vadd.f32 0.0, %v1160
        %v1162 = vpop.f32.mrb[0].mxu0
        %1163 = vmatprep.mubr.bf16.mxu0 0
        %1164 = vmatmul.mubr.bf16.gmra.mrb[0].mxu0 %v608
        %v1165 = vpop.f32.mrb[0].mxu0
        %v1166 = vadd.f32 0.0, %v1165
        %v1167 = vpop.f32.mrb[0].mxu0
        %v1168 = vpop.f32.mrb[0].mxu0
        %v1169 = vadd.f32 0.0, %v1168
        %v1170 = vpop.f32.mrb[0].mxu0
        %1171 = vmatprep.mubr.bf16.mxu0 0
        %1172 = vmatmul.mubr.bf16.gmra.mrb[0].mxu0 %v611
        %v1173 = vpop.f32.mrb[0].mxu0
        %v1174 = vadd.f32 0.0, %v1173
        %v1175 = vpop.f32.mrb[0].mxu0
        %v1176 = vpop.f32.mrb[0].mxu0
        %v1177 = vadd.f32 0.0, %v1176
        %v1178 = vpop.f32.mrb[0].mxu0
        %1179 = vmatprep.mubr.bf16.mxu0 0
        %1180 = vmatmul.mubr.bf16.gmra.mrb[0].mxu0 %v614
        %v1181 = vpop.f32.mrb[0].mxu0
        %v1182 = vadd.f32 0.0, %v1181
        %v1183 = vpop.f32.mrb[0].mxu0
        %v1184 = vpop.f32.mrb[0].mxu0
        %v1185 = vadd.f32 0.0, %v1184
        %v1186 = vpop.f32.mrb[0].mxu0
        %1187 = vmatprep.mubr.bf16.mxu0 0
        %1188 = vmatmul.mubr.bf16.gmra.mrb[0].mxu0 %v617
        %v1189 = vpop.f32.mrb[0].mxu0
        %v1190 = vadd.f32 0.0, %v1189
        %v1191 = vpop.f32.mrb[0].mxu0
        %v1192 = vpop.f32.mrb[0].mxu0
        %v1193 = vadd.f32 0.0, %v1192
        %v1194 = vpop.f32.mrb[0].mxu0
        %1195 = vmatprep.mubr.bf16.mxu0 0
        %1196 = vmatmul.mubr.bf16.gmra.mrb[0].mxu0 %v620
        %v1197 = vpop.f32.mrb[0].mxu0
        %v1198 = vadd.f32 0.0, %v1197
        %v1199 = vpop.f32.mrb[0].mxu0
        %v1200 = vpop.f32.mrb[0].mxu0
        %v1201 = vadd.f32 0.0, %v1200
        %v1202 = vpop.f32.mrb[0].mxu0
        %1203 = vmatprep.mubr.bf16.mxu0 0
        %1204 = vmatmul.mubr.bf16.gmra.mrb[0].mxu0 %v623
        %v1205 = vpop.f32.mrb[0].mxu0
        %v1206 = vadd.f32 0.0, %v1205
        %v1207 = vpop.f32.mrb[0].mxu0
        %v1208 = vpop.f32.mrb[0].mxu0
        %v1209 = vadd.f32 0.0, %v1208
        %v1210 = vpop.f32.mrb[0].mxu0
        %1211 = vmatprep.mubr.bf16.mxu0 0
        %1212 = vmatmul.mubr.bf16.gmra.mrb[0].mxu0 %v626
        %v1213 = vpop.f32.mrb[0].mxu0
        %v1214 = vadd.f32 0.0, %v1213
        %v1215 = vpop.f32.mrb[0].mxu0
        %v1216 = vpop.f32.mrb[0].mxu0
        %v1217 = vadd.f32 0.0, %v1216
        %v1218 = vpop.f32.mrb[0].mxu0
        %1219 = vmatprep.mubr.bf16.mxu0 0
        %1220 = vmatmul.mubr.bf16.gmra.mrb[0].mxu0 %v629
        %v1221 = vpop.f32.mrb[0].mxu0
        %v1222 = vadd.f32 0.0, %v1221
        %v1223 = vpop.f32.mrb[0].mxu0
        %v1224 = vpop.f32.mrb[0].mxu0
        %v1225 = vadd.f32 0.0, %v1224
        %v1226 = vpop.f32.mrb[0].mxu0
        %1227 = vmatprep.mubr.bf16.mxu0 0
        %1228 = vmatmul.mubr.bf16.gmra.mrb[0].mxu0 %v632
        %v1229 = vpop.f32.mrb[0].mxu0
        %v1230 = vadd.f32 0.0, %v1229
        %v1231 = vpop.f32.mrb[0].mxu0
        %v1232 = vpop.f32.mrb[0].mxu0
        %v1233 = vadd.f32 0.0, %v1232
        %v1234 = vpop.f32.mrb[0].mxu0
        %1235 = vmatprep.mubr.bf16.mxu0 0
        %1236 = vmatmul.mubr.bf16.gmra.mrb[0].mxu0 %v635
        %v1237 = vpop.f32.mrb[0].mxu0
        %v1238 = vadd.f32 0.0, %v1237
        %v1239 = vpop.f32.mrb[0].mxu0
        %v1240 = vpop.f32.mrb[0].mxu0
        %v1241 = vadd.f32 0.0, %v1240
        %v1242 = vpop.f32.mrb[0].mxu0
        %1243 = vmatprep.mubr.bf16.mxu0 0
        %1244 = vmatmul.mubr.bf16.gmra.mrb[0].mxu0 %v638
        %v1245 = vpop.f32.mrb[0].mxu0
        %v1246 = vadd.f32 0.0, %v1245
        %v1247 = vpop.f32.mrb[0].mxu0
        %v1248 = vpop.f32.mrb[0].mxu0
        %v1249 = vadd.f32 0.0, %v1248
        %v1250 = vpop.f32.mrb[0].mxu0
        %1251 = vmatprep.mubr.bf16.mxu0 0
        %1252 = vmatmul.mubr.bf16.gmra.mrb[0].mxu0 %v641
        %v1253 = vpop.f32.mrb[0].mxu0
        %v1254 = vadd.f32 0.0, %v1253
        %v1255 = vpop.f32.mrb[0].mxu0
        %v1256 = vpop.f32.mrb[0].mxu0
        %v1257 = vadd.f32 0.0, %v1256
        %v1258 = vpop.f32.mrb[0].mxu0
        %1259 = vmatprep.mubr.bf16.mxu0 0
        %1260 = vmatmul.mubr.bf16.gmra.mrb[0].mxu0 %v644
        %v1261 = vpop.f32.mrb[0].mxu0
        %v1262 = vadd.f32 0.0, %v1261
        %v1263 = vpop.f32.mrb[0].mxu0
        %v1264 = vpop.f32.mrb[0].mxu0
        %v1265 = vadd.f32 0.0, %v1264
        %v1266 = vpop.f32.mrb[0].mxu0
        %1267 = vmatprep.mubr.bf16.mxu0 0
        %1268 = vmatmul.mubr.bf16.gmra.mrb[0].mxu0 %v647
        %v1269 = vpop.f32.mrb[0].mxu0
        %v1270 = vadd.f32 0.0, %v1269
        %v1271 = vpop.f32.mrb[0].mxu0
        %v1272 = vpop.f32.mrb[0].mxu0
        %v1273 = vadd.f32 0.0, %v1272
        %v1274 = vpop.f32.mrb[0].mxu0
        %1275 = vmatprep.mubr.bf16.mxu0 0
        %1276 = vmatmul.mubr.bf16.gmra.mrb[0].mxu0 %v650
        %v1277 = vpop.f32.mrb[0].mxu0
        %v1278 = vadd.f32 0.0, %v1277
        %v1279 = vpop.f32.mrb[0].mxu0
        %v1280 = vpop.f32.mrb[0].mxu0
        %v1281 = vadd.f32 0.0, %v1280
        %v1282 = vpop.f32.mrb[0].mxu0
        %1283 = vmatprep.mubr.bf16.mxu0 0
        %1284 = vmatmul.mubr.bf16.gmra.mrb[0].mxu0 %v653
        %v1285 = vpop.f32.mrb[0].mxu0
        %v1286 = vadd.f32 0.0, %v1285
        %v1287 = vpop.f32.mrb[0].mxu0
        %v1288 = vpop.f32.mrb[0].mxu0
        %v1289 = vadd.f32 0.0, %v1288
        %v1290 = vpop.f32.mrb[0].mxu0
        %1291 = vmatprep.mubr.bf16.mxu0 0
        %1292 = vmatmul.mubr.bf16.gmra.mrb[0].mxu0 %v656
        %v1293 = vpop.f32.mrb[0].mxu0
        %v1294 = vadd.f32 0.0, %v1293
        %v1295 = vpop.f32.mrb[0].mxu0
        %v1296 = vpop.f32.mrb[0].mxu0
        %v1297 = vadd.f32 0.0, %v1296
        %v1298 = vpop.f32.mrb[0].mxu0
        %1299 = vmatprep.mubr.bf16.mxu0 0
        %1300 = vmatmul.mubr.bf16.gmra.mrb[0].mxu0 %v659
        %v1301 = vpop.f32.mrb[0].mxu0
        %v1302 = vadd.f32 0.0, %v1301
        %v1303 = vpop.f32.mrb[0].mxu0
        %v1304 = vpop.f32.mrb[0].mxu0
        %v1305 = vadd.f32 0.0, %v1304
        %v1306 = vpop.f32.mrb[0].mxu0
        %1307 = vmatprep.mubr.bf16.mxu0 0
        %1308 = vmatmul.mubr.bf16.gmra.mrb[0].mxu0 %v662
        %v1309 = vpop.f32.mrb[0].mxu0
        %v1310 = vadd.f32 0.0, %v1309
        %v1311 = vpop.f32.mrb[0].mxu0
        %v1312 = vpop.f32.mrb[0].mxu0
        %v1313 = vadd.f32 0.0, %v1312
        %v1314 = vpop.f32.mrb[0].mxu0
        %1315 = vdwg.mxu0
        %v1316 = vmul.f32 %v709, %v869
        %v1317 = vmul.f32 %v713, %v873
        %v1318 = vmul.f32 %v719, %v879
        %v1319 = vmul.f32 %v723, %v883
        %v1320 = vmul.f32 %v729, %v889
        %v1321 = vmul.f32 %v733, %v893
        %v1322 = vmul.f32 %v739, %v899
        %v1323 = vmul.f32 %v743, %v903
        %v1324 = vmul.f32 %v749, %v909
        %v1325 = vmul.f32 %v753, %v913
        %v1326 = vmul.f32 %v759, %v919
        %v1327 = vmul.f32 %v763, %v923
        %v1328 = vmul.f32 %v769, %v929
        %v1329 = vmul.f32 %v773, %v933
        %v1330 = vmul.f32 %v779, %v939
        %v1331 = vmul.f32 %v783, %v943
        %v1332 = vmul.f32 %v789, %v949
        %v1333 = vmul.f32 %v793, %v953
        %v1334 = vmul.f32 %v799, %v959
        %v1335 = vmul.f32 %v803, %v963
        %v1336 = vmul.f32 %v809, %v969
        %v1337 = vmul.f32 %v813, %v973
        %v1338 = vmul.f32 %v819, %v979
        %v1339 = vmul.f32 %v823, %v983
        %v1340 = vmul.f32 %v829, %v989
        %v1341 = vmul.f32 %v833, %v993
        %v1342 = vmul.f32 %v839, %v999
        %v1343 = vmul.f32 %v843, %v1003
        %v1344 = vmul.f32 %v849, %v1009
        %v1345 = vmul.f32 %v853, %v1013
        %v1346 = vmul.f32 %v859, %v1019
        %v1347 = vmul.f32 %v863, %v1023
        %v1348 = vmul.f32 %v711, %v871
        %v1349 = vmul.f32 %v715, %v875
        %v1350 = vmul.f32 %v721, %v881
        %v1351 = vmul.f32 %v725, %v885
        %v1352 = vmul.f32 %v731, %v891
        %v1353 = vmul.f32 %v735, %v895
        %v1354 = vmul.f32 %v741, %v901
        %v1355 = vmul.f32 %v745, %v905
        %v1356 = vmul.f32 %v751, %v911
        %v1357 = vmul.f32 %v755, %v915
        %v1358 = vmul.f32 %v761, %v921
        %v1359 = vmul.f32 %v765, %v925
        %v1360 = vmul.f32 %v771, %v931
        %v1361 = vmul.f32 %v775, %v935
        %v1362 = vmul.f32 %v781, %v941
        %v1363 = vmul.f32 %v785, %v945
        %v1364 = vmul.f32 %v791, %v951
        %v1365 = vmul.f32 %v795, %v955
        %v1366 = vmul.f32 %v801, %v961
        %v1367 = vmul.f32 %v805, %v965
        %v1368 = vmul.f32 %v811, %v971
        %v1369 = vmul.f32 %v815, %v975
        %v1370 = vmul.f32 %v821, %v981
        %v1371 = vmul.f32 %v825, %v985
        %v1372 = vmul.f32 %v831, %v991
        %v1373 = vmul.f32 %v835, %v995
        %v1374 = vmul.f32 %v841, %v1001
        %v1375 = vmul.f32 %v845, %v1005
        %v1376 = vmul.f32 %v851, %v1011
        %v1377 = vmul.f32 %v855, %v1015
        %v1378 = vmul.f32 %v861, %v1021
        %v1379 = vmul.f32 %v865, %v1025
        %v1380 = vadd.f32 %v1316, %v1348
        %v1381 = vadd.f32 %v1317, %v1349
        %v1382 = vadd.f32 %v1318, %v1350
        %v1383 = vadd.f32 %v1319, %v1351
        %v1384 = vadd.f32 %v1320, %v1352
        %v1385 = vadd.f32 %v1321, %v1353
        %v1386 = vadd.f32 %v1322, %v1354
        %v1387 = vadd.f32 %v1323, %v1355
        %v1388 = vadd.f32 %v1324, %v1356
        %v1389 = vadd.f32 %v1325, %v1357
        %v1390 = vadd.f32 %v1326, %v1358
        %v1391 = vadd.f32 %v1327, %v1359
        %v1392 = vadd.f32 %v1328, %v1360
        %v1393 = vadd.f32 %v1329, %v1361
        %v1394 = vadd.f32 %v1330, %v1362
        %v1395 = vadd.f32 %v1331, %v1363
        %v1396 = vadd.f32 %v1332, %v1364
        %v1397 = vadd.f32 %v1333, %v1365
        %v1398 = vadd.f32 %v1334, %v1366
        %v1399 = vadd.f32 %v1335, %v1367
        %v1400 = vadd.f32 %v1336, %v1368
        %v1401 = vadd.f32 %v1337, %v1369
        %v1402 = vadd.f32 %v1338, %v1370
        %v1403 = vadd.f32 %v1339, %v1371
        %v1404 = vadd.f32 %v1340, %v1372
        %v1405 = vadd.f32 %v1341, %v1373
        %v1406 = vadd.f32 %v1342, %v1374
        %v1407 = vadd.f32 %v1343, %v1375
        %v1408 = vadd.f32 %v1344, %v1376
        %v1409 = vadd.f32 %v1345, %v1377
        %v1410 = vadd.f32 %v1346, %v1378
        %v1411 = vadd.f32 %v1347, %v1379
        %v1412 = vmul.f32 %v1062, %v1190
        %v1413 = vmul.f32 %v1065, %v1193
        %v1414 = vmul.f32 %v1070, %v1198
        %v1415 = vmul.f32 %v1073, %v1201
        %v1416 = vmul.f32 %v1078, %v1206
        %v1417 = vmul.f32 %v1081, %v1209
        %v1418 = vmul.f32 %v1086, %v1214
        %v1419 = vmul.f32 %v1089, %v1217
        %v1420 = vmul.f32 %v1094, %v1222
        %v1421 = vmul.f32 %v1097, %v1225
        %v1422 = vmul.f32 %v1102, %v1230
        %v1423 = vmul.f32 %v1105, %v1233
        %v1424 = vmul.f32 %v1110, %v1238
        %v1425 = vmul.f32 %v1113, %v1241
        %v1426 = vmul.f32 %v1118, %v1246
        %v1427 = vmul.f32 %v1121, %v1249
        %v1428 = vmul.f32 %v1126, %v1254
        %v1429 = vmul.f32 %v1129, %v1257
        %v1430 = vmul.f32 %v1134, %v1262
        %v1431 = vmul.f32 %v1137, %v1265
        %v1432 = vmul.f32 %v1142, %v1270
        %v1433 = vmul.f32 %v1145, %v1273
        %v1434 = vmul.f32 %v1150, %v1278
        %v1435 = vmul.f32 %v1153, %v1281
        %v1436 = vmul.f32 %v1158, %v1286
        %v1437 = vmul.f32 %v1161, %v1289
        %v1438 = vmul.f32 %v1166, %v1294
        %v1439 = vmul.f32 %v1169, %v1297
        %v1440 = vmul.f32 %v1174, %v1302
        %v1441 = vmul.f32 %v1177, %v1305
        %v1442 = vmul.f32 %v1182, %v1310
        %v1443 = vmul.f32 %v1185, %v1313
        %v1444 = vadd.f32 %v1380, %v1412
        %v1445 = vadd.f32 %v1381, %v1413
        %v1446 = vadd.f32 %v1382, %v1414
        %v1447 = vadd.f32 %v1383, %v1415
        %v1448 = vadd.f32 %v1384, %v1416
        %v1449 = vadd.f32 %v1385, %v1417
        %v1450 = vadd.f32 %v1386, %v1418
        %v1451 = vadd.f32 %v1387, %v1419
        %v1452 = vadd.f32 %v1388, %v1420
        %v1453 = vadd.f32 %v1389, %v1421
        %v1454 = vadd.f32 %v1390, %v1422
        %v1455 = vadd.f32 %v1391, %v1423
        %v1456 = vadd.f32 %v1392, %v1424
        %v1457 = vadd.f32 %v1393, %v1425
        %v1458 = vadd.f32 %v1394, %v1426
        %v1459 = vadd.f32 %v1395, %v1427
        %v1460 = vadd.f32 %v1396, %v1428
        %v1461 = vadd.f32 %v1397, %v1429
        %v1462 = vadd.f32 %v1398, %v1430
        %v1463 = vadd.f32 %v1399, %v1431
        %v1464 = vadd.f32 %v1400, %v1432
        %v1465 = vadd.f32 %v1401, %v1433
        %v1466 = vadd.f32 %v1402, %v1434
        %v1467 = vadd.f32 %v1403, %v1435
        %v1468 = vadd.f32 %v1404, %v1436
        %v1469 = vadd.f32 %v1405, %v1437
        %v1470 = vadd.f32 %v1406, %v1438
        %v1471 = vadd.f32 %v1407, %v1439
        %v1472 = vadd.f32 %v1408, %v1440
        %v1473 = vadd.f32 %v1409, %v1441
        %v1474 = vadd.f32 %v1410, %v1442
        %v1475 = vadd.f32 %v1411, %v1443
        %v1476 = vmul.f32 %v869, %v869
        %v1477 = vmul.f32 %v873, %v873
        %v1478 = vmul.f32 %v879, %v879
        %v1479 = vmul.f32 %v883, %v883
        %v1480 = vmul.f32 %v889, %v889
        %v1481 = vmul.f32 %v893, %v893
        %v1482 = vmul.f32 %v899, %v899
        %v1483 = vmul.f32 %v903, %v903
        %v1484 = vmul.f32 %v909, %v909
        %v1485 = vmul.f32 %v913, %v913
        %v1486 = vmul.f32 %v919, %v919
        %v1487 = vmul.f32 %v923, %v923
        %v1488 = vmul.f32 %v929, %v929
        %v1489 = vmul.f32 %v933, %v933
        %v1490 = vmul.f32 %v939, %v939
        %v1491 = vmul.f32 %v943, %v943
        %v1492 = vmul.f32 %v949, %v949
        %v1493 = vmul.f32 %v953, %v953
        %v1494 = vmul.f32 %v959, %v959
        %v1495 = vmul.f32 %v963, %v963
        %v1496 = vmul.f32 %v969, %v969
        %v1497 = vmul.f32 %v973, %v973
        %v1498 = vmul.f32 %v979, %v979
        %v1499 = vmul.f32 %v983, %v983
        %v1500 = vmul.f32 %v989, %v989
        %v1501 = vmul.f32 %v993, %v993
        %v1502 = vmul.f32 %v999, %v999
        %v1503 = vmul.f32 %v1003, %v1003
        %v1504 = vmul.f32 %v1009, %v1009
        %v1505 = vmul.f32 %v1013, %v1013
        %v1506 = vmul.f32 %v1019, %v1019
        %v1507 = vmul.f32 %v1023, %v1023
        %v1508 = vmul.f32 %v871, %v871
        %v1509 = vmul.f32 %v875, %v875
        %v1510 = vmul.f32 %v881, %v881
        %v1511 = vmul.f32 %v885, %v885
        %v1512 = vmul.f32 %v891, %v891
        %v1513 = vmul.f32 %v895, %v895
        %v1514 = vmul.f32 %v901, %v901
        %v1515 = vmul.f32 %v905, %v905
        %v1516 = vmul.f32 %v911, %v911
        %v1517 = vmul.f32 %v915, %v915
        %v1518 = vmul.f32 %v921, %v921
        %v1519 = vmul.f32 %v925, %v925
        %v1520 = vmul.f32 %v931, %v931
        %v1521 = vmul.f32 %v935, %v935
        %v1522 = vmul.f32 %v941, %v941
        %v1523 = vmul.f32 %v945, %v945
        %v1524 = vmul.f32 %v951, %v951
        %v1525 = vmul.f32 %v955, %v955
        %v1526 = vmul.f32 %v961, %v961
        %v1527 = vmul.f32 %v965, %v965
        %v1528 = vmul.f32 %v971, %v971
        %v1529 = vmul.f32 %v975, %v975
        %v1530 = vmul.f32 %v981, %v981
        %v1531 = vmul.f32 %v985, %v985
        %v1532 = vmul.f32 %v991, %v991
        %v1533 = vmul.f32 %v995, %v995
        %v1534 = vmul.f32 %v1001, %v1001
        %v1535 = vmul.f32 %v1005, %v1005
        %v1536 = vmul.f32 %v1011, %v1011
        %v1537 = vmul.f32 %v1015, %v1015
        %v1538 = vmul.f32 %v1021, %v1021
        %v1539 = vmul.f32 %v1025, %v1025
        %v1540 = vadd.f32 %v1476, %v1508
        %v1541 = vadd.f32 %v1477, %v1509
        %v1542 = vadd.f32 %v1478, %v1510
        %v1543 = vadd.f32 %v1479, %v1511
        %v1544 = vadd.f32 %v1480, %v1512
        %v1545 = vadd.f32 %v1481, %v1513
        %v1546 = vadd.f32 %v1482, %v1514
        %v1547 = vadd.f32 %v1483, %v1515
        %v1548 = vadd.f32 %v1484, %v1516
        %v1549 = vadd.f32 %v1485, %v1517
        %v1550 = vadd.f32 %v1486, %v1518
        %v1551 = vadd.f32 %v1487, %v1519
        %v1552 = vadd.f32 %v1488, %v1520
        %v1553 = vadd.f32 %v1489, %v1521
        %v1554 = vadd.f32 %v1490, %v1522
        %v1555 = vadd.f32 %v1491, %v1523
        %v1556 = vadd.f32 %v1492, %v1524
        %v1557 = vadd.f32 %v1493, %v1525
        %v1558 = vadd.f32 %v1494, %v1526
        %v1559 = vadd.f32 %v1495, %v1527
        %v1560 = vadd.f32 %v1496, %v1528
        %v1561 = vadd.f32 %v1497, %v1529
        %v1562 = vadd.f32 %v1498, %v1530
        %v1563 = vadd.f32 %v1499, %v1531
        %v1564 = vadd.f32 %v1500, %v1532
        %v1565 = vadd.f32 %v1501, %v1533
        %v1566 = vadd.f32 %v1502, %v1534
        %v1567 = vadd.f32 %v1503, %v1535
        %v1568 = vadd.f32 %v1504, %v1536
        %v1569 = vadd.f32 %v1505, %v1537
        %v1570 = vadd.f32 %v1506, %v1538
        %v1571 = vadd.f32 %v1507, %v1539
        %v1572 = vmul.f32 %v1190, %v1190
        %v1573 = vmul.f32 %v1193, %v1193
        %v1574 = vmul.f32 %v1198, %v1198
        %v1575 = vmul.f32 %v1201, %v1201
        %v1576 = vmul.f32 %v1206, %v1206
        %v1577 = vmul.f32 %v1209, %v1209
        %v1578 = vmul.f32 %v1214, %v1214
        %v1579 = vmul.f32 %v1217, %v1217
        %v1580 = vmul.f32 %v1222, %v1222
        %v1581 = vmul.f32 %v1225, %v1225
        %v1582 = vmul.f32 %v1230, %v1230
        %v1583 = vmul.f32 %v1233, %v1233
        %v1584 = vmul.f32 %v1238, %v1238
        %v1585 = vmul.f32 %v1241, %v1241
        %v1586 = vmul.f32 %v1246, %v1246
        %v1587 = vmul.f32 %v1249, %v1249
        %v1588 = vmul.f32 %v1254, %v1254
        %v1589 = vmul.f32 %v1257, %v1257
        %v1590 = vmul.f32 %v1262, %v1262
        %v1591 = vmul.f32 %v1265, %v1265
        %v1592 = vmul.f32 %v1270, %v1270
        %v1593 = vmul.f32 %v1273, %v1273
        %v1594 = vmul.f32 %v1278, %v1278
        %v1595 = vmul.f32 %v1281, %v1281
        %v1596 = vmul.f32 %v1286, %v1286
        %v1597 = vmul.f32 %v1289, %v1289
        %v1598 = vmul.f32 %v1294, %v1294
        %v1599 = vmul.f32 %v1297, %v1297
        %v1600 = vmul.f32 %v1302, %v1302
        %v1601 = vmul.f32 %v1305, %v1305
        %v1602 = vmul.f32 %v1310, %v1310
        %v1603 = vmul.f32 %v1313, %v1313
        %v1604 = vadd.f32 %v1540, %v1572
        %v1605 = vadd.f32 %v1541, %v1573
        %v1606 = vadd.f32 %v1542, %v1574
        %v1607 = vadd.f32 %v1543, %v1575
        %v1608 = vadd.f32 %v1544, %v1576
        %v1609 = vadd.f32 %v1545, %v1577
        %v1610 = vadd.f32 %v1546, %v1578
        %v1611 = vadd.f32 %v1547, %v1579
        %v1612 = vadd.f32 %v1548, %v1580
        %v1613 = vadd.f32 %v1549, %v1581
        %v1614 = vadd.f32 %v1550, %v1582
        %v1615 = vadd.f32 %v1551, %v1583
        %v1616 = vadd.f32 %v1552, %v1584
        %v1617 = vadd.f32 %v1553, %v1585
        %v1618 = vadd.f32 %v1554, %v1586
        %v1619 = vadd.f32 %v1555, %v1587
        %v1620 = vadd.f32 %v1556, %v1588
        %v1621 = vadd.f32 %v1557, %v1589
        %v1622 = vadd.f32 %v1558, %v1590
        %v1623 = vadd.f32 %v1559, %v1591
        %v1624 = vadd.f32 %v1560, %v1592
        %v1625 = vadd.f32 %v1561, %v1593
        %v1626 = vadd.f32 %v1562, %v1594
        %v1627 = vadd.f32 %v1563, %v1595
        %v1628 = vadd.f32 %v1564, %v1596
        %v1629 = vadd.f32 %v1565, %v1597
        %v1630 = vadd.f32 %v1566, %v1598
        %v1631 = vadd.f32 %v1567, %v1599
        %v1632 = vadd.f32 %v1568, %v1600
        %v1633 = vadd.f32 %v1569, %v1601
        %v1634 = vadd.f32 %v1570, %v1602
        %v1635 = vadd.f32 %v1571, %v1603
        %v1636 = vmin.f32 %v1444, 0.0
        %v1637 = vmin.f32 %v1445, 0.0
        %v1638 = vmin.f32 %v1446, 0.0
        %v1639 = vmin.f32 %v1447, 0.0
        %v1640 = vmin.f32 %v1448, 0.0
        %v1641 = vmin.f32 %v1449, 0.0
        %v1642 = vmin.f32 %v1450, 0.0
        %v1643 = vmin.f32 %v1451, 0.0
        %v1644 = vmin.f32 %v1452, 0.0
        %v1645 = vmin.f32 %v1453, 0.0
        %v1646 = vmin.f32 %v1454, 0.0
        %v1647 = vmin.f32 %v1455, 0.0
        %v1648 = vmin.f32 %v1456, 0.0
        %v1649 = vmin.f32 %v1457, 0.0
        %v1650 = vmin.f32 %v1458, 0.0
        %v1651 = vmin.f32 %v1459, 0.0
        %v1652 = vmin.f32 %v1460, 0.0
        %v1653 = vmin.f32 %v1461, 0.0
        %v1654 = vmin.f32 %v1462, 0.0
        %v1655 = vmin.f32 %v1463, 0.0
        %v1656 = vmin.f32 %v1464, 0.0
        %v1657 = vmin.f32 %v1465, 0.0
        %v1658 = vmin.f32 %v1466, 0.0
        %v1659 = vmin.f32 %v1467, 0.0
        %v1660 = vmin.f32 %v1468, 0.0
        %v1661 = vmin.f32 %v1469, 0.0
        %v1662 = vmin.f32 %v1470, 0.0
        %v1663 = vmin.f32 %v1471, 0.0
        %v1664 = vmin.f32 %v1472, 0.0
        %v1665 = vmin.f32 %v1473, 0.0
        %v1666 = vmin.f32 %v1474, 0.0
        %v1667 = vmin.f32 %v1475, 0.0
        %v1668 = vmax.f32 %v1604, 1e-06
        %v1669 = vmax.f32 %v1605, 1e-06
        %v1670 = vmax.f32 %v1606, 1e-06
        %v1671 = vmax.f32 %v1607, 1e-06
        %v1672 = vmax.f32 %v1608, 1e-06
        %v1673 = vmax.f32 %v1609, 1e-06
        %v1674 = vmax.f32 %v1610, 1e-06
        %v1675 = vmax.f32 %v1611, 1e-06
        %v1676 = vmax.f32 %v1612, 1e-06
        %v1677 = vmax.f32 %v1613, 1e-06
        %v1678 = vmax.f32 %v1614, 1e-06
        %v1679 = vmax.f32 %v1615, 1e-06
        %v1680 = vmax.f32 %v1616, 1e-06
        %v1681 = vmax.f32 %v1617, 1e-06
        %v1682 = vmax.f32 %v1618, 1e-06
        %v1683 = vmax.f32 %v1619, 1e-06
        %v1684 = vmax.f32 %v1620, 1e-06
        %v1685 = vmax.f32 %v1621, 1e-06
        %v1686 = vmax.f32 %v1622, 1e-06
        %v1687 = vmax.f32 %v1623, 1e-06
        %v1688 = vmax.f32 %v1624, 1e-06
        %v1689 = vmax.f32 %v1625, 1e-06
        %v1690 = vmax.f32 %v1626, 1e-06
        %v1691 = vmax.f32 %v1627, 1e-06
        %v1692 = vmax.f32 %v1628, 1e-06
        %v1693 = vmax.f32 %v1629, 1e-06
        %v1694 = vmax.f32 %v1630, 1e-06
        %v1695 = vmax.f32 %v1631, 1e-06
        %v1696 = vmax.f32 %v1632, 1e-06
        %v1697 = vmax.f32 %v1633, 1e-06
        %v1698 = vmax.f32 %v1634, 1e-06
        %v1699 = vmax.f32 %v1635, 1e-06
        %v1700 = vrcp.pop %v1668
        %v1701 = vrcp.pop %v1669
        %v1702 = vrcp.pop %v1670
        %v1703 = vrcp.pop %v1671
        %v1704 = vrcp.pop %v1672
        %v1705 = vrcp.pop %v1673
        %v1706 = vrcp.pop %v1674
        %v1707 = vrcp.pop %v1675
        %v1708 = vrcp.pop %v1676
        %v1709 = vrcp.pop %v1677
        %v1710 = vrcp.pop %v1678
        %v1711 = vrcp.pop %v1679
        %v1712 = vrcp.pop %v1680
        %v1713 = vrcp.pop %v1681
        %v1714 = vrcp.pop %v1682
        %v1715 = vrcp.pop %v1683
        %v1716 = vrcp.pop %v1684
        %v1717 = vrcp.pop %v1685
        %v1718 = vrcp.pop %v1686
        %v1719 = vrcp.pop %v1687
        %v1720 = vrcp.pop %v1688
        %v1721 = vrcp.pop %v1689
        %v1722 = vrcp.pop %v1690
        %v1723 = vrcp.pop %v1691
        %v1724 = vrcp.pop %v1692
        %v1725 = vrcp.pop %v1693
        %v1726 = vrcp.pop %v1694
        %v1727 = vrcp.pop %v1695
        %v1728 = vrcp.pop %v1696
        %v1729 = vrcp.pop %v1697
        %v1730 = vrcp.pop %v1698
        %v1731 = vrcp.pop %v1699
        %v1732 = vmul.f32 %v1636, %v1700
        %v1733 = vmul.f32 %v1637, %v1701
        %v1734 = vmul.f32 %v1638, %v1702
        %v1735 = vmul.f32 %v1639, %v1703
        %v1736 = vmul.f32 %v1640, %v1704
        %v1737 = vmul.f32 %v1641, %v1705
        %v1738 = vmul.f32 %v1642, %v1706
        %v1739 = vmul.f32 %v1643, %v1707
        %v1740 = vmul.f32 %v1644, %v1708
        %v1741 = vmul.f32 %v1645, %v1709
        %v1742 = vmul.f32 %v1646, %v1710
        %v1743 = vmul.f32 %v1647, %v1711
        %v1744 = vmul.f32 %v1648, %v1712
        %v1745 = vmul.f32 %v1649, %v1713
        %v1746 = vmul.f32 %v1650, %v1714
        %v1747 = vmul.f32 %v1651, %v1715
        %v1748 = vmul.f32 %v1652, %v1716
        %v1749 = vmul.f32 %v1653, %v1717
        %v1750 = vmul.f32 %v1654, %v1718
        %v1751 = vmul.f32 %v1655, %v1719
        %v1752 = vmul.f32 %v1656, %v1720
        %v1753 = vmul.f32 %v1657, %v1721
        %v1754 = vmul.f32 %v1658, %v1722
        %v1755 = vmul.f32 %v1659, %v1723
        %v1756 = vmul.f32 %v1660, %v1724
        %v1757 = vmul.f32 %v1661, %v1725
        %v1758 = vmul.f32 %v1662, %v1726
        %v1759 = vmul.f32 %v1663, %v1727
        %v1760 = vmul.f32 %v1664, %v1728
        %v1761 = vmul.f32 %v1665, %v1729
        %v1762 = vmul.f32 %v1666, %v1730
        %v1763 = vmul.f32 %v1667, %v1731
        %v1764 = vmul.f32 %v1732, %v869
        %v1765 = vmul.f32 %v1733, %v873
        %v1766 = vmul.f32 %v1734, %v879
        %v1767 = vmul.f32 %v1735, %v883
        %v1768 = vmul.f32 %v1736, %v889
        %v1769 = vmul.f32 %v1737, %v893
        %v1770 = vmul.f32 %v1738, %v899
        %v1771 = vmul.f32 %v1739, %v903
        %v1772 = vmul.f32 %v1740, %v909
        %v1773 = vmul.f32 %v1741, %v913
        %v1774 = vmul.f32 %v1742, %v919
        %v1775 = vmul.f32 %v1743, %v923
        %v1776 = vmul.f32 %v1744, %v929
        %v1777 = vmul.f32 %v1745, %v933
        %v1778 = vmul.f32 %v1746, %v939
        %v1779 = vmul.f32 %v1747, %v943
        %v1780 = vmul.f32 %v1748, %v949
        %v1781 = vmul.f32 %v1749, %v953
        %v1782 = vmul.f32 %v1750, %v959
        %v1783 = vmul.f32 %v1751, %v963
        %v1784 = vmul.f32 %v1752, %v969
        %v1785 = vmul.f32 %v1753, %v973
        %v1786 = vmul.f32 %v1754, %v979
        %v1787 = vmul.f32 %v1755, %v983
        %v1788 = vmul.f32 %v1756, %v989
        %v1789 = vmul.f32 %v1757, %v993
        %v1790 = vmul.f32 %v1758, %v999
        %v1791 = vmul.f32 %v1759, %v1003
        %v1792 = vmul.f32 %v1760, %v1009
        %v1793 = vmul.f32 %v1761, %v1013
        %v1794 = vmul.f32 %v1762, %v1019
        %v1795 = vmul.f32 %v1763, %v1023
        %v1796 = vsub.f32 %v709, %v1764
        %v1797 = vsub.f32 %v713, %v1765
        %v1798 = vsub.f32 %v719, %v1766
        %v1799 = vsub.f32 %v723, %v1767
        %v1800 = vsub.f32 %v729, %v1768
        %v1801 = vsub.f32 %v733, %v1769
        %v1802 = vsub.f32 %v739, %v1770
        %v1803 = vsub.f32 %v743, %v1771
        %v1804 = vsub.f32 %v749, %v1772
        %v1805 = vsub.f32 %v753, %v1773
        %v1806 = vsub.f32 %v759, %v1774
        %v1807 = vsub.f32 %v763, %v1775
        %v1808 = vsub.f32 %v769, %v1776
        %v1809 = vsub.f32 %v773, %v1777
        %v1810 = vsub.f32 %v779, %v1778
        %v1811 = vsub.f32 %v783, %v1779
        %v1812 = vsub.f32 %v789, %v1780
        %v1813 = vsub.f32 %v793, %v1781
        %v1814 = vsub.f32 %v799, %v1782
        %v1815 = vsub.f32 %v803, %v1783
        %v1816 = vsub.f32 %v809, %v1784
        %v1817 = vsub.f32 %v813, %v1785
        %v1818 = vsub.f32 %v819, %v1786
        %v1819 = vsub.f32 %v823, %v1787
        %v1820 = vsub.f32 %v829, %v1788
        %v1821 = vsub.f32 %v833, %v1789
        %v1822 = vsub.f32 %v839, %v1790
        %v1823 = vsub.f32 %v843, %v1791
        %v1824 = vsub.f32 %v849, %v1792
        %v1825 = vsub.f32 %v853, %v1793
        %v1826 = vsub.f32 %v859, %v1794
        %v1827 = vsub.f32 %v863, %v1795
        %v1828 = vmul.f32 %v1732, %v871
        %v1829 = vmul.f32 %v1733, %v875
        %v1830 = vmul.f32 %v1734, %v881
        %v1831 = vmul.f32 %v1735, %v885
        %v1832 = vmul.f32 %v1736, %v891
        %v1833 = vmul.f32 %v1737, %v895
        %v1834 = vmul.f32 %v1738, %v901
        %v1835 = vmul.f32 %v1739, %v905
        %v1836 = vmul.f32 %v1740, %v911
        %v1837 = vmul.f32 %v1741, %v915
        %v1838 = vmul.f32 %v1742, %v921
        %v1839 = vmul.f32 %v1743, %v925
        %v1840 = vmul.f32 %v1744, %v931
        %v1841 = vmul.f32 %v1745, %v935
        %v1842 = vmul.f32 %v1746, %v941
        %v1843 = vmul.f32 %v1747, %v945
        %v1844 = vmul.f32 %v1748, %v951
        %v1845 = vmul.f32 %v1749, %v955
        %v1846 = vmul.f32 %v1750, %v961
        %v1847 = vmul.f32 %v1751, %v965
        %v1848 = vmul.f32 %v1752, %v971
        %v1849 = vmul.f32 %v1753, %v975
        %v1850 = vmul.f32 %v1754, %v981
        %v1851 = vmul.f32 %v1755, %v985
        %v1852 = vmul.f32 %v1756, %v991
        %v1853 = vmul.f32 %v1757, %v995
        %v1854 = vmul.f32 %v1758, %v1001
        %v1855 = vmul.f32 %v1759, %v1005
        %v1856 = vmul.f32 %v1760, %v1011
        %v1857 = vmul.f32 %v1761, %v1015
        %v1858 = vmul.f32 %v1762, %v1021
        %v1859 = vmul.f32 %v1763, %v1025
        %v1860 = vsub.f32 %v711, %v1828
        %v1861 = vsub.f32 %v715, %v1829
        %v1862 = vsub.f32 %v721, %v1830
        %v1863 = vsub.f32 %v725, %v1831
        %v1864 = vsub.f32 %v731, %v1832
        %v1865 = vsub.f32 %v735, %v1833
        %v1866 = vsub.f32 %v741, %v1834
        %v1867 = vsub.f32 %v745, %v1835
        %v1868 = vsub.f32 %v751, %v1836
        %v1869 = vsub.f32 %v755, %v1837
        %v1870 = vsub.f32 %v761, %v1838
        %v1871 = vsub.f32 %v765, %v1839
        %v1872 = vsub.f32 %v771, %v1840
        %v1873 = vsub.f32 %v775, %v1841
        %v1874 = vsub.f32 %v781, %v1842
        %v1875 = vsub.f32 %v785, %v1843
        %v1876 = vsub.f32 %v791, %v1844
        %v1877 = vsub.f32 %v795, %v1845
        %v1878 = vsub.f32 %v801, %v1846
        %v1879 = vsub.f32 %v805, %v1847
        %v1880 = vsub.f32 %v811, %v1848
        %v1881 = vsub.f32 %v815, %v1849
        %v1882 = vsub.f32 %v821, %v1850
        %v1883 = vsub.f32 %v825, %v1851
        %v1884 = vsub.f32 %v831, %v1852
        %v1885 = vsub.f32 %v835, %v1853
        %v1886 = vsub.f32 %v841, %v1854
        %v1887 = vsub.f32 %v845, %v1855
        %v1888 = vsub.f32 %v851, %v1856
        %v1889 = vsub.f32 %v855, %v1857
        %v1890 = vsub.f32 %v861, %v1858
        %v1891 = vsub.f32 %v865, %v1859
        %v1892 = vmul.f32 %v1732, %v1190
        %v1893 = vmul.f32 %v1733, %v1193
        %v1894 = vmul.f32 %v1734, %v1198
        %v1895 = vmul.f32 %v1735, %v1201
        %v1896 = vmul.f32 %v1736, %v1206
        %v1897 = vmul.f32 %v1737, %v1209
        %v1898 = vmul.f32 %v1738, %v1214
        %v1899 = vmul.f32 %v1739, %v1217
        %v1900 = vmul.f32 %v1740, %v1222
        %v1901 = vmul.f32 %v1741, %v1225
        %v1902 = vmul.f32 %v1742, %v1230
        %v1903 = vmul.f32 %v1743, %v1233
        %v1904 = vmul.f32 %v1744, %v1238
        %v1905 = vmul.f32 %v1745, %v1241
        %v1906 = vmul.f32 %v1746, %v1246
        %v1907 = vmul.f32 %v1747, %v1249
        %v1908 = vmul.f32 %v1748, %v1254
        %v1909 = vmul.f32 %v1749, %v1257
        %v1910 = vmul.f32 %v1750, %v1262
        %v1911 = vmul.f32 %v1751, %v1265
        %v1912 = vmul.f32 %v1752, %v1270
        %v1913 = vmul.f32 %v1753, %v1273
        %v1914 = vmul.f32 %v1754, %v1278
        %v1915 = vmul.f32 %v1755, %v1281
        %v1916 = vmul.f32 %v1756, %v1286
        %v1917 = vmul.f32 %v1757, %v1289
        %v1918 = vmul.f32 %v1758, %v1294
        %v1919 = vmul.f32 %v1759, %v1297
        %v1920 = vmul.f32 %v1760, %v1302
        %v1921 = vmul.f32 %v1761, %v1305
        %v1922 = vmul.f32 %v1762, %v1310
        %v1923 = vmul.f32 %v1763, %v1313
        %v1924 = vsub.f32 %v1062, %v1892
        %v1925 = vsub.f32 %v1065, %v1893
        %v1926 = vsub.f32 %v1070, %v1894
        %v1927 = vsub.f32 %v1073, %v1895
        %v1928 = vsub.f32 %v1078, %v1896
        %v1929 = vsub.f32 %v1081, %v1897
        %v1930 = vsub.f32 %v1086, %v1898
        %v1931 = vsub.f32 %v1089, %v1899
        %v1932 = vsub.f32 %v1094, %v1900
        %v1933 = vsub.f32 %v1097, %v1901
        %v1934 = vsub.f32 %v1102, %v1902
        %v1935 = vsub.f32 %v1105, %v1903
        %v1936 = vsub.f32 %v1110, %v1904
        %v1937 = vsub.f32 %v1113, %v1905
        %v1938 = vsub.f32 %v1118, %v1906
        %v1939 = vsub.f32 %v1121, %v1907
        %v1940 = vsub.f32 %v1126, %v1908
        %v1941 = vsub.f32 %v1129, %v1909
        %v1942 = vsub.f32 %v1134, %v1910
        %v1943 = vsub.f32 %v1137, %v1911
        %v1944 = vsub.f32 %v1142, %v1912
        %v1945 = vsub.f32 %v1145, %v1913
        %v1946 = vsub.f32 %v1150, %v1914
        %v1947 = vsub.f32 %v1153, %v1915
        %v1948 = vsub.f32 %v1158, %v1916
        %v1949 = vsub.f32 %v1161, %v1917
        %v1950 = vsub.f32 %v1166, %v1918
        %v1951 = vsub.f32 %v1169, %v1919
        %v1952 = vsub.f32 %v1174, %v1920
        %v1953 = vsub.f32 %v1177, %v1921
        %v1954 = vsub.f32 %v1182, %v1922
        %v1955 = vsub.f32 %v1185, %v1923
        %v1956 = vadd.f32 %v1796, %v1800
        %v1957 = vadd.f32 %v1860, %v1864
        %v1958 = vadd.f32 %v1924, %v1928
        %v1959 = vadd.f32 %v1797, %v1801
        %v1960 = vadd.f32 %v1861, %v1865
        %v1961 = vadd.f32 %v1925, %v1929
        %v1962 = vadd.f32 %v1798, %v1802
        %v1963 = vadd.f32 %v1862, %v1866
        %v1964 = vadd.f32 %v1926, %v1930
        %v1965 = vadd.f32 %v1799, %v1803
        %v1966 = vadd.f32 %v1863, %v1867
        %v1967 = vadd.f32 %v1927, %v1931
        %v1968 = vadd.f32 %v1956, %v1804
        %v1969 = vadd.f32 %v1957, %v1868
        %v1970 = vadd.f32 %v1958, %v1932
        %v1971 = vadd.f32 %v1959, %v1805
        %v1972 = vadd.f32 %v1960, %v1869
        %v1973 = vadd.f32 %v1961, %v1933
        %v1974 = vadd.f32 %v1962, %v1806
        %v1975 = vadd.f32 %v1963, %v1870
        %v1976 = vadd.f32 %v1964, %v1934
        %v1977 = vadd.f32 %v1965, %v1807
        %v1978 = vadd.f32 %v1966, %v1871
        %v1979 = vadd.f32 %v1967, %v1935
        %v1980 = vadd.f32 %v1968, %v1808
        %v1981 = vadd.f32 %v1969, %v1872
        %v1982 = vadd.f32 %v1970, %v1936
        %v1983 = vadd.f32 %v1971, %v1809
        %v1984 = vadd.f32 %v1972, %v1873
        %v1985 = vadd.f32 %v1973, %v1937
        %v1986 = vadd.f32 %v1974, %v1810
        %v1987 = vadd.f32 %v1975, %v1874
        %v1988 = vadd.f32 %v1976, %v1938
        %v1989 = vadd.f32 %v1977, %v1811
        %v1990 = vadd.f32 %v1978, %v1875
        %v1991 = vadd.f32 %v1979, %v1939
        %v1992 = vadd.f32 %v1980, %v1812
        %v1993 = vadd.f32 %v1981, %v1876
        %v1994 = vadd.f32 %v1982, %v1940
        %v1995 = vadd.f32 %v1983, %v1813
        %v1996 = vadd.f32 %v1984, %v1877
        %v1997 = vadd.f32 %v1985, %v1941
        %v1998 = vadd.f32 %v1986, %v1814
        %v1999 = vadd.f32 %v1987, %v1878
        %v2000 = vadd.f32 %v1988, %v1942
        %v2001 = vadd.f32 %v1989, %v1815
        %v2002 = vadd.f32 %v1990, %v1879
        %v2003 = vadd.f32 %v1991, %v1943
        %v2004 = vadd.f32 %v1992, %v1816
        %v2005 = vadd.f32 %v1993, %v1880
        %v2006 = vadd.f32 %v1994, %v1944
        %v2007 = vadd.f32 %v1995, %v1817
        %v2008 = vadd.f32 %v1996, %v1881
        %v2009 = vadd.f32 %v1997, %v1945
        %v2010 = vadd.f32 %v1998, %v1818
        %v2011 = vadd.f32 %v1999, %v1882
        %v2012 = vadd.f32 %v2000, %v1946
        %v2013 = vadd.f32 %v2001, %v1819
        %v2014 = vadd.f32 %v2002, %v1883
        %v2015 = vadd.f32 %v2003, %v1947
        %v2016 = vadd.f32 %v2004, %v1820
        %v2017 = vadd.f32 %v2005, %v1884
        %v2018 = vadd.f32 %v2006, %v1948
        %v2019 = vadd.f32 %v2007, %v1821
        %v2020 = vadd.f32 %v2008, %v1885
        %v2021 = vadd.f32 %v2009, %v1949
        %v2022 = vadd.f32 %v2010, %v1822
        %v2023 = vadd.f32 %v2011, %v1886
        %v2024 = vadd.f32 %v2012, %v1950
        %v2025 = vadd.f32 %v2013, %v1823
        %v2026 = vadd.f32 %v2014, %v1887
        %v2027 = vadd.f32 %v2015, %v1951
        %v2028 = vadd.f32 %v2016, %v1824
        %v2029 = vadd.f32 %v2017, %v1888
        %v2030 = vadd.f32 %v2018, %v1952
        %v2031 = vadd.f32 %v2019, %v1825
        %v2032 = vadd.f32 %v2020, %v1889
        %v2033 = vadd.f32 %v2021, %v1953
        %v2034 = vadd.f32 %v2022, %v1826
        %v2035 = vadd.f32 %v2023, %v1890
        %v2036 = vadd.f32 %v2024, %v1954
        %v2037 = vadd.f32 %v2025, %v1827
        %v2038 = vadd.f32 %v2026, %v1891
        %v2039 = vadd.f32 %v2027, %v1955
        %v2040 = vmul.f32 %v2028, 0.125
        %v2041 = vmul.f32 %v2029, 0.125
        %v2042 = vmul.f32 %v2030, 0.125
        %v2043 = vmul.f32 %v2031, 0.125
        %v2044 = vmul.f32 %v2032, 0.125
        %v2045 = vmul.f32 %v2033, 0.125
        %v2046 = vmul.f32 %v2034, 0.125
        %v2047 = vmul.f32 %v2035, 0.125
        %v2048 = vmul.f32 %v2036, 0.125
        %v2049 = vmul.f32 %v2037, 0.125
        %v2050 = vmul.f32 %v2038, 0.125
        %v2051 = vmul.f32 %v2039, 0.125
        %v2052 = vpack.c.bf16 %v2043, %v2040
        %v2053 = vpack.c.bf16 %v2044, %v2041
        %v2054 = vpack.c.bf16 %v2045, %v2042
        %v2055 = vpack.c.bf16 %v2049, %v2046
        %v2056 = vpack.c.bf16 %v2050, %v2047
        %v2057 = vpack.c.bf16 %v2051, %v2048
        %v2058 = vld [vmem:[%s3] sm:$0xf]
        %v2059 = vld [vmem:[%s3 + $0x4] sm:$0xf]
        %v2060 = vld [vmem:[%s3 + $0x8] sm:$0xf]
        %v2061 = vld [vmem:[%s3 + $0xc] sm:$0xf]
        %v2062 = vld [vmem:[%s3 + $0x10] sm:$0xf]
        %v2063 = vld [vmem:[%s3 + $0x14] sm:$0xf]
        %v2064 = vld [vmem:[%s3 + $0x18] sm:$0xf]
        %v2065 = vld [vmem:[%s3 + $0x1c] sm:$0xf]
        %v2074 = vunpack.c.l.b16 %v2058
        %v2075 = vunpack.c.l.b16 %v2059
        %v2076 = vunpack.c.l.b16 %v2060
        %v2077 = vunpack.c.l.b16 %v2061
        %v2078 = vunpack.c.l.b16 %v2062
        %v2079 = vunpack.c.l.b16 %v2063
        %v2080 = vunpack.c.l.b16 %v2064
        %v2081 = vunpack.c.l.b16 %v2065
        %v2082 = vpack.c.b16 %v2075, %v2074
        %v2083 = vpack.c.b16 %v2077, %v2076
        %v2084 = vpack.c.b16 %v2079, %v2078
        %v2085 = vpack.c.b16 %v2081, %v2080
        %vm2086 = vcmask 261120
        %v2088 = vsel %vm2086, %v2082, 0
        %v2091 = vsel %vm2086, %v2083, 0
        %v2094 = vsel %vm2086, %v2084, 0
        %v2097 = vsel %vm2086, %v2085, 0
        %2099 = vmatprep.subr.bf16.mxu0 %v2053
        %2100 = vmatpush1.bf16.msra.mxu0 %v2052
        %2101 = vmatprep.subr.bf16.mxu0 %v2056
        %2102 = vmatpush1.bf16.msra.mxu0 %v2055
        %2103 = vmatprep.subr.bf16.mxu0 0
        %2104 = vmatpush1.bf16.msra.mxu0 0
        %2105 = vmatprep.subr.bf16.mxu0 0
        %2106 = vmatpush1.bf16.msra.mxu0 0
        %2107 = vmatprep.subr.bf16.mxu0 0
        %2108 = vmatpush1.bf16.msra.mxu0 0
        %2109 = vmatprep.subr.bf16.mxu0 0
        %2110 = vmatpush1.bf16.msra.mxu0 0
        %2111 = vmatprep.subr.bf16.mxu0 0
        %2112 = vmatpush1.bf16.msra.mxu0 0
        %2113 = vmatprep.subr.bf16.mxu0 0
        %2114 = vmatpush1.bf16.msra.mxu0 0
        %2115 = vmatprep.subr.bf16.mxu0 0
        %2116 = vmatpush1.bf16.msra.mxu0 0
        %2117 = vmatprep.subr.bf16.mxu0 0
        %2118 = vmatpush1.bf16.msra.mxu0 0
        %2119 = vmatprep.subr.bf16.mxu0 0
        %2120 = vmatpush1.bf16.msra.mxu0 0
        %2121 = vmatprep.subr.bf16.mxu0 0
        %2122 = vmatpush1.bf16.msra.mxu0 0
        %2123 = vmatprep.subr.bf16.mxu0 0
        %2124 = vmatpush1.bf16.msra.mxu0 0
        %2125 = vmatprep.subr.bf16.mxu0 0
        %2126 = vmatpush1.bf16.msra.mxu0 0
        %2127 = vmatprep.subr.bf16.mxu0 0
        %2128 = vmatpush1.bf16.msra.mxu0 0
        %2129 = vmatprep.subr.bf16.mxu0 0
        %2130 = vmatpush1.bf16.msra.mxu0 0
        %2131 = vmatprep.mubr.bf16.mxu0 0
        %2132 = vmatmul.mubr.bf16.gmra.mrb[0].mxu0 %v2088
        %v2133 = vpop.f32.mrb[0].mxu0
        %v2134 = vadd.f32 0.0, %v2133
        %v2135 = vpop.f32.mrb[0].mxu0
        %v2136 = vadd.f32 0.0, %v2135
        %v2137 = vpop.f32.mrb[0].mxu0
        %v2138 = vadd.f32 0.0, %v2137
        %v2139 = vpop.f32.mrb[0].mxu0
        %v2140 = vadd.f32 0.0, %v2139
        %2141 = vmatprep.mubr.bf16.mxu0 0
        %2142 = vmatmul.mubr.bf16.gmra.mrb[0].mxu0 %v2091
        %v2143 = vpop.f32.mrb[0].mxu0
        %v2144 = vadd.f32 0.0, %v2143
        %v2145 = vpop.f32.mrb[0].mxu0
        %v2146 = vadd.f32 0.0, %v2145
        %v2147 = vpop.f32.mrb[0].mxu0
        %v2148 = vadd.f32 0.0, %v2147
        %v2149 = vpop.f32.mrb[0].mxu0
        %v2150 = vadd.f32 0.0, %v2149
        %2151 = vmatprep.mubr.bf16.mxu0 0
        %2152 = vmatmul.mubr.bf16.gmra.mrb[0].mxu0 %v2094
        %v2153 = vpop.f32.mrb[0].mxu0
        %v2154 = vadd.f32 0.0, %v2153
        %v2155 = vpop.f32.mrb[0].mxu0
        %v2156 = vadd.f32 0.0, %v2155
        %v2157 = vpop.f32.mrb[0].mxu0
        %v2158 = vadd.f32 0.0, %v2157
        %v2159 = vpop.f32.mrb[0].mxu0
        %v2160 = vadd.f32 0.0, %v2159
        %2161 = vmatprep.mubr.bf16.mxu0 0
        %2162 = vmatmul.mubr.bf16.gmra.mrb[0].mxu0 %v2097
        %v2163 = vpop.f32.mrb[0].mxu0
        %v2164 = vadd.f32 0.0, %v2163
        %v2165 = vpop.f32.mrb[0].mxu0
        %v2166 = vadd.f32 0.0, %v2165
        %v2167 = vpop.f32.mrb[0].mxu0
        %v2168 = vadd.f32 0.0, %v2167
        %v2169 = vpop.f32.mrb[0].mxu0
        %v2170 = vadd.f32 0.0, %v2169
        %2171 = vdwg.mxu0
        %2172 = vmatprep.subr.bf16.mxu0 0
        %2173 = vmatpush1.bf16.msra.mxu0 %v2054
        %2174 = vmatprep.subr.bf16.mxu0 0
        %2175 = vmatpush1.bf16.msra.mxu0 %v2057
        %2176 = vmatprep.subr.bf16.mxu0 0
        %2177 = vmatpush1.bf16.msra.mxu0 0
        %2178 = vmatprep.subr.bf16.mxu0 0
        %2179 = vmatpush1.bf16.msra.mxu0 0
        %2180 = vmatprep.subr.bf16.mxu0 0
        %2181 = vmatpush1.bf16.msra.mxu0 0
        %2182 = vmatprep.subr.bf16.mxu0 0
        %2183 = vmatpush1.bf16.msra.mxu0 0
        %2184 = vmatprep.subr.bf16.mxu0 0
        %2185 = vmatpush1.bf16.msra.mxu0 0
        %2186 = vmatprep.subr.bf16.mxu0 0
        %2187 = vmatpush1.bf16.msra.mxu0 0
        %2188 = vmatprep.subr.bf16.mxu0 0
        %2189 = vmatpush1.bf16.msra.mxu0 0
        %2190 = vmatprep.subr.bf16.mxu0 0
        %2191 = vmatpush1.bf16.msra.mxu0 0
        %2192 = vmatprep.subr.bf16.mxu0 0
        %2193 = vmatpush1.bf16.msra.mxu0 0
        %2194 = vmatprep.subr.bf16.mxu0 0
        %2195 = vmatpush1.bf16.msra.mxu0 0
        %2196 = vmatprep.subr.bf16.mxu0 0
        %2197 = vmatpush1.bf16.msra.mxu0 0
        %2198 = vmatprep.subr.bf16.mxu0 0
        %2199 = vmatpush1.bf16.msra.mxu0 0
        %2200 = vmatprep.subr.bf16.mxu0 0
        %2201 = vmatpush1.bf16.msra.mxu0 0
        %2202 = vmatprep.subr.bf16.mxu0 0
        %2203 = vmatpush1.bf16.msra.mxu0 0
        %2204 = vmatprep.mubr.bf16.mxu0 0
        %2205 = vmatmul.mubr.bf16.gmra.mrb[0].mxu0 %v2088
        %v2206 = vpop.f32.mrb[0].mxu0
        %v2207 = vadd.f32 0.0, %v2206
        %v2208 = vpop.f32.mrb[0].mxu0
        %v2209 = vpop.f32.mrb[0].mxu0
        %v2210 = vadd.f32 0.0, %v2209
        %v2211 = vpop.f32.mrb[0].mxu0
        %2212 = vmatprep.mubr.bf16.mxu0 0
        %2213 = vmatmul.mubr.bf16.gmra.mrb[0].mxu0 %v2091
        %v2214 = vpop.f32.mrb[0].mxu0
        %v2215 = vadd.f32 0.0, %v2214
        %v2216 = vpop.f32.mrb[0].mxu0
        %v2217 = vpop.f32.mrb[0].mxu0
        %v2218 = vadd.f32 0.0, %v2217
        %v2219 = vpop.f32.mrb[0].mxu0
        %2220 = vmatprep.mubr.bf16.mxu0 0
        %2221 = vmatmul.mubr.bf16.gmra.mrb[0].mxu0 %v2094
        %v2222 = vpop.f32.mrb[0].mxu0
        %v2223 = vadd.f32 0.0, %v2222
        %v2224 = vpop.f32.mrb[0].mxu0
        %v2225 = vpop.f32.mrb[0].mxu0
        %v2226 = vadd.f32 0.0, %v2225
        %v2227 = vpop.f32.mrb[0].mxu0
        %2228 = vmatprep.mubr.bf16.mxu0 0
        %2229 = vmatmul.mubr.bf16.gmra.mrb[0].mxu0 %v2097
        %v2230 = vpop.f32.mrb[0].mxu0
        %v2231 = vadd.f32 0.0, %v2230
        %v2232 = vpop.f32.mrb[0].mxu0
        %v2233 = vpop.f32.mrb[0].mxu0
        %v2234 = vadd.f32 0.0, %v2233
        %v2235 = vpop.f32.mrb[0].mxu0
        %2236 = vdwg.mxu0
        %v2237 = vmul.f32 %v2134, %v2154
        %v2238 = vmul.f32 %v2138, %v2158
        %v2239 = vmul.f32 %v2144, %v2164
        %v2240 = vmul.f32 %v2148, %v2168
        %v2241 = vmul.f32 %v2136, %v2156
        %v2242 = vmul.f32 %v2140, %v2160
        %v2243 = vmul.f32 %v2146, %v2166
        %v2244 = vmul.f32 %v2150, %v2170
        %v2245 = vadd.f32 %v2237, %v2241
        %v2246 = vadd.f32 %v2238, %v2242
        %v2247 = vadd.f32 %v2239, %v2243
        %v2248 = vadd.f32 %v2240, %v2244
        %v2249 = vmul.f32 %v2207, %v2223
        %v2250 = vmul.f32 %v2210, %v2226
        %v2251 = vmul.f32 %v2215, %v2231
        %v2252 = vmul.f32 %v2218, %v2234
        %v2253 = vadd.f32 %v2245, %v2249
        %v2254 = vadd.f32 %v2246, %v2250
        %v2255 = vadd.f32 %v2247, %v2251
        %v2256 = vadd.f32 %v2248, %v2252
        %v2257 = vmul.f32 %v2154, %v2154
        %v2258 = vmul.f32 %v2158, %v2158
        %v2259 = vmul.f32 %v2164, %v2164
        %v2260 = vmul.f32 %v2168, %v2168
        %v2261 = vmul.f32 %v2156, %v2156
        %v2262 = vmul.f32 %v2160, %v2160
        %v2263 = vmul.f32 %v2166, %v2166
        %v2264 = vmul.f32 %v2170, %v2170
        %v2265 = vadd.f32 %v2257, %v2261
        %v2266 = vadd.f32 %v2258, %v2262
        %v2267 = vadd.f32 %v2259, %v2263
        %v2268 = vadd.f32 %v2260, %v2264
        %v2269 = vmul.f32 %v2223, %v2223
        %v2270 = vmul.f32 %v2226, %v2226
        %v2271 = vmul.f32 %v2231, %v2231
        %v2272 = vmul.f32 %v2234, %v2234
        %v2273 = vadd.f32 %v2265, %v2269
        %v2274 = vadd.f32 %v2266, %v2270
        %v2275 = vadd.f32 %v2267, %v2271
        %v2276 = vadd.f32 %v2268, %v2272
        %v2277 = vmin.f32 %v2253, 0.0
        %v2278 = vmin.f32 %v2254, 0.0
        %v2279 = vmin.f32 %v2255, 0.0
        %v2280 = vmin.f32 %v2256, 0.0
        %v2281 = vmax.f32 %v2273, 1e-06
        %v2282 = vmax.f32 %v2274, 1e-06
        %v2283 = vmax.f32 %v2275, 1e-06
        %v2284 = vmax.f32 %v2276, 1e-06
        %v2285 = vrcp.pop %v2281
        %v2286 = vrcp.pop %v2282
        %v2287 = vrcp.pop %v2283
        %v2288 = vrcp.pop %v2284
        %v2289 = vmul.f32 %v2277, %v2285
        %v2290 = vmul.f32 %v2278, %v2286
        %v2291 = vmul.f32 %v2279, %v2287
        %v2292 = vmul.f32 %v2280, %v2288
        %v2293 = vmul.f32 %v2289, %v2154
        %v2294 = vmul.f32 %v2290, %v2158
        %v2295 = vmul.f32 %v2291, %v2164
        %v2296 = vmul.f32 %v2292, %v2168
        %v2297 = vsub.f32 %v2134, %v2293
        %v2298 = vsub.f32 %v2138, %v2294
        %v2299 = vsub.f32 %v2144, %v2295
        %v2300 = vsub.f32 %v2148, %v2296
        %v2301 = vmul.f32 %v2289, %v2156
        %v2302 = vmul.f32 %v2290, %v2160
        %v2303 = vmul.f32 %v2291, %v2166
        %v2304 = vmul.f32 %v2292, %v2170
        %v2305 = vsub.f32 %v2136, %v2301
        %v2306 = vsub.f32 %v2140, %v2302
        %v2307 = vsub.f32 %v2146, %v2303
        %v2308 = vsub.f32 %v2150, %v2304
        %v2309 = vmul.f32 %v2289, %v2223
        %v2310 = vmul.f32 %v2290, %v2226
        %v2311 = vmul.f32 %v2291, %v2231
        %v2312 = vmul.f32 %v2292, %v2234
        %v2313 = vsub.f32 %v2207, %v2309
        %v2314 = vsub.f32 %v2210, %v2310
        %v2315 = vsub.f32 %v2215, %v2311
        %v2316 = vsub.f32 %v2218, %v2312
        %v2317 = vpack.c.bf16 %v2298, %v2297
        %v2318 = vpack.c.bf16 %v2306, %v2305
        %v2319 = vpack.c.bf16 %v2314, %v2313
        %v2320 = vpack.c.bf16 %v2300, %v2299
        %v2321 = vpack.c.bf16 %v2308, %v2307
        %v2322 = vpack.c.bf16 %v2316, %v2315
        %v2323 = vld [vmem:[%s1] sm:$0xff]
        %v2324 = vld [vmem:[%s1 + $0x8] sm:$0xf]
        %v2325 = vld [vmem:[%s1 + $0xc] sm:$0xff]
        %v2326 = vld [vmem:[%s1 + $0x14] sm:$0xf]
        %v2327 = vld [vmem:[%s1 + $0x18] sm:$0xff]
        %v2328 = vld [vmem:[%s1 + $0x20] sm:$0xf]
        %v2329 = vld [vmem:[%s1 + $0x24] sm:$0xff]
        %v2330 = vld [vmem:[%s1 + $0x2c] sm:$0xf]
        %v2331 = vld [vmem:[%s1 + $0x30] sm:$0xff]
        %v2332 = vld [vmem:[%s1 + $0x38] sm:$0xf]
        %v2333 = vld [vmem:[%s1 + $0x3c] sm:$0xff]
        %v2334 = vld [vmem:[%s1 + $0x44] sm:$0xf]
        %v2335 = vld [vmem:[%s1 + $0x48] sm:$0xff]
        %v2336 = vld [vmem:[%s1 + $0x50] sm:$0xf]
        %v2337 = vld [vmem:[%s1 + $0x54] sm:$0xff]
        %v2338 = vld [vmem:[%s1 + $0x5c] sm:$0xf]
        %v2339 = vld [vmem:[%s1 + $0x60] sm:$0xff]
        %v2340 = vld [vmem:[%s1 + $0x68] sm:$0xf]
        %v2341 = vld [vmem:[%s1 + $0x6c] sm:$0xff]
        %v2342 = vld [vmem:[%s1 + $0x74] sm:$0xf]
        %v2343 = vld [vmem:[%s1 + $0x78] sm:$0xff]
        %v2344 = vld [vmem:[%s1 + $0x80] sm:$0xf]
        %v2345 = vld [vmem:[%s1 + $0x84] sm:$0xff]
        %v2346 = vld [vmem:[%s1 + $0x8c] sm:$0xf]
        %v2347 = vld [vmem:[%s1 + $0x90] sm:$0xff]
        %v2348 = vld [vmem:[%s1 + $0x98] sm:$0xf]
        %v2349 = vld [vmem:[%s1 + $0x9c] sm:$0xff]
        %v2350 = vld [vmem:[%s1 + $0xa4] sm:$0xf]
        %v2351 = vld [vmem:[%s1 + $0xa8] sm:$0xff]
        %v2352 = vld [vmem:[%s1 + $0xb0] sm:$0xf]
        %v2353 = vld [vmem:[%s1 + $0xb4] sm:$0xff]
        %v2354 = vld [vmem:[%s1 + $0xbc] sm:$0xf]
        %v2355 = vld [vmem:[%s1 + $0xc0] sm:$0xff]
        %v2356 = vld [vmem:[%s1 + $0xc8] sm:$0xf]
        %v2357 = vld [vmem:[%s1 + $0xcc] sm:$0xff]
        %v2358 = vld [vmem:[%s1 + $0xd4] sm:$0xf]
        %v2359 = vld [vmem:[%s1 + $0xd8] sm:$0xff]
        %v2360 = vld [vmem:[%s1 + $0xe0] sm:$0xf]
        %v2361 = vld [vmem:[%s1 + $0xe4] sm:$0xff]
        %v2362 = vld [vmem:[%s1 + $0xec] sm:$0xf]
        %v2363 = vld [vmem:[%s1 + $0xf0] sm:$0xff]
        %v2364 = vld [vmem:[%s1 + $0xf8] sm:$0xf]
        %v2365 = vld [vmem:[%s1 + $0xfc] sm:$0xff]
        %v2366 = vld [vmem:[%s1 + $0x104] sm:$0xf]
        %v2367 = vld [vmem:[%s1 + $0x108] sm:$0xff]
        %v2368 = vld [vmem:[%s1 + $0x110] sm:$0xf]
        %v2369 = vld [vmem:[%s1 + $0x114] sm:$0xff]
        %v2370 = vld [vmem:[%s1 + $0x11c] sm:$0xf]
        %v2371 = vld [vmem:[%s1 + $0x120] sm:$0xff]
        %v2372 = vld [vmem:[%s1 + $0x128] sm:$0xf]
        %v2373 = vld [vmem:[%s1 + $0x12c] sm:$0xff]
        %v2374 = vld [vmem:[%s1 + $0x134] sm:$0xf]
        %v2375 = vld [vmem:[%s1 + $0x138] sm:$0xff]
        %v2376 = vld [vmem:[%s1 + $0x140] sm:$0xf]
        %v2377 = vld [vmem:[%s1 + $0x144] sm:$0xff]
        %v2378 = vld [vmem:[%s1 + $0x14c] sm:$0xf]
        %v2379 = vld [vmem:[%s1 + $0x150] sm:$0xff]
        %v2380 = vld [vmem:[%s1 + $0x158] sm:$0xf]
        %v2381 = vld [vmem:[%s1 + $0x15c] sm:$0xff]
        %v2382 = vld [vmem:[%s1 + $0x164] sm:$0xf]
        %v2383 = vld [vmem:[%s1 + $0x168] sm:$0xff]
        %v2384 = vld [vmem:[%s1 + $0x170] sm:$0xf]
        %v2385 = vld [vmem:[%s1 + $0x174] sm:$0xff]
        %v2386 = vld [vmem:[%s1 + $0x17c] sm:$0xf]
        %v2387 = vld [vmem:[%s1 + $0x180] sm:$0xff]
        %v2388 = vld [vmem:[%s1 + $0x188] sm:$0xf]
        %v2389 = vld [vmem:[%s1 + $0x18c] sm:$0xff]
        %v2390 = vld [vmem:[%s1 + $0x194] sm:$0xf]
        %v2391 = vld [vmem:[%s1 + $0x198] sm:$0xff]
        %v2392 = vld [vmem:[%s1 + $0x1a0] sm:$0xf]
        %v2393 = vld [vmem:[%s1 + $0x1a4] sm:$0xff]
        %v2394 = vld [vmem:[%s1 + $0x1ac] sm:$0xf]
        %v2395 = vld [vmem:[%s1 + $0x1b0] sm:$0xff]
        %v2396 = vld [vmem:[%s1 + $0x1b8] sm:$0xf]
        %v2397 = vld [vmem:[%s1 + $0x1bc] sm:$0xff]
        %v2398 = vld [vmem:[%s1 + $0x1c4] sm:$0xf]
        %v2399 = vld [vmem:[%s1 + $0x1c8] sm:$0xff]
        %v2400 = vld [vmem:[%s1 + $0x1d0] sm:$0xf]
        %v2401 = vld [vmem:[%s1 + $0x1d4] sm:$0xff]
        %v2402 = vld [vmem:[%s1 + $0x1dc] sm:$0xf]
        %v2403 = vld [vmem:[%s1 + $0x1e0] sm:$0xff]
        %v2404 = vld [vmem:[%s1 + $0x1e8] sm:$0xf]
        %v2405 = vld [vmem:[%s1 + $0x1ec] sm:$0xff]
        %v2406 = vld [vmem:[%s1 + $0x1f4] sm:$0xf]
        %v2407 = vld [vmem:[%s1 + $0x1f8] sm:$0xff]
        %v2408 = vld [vmem:[%s1 + $0x200] sm:$0xf]
        %v2409 = vld [vmem:[%s1 + $0x204] sm:$0xff]
        %v2410 = vld [vmem:[%s1 + $0x20c] sm:$0xf]
        %v2411 = vld [vmem:[%s1 + $0x210] sm:$0xff]
        %v2412 = vld [vmem:[%s1 + $0x218] sm:$0xf]
        %v2413 = vld [vmem:[%s1 + $0x21c] sm:$0xff]
        %v2414 = vld [vmem:[%s1 + $0x224] sm:$0xf]
        %v2415 = vld [vmem:[%s1 + $0x228] sm:$0xff]
        %v2416 = vld [vmem:[%s1 + $0x230] sm:$0xf]
        %v2417 = vld [vmem:[%s1 + $0x234] sm:$0xff]
        %v2418 = vld [vmem:[%s1 + $0x23c] sm:$0xf]
        %v2515 = vunpack.c.l.b16 %v2323
        %v2516 = vunpack.c.h.b16 %v2323
        %v2517 = vunpack.c.l.b16 %v2324
        %v2518 = vunpack.c.l.b16 %v2325
        %v2519 = vunpack.c.h.b16 %v2325
        %v2520 = vunpack.c.l.b16 %v2326
        %v2521 = vunpack.c.l.b16 %v2327
        %v2522 = vunpack.c.h.b16 %v2327
        %v2523 = vunpack.c.l.b16 %v2328
        %v2524 = vunpack.c.l.b16 %v2329
        %v2525 = vunpack.c.h.b16 %v2329
        %v2526 = vunpack.c.l.b16 %v2330
        %v2527 = vunpack.c.l.b16 %v2331
        %v2528 = vunpack.c.h.b16 %v2331
        %v2529 = vunpack.c.l.b16 %v2332
        %v2530 = vunpack.c.l.b16 %v2333
        %v2531 = vunpack.c.h.b16 %v2333
        %v2532 = vunpack.c.l.b16 %v2334
        %v2533 = vunpack.c.l.b16 %v2335
        %v2534 = vunpack.c.h.b16 %v2335
        %v2535 = vunpack.c.l.b16 %v2336
        %v2536 = vunpack.c.l.b16 %v2337
        %v2537 = vunpack.c.h.b16 %v2337
        %v2538 = vunpack.c.l.b16 %v2338
        %v2539 = vunpack.c.l.b16 %v2339
        %v2540 = vunpack.c.h.b16 %v2339
        %v2541 = vunpack.c.l.b16 %v2340
        %v2542 = vunpack.c.l.b16 %v2341
        %v2543 = vunpack.c.h.b16 %v2341
        %v2544 = vunpack.c.l.b16 %v2342
        %v2545 = vunpack.c.l.b16 %v2343
        %v2546 = vunpack.c.h.b16 %v2343
        %v2547 = vunpack.c.l.b16 %v2344
        %v2548 = vunpack.c.l.b16 %v2345
        %v2549 = vunpack.c.h.b16 %v2345
        %v2550 = vunpack.c.l.b16 %v2346
        %v2551 = vunpack.c.l.b16 %v2347
        %v2552 = vunpack.c.h.b16 %v2347
        %v2553 = vunpack.c.l.b16 %v2348
        %v2554 = vunpack.c.l.b16 %v2349
        %v2555 = vunpack.c.h.b16 %v2349
        %v2556 = vunpack.c.l.b16 %v2350
        %v2557 = vunpack.c.l.b16 %v2351
        %v2558 = vunpack.c.h.b16 %v2351
        %v2559 = vunpack.c.l.b16 %v2352
        %v2560 = vunpack.c.l.b16 %v2353
        %v2561 = vunpack.c.h.b16 %v2353
        %v2562 = vunpack.c.l.b16 %v2354
        %v2563 = vunpack.c.l.b16 %v2355
        %v2564 = vunpack.c.h.b16 %v2355
        %v2565 = vunpack.c.l.b16 %v2356
        %v2566 = vunpack.c.l.b16 %v2357
        %v2567 = vunpack.c.h.b16 %v2357
        %v2568 = vunpack.c.l.b16 %v2358
        %v2569 = vunpack.c.l.b16 %v2359
        %v2570 = vunpack.c.h.b16 %v2359
        %v2571 = vunpack.c.l.b16 %v2360
        %v2572 = vunpack.c.l.b16 %v2361
        %v2573 = vunpack.c.h.b16 %v2361
        %v2574 = vunpack.c.l.b16 %v2362
        %v2575 = vunpack.c.l.b16 %v2363
        %v2576 = vunpack.c.h.b16 %v2363
        %v2577 = vunpack.c.l.b16 %v2364
        %v2578 = vunpack.c.l.b16 %v2365
        %v2579 = vunpack.c.h.b16 %v2365
        %v2580 = vunpack.c.l.b16 %v2366
        %v2581 = vunpack.c.l.b16 %v2367
        %v2582 = vunpack.c.h.b16 %v2367
        %v2583 = vunpack.c.l.b16 %v2368
        %v2584 = vunpack.c.l.b16 %v2369
        %v2585 = vunpack.c.h.b16 %v2369
        %v2586 = vunpack.c.l.b16 %v2370
        %v2587 = vunpack.c.l.b16 %v2371
        %v2588 = vunpack.c.h.b16 %v2371
        %v2589 = vunpack.c.l.b16 %v2372
        %v2590 = vunpack.c.l.b16 %v2373
        %v2591 = vunpack.c.h.b16 %v2373
        %v2592 = vunpack.c.l.b16 %v2374
        %v2593 = vunpack.c.l.b16 %v2375
        %v2594 = vunpack.c.h.b16 %v2375
        %v2595 = vunpack.c.l.b16 %v2376
        %v2596 = vunpack.c.l.b16 %v2377
        %v2597 = vunpack.c.h.b16 %v2377
        %v2598 = vunpack.c.l.b16 %v2378
        %v2599 = vunpack.c.l.b16 %v2379
        %v2600 = vunpack.c.h.b16 %v2379
        %v2601 = vunpack.c.l.b16 %v2380
        %v2602 = vunpack.c.l.b16 %v2381
        %v2603 = vunpack.c.h.b16 %v2381
        %v2604 = vunpack.c.l.b16 %v2382
        %v2605 = vunpack.c.l.b16 %v2383
        %v2606 = vunpack.c.h.b16 %v2383
        %v2607 = vunpack.c.l.b16 %v2384
        %v2608 = vunpack.c.l.b16 %v2385
        %v2609 = vunpack.c.h.b16 %v2385
        %v2610 = vunpack.c.l.b16 %v2386
        %v2611 = vunpack.c.l.b16 %v2387
        %v2612 = vunpack.c.h.b16 %v2387
        %v2613 = vunpack.c.l.b16 %v2388
        %v2614 = vunpack.c.l.b16 %v2389
        %v2615 = vunpack.c.h.b16 %v2389
        %v2616 = vunpack.c.l.b16 %v2390
        %v2617 = vunpack.c.l.b16 %v2391
        %v2618 = vunpack.c.h.b16 %v2391
        %v2619 = vunpack.c.l.b16 %v2392
        %v2620 = vunpack.c.l.b16 %v2393
        %v2621 = vunpack.c.h.b16 %v2393
        %v2622 = vunpack.c.l.b16 %v2394
        %v2623 = vunpack.c.l.b16 %v2395
        %v2624 = vunpack.c.h.b16 %v2395
        %v2625 = vunpack.c.l.b16 %v2396
        %v2626 = vunpack.c.l.b16 %v2397
        %v2627 = vunpack.c.h.b16 %v2397
        %v2628 = vunpack.c.l.b16 %v2398
        %v2629 = vunpack.c.l.b16 %v2399
        %v2630 = vunpack.c.h.b16 %v2399
        %v2631 = vunpack.c.l.b16 %v2400
        %v2632 = vunpack.c.l.b16 %v2401
        %v2633 = vunpack.c.h.b16 %v2401
        %v2634 = vunpack.c.l.b16 %v2402
        %v2635 = vunpack.c.l.b16 %v2403
        %v2636 = vunpack.c.h.b16 %v2403
        %v2637 = vunpack.c.l.b16 %v2404
        %v2638 = vunpack.c.l.b16 %v2405
        %v2639 = vunpack.c.h.b16 %v2405
        %v2640 = vunpack.c.l.b16 %v2406
        %v2641 = vunpack.c.l.b16 %v2407
        %v2642 = vunpack.c.h.b16 %v2407
        %v2643 = vunpack.c.l.b16 %v2408
        %v2644 = vunpack.c.l.b16 %v2409
        %v2645 = vunpack.c.h.b16 %v2409
        %v2646 = vunpack.c.l.b16 %v2410
        %v2647 = vunpack.c.l.b16 %v2411
        %v2648 = vunpack.c.h.b16 %v2411
        %v2649 = vunpack.c.l.b16 %v2412
        %v2650 = vunpack.c.l.b16 %v2413
        %v2651 = vunpack.c.h.b16 %v2413
        %v2652 = vunpack.c.l.b16 %v2414
        %v2653 = vunpack.c.l.b16 %v2415
        %v2654 = vunpack.c.h.b16 %v2415
        %v2655 = vunpack.c.l.b16 %v2416
        %v2656 = vunpack.c.l.b16 %v2417
        %v2657 = vunpack.c.h.b16 %v2417
        %v2658 = vunpack.c.l.b16 %v2418
        %v2659 = vpack.c.b16 %v2518, %v2515
        %v2660 = vpack.c.b16 %v2519, %v2516
        %v2661 = vpack.c.b16 %v2520, %v2517
        %v2662 = vpack.c.b16 %v2524, %v2521
        %v2663 = vpack.c.b16 %v2525, %v2522
        %v2664 = vpack.c.b16 %v2526, %v2523
        %v2665 = vpack.c.b16 %v2530, %v2527
        %v2666 = vpack.c.b16 %v2531, %v2528
        %v2667 = vpack.c.b16 %v2532, %v2529
        %v2668 = vpack.c.b16 %v2536, %v2533
        %v2669 = vpack.c.b16 %v2537, %v2534
        %v2670 = vpack.c.b16 %v2538, %v2535
        %v2671 = vpack.c.b16 %v2542, %v2539
        %v2672 = vpack.c.b16 %v2543, %v2540
        %v2673 = vpack.c.b16 %v2544, %v2541
        %v2674 = vpack.c.b16 %v2548, %v2545
        %v2675 = vpack.c.b16 %v2549, %v2546
        %v2676 = vpack.c.b16 %v2550, %v2547
        %v2677 = vpack.c.b16 %v2554, %v2551
        %v2678 = vpack.c.b16 %v2555, %v2552
        %v2679 = vpack.c.b16 %v2556, %v2553
        %v2680 = vpack.c.b16 %v2560, %v2557
        %v2681 = vpack.c.b16 %v2561, %v2558
        %v2682 = vpack.c.b16 %v2562, %v2559
        %v2683 = vpack.c.b16 %v2566, %v2563
        %v2684 = vpack.c.b16 %v2567, %v2564
        %v2685 = vpack.c.b16 %v2568, %v2565
        %v2686 = vpack.c.b16 %v2572, %v2569
        %v2687 = vpack.c.b16 %v2573, %v2570
        %v2688 = vpack.c.b16 %v2574, %v2571
        %v2689 = vpack.c.b16 %v2578, %v2575
        %v2690 = vpack.c.b16 %v2579, %v2576
        %v2691 = vpack.c.b16 %v2580, %v2577
        %v2692 = vpack.c.b16 %v2584, %v2581
        %v2693 = vpack.c.b16 %v2585, %v2582
        %v2694 = vpack.c.b16 %v2586, %v2583
        %v2695 = vpack.c.b16 %v2590, %v2587
        %v2696 = vpack.c.b16 %v2591, %v2588
        %v2697 = vpack.c.b16 %v2592, %v2589
        %v2698 = vpack.c.b16 %v2596, %v2593
        %v2699 = vpack.c.b16 %v2597, %v2594
        %v2700 = vpack.c.b16 %v2598, %v2595
        %v2701 = vpack.c.b16 %v2602, %v2599
        %v2702 = vpack.c.b16 %v2603, %v2600
        %v2703 = vpack.c.b16 %v2604, %v2601
        %v2704 = vpack.c.b16 %v2608, %v2605
        %v2705 = vpack.c.b16 %v2609, %v2606
        %v2706 = vpack.c.b16 %v2610, %v2607
        %v2707 = vpack.c.b16 %v2614, %v2611
        %v2708 = vpack.c.b16 %v2615, %v2612
        %v2709 = vpack.c.b16 %v2616, %v2613
        %v2710 = vpack.c.b16 %v2620, %v2617
        %v2711 = vpack.c.b16 %v2621, %v2618
        %v2712 = vpack.c.b16 %v2622, %v2619
        %v2713 = vpack.c.b16 %v2626, %v2623
        %v2714 = vpack.c.b16 %v2627, %v2624
        %v2715 = vpack.c.b16 %v2628, %v2625
        %v2716 = vpack.c.b16 %v2632, %v2629
        %v2717 = vpack.c.b16 %v2633, %v2630
        %v2718 = vpack.c.b16 %v2634, %v2631
        %v2719 = vpack.c.b16 %v2638, %v2635
        %v2720 = vpack.c.b16 %v2639, %v2636
        %v2721 = vpack.c.b16 %v2640, %v2637
        %v2722 = vpack.c.b16 %v2644, %v2641
        %v2723 = vpack.c.b16 %v2645, %v2642
        %v2724 = vpack.c.b16 %v2646, %v2643
        %v2725 = vpack.c.b16 %v2650, %v2647
        %v2726 = vpack.c.b16 %v2651, %v2648
        %v2727 = vpack.c.b16 %v2652, %v2649
        %v2728 = vpack.c.b16 %v2656, %v2653
        %v2729 = vpack.c.b16 %v2657, %v2654
        %v2730 = vpack.c.b16 %v2658, %v2655
        %2803 = vmatprep.subr.bf16.mxu0 %v2660
        %2804 = vmatpush1.bf16.msra.mxu0 %v2659
        %2805 = vmatprep.subr.bf16.mxu0 %v2663
        %2806 = vmatpush1.bf16.msra.mxu0 %v2662
        %2807 = vmatprep.subr.bf16.mxu0 %v2666
        %2808 = vmatpush1.bf16.msra.mxu0 %v2665
        %2809 = vmatprep.subr.bf16.mxu0 %v2669
        %2810 = vmatpush1.bf16.msra.mxu0 %v2668
        %2811 = vmatprep.subr.bf16.mxu0 %v2672
        %2812 = vmatpush1.bf16.msra.mxu0 %v2671
        %2813 = vmatprep.subr.bf16.mxu0 %v2675
        %2814 = vmatpush1.bf16.msra.mxu0 %v2674
        %2815 = vmatprep.subr.bf16.mxu0 %v2678
        %2816 = vmatpush1.bf16.msra.mxu0 %v2677
        %2817 = vmatprep.subr.bf16.mxu0 %v2681
        %2818 = vmatpush1.bf16.msra.mxu0 %v2680
        %2819 = vmatprep.subr.bf16.mxu0 %v2684
        %2820 = vmatpush1.bf16.msra.mxu0 %v2683
        %2821 = vmatprep.subr.bf16.mxu0 %v2687
        %2822 = vmatpush1.bf16.msra.mxu0 %v2686
        %2823 = vmatprep.subr.bf16.mxu0 %v2690
        %2824 = vmatpush1.bf16.msra.mxu0 %v2689
        %2825 = vmatprep.subr.bf16.mxu0 %v2693
        %2826 = vmatpush1.bf16.msra.mxu0 %v2692
        %2827 = vmatprep.subr.bf16.mxu0 %v2696
        %2828 = vmatpush1.bf16.msra.mxu0 %v2695
        %2829 = vmatprep.subr.bf16.mxu0 %v2699
        %2830 = vmatpush1.bf16.msra.mxu0 %v2698
        %2831 = vmatprep.subr.bf16.mxu0 %v2702
        %2832 = vmatpush1.bf16.msra.mxu0 %v2701
        %2833 = vmatprep.subr.bf16.mxu0 %v2705
        %2834 = vmatpush1.bf16.msra.mxu0 %v2704
        %2835 = vmatprep.mubr.bf16.mxu0 %v2318
        %2836 = vmatmul.mubr.bf16.gmra.mrb[0].mxu0 %v2317
        %v2837 = vpop.f32.mrb[0].mxu0
        %v2838 = vadd.f32 0.0, %v2837
        %v2839 = vpop.f32.mrb[0].mxu0
        %v2840 = vadd.f32 0.0, %v2839
        %v2841 = vpop.f32.mrb[0].mxu0
        %v2842 = vadd.f32 0.0, %v2841
        %v2843 = vpop.f32.mrb[0].mxu0
        %v2844 = vadd.f32 0.0, %v2843
        %2845 = vmatprep.mubr.bf16.mxu0 %v2321
        %2846 = vmatmul.mubr.bf16.gmra.mrb[0].mxu0 %v2320
        %v2847 = vpop.f32.mrb[0].mxu0
        %v2848 = vadd.f32 0.0, %v2847
        %v2849 = vpop.f32.mrb[0].mxu0
        %v2850 = vadd.f32 0.0, %v2849
        %v2851 = vpop.f32.mrb[0].mxu0
        %v2852 = vadd.f32 0.0, %v2851
        %v2853 = vpop.f32.mrb[0].mxu0
        %v2854 = vadd.f32 0.0, %v2853
        %2855 = vdwg.mxu0
        %2856 = vmatprep.subr.bf16.mxu0 %v2708
        %2857 = vmatpush1.bf16.msra.mxu0 %v2707
        %2858 = vmatprep.subr.bf16.mxu0 %v2711
        %2859 = vmatpush1.bf16.msra.mxu0 %v2710
        %2860 = vmatprep.subr.bf16.mxu0 %v2714
        %2861 = vmatpush1.bf16.msra.mxu0 %v2713
        %2862 = vmatprep.subr.bf16.mxu0 %v2717
        %2863 = vmatpush1.bf16.msra.mxu0 %v2716
        %2864 = vmatprep.subr.bf16.mxu0 %v2720
        %2865 = vmatpush1.bf16.msra.mxu0 %v2719
        %2866 = vmatprep.subr.bf16.mxu0 %v2723
        %2867 = vmatpush1.bf16.msra.mxu0 %v2722
        %2868 = vmatprep.subr.bf16.mxu0 %v2726
        %2869 = vmatpush1.bf16.msra.mxu0 %v2725
        %2870 = vmatprep.subr.bf16.mxu0 %v2729
        %2871 = vmatpush1.bf16.msra.mxu0 %v2728
        %2872 = vmatprep.subr.bf16.mxu0 0
        %2873 = vmatpush1.bf16.msra.mxu0 0
        %2874 = vmatprep.subr.bf16.mxu0 0
        %2875 = vmatpush1.bf16.msra.mxu0 0
        %2876 = vmatprep.subr.bf16.mxu0 0
        %2877 = vmatpush1.bf16.msra.mxu0 0
        %2878 = vmatprep.subr.bf16.mxu0 0
        %2879 = vmatpush1.bf16.msra.mxu0 0
        %2880 = vmatprep.subr.bf16.mxu0 0
        %2881 = vmatpush1.bf16.msra.mxu0 0
        %2882 = vmatprep.subr.bf16.mxu0 0
        %2883 = vmatpush1.bf16.msra.mxu0 0
        %2884 = vmatprep.subr.bf16.mxu0 0
        %2885 = vmatpush1.bf16.msra.mxu0 0
        %2886 = vmatprep.subr.bf16.mxu0 0
        %2887 = vmatpush1.bf16.msra.mxu0 0
        %2888 = vmatprep.mubr.bf16.mxu0 0
        %2889 = vmatmul.mubr.bf16.gmra.mrb[0].mxu0 %v2319
        %v2890 = vpop.f32.mrb[0].mxu0
        %v2891 = vadd.f32 %v2838, %v2890
        %v2892 = vpop.f32.mrb[0].mxu0
        %v2893 = vadd.f32 %v2840, %v2892
        %v2894 = vpop.f32.mrb[0].mxu0
        %v2895 = vadd.f32 %v2842, %v2894
        %v2896 = vpop.f32.mrb[0].mxu0
        %v2897 = vadd.f32 %v2844, %v2896
        %2898 = vmatprep.mubr.bf16.mxu0 0
        %2899 = vmatmul.mubr.bf16.gmra.mrb[0].mxu0 %v2322
        %v2900 = vpop.f32.mrb[0].mxu0
        %v2901 = vadd.f32 %v2848, %v2900
        %v2902 = vpop.f32.mrb[0].mxu0
        %v2903 = vadd.f32 %v2850, %v2902
        %v2904 = vpop.f32.mrb[0].mxu0
        %v2905 = vadd.f32 %v2852, %v2904
        %v2906 = vpop.f32.mrb[0].mxu0
        %v2907 = vadd.f32 %v2854, %v2906
        %2908 = vdwg.mxu0
        %2909 = vmatprep.subr.bf16.mxu0 0
        %2910 = vmatpush1.bf16.msra.mxu0 %v2661
        %2911 = vmatprep.subr.bf16.mxu0 0
        %2912 = vmatpush1.bf16.msra.mxu0 %v2664
        %2913 = vmatprep.subr.bf16.mxu0 0
        %2914 = vmatpush1.bf16.msra.mxu0 %v2667
        %2915 = vmatprep.subr.bf16.mxu0 0
        %2916 = vmatpush1.bf16.msra.mxu0 %v2670
        %2917 = vmatprep.subr.bf16.mxu0 0
        %2918 = vmatpush1.bf16.msra.mxu0 %v2673
        %2919 = vmatprep.subr.bf16.mxu0 0
        %2920 = vmatpush1.bf16.msra.mxu0 %v2676
        %2921 = vmatprep.subr.bf16.mxu0 0
        %2922 = vmatpush1.bf16.msra.mxu0 %v2679
        %2923 = vmatprep.subr.bf16.mxu0 0
        %2924 = vmatpush1.bf16.msra.mxu0 %v2682
        %2925 = vmatprep.subr.bf16.mxu0 0
        %2926 = vmatpush1.bf16.msra.mxu0 %v2685
        %2927 = vmatprep.subr.bf16.mxu0 0
        %2928 = vmatpush1.bf16.msra.mxu0 %v2688
        %2929 = vmatprep.subr.bf16.mxu0 0
        %2930 = vmatpush1.bf16.msra.mxu0 %v2691
        %2931 = vmatprep.subr.bf16.mxu0 0
        %2932 = vmatpush1.bf16.msra.mxu0 %v2694
        %2933 = vmatprep.subr.bf16.mxu0 0
        %2934 = vmatpush1.bf16.msra.mxu0 %v2697
        %2935 = vmatprep.subr.bf16.mxu0 0
        %2936 = vmatpush1.bf16.msra.mxu0 %v2700
        %2937 = vmatprep.subr.bf16.mxu0 0
        %2938 = vmatpush1.bf16.msra.mxu0 %v2703
        %2939 = vmatprep.subr.bf16.mxu0 0
        %2940 = vmatpush1.bf16.msra.mxu0 %v2706
        %2941 = vmatprep.mubr.bf16.mxu0 %v2318
        %2942 = vmatmul.mubr.bf16.gmra.mrb[0].mxu0 %v2317
        %v2943 = vpop.f32.mrb[0].mxu0
        %v2944 = vadd.f32 0.0, %v2943
        %v2945 = vpop.f32.mrb[0].mxu0
        %v2946 = vpop.f32.mrb[0].mxu0
        %v2947 = vadd.f32 0.0, %v2946
        %v2948 = vpop.f32.mrb[0].mxu0
        %2949 = vmatprep.mubr.bf16.mxu0 %v2321
        %2950 = vmatmul.mubr.bf16.gmra.mrb[0].mxu0 %v2320
        %v2951 = vpop.f32.mrb[0].mxu0
        %v2952 = vadd.f32 0.0, %v2951
        %v2953 = vpop.f32.mrb[0].mxu0
        %v2954 = vpop.f32.mrb[0].mxu0
        %v2955 = vadd.f32 0.0, %v2954
        %v2956 = vpop.f32.mrb[0].mxu0
        %2957 = vdwg.mxu0
        %2958 = vmatprep.subr.bf16.mxu0 0
        %2959 = vmatpush1.bf16.msra.mxu0 %v2709
        %2960 = vmatprep.subr.bf16.mxu0 0
        %2961 = vmatpush1.bf16.msra.mxu0 %v2712
        %2962 = vmatprep.subr.bf16.mxu0 0
        %2963 = vmatpush1.bf16.msra.mxu0 %v2715
        %2964 = vmatprep.subr.bf16.mxu0 0
        %2965 = vmatpush1.bf16.msra.mxu0 %v2718
        %2966 = vmatprep.subr.bf16.mxu0 0
        %2967 = vmatpush1.bf16.msra.mxu0 %v2721
        %2968 = vmatprep.subr.bf16.mxu0 0
        %2969 = vmatpush1.bf16.msra.mxu0 %v2724
        %2970 = vmatprep.subr.bf16.mxu0 0
        %2971 = vmatpush1.bf16.msra.mxu0 %v2727
        %2972 = vmatprep.subr.bf16.mxu0 0
        %2973 = vmatpush1.bf16.msra.mxu0 %v2730
        %2974 = vmatprep.subr.bf16.mxu0 0
        %2975 = vmatpush1.bf16.msra.mxu0 0
        %2976 = vmatprep.subr.bf16.mxu0 0
        %2977 = vmatpush1.bf16.msra.mxu0 0
        %2978 = vmatprep.subr.bf16.mxu0 0
        %2979 = vmatpush1.bf16.msra.mxu0 0
        %2980 = vmatprep.subr.bf16.mxu0 0
        %2981 = vmatpush1.bf16.msra.mxu0 0
        %2982 = vmatprep.subr.bf16.mxu0 0
        %2983 = vmatpush1.bf16.msra.mxu0 0
        %2984 = vmatprep.subr.bf16.mxu0 0
        %2985 = vmatpush1.bf16.msra.mxu0 0
        %2986 = vmatprep.subr.bf16.mxu0 0
        %2987 = vmatpush1.bf16.msra.mxu0 0
        %2988 = vmatprep.subr.bf16.mxu0 0
        %2989 = vmatpush1.bf16.msra.mxu0 0
        %2990 = vmatprep.mubr.bf16.mxu0 0
        %2991 = vmatmul.mubr.bf16.gmra.mrb[0].mxu0 %v2319
        %v2992 = vpop.f32.mrb[0].mxu0
        %v2993 = vadd.f32 %v2944, %v2992
        %v2994 = vpop.f32.mrb[0].mxu0
        %v2995 = vpop.f32.mrb[0].mxu0
        %v2996 = vadd.f32 %v2947, %v2995
        %v2997 = vpop.f32.mrb[0].mxu0
        %2998 = vmatprep.mubr.bf16.mxu0 0
        %2999 = vmatmul.mubr.bf16.gmra.mrb[0].mxu0 %v2322
        %v3000 = vpop.f32.mrb[0].mxu0
        %v3001 = vadd.f32 %v2952, %v3000
        %v3002 = vpop.f32.mrb[0].mxu0
        %v3003 = vpop.f32.mrb[0].mxu0
        %v3004 = vadd.f32 %v2955, %v3003
        %v3005 = vpop.f32.mrb[0].mxu0
        %3006 = vdwg.mxu0
        %v3007 = vld [vmem:[%s4] sm:$0xf]
        %v3008 = vld [vmem:[%s4 + $0x4] sm:$0xf]
        %v3009 = vld [vmem:[%s4 + $0x8] sm:$0xf]
        %v3010 = vld [vmem:[%s4 + $0xc] sm:$0xf]
        %v3011 = vld [vmem:[%s4 + $0x10] sm:$0xf]
        %v3012 = vld [vmem:[%s4 + $0x14] sm:$0xf]
        %v3013 = vld [vmem:[%s4 + $0x18] sm:$0xf]
        %v3014 = vld [vmem:[%s4 + $0x1c] sm:$0xf]
        %v3015 = vld [vmem:[%s5] sm:$0xf]
        %v3016 = vld [vmem:[%s5 + $0x4] sm:$0xf]
        %v3017 = vld [vmem:[%s5 + $0x8] sm:$0xf]
        %v3018 = vld [vmem:[%s5 + $0xc] sm:$0xf]
        %v3019 = vld [vmem:[%s5 + $0x10] sm:$0xf]
        %v3020 = vld [vmem:[%s5 + $0x14] sm:$0xf]
        %v3021 = vld [vmem:[%s5 + $0x18] sm:$0xf]
        %v3022 = vld [vmem:[%s5 + $0x1c] sm:$0xf]
        %v3023 = vpack.c.bf16 %v2895, %v2891
        %v3024 = vpack.c.bf16 %v2897, %v2893
        %v3025 = vpack.c.bf16 %v2996, %v2993
        %v3026 = vpack.c.bf16 %v2905, %v2901
        %v3027 = vpack.c.bf16 %v2907, %v2903
        %v3028 = vpack.c.bf16 %v3004, %v3001
        %v3037 = vunpack.c.l.b16 %v3015
        %v3038 = vunpack.c.l.b16 %v3016
        %v3039 = vunpack.c.l.b16 %v3017
        %v3040 = vunpack.c.l.b16 %v3018
        %v3041 = vunpack.c.l.b16 %v3019
        %v3042 = vunpack.c.l.b16 %v3020
        %v3043 = vunpack.c.l.b16 %v3021
        %v3044 = vunpack.c.l.b16 %v3022
        %v3045 = vpack.c.b16 %v3038, %v3037
        %v3046 = vpack.c.b16 %v3040, %v3039
        %v3047 = vpack.c.b16 %v3042, %v3041
        %v3048 = vpack.c.b16 %v3044, %v3043
        %v3050 = vsel %vm2086, %v3045, 0
        %v3053 = vsel %vm2086, %v3046, 0
        %v3056 = vsel %vm2086, %v3047, 0
        %v3059 = vsel %vm2086, %v3048, 0
        %3061 = vmatprep.subr.bf16.mxu0 %v3024
        %3062 = vmatpush1.bf16.msra.mxu0 %v3023
        %3063 = vmatprep.subr.bf16.mxu0 %v3027
        %3064 = vmatpush1.bf16.msra.mxu0 %v3026
        %3065 = vmatprep.subr.bf16.mxu0 0
        %3066 = vmatpush1.bf16.msra.mxu0 0
        %3067 = vmatprep.subr.bf16.mxu0 0
        %3068 = vmatpush1.bf16.msra.mxu0 0
        %3069 = vmatprep.subr.bf16.mxu0 0
        %3070 = vmatpush1.bf16.msra.mxu0 0
        %3071 = vmatprep.subr.bf16.mxu0 0
        %3072 = vmatpush1.bf16.msra.mxu0 0
        %3073 = vmatprep.subr.bf16.mxu0 0
        %3074 = vmatpush1.bf16.msra.mxu0 0
        %3075 = vmatprep.subr.bf16.mxu0 0
        %3076 = vmatpush1.bf16.msra.mxu0 0
        %3077 = vmatprep.subr.bf16.mxu0 0
        %3078 = vmatpush1.bf16.msra.mxu0 0
        %3079 = vmatprep.subr.bf16.mxu0 0
        %3080 = vmatpush1.bf16.msra.mxu0 0
        %3081 = vmatprep.subr.bf16.mxu0 0
        %3082 = vmatpush1.bf16.msra.mxu0 0
        %3083 = vmatprep.subr.bf16.mxu0 0
        %3084 = vmatpush1.bf16.msra.mxu0 0
        %3085 = vmatprep.subr.bf16.mxu0 0
        %3086 = vmatpush1.bf16.msra.mxu0 0
        %3087 = vmatprep.subr.bf16.mxu0 0
        %3088 = vmatpush1.bf16.msra.mxu0 0
        %3089 = vmatprep.subr.bf16.mxu0 0
        %3090 = vmatpush1.bf16.msra.mxu0 0
        %3091 = vmatprep.subr.bf16.mxu0 0
        %3092 = vmatpush1.bf16.msra.mxu0 0
        %3093 = vmatprep.mubr.bf16.mxu0 0
        %3094 = vmatmul.mubr.bf16.gmra.mrb[0].mxu0 %v3050
        %v3095 = vpop.f32.mrb[0].mxu0
        %v3096 = vadd.f32 0.0, %v3095
        %v3097 = vpop.f32.mrb[0].mxu0
        %v3098 = vadd.f32 0.0, %v3097
        %v3099 = vpop.f32.mrb[0].mxu0
        %v3100 = vadd.f32 0.0, %v3099
        %v3101 = vpop.f32.mrb[0].mxu0
        %v3102 = vadd.f32 0.0, %v3101
        %3103 = vmatprep.mubr.bf16.mxu0 0
        %3104 = vmatmul.mubr.bf16.gmra.mrb[0].mxu0 %v3053
        %v3105 = vpop.f32.mrb[0].mxu0
        %v3106 = vadd.f32 0.0, %v3105
        %v3107 = vpop.f32.mrb[0].mxu0
        %v3108 = vadd.f32 0.0, %v3107
        %v3109 = vpop.f32.mrb[0].mxu0
        %v3110 = vadd.f32 0.0, %v3109
        %v3111 = vpop.f32.mrb[0].mxu0
        %v3112 = vadd.f32 0.0, %v3111
        %3113 = vmatprep.mubr.bf16.mxu0 0
        %3114 = vmatmul.mubr.bf16.gmra.mrb[0].mxu0 %v3056
        %v3115 = vpop.f32.mrb[0].mxu0
        %v3116 = vadd.f32 0.0, %v3115
        %v3117 = vpop.f32.mrb[0].mxu0
        %v3118 = vadd.f32 0.0, %v3117
        %v3119 = vpop.f32.mrb[0].mxu0
        %v3120 = vadd.f32 0.0, %v3119
        %v3121 = vpop.f32.mrb[0].mxu0
        %v3122 = vadd.f32 0.0, %v3121
        %3123 = vmatprep.mubr.bf16.mxu0 0
        %3124 = vmatmul.mubr.bf16.gmra.mrb[0].mxu0 %v3059
        %v3125 = vpop.f32.mrb[0].mxu0
        %v3126 = vadd.f32 0.0, %v3125
        %v3127 = vpop.f32.mrb[0].mxu0
        %v3128 = vadd.f32 0.0, %v3127
        %v3129 = vpop.f32.mrb[0].mxu0
        %v3130 = vadd.f32 0.0, %v3129
        %v3131 = vpop.f32.mrb[0].mxu0
        %v3132 = vadd.f32 0.0, %v3131
        %3133 = vdwg.mxu0
        %3134 = vmatprep.subr.bf16.mxu0 0
        %3135 = vmatpush1.bf16.msra.mxu0 %v3025
        %3136 = vmatprep.subr.bf16.mxu0 0
        %3137 = vmatpush1.bf16.msra.mxu0 %v3028
        %3138 = vmatprep.subr.bf16.mxu0 0
        %3139 = vmatpush1.bf16.msra.mxu0 0
        %3140 = vmatprep.subr.bf16.mxu0 0
        %3141 = vmatpush1.bf16.msra.mxu0 0
        %3142 = vmatprep.subr.bf16.mxu0 0
        %3143 = vmatpush1.bf16.msra.mxu0 0
        %3144 = vmatprep.subr.bf16.mxu0 0
        %3145 = vmatpush1.bf16.msra.mxu0 0
        %3146 = vmatprep.subr.bf16.mxu0 0
        %3147 = vmatpush1.bf16.msra.mxu0 0
        %3148 = vmatprep.subr.bf16.mxu0 0
        %3149 = vmatpush1.bf16.msra.mxu0 0
        %3150 = vmatprep.subr.bf16.mxu0 0
        %3151 = vmatpush1.bf16.msra.mxu0 0
        %3152 = vmatprep.subr.bf16.mxu0 0
        %3153 = vmatpush1.bf16.msra.mxu0 0
        %3154 = vmatprep.subr.bf16.mxu0 0
        %3155 = vmatpush1.bf16.msra.mxu0 0
        %3156 = vmatprep.subr.bf16.mxu0 0
        %3157 = vmatpush1.bf16.msra.mxu0 0
        %3158 = vmatprep.subr.bf16.mxu0 0
        %3159 = vmatpush1.bf16.msra.mxu0 0
        %3160 = vmatprep.subr.bf16.mxu0 0
        %3161 = vmatpush1.bf16.msra.mxu0 0
        %3162 = vmatprep.subr.bf16.mxu0 0
        %3163 = vmatpush1.bf16.msra.mxu0 0
        %3164 = vmatprep.subr.bf16.mxu0 0
        %3165 = vmatpush1.bf16.msra.mxu0 0
        %3166 = vmatprep.mubr.bf16.mxu0 0
        %3167 = vmatmul.mubr.bf16.gmra.mrb[0].mxu0 %v3050
        %v3168 = vpop.f32.mrb[0].mxu0
        %v3169 = vadd.f32 0.0, %v3168
        %v3170 = vpop.f32.mrb[0].mxu0
        %v3171 = vpop.f32.mrb[0].mxu0
        %v3172 = vadd.f32 0.0, %v3171
        %v3173 = vpop.f32.mrb[0].mxu0
        %3174 = vmatprep.mubr.bf16.mxu0 0
        %3175 = vmatmul.mubr.bf16.gmra.mrb[0].mxu0 %v3053
        %v3176 = vpop.f32.mrb[0].mxu0
        %v3177 = vadd.f32 0.0, %v3176
        %v3178 = vpop.f32.mrb[0].mxu0
        %v3179 = vpop.f32.mrb[0].mxu0
        %v3180 = vadd.f32 0.0, %v3179
        %v3181 = vpop.f32.mrb[0].mxu0
        %3182 = vmatprep.mubr.bf16.mxu0 0
        %3183 = vmatmul.mubr.bf16.gmra.mrb[0].mxu0 %v3056
        %v3184 = vpop.f32.mrb[0].mxu0
        %v3185 = vadd.f32 0.0, %v3184
        %v3186 = vpop.f32.mrb[0].mxu0
        %v3187 = vpop.f32.mrb[0].mxu0
        %v3188 = vadd.f32 0.0, %v3187
        %v3189 = vpop.f32.mrb[0].mxu0
        %3190 = vmatprep.mubr.bf16.mxu0 0
        %3191 = vmatmul.mubr.bf16.gmra.mrb[0].mxu0 %v3059
        %v3192 = vpop.f32.mrb[0].mxu0
        %v3193 = vadd.f32 0.0, %v3192
        %v3194 = vpop.f32.mrb[0].mxu0
        %v3195 = vpop.f32.mrb[0].mxu0
        %v3196 = vadd.f32 0.0, %v3195
        %v3197 = vpop.f32.mrb[0].mxu0
        %3198 = vdwg.mxu0
        %v3199 = vmul.f32 %v3096, 0.015625
        %v3200 = vmul.f32 %v3098, 0.015625
        %v3201 = vmul.f32 %v3169, 0.015625
        %v3202 = vmul.f32 %v3100, 0.015625
        %v3203 = vmul.f32 %v3102, 0.015625
        %v3204 = vmul.f32 %v3172, 0.015625
        %v3205 = vmul.f32 %v3106, 0.015625
        %v3206 = vmul.f32 %v3108, 0.015625
        %v3207 = vmul.f32 %v3177, 0.015625
        %v3208 = vmul.f32 %v3110, 0.015625
        %v3209 = vmul.f32 %v3112, 0.015625
        %v3210 = vmul.f32 %v3180, 0.015625
        %v3211 = vmul.f32 %v3116, 0.015625
        %v3212 = vmul.f32 %v3118, 0.015625
        %v3213 = vmul.f32 %v3185, 0.015625
        %v3214 = vmul.f32 %v3120, 0.015625
        %v3215 = vmul.f32 %v3122, 0.015625
        %v3216 = vmul.f32 %v3188, 0.015625
        %v3217 = vmul.f32 %v3126, 0.015625
        %v3218 = vmul.f32 %v3128, 0.015625
        %v3219 = vmul.f32 %v3193, 0.015625
        %v3220 = vmul.f32 %v3130, 0.015625
        %v3221 = vmul.f32 %v3132, 0.015625
        %v3222 = vmul.f32 %v3196, 0.015625
        %v3231 = vunpack.c.l.b16 %v3007
        %v3232 = vunpack.c.l.b16 %v3008
        %v3233 = vunpack.c.l.b16 %v3009
        %v3234 = vunpack.c.l.b16 %v3010
        %v3235 = vunpack.c.l.b16 %v3011
        %v3236 = vunpack.c.l.b16 %v3012
        %v3237 = vunpack.c.l.b16 %v3013
        %v3238 = vunpack.c.l.b16 %v3014
        %v3239 = vpack.c.b16 %v3232, %v3231
        %v3240 = vpack.c.b16 %v3234, %v3233
        %v3241 = vpack.c.b16 %v3236, %v3235
        %v3242 = vpack.c.b16 %v3238, %v3237
        %v3244 = vsel %vm2086, %v3239, 0
        %v3247 = vsel %vm2086, %v3240, 0
        %v3250 = vsel %vm2086, %v3241, 0
        %v3253 = vsel %vm2086, %v3242, 0
        %3255 = vmatprep.subr.bf16.mxu0 %v2318
        %3256 = vmatpush1.bf16.msra.mxu0 %v2317
        %3257 = vmatprep.subr.bf16.mxu0 %v2321
        %3258 = vmatpush1.bf16.msra.mxu0 %v2320
        %3259 = vmatprep.subr.bf16.mxu0 0
        %3260 = vmatpush1.bf16.msra.mxu0 0
        %3261 = vmatprep.subr.bf16.mxu0 0
        %3262 = vmatpush1.bf16.msra.mxu0 0
        %3263 = vmatprep.subr.bf16.mxu0 0
        %3264 = vmatpush1.bf16.msra.mxu0 0
        %3265 = vmatprep.subr.bf16.mxu0 0
        %3266 = vmatpush1.bf16.msra.mxu0 0
        %3267 = vmatprep.subr.bf16.mxu0 0
        %3268 = vmatpush1.bf16.msra.mxu0 0
        %3269 = vmatprep.subr.bf16.mxu0 0
        %3270 = vmatpush1.bf16.msra.mxu0 0
        %3271 = vmatprep.subr.bf16.mxu0 0
        %3272 = vmatpush1.bf16.msra.mxu0 0
        %3273 = vmatprep.subr.bf16.mxu0 0
        %3274 = vmatpush1.bf16.msra.mxu0 0
        %3275 = vmatprep.subr.bf16.mxu0 0
        %3276 = vmatpush1.bf16.msra.mxu0 0
        %3277 = vmatprep.subr.bf16.mxu0 0
        %3278 = vmatpush1.bf16.msra.mxu0 0
        %3279 = vmatprep.subr.bf16.mxu0 0
        %3280 = vmatpush1.bf16.msra.mxu0 0
        %3281 = vmatprep.subr.bf16.mxu0 0
        %3282 = vmatpush1.bf16.msra.mxu0 0
        %3283 = vmatprep.subr.bf16.mxu0 0
        %3284 = vmatpush1.bf16.msra.mxu0 0
        %3285 = vmatprep.subr.bf16.mxu0 0
        %3286 = vmatpush1.bf16.msra.mxu0 0
        %3287 = vmatprep.mubr.bf16.mxu0 0
        %3288 = vmatmul.mubr.bf16.gmra.mrb[0].mxu0 %v3244
        %v3289 = vpop.f32.mrb[0].mxu0
        %v3290 = vadd.f32 %v3199, %v3289
        %v3291 = vpop.f32.mrb[0].mxu0
        %v3292 = vadd.f32 %v3200, %v3291
        %v3293 = vpop.f32.mrb[0].mxu0
        %v3294 = vadd.f32 %v3202, %v3293
        %v3295 = vpop.f32.mrb[0].mxu0
        %v3296 = vadd.f32 %v3203, %v3295
        %3297 = vmatprep.mubr.bf16.mxu0 0
        %3298 = vmatmul.mubr.bf16.gmra.mrb[0].mxu0 %v3247
        %v3299 = vpop.f32.mrb[0].mxu0
        %v3300 = vadd.f32 %v3205, %v3299
        %v3301 = vpop.f32.mrb[0].mxu0
        %v3302 = vadd.f32 %v3206, %v3301
        %v3303 = vpop.f32.mrb[0].mxu0
        %v3304 = vadd.f32 %v3208, %v3303
        %v3305 = vpop.f32.mrb[0].mxu0
        %v3306 = vadd.f32 %v3209, %v3305
        %3307 = vmatprep.mubr.bf16.mxu0 0
        %3308 = vmatmul.mubr.bf16.gmra.mrb[0].mxu0 %v3250
        %v3309 = vpop.f32.mrb[0].mxu0
        %v3310 = vadd.f32 %v3211, %v3309
        %v3311 = vpop.f32.mrb[0].mxu0
        %v3312 = vadd.f32 %v3212, %v3311
        %v3313 = vpop.f32.mrb[0].mxu0
        %v3314 = vadd.f32 %v3214, %v3313
        %v3315 = vpop.f32.mrb[0].mxu0
        %v3316 = vadd.f32 %v3215, %v3315
        %3317 = vmatprep.mubr.bf16.mxu0 0
        %3318 = vmatmul.mubr.bf16.gmra.mrb[0].mxu0 %v3253
        %v3319 = vpop.f32.mrb[0].mxu0
        %v3320 = vadd.f32 %v3217, %v3319
        %v3321 = vpop.f32.mrb[0].mxu0
        %v3322 = vadd.f32 %v3218, %v3321
        %v3323 = vpop.f32.mrb[0].mxu0
        %v3324 = vadd.f32 %v3220, %v3323
        %v3325 = vpop.f32.mrb[0].mxu0
        %v3326 = vadd.f32 %v3221, %v3325
        %3327 = vdwg.mxu0
        %3328 = vmatprep.subr.bf16.mxu0 0
        %3329 = vmatpush1.bf16.msra.mxu0 %v2319
        %3330 = vmatprep.subr.bf16.mxu0 0
        %3331 = vmatpush1.bf16.msra.mxu0 %v2322
        %3332 = vmatprep.subr.bf16.mxu0 0
        %3333 = vmatpush1.bf16.msra.mxu0 0
        %3334 = vmatprep.subr.bf16.mxu0 0
        %3335 = vmatpush1.bf16.msra.mxu0 0
        %3336 = vmatprep.subr.bf16.mxu0 0
        %3337 = vmatpush1.bf16.msra.mxu0 0
        %3338 = vmatprep.subr.bf16.mxu0 0
        %3339 = vmatpush1.bf16.msra.mxu0 0
        %3340 = vmatprep.subr.bf16.mxu0 0
        %3341 = vmatpush1.bf16.msra.mxu0 0
        %3342 = vmatprep.subr.bf16.mxu0 0
        %3343 = vmatpush1.bf16.msra.mxu0 0
        %3344 = vmatprep.subr.bf16.mxu0 0
        %3345 = vmatpush1.bf16.msra.mxu0 0
        %3346 = vmatprep.subr.bf16.mxu0 0
        %3347 = vmatpush1.bf16.msra.mxu0 0
        %3348 = vmatprep.subr.bf16.mxu0 0
        %3349 = vmatpush1.bf16.msra.mxu0 0
        %3350 = vmatprep.subr.bf16.mxu0 0
        %3351 = vmatpush1.bf16.msra.mxu0 0
        %3352 = vmatprep.subr.bf16.mxu0 0
        %3353 = vmatpush1.bf16.msra.mxu0 0
        %3354 = vmatprep.subr.bf16.mxu0 0
        %3355 = vmatpush1.bf16.msra.mxu0 0
        %3356 = vmatprep.subr.bf16.mxu0 0
        %3357 = vmatpush1.bf16.msra.mxu0 0
        %3358 = vmatprep.subr.bf16.mxu0 0
        %3359 = vmatpush1.bf16.msra.mxu0 0
        %3360 = vmatprep.mubr.bf16.mxu0 0
        %3361 = vmatmul.mubr.bf16.gmra.mrb[0].mxu0 %v3244
        %v3362 = vpop.f32.mrb[0].mxu0
        %v3363 = vadd.f32 %v3201, %v3362
        %v3364 = vpop.f32.mrb[0].mxu0
        %v3365 = vpop.f32.mrb[0].mxu0
        %v3366 = vadd.f32 %v3204, %v3365
        %v3367 = vpop.f32.mrb[0].mxu0
        %3368 = vmatprep.mubr.bf16.mxu0 0
        %3369 = vmatmul.mubr.bf16.gmra.mrb[0].mxu0 %v3247
        %v3370 = vpop.f32.mrb[0].mxu0
        %v3371 = vadd.f32 %v3207, %v3370
        %v3372 = vpop.f32.mrb[0].mxu0
        %v3373 = vpop.f32.mrb[0].mxu0
        %v3374 = vadd.f32 %v3210, %v3373
        %v3375 = vpop.f32.mrb[0].mxu0
        %3376 = vmatprep.mubr.bf16.mxu0 0
        %3377 = vmatmul.mubr.bf16.gmra.mrb[0].mxu0 %v3250
        %v3378 = vpop.f32.mrb[0].mxu0
        %v3379 = vadd.f32 %v3213, %v3378
        %v3380 = vpop.f32.mrb[0].mxu0
        %v3381 = vpop.f32.mrb[0].mxu0
        %v3382 = vadd.f32 %v3216, %v3381
        %v3383 = vpop.f32.mrb[0].mxu0
        %3384 = vmatprep.mubr.bf16.mxu0 0
        %3385 = vmatmul.mubr.bf16.gmra.mrb[0].mxu0 %v3253
        %v3386 = vpop.f32.mrb[0].mxu0
        %v3387 = vadd.f32 %v3219, %v3386
        %v3388 = vpop.f32.mrb[0].mxu0
        %v3389 = vpop.f32.mrb[0].mxu0
        %v3390 = vadd.f32 %v3222, %v3389
        %v3391 = vpop.f32.mrb[0].mxu0
        %3392 = vdwg.mxu0
        %v3393 = vmul.f32 %v3290, %v3310
        %v3394 = vmul.f32 %v3294, %v3314
        %v3395 = vmul.f32 %v3300, %v3320
        %v3396 = vmul.f32 %v3304, %v3324
        %v3397 = vmul.f32 %v3292, %v3312
        %v3398 = vmul.f32 %v3296, %v3316
        %v3399 = vmul.f32 %v3302, %v3322
        %v3400 = vmul.f32 %v3306, %v3326
        %v3401 = vadd.f32 %v3393, %v3397
        %v3402 = vadd.f32 %v3394, %v3398
        %v3403 = vadd.f32 %v3395, %v3399
        %v3404 = vadd.f32 %v3396, %v3400
        %v3405 = vmul.f32 %v3363, %v3379
        %v3406 = vmul.f32 %v3366, %v3382
        %v3407 = vmul.f32 %v3371, %v3387
        %v3408 = vmul.f32 %v3374, %v3390
        %v3409 = vadd.f32 %v3401, %v3405
        %v3410 = vadd.f32 %v3402, %v3406
        %v3411 = vadd.f32 %v3403, %v3407
        %v3412 = vadd.f32 %v3404, %v3408
        %v3413 = vmul.f32 %v3310, %v3310
        %v3414 = vmul.f32 %v3314, %v3314
        %v3415 = vmul.f32 %v3320, %v3320
        %v3416 = vmul.f32 %v3324, %v3324
        %v3417 = vmul.f32 %v3312, %v3312
        %v3418 = vmul.f32 %v3316, %v3316
        %v3419 = vmul.f32 %v3322, %v3322
        %v3420 = vmul.f32 %v3326, %v3326
        %v3421 = vadd.f32 %v3413, %v3417
        %v3422 = vadd.f32 %v3414, %v3418
        %v3423 = vadd.f32 %v3415, %v3419
        %v3424 = vadd.f32 %v3416, %v3420
        %v3425 = vmul.f32 %v3379, %v3379
        %v3426 = vmul.f32 %v3382, %v3382
        %v3427 = vmul.f32 %v3387, %v3387
        %v3428 = vmul.f32 %v3390, %v3390
        %v3429 = vadd.f32 %v3421, %v3425
        %v3430 = vadd.f32 %v3422, %v3426
        %v3431 = vadd.f32 %v3423, %v3427
        %v3432 = vadd.f32 %v3424, %v3428
        %v3433 = vmin.f32 %v3409, 0.0
        %v3434 = vmin.f32 %v3410, 0.0
        %v3435 = vmin.f32 %v3411, 0.0
        %v3436 = vmin.f32 %v3412, 0.0
        %v3437 = vmax.f32 %v3429, 1e-06
        %v3438 = vmax.f32 %v3430, 1e-06
        %v3439 = vmax.f32 %v3431, 1e-06
        %v3440 = vmax.f32 %v3432, 1e-06
        %v3441 = vrcp.pop %v3437
        %v3442 = vrcp.pop %v3438
        %v3443 = vrcp.pop %v3439
        %v3444 = vrcp.pop %v3440
        %v3445 = vmul.f32 %v3433, %v3441
        %v3446 = vmul.f32 %v3434, %v3442
        %v3447 = vmul.f32 %v3435, %v3443
        %v3448 = vmul.f32 %v3436, %v3444
        %v3449 = vmul.f32 %v3445, %v3310
        %v3450 = vmul.f32 %v3446, %v3314
        %v3451 = vmul.f32 %v3447, %v3320
        %v3452 = vmul.f32 %v3448, %v3324
        %v3453 = vsub.f32 %v3290, %v3449
        %v3454 = vsub.f32 %v3294, %v3450
        %v3455 = vsub.f32 %v3300, %v3451
        %v3456 = vsub.f32 %v3304, %v3452
        %v3457 = vmul.f32 %v3445, %v3312
        %v3458 = vmul.f32 %v3446, %v3316
        %v3459 = vmul.f32 %v3447, %v3322
        %v3460 = vmul.f32 %v3448, %v3326
        %v3461 = vsub.f32 %v3292, %v3457
        %v3462 = vsub.f32 %v3296, %v3458
        %v3463 = vsub.f32 %v3302, %v3459
        %v3464 = vsub.f32 %v3306, %v3460
        %v3465 = vmul.f32 %v3445, %v3379
        %v3466 = vmul.f32 %v3446, %v3382
        %v3467 = vmul.f32 %v3447, %v3387
        %v3468 = vmul.f32 %v3448, %v3390
        %v3469 = vsub.f32 %v3363, %v3465
        %v3470 = vsub.f32 %v3366, %v3466
        %v3471 = vsub.f32 %v3371, %v3467
        %v3472 = vsub.f32 %v3374, %v3468
        %v3473 = vld [vmem:[#allocation5] sm:$0xf]
        %v3474 = vld [vmem:[#allocation5 + $0x4] sm:$0xf]
        %v3475 = vld [vmem:[#allocation5 + $0x8] sm:$0xf]
        %v3476 = vld [vmem:[#allocation5 + $0xc] sm:$0xf]
        %v3477 = vpack.c.bf16 %v3454, %v3453
        %v3478 = vpack.c.bf16 %v3462, %v3461
        %v3479 = vpack.c.bf16 %v3470, %v3469
        %v3480 = vpack.c.bf16 %v3456, %v3455
        %v3481 = vpack.c.bf16 %v3464, %v3463
        %v3482 = vpack.c.bf16 %v3472, %v3471
        %s3483 = scalar_lea.vmem %s3, 32
        %v3484 = vld [vmem:[%s3483] sm:$0xf]
        %v3485 = vld [vmem:[%s3483 + $0x4] sm:$0xf]
        %v3486 = vld [vmem:[%s3483 + $0x8] sm:$0xf]
        %v3487 = vld [vmem:[%s3483 + $0xc] sm:$0xf]
        %v3488 = vld [vmem:[%s3483 + $0x10] sm:$0xf]
        %v3489 = vld [vmem:[%s3483 + $0x14] sm:$0xf]
        %v3490 = vld [vmem:[%s3483 + $0x18] sm:$0xf]
        %v3491 = vld [vmem:[%s3483 + $0x1c] sm:$0xf]
        %v3500 = vunpack.c.l.b16 %v3484
        %v3501 = vunpack.c.l.b16 %v3485
        %v3502 = vunpack.c.l.b16 %v3486
        %v3503 = vunpack.c.l.b16 %v3487
        %v3504 = vunpack.c.l.b16 %v3488
        %v3505 = vunpack.c.l.b16 %v3489
        %v3506 = vunpack.c.l.b16 %v3490
        %v3507 = vunpack.c.l.b16 %v3491
        %v3508 = vpack.c.b16 %v3501, %v3500
        %v3509 = vpack.c.b16 %v3503, %v3502
        %v3510 = vpack.c.b16 %v3505, %v3504
        %v3511 = vpack.c.b16 %v3507, %v3506
        %v3513 = vsel %vm2086, %v3508, 0
        %v3516 = vsel %vm2086, %v3509, 0
        %v3519 = vsel %vm2086, %v3510, 0
        %v3522 = vsel %vm2086, %v3511, 0
        %3524 = vmatprep.subr.bf16.mxu0 %v3478
        %3525 = vmatpush1.bf16.msra.mxu0 %v3477
        %3526 = vmatprep.subr.bf16.mxu0 %v3481
        %3527 = vmatpush1.bf16.msra.mxu0 %v3480
        %3528 = vmatprep.subr.bf16.mxu0 0
        %3529 = vmatpush1.bf16.msra.mxu0 0
        %3530 = vmatprep.subr.bf16.mxu0 0
        %3531 = vmatpush1.bf16.msra.mxu0 0
        %3532 = vmatprep.subr.bf16.mxu0 0
        %3533 = vmatpush1.bf16.msra.mxu0 0
        %3534 = vmatprep.subr.bf16.mxu0 0
        %3535 = vmatpush1.bf16.msra.mxu0 0
        %3536 = vmatprep.subr.bf16.mxu0 0
        %3537 = vmatpush1.bf16.msra.mxu0 0
        %3538 = vmatprep.subr.bf16.mxu0 0
        %3539 = vmatpush1.bf16.msra.mxu0 0
        %3540 = vmatprep.subr.bf16.mxu0 0
        %3541 = vmatpush1.bf16.msra.mxu0 0
        %3542 = vmatprep.subr.bf16.mxu0 0
        %3543 = vmatpush1.bf16.msra.mxu0 0
        %3544 = vmatprep.subr.bf16.mxu0 0
        %3545 = vmatpush1.bf16.msra.mxu0 0
        %3546 = vmatprep.subr.bf16.mxu0 0
        %3547 = vmatpush1.bf16.msra.mxu0 0
        %3548 = vmatprep.subr.bf16.mxu0 0
        %3549 = vmatpush1.bf16.msra.mxu0 0
        %3550 = vmatprep.subr.bf16.mxu0 0
        %3551 = vmatpush1.bf16.msra.mxu0 0
        %3552 = vmatprep.subr.bf16.mxu0 0
        %3553 = vmatpush1.bf16.msra.mxu0 0
        %3554 = vmatprep.subr.bf16.mxu0 0
        %3555 = vmatpush1.bf16.msra.mxu0 0
        %3556 = vmatprep.mubr.bf16.mxu0 0
        %3557 = vmatmul.mubr.bf16.gmra.mrb[0].mxu0 %v3513
        %v3558 = vpop.f32.mrb[0].mxu0
        %v3559 = vadd.f32 0.0, %v3558
        %v3560 = vpop.f32.mrb[0].mxu0
        %v3561 = vadd.f32 0.0, %v3560
        %v3562 = vpop.f32.mrb[0].mxu0
        %v3563 = vadd.f32 0.0, %v3562
        %v3564 = vpop.f32.mrb[0].mxu0
        %v3565 = vadd.f32 0.0, %v3564
        %3566 = vmatprep.mubr.bf16.mxu0 0
        %3567 = vmatmul.mubr.bf16.gmra.mrb[0].mxu0 %v3516
        %v3568 = vpop.f32.mrb[0].mxu0
        %v3569 = vadd.f32 0.0, %v3568
        %v3570 = vpop.f32.mrb[0].mxu0
        %v3571 = vadd.f32 0.0, %v3570
        %v3572 = vpop.f32.mrb[0].mxu0
        %v3573 = vadd.f32 0.0, %v3572
        %v3574 = vpop.f32.mrb[0].mxu0
        %v3575 = vadd.f32 0.0, %v3574
        %3576 = vmatprep.mubr.bf16.mxu0 0
        %3577 = vmatmul.mubr.bf16.gmra.mrb[0].mxu0 %v3519
        %v3578 = vpop.f32.mrb[0].mxu0
        %v3579 = vadd.f32 0.0, %v3578
        %v3580 = vpop.f32.mrb[0].mxu0
        %v3581 = vadd.f32 0.0, %v3580
        %v3582 = vpop.f32.mrb[0].mxu0
        %v3583 = vadd.f32 0.0, %v3582
        %v3584 = vpop.f32.mrb[0].mxu0
        %v3585 = vadd.f32 0.0, %v3584
        %3586 = vmatprep.mubr.bf16.mxu0 0
        %3587 = vmatmul.mubr.bf16.gmra.mrb[0].mxu0 %v3522
        %v3588 = vpop.f32.mrb[0].mxu0
        %v3589 = vadd.f32 0.0, %v3588
        %v3590 = vpop.f32.mrb[0].mxu0
        %v3591 = vadd.f32 0.0, %v3590
        %v3592 = vpop.f32.mrb[0].mxu0
        %v3593 = vadd.f32 0.0, %v3592
        %v3594 = vpop.f32.mrb[0].mxu0
        %v3595 = vadd.f32 0.0, %v3594
        %3596 = vdwg.mxu0
        %3597 = vmatprep.subr.bf16.mxu0 0
        %3598 = vmatpush1.bf16.msra.mxu0 %v3479
        %3599 = vmatprep.subr.bf16.mxu0 0
        %3600 = vmatpush1.bf16.msra.mxu0 %v3482
        %3601 = vmatprep.subr.bf16.mxu0 0
        %3602 = vmatpush1.bf16.msra.mxu0 0
        %3603 = vmatprep.subr.bf16.mxu0 0
        %3604 = vmatpush1.bf16.msra.mxu0 0
        %3605 = vmatprep.subr.bf16.mxu0 0
        %3606 = vmatpush1.bf16.msra.mxu0 0
        %3607 = vmatprep.subr.bf16.mxu0 0
        %3608 = vmatpush1.bf16.msra.mxu0 0
        %3609 = vmatprep.subr.bf16.mxu0 0
        %3610 = vmatpush1.bf16.msra.mxu0 0
        %3611 = vmatprep.subr.bf16.mxu0 0
        %3612 = vmatpush1.bf16.msra.mxu0 0
        %3613 = vmatprep.subr.bf16.mxu0 0
        %3614 = vmatpush1.bf16.msra.mxu0 0
        %3615 = vmatprep.subr.bf16.mxu0 0
        %3616 = vmatpush1.bf16.msra.mxu0 0
        %3617 = vmatprep.subr.bf16.mxu0 0
        %3618 = vmatpush1.bf16.msra.mxu0 0
        %3619 = vmatprep.subr.bf16.mxu0 0
        %3620 = vmatpush1.bf16.msra.mxu0 0
        %3621 = vmatprep.subr.bf16.mxu0 0
        %3622 = vmatpush1.bf16.msra.mxu0 0
        %3623 = vmatprep.subr.bf16.mxu0 0
        %3624 = vmatpush1.bf16.msra.mxu0 0
        %3625 = vmatprep.subr.bf16.mxu0 0
        %3626 = vmatpush1.bf16.msra.mxu0 0
        %3627 = vmatprep.subr.bf16.mxu0 0
        %3628 = vmatpush1.bf16.msra.mxu0 0
        %3629 = vmatprep.mubr.bf16.mxu0 0
        %3630 = vmatmul.mubr.bf16.gmra.mrb[0].mxu0 %v3513
        %v3631 = vpop.f32.mrb[0].mxu0
        %v3632 = vadd.f32 0.0, %v3631
        %v3633 = vpop.f32.mrb[0].mxu0
        %v3634 = vpop.f32.mrb[0].mxu0
        %v3635 = vadd.f32 0.0, %v3634
        %v3636 = vpop.f32.mrb[0].mxu0
        %3637 = vmatprep.mubr.bf16.mxu0 0
        %3638 = vmatmul.mubr.bf16.gmra.mrb[0].mxu0 %v3516
        %v3639 = vpop.f32.mrb[0].mxu0
        %v3640 = vadd.f32 0.0, %v3639
        %v3641 = vpop.f32.mrb[0].mxu0
        %v3642 = vpop.f32.mrb[0].mxu0
        %v3643 = vadd.f32 0.0, %v3642
        %v3644 = vpop.f32.mrb[0].mxu0
        %3645 = vmatprep.mubr.bf16.mxu0 0
        %3646 = vmatmul.mubr.bf16.gmra.mrb[0].mxu0 %v3519
        %v3647 = vpop.f32.mrb[0].mxu0
        %v3648 = vadd.f32 0.0, %v3647
        %v3649 = vpop.f32.mrb[0].mxu0
        %v3650 = vpop.f32.mrb[0].mxu0
        %v3651 = vadd.f32 0.0, %v3650
        %v3652 = vpop.f32.mrb[0].mxu0
        %3653 = vmatprep.mubr.bf16.mxu0 0
        %3654 = vmatmul.mubr.bf16.gmra.mrb[0].mxu0 %v3522
        %v3655 = vpop.f32.mrb[0].mxu0
        %v3656 = vadd.f32 0.0, %v3655
        %v3657 = vpop.f32.mrb[0].mxu0
        %v3658 = vpop.f32.mrb[0].mxu0
        %v3659 = vadd.f32 0.0, %v3658
        %v3660 = vpop.f32.mrb[0].mxu0
        %3661 = vdwg.mxu0
        %v3662 = vmul.f32 %v3559, %v3579
        %v3663 = vmul.f32 %v3563, %v3583
        %v3664 = vmul.f32 %v3569, %v3589
        %v3665 = vmul.f32 %v3573, %v3593
        %v3666 = vmul.f32 %v3561, %v3581
        %v3667 = vmul.f32 %v3565, %v3585
        %v3668 = vmul.f32 %v3571, %v3591
        %v3669 = vmul.f32 %v3575, %v3595
        %v3670 = vadd.f32 %v3662, %v3666
        %v3671 = vadd.f32 %v3663, %v3667
        %v3672 = vadd.f32 %v3664, %v3668
        %v3673 = vadd.f32 %v3665, %v3669
        %v3674 = vmul.f32 %v3632, %v3648
        %v3675 = vmul.f32 %v3635, %v3651
        %v3676 = vmul.f32 %v3640, %v3656
        %v3677 = vmul.f32 %v3643, %v3659
        %v3678 = vadd.f32 %v3670, %v3674
        %v3679 = vadd.f32 %v3671, %v3675
        %v3680 = vadd.f32 %v3672, %v3676
        %v3681 = vadd.f32 %v3673, %v3677
        %v3682 = vmul.f32 %v3579, %v3579
        %v3683 = vmul.f32 %v3583, %v3583
        %v3684 = vmul.f32 %v3589, %v3589
        %v3685 = vmul.f32 %v3593, %v3593
        %v3686 = vmul.f32 %v3581, %v3581
        %v3687 = vmul.f32 %v3585, %v3585
        %v3688 = vmul.f32 %v3591, %v3591
        %v3689 = vmul.f32 %v3595, %v3595
        %v3690 = vadd.f32 %v3682, %v3686
        %v3691 = vadd.f32 %v3683, %v3687
        %v3692 = vadd.f32 %v3684, %v3688
        %v3693 = vadd.f32 %v3685, %v3689
        %v3694 = vmul.f32 %v3648, %v3648
        %v3695 = vmul.f32 %v3651, %v3651
        %v3696 = vmul.f32 %v3656, %v3656
        %v3697 = vmul.f32 %v3659, %v3659
        %v3698 = vadd.f32 %v3690, %v3694
        %v3699 = vadd.f32 %v3691, %v3695
        %v3700 = vadd.f32 %v3692, %v3696
        %v3701 = vadd.f32 %v3693, %v3697
        %v3702 = vmin.f32 %v3678, 0.0
        %v3703 = vmin.f32 %v3679, 0.0
        %v3704 = vmin.f32 %v3680, 0.0
        %v3705 = vmin.f32 %v3681, 0.0
        %v3706 = vmax.f32 %v3698, 1e-06
        %v3707 = vmax.f32 %v3699, 1e-06
        %v3708 = vmax.f32 %v3700, 1e-06
        %v3709 = vmax.f32 %v3701, 1e-06
        %v3710 = vrcp.pop %v3706
        %v3711 = vrcp.pop %v3707
        %v3712 = vrcp.pop %v3708
        %v3713 = vrcp.pop %v3709
        %v3714 = vmul.f32 %v3702, %v3710
        %v3715 = vmul.f32 %v3703, %v3711
        %v3716 = vmul.f32 %v3704, %v3712
        %v3717 = vmul.f32 %v3705, %v3713
        %v3718 = vmul.f32 %v3714, %v3579
        %v3719 = vmul.f32 %v3715, %v3583
        %v3720 = vmul.f32 %v3716, %v3589
        %v3721 = vmul.f32 %v3717, %v3593
        %v3722 = vsub.f32 %v3559, %v3718
        %v3723 = vsub.f32 %v3563, %v3719
        %v3724 = vsub.f32 %v3569, %v3720
        %v3725 = vsub.f32 %v3573, %v3721
        %v3726 = vmul.f32 %v3714, %v3581
        %v3727 = vmul.f32 %v3715, %v3585
        %v3728 = vmul.f32 %v3716, %v3591
        %v3729 = vmul.f32 %v3717, %v3595
        %v3730 = vsub.f32 %v3561, %v3726
        %v3731 = vsub.f32 %v3565, %v3727
        %v3732 = vsub.f32 %v3571, %v3728
        %v3733 = vsub.f32 %v3575, %v3729
        %v3734 = vmul.f32 %v3714, %v3648
        %v3735 = vmul.f32 %v3715, %v3651
        %v3736 = vmul.f32 %v3716, %v3656
        %v3737 = vmul.f32 %v3717, %v3659
        %v3738 = vsub.f32 %v3632, %v3734
        %v3739 = vsub.f32 %v3635, %v3735
        %v3740 = vsub.f32 %v3640, %v3736
        %v3741 = vsub.f32 %v3643, %v3737
        %v3742 = vpack.c.bf16 %v3723, %v3722
        %v3743 = vpack.c.bf16 %v3731, %v3730
        %v3744 = vpack.c.bf16 %v3739, %v3738
        %v3745 = vpack.c.bf16 %v3725, %v3724
        %v3746 = vpack.c.bf16 %v3733, %v3732
        %v3747 = vpack.c.bf16 %v3741, %v3740
        %3748 = vmatprep.subr.bf16.mxu0 %v2660
        %3749 = vmatpush1.bf16.msra.mxu0 %v2659
        %3750 = vmatprep.subr.bf16.mxu0 %v2663
        %3751 = vmatpush1.bf16.msra.mxu0 %v2662
        %3752 = vmatprep.subr.bf16.mxu0 %v2666
        %3753 = vmatpush1.bf16.msra.mxu0 %v2665
        %3754 = vmatprep.subr.bf16.mxu0 %v2669
        %3755 = vmatpush1.bf16.msra.mxu0 %v2668
        %3756 = vmatprep.subr.bf16.mxu0 %v2672
        %3757 = vmatpush1.bf16.msra.mxu0 %v2671
        %3758 = vmatprep.subr.bf16.mxu0 %v2675
        %3759 = vmatpush1.bf16.msra.mxu0 %v2674
        %3760 = vmatprep.subr.bf16.mxu0 %v2678
        %3761 = vmatpush1.bf16.msra.mxu0 %v2677
        %3762 = vmatprep.subr.bf16.mxu0 %v2681
        %3763 = vmatpush1.bf16.msra.mxu0 %v2680
        %3764 = vmatprep.subr.bf16.mxu0 %v2684
        %3765 = vmatpush1.bf16.msra.mxu0 %v2683
        %3766 = vmatprep.subr.bf16.mxu0 %v2687
        %3767 = vmatpush1.bf16.msra.mxu0 %v2686
        %3768 = vmatprep.subr.bf16.mxu0 %v2690
        %3769 = vmatpush1.bf16.msra.mxu0 %v2689
        %3770 = vmatprep.subr.bf16.mxu0 %v2693
        %3771 = vmatpush1.bf16.msra.mxu0 %v2692
        %3772 = vmatprep.subr.bf16.mxu0 %v2696
        %3773 = vmatpush1.bf16.msra.mxu0 %v2695
        %3774 = vmatprep.subr.bf16.mxu0 %v2699
        %3775 = vmatpush1.bf16.msra.mxu0 %v2698
        %3776 = vmatprep.subr.bf16.mxu0 %v2702
        %3777 = vmatpush1.bf16.msra.mxu0 %v2701
        %3778 = vmatprep.subr.bf16.mxu0 %v2705
        %3779 = vmatpush1.bf16.msra.mxu0 %v2704
        %3780 = vmatprep.mubr.bf16.mxu0 %v3743
        %3781 = vmatmul.mubr.bf16.gmra.mrb[0].mxu0 %v3742
        %v3782 = vpop.f32.mrb[0].mxu0
        %v3783 = vadd.f32 0.0, %v3782
        %v3784 = vpop.f32.mrb[0].mxu0
        %v3785 = vadd.f32 0.0, %v3784
        %v3786 = vpop.f32.mrb[0].mxu0
        %v3787 = vadd.f32 0.0, %v3786
        %v3788 = vpop.f32.mrb[0].mxu0
        %v3789 = vadd.f32 0.0, %v3788
        %3790 = vmatprep.mubr.bf16.mxu0 %v3746
        %3791 = vmatmul.mubr.bf16.gmra.mrb[0].mxu0 %v3745
        %v3792 = vpop.f32.mrb[0].mxu0
        %v3793 = vadd.f32 0.0, %v3792
        %v3794 = vpop.f32.mrb[0].mxu0
        %v3795 = vadd.f32 0.0, %v3794
        %v3796 = vpop.f32.mrb[0].mxu0
        %v3797 = vadd.f32 0.0, %v3796
        %v3798 = vpop.f32.mrb[0].mxu0
        %v3799 = vadd.f32 0.0, %v3798
        %3800 = vdwg.mxu0
        %3801 = vmatprep.subr.bf16.mxu0 %v2708
        %3802 = vmatpush1.bf16.msra.mxu0 %v2707
        %3803 = vmatprep.subr.bf16.mxu0 %v2711
        %3804 = vmatpush1.bf16.msra.mxu0 %v2710
        %3805 = vmatprep.subr.bf16.mxu0 %v2714
        %3806 = vmatpush1.bf16.msra.mxu0 %v2713
        %3807 = vmatprep.subr.bf16.mxu0 %v2717
        %3808 = vmatpush1.bf16.msra.mxu0 %v2716
        %3809 = vmatprep.subr.bf16.mxu0 %v2720
        %3810 = vmatpush1.bf16.msra.mxu0 %v2719
        %3811 = vmatprep.subr.bf16.mxu0 %v2723
        %3812 = vmatpush1.bf16.msra.mxu0 %v2722
        %3813 = vmatprep.subr.bf16.mxu0 %v2726
        %3814 = vmatpush1.bf16.msra.mxu0 %v2725
        %3815 = vmatprep.subr.bf16.mxu0 %v2729
        %3816 = vmatpush1.bf16.msra.mxu0 %v2728
        %3817 = vmatprep.subr.bf16.mxu0 0
        %3818 = vmatpush1.bf16.msra.mxu0 0
        %3819 = vmatprep.subr.bf16.mxu0 0
        %3820 = vmatpush1.bf16.msra.mxu0 0
        %3821 = vmatprep.subr.bf16.mxu0 0
        %3822 = vmatpush1.bf16.msra.mxu0 0
        %3823 = vmatprep.subr.bf16.mxu0 0
        %3824 = vmatpush1.bf16.msra.mxu0 0
        %3825 = vmatprep.subr.bf16.mxu0 0
        %3826 = vmatpush1.bf16.msra.mxu0 0
        %3827 = vmatprep.subr.bf16.mxu0 0
        %3828 = vmatpush1.bf16.msra.mxu0 0
        %3829 = vmatprep.subr.bf16.mxu0 0
        %3830 = vmatpush1.bf16.msra.mxu0 0
        %3831 = vmatprep.subr.bf16.mxu0 0
        %3832 = vmatpush1.bf16.msra.mxu0 0
        %3833 = vmatprep.mubr.bf16.mxu0 0
        %3834 = vmatmul.mubr.bf16.gmra.mrb[0].mxu0 %v3744
        %v3835 = vpop.f32.mrb[0].mxu0
        %v3836 = vadd.f32 %v3783, %v3835
        %v3837 = vpop.f32.mrb[0].mxu0
        %v3838 = vadd.f32 %v3785, %v3837
        %v3839 = vpop.f32.mrb[0].mxu0
        %v3840 = vadd.f32 %v3787, %v3839
        %v3841 = vpop.f32.mrb[0].mxu0
        %v3842 = vadd.f32 %v3789, %v3841
        %3843 = vmatprep.mubr.bf16.mxu0 0
        %3844 = vmatmul.mubr.bf16.gmra.mrb[0].mxu0 %v3747
        %v3845 = vpop.f32.mrb[0].mxu0
        %v3846 = vadd.f32 %v3793, %v3845
        %v3847 = vpop.f32.mrb[0].mxu0
        %v3848 = vadd.f32 %v3795, %v3847
        %v3849 = vpop.f32.mrb[0].mxu0
        %v3850 = vadd.f32 %v3797, %v3849
        %v3851 = vpop.f32.mrb[0].mxu0
        %v3852 = vadd.f32 %v3799, %v3851
        %3853 = vdwg.mxu0
        %3854 = vmatprep.subr.bf16.mxu0 0
        %3855 = vmatpush1.bf16.msra.mxu0 %v2661
        %3856 = vmatprep.subr.bf16.mxu0 0
        %3857 = vmatpush1.bf16.msra.mxu0 %v2664
        %3858 = vmatprep.subr.bf16.mxu0 0
        %3859 = vmatpush1.bf16.msra.mxu0 %v2667
        %3860 = vmatprep.subr.bf16.mxu0 0
        %3861 = vmatpush1.bf16.msra.mxu0 %v2670
        %3862 = vmatprep.subr.bf16.mxu0 0
        %3863 = vmatpush1.bf16.msra.mxu0 %v2673
        %3864 = vmatprep.subr.bf16.mxu0 0
        %3865 = vmatpush1.bf16.msra.mxu0 %v2676
        %3866 = vmatprep.subr.bf16.mxu0 0
        %3867 = vmatpush1.bf16.msra.mxu0 %v2679
        %3868 = vmatprep.subr.bf16.mxu0 0
        %3869 = vmatpush1.bf16.msra.mxu0 %v2682
        %3870 = vmatprep.subr.bf16.mxu0 0
        %3871 = vmatpush1.bf16.msra.mxu0 %v2685
        %3872 = vmatprep.subr.bf16.mxu0 0
        %3873 = vmatpush1.bf16.msra.mxu0 %v2688
        %3874 = vmatprep.subr.bf16.mxu0 0
        %3875 = vmatpush1.bf16.msra.mxu0 %v2691
        %3876 = vmatprep.subr.bf16.mxu0 0
        %3877 = vmatpush1.bf16.msra.mxu0 %v2694
        %3878 = vmatprep.subr.bf16.mxu0 0
        %3879 = vmatpush1.bf16.msra.mxu0 %v2697
        %3880 = vmatprep.subr.bf16.mxu0 0
        %3881 = vmatpush1.bf16.msra.mxu0 %v2700
        %3882 = vmatprep.subr.bf16.mxu0 0
        %3883 = vmatpush1.bf16.msra.mxu0 %v2703
        %3884 = vmatprep.subr.bf16.mxu0 0
        %3885 = vmatpush1.bf16.msra.mxu0 %v2706
        %3886 = vmatprep.mubr.bf16.mxu0 %v3743
        %3887 = vmatmul.mubr.bf16.gmra.mrb[0].mxu0 %v3742
        %v3888 = vpop.f32.mrb[0].mxu0
        %v3889 = vadd.f32 0.0, %v3888
        %v3890 = vpop.f32.mrb[0].mxu0
        %v3891 = vpop.f32.mrb[0].mxu0
        %v3892 = vadd.f32 0.0, %v3891
        %v3893 = vpop.f32.mrb[0].mxu0
        %3894 = vmatprep.mubr.bf16.mxu0 %v3746
        %3895 = vmatmul.mubr.bf16.gmra.mrb[0].mxu0 %v3745
        %v3896 = vpop.f32.mrb[0].mxu0
        %v3897 = vadd.f32 0.0, %v3896
        %v3898 = vpop.f32.mrb[0].mxu0
        %v3899 = vpop.f32.mrb[0].mxu0
        %v3900 = vadd.f32 0.0, %v3899
        %v3901 = vpop.f32.mrb[0].mxu0
        %3902 = vdwg.mxu0
        %3903 = vmatprep.subr.bf16.mxu0 0
        %3904 = vmatpush1.bf16.msra.mxu0 %v2709
        %3905 = vmatprep.subr.bf16.mxu0 0
        %3906 = vmatpush1.bf16.msra.mxu0 %v2712
        %3907 = vmatprep.subr.bf16.mxu0 0
        %3908 = vmatpush1.bf16.msra.mxu0 %v2715
        %3909 = vmatprep.subr.bf16.mxu0 0
        %3910 = vmatpush1.bf16.msra.mxu0 %v2718
        %3911 = vmatprep.subr.bf16.mxu0 0
        %3912 = vmatpush1.bf16.msra.mxu0 %v2721
        %3913 = vmatprep.subr.bf16.mxu0 0
        %3914 = vmatpush1.bf16.msra.mxu0 %v2724
        %3915 = vmatprep.subr.bf16.mxu0 0
        %3916 = vmatpush1.bf16.msra.mxu0 %v2727
        %3917 = vmatprep.subr.bf16.mxu0 0
        %3918 = vmatpush1.bf16.msra.mxu0 %v2730
        %3919 = vmatprep.subr.bf16.mxu0 0
        %3920 = vmatpush1.bf16.msra.mxu0 0
        %3921 = vmatprep.subr.bf16.mxu0 0
        %3922 = vmatpush1.bf16.msra.mxu0 0
        %3923 = vmatprep.subr.bf16.mxu0 0
        %3924 = vmatpush1.bf16.msra.mxu0 0
        %3925 = vmatprep.subr.bf16.mxu0 0
        %3926 = vmatpush1.bf16.msra.mxu0 0
        %3927 = vmatprep.subr.bf16.mxu0 0
        %3928 = vmatpush1.bf16.msra.mxu0 0
        %3929 = vmatprep.subr.bf16.mxu0 0
        %3930 = vmatpush1.bf16.msra.mxu0 0
        %3931 = vmatprep.subr.bf16.mxu0 0
        %3932 = vmatpush1.bf16.msra.mxu0 0
        %3933 = vmatprep.subr.bf16.mxu0 0
        %3934 = vmatpush1.bf16.msra.mxu0 0
        %3935 = vmatprep.mubr.bf16.mxu0 0
        %3936 = vmatmul.mubr.bf16.gmra.mrb[0].mxu0 %v3744
        %v3937 = vpop.f32.mrb[0].mxu0
        %v3938 = vadd.f32 %v3889, %v3937
        %v3939 = vpop.f32.mrb[0].mxu0
        %v3940 = vpop.f32.mrb[0].mxu0
        %v3941 = vadd.f32 %v3892, %v3940
        %v3942 = vpop.f32.mrb[0].mxu0
        %3943 = vmatprep.mubr.bf16.mxu0 0
        %3944 = vmatmul.mubr.bf16.gmra.mrb[0].mxu0 %v3747
        %v3945 = vpop.f32.mrb[0].mxu0
        %v3946 = vadd.f32 %v3897, %v3945
        %v3947 = vpop.f32.mrb[0].mxu0
        %v3948 = vpop.f32.mrb[0].mxu0
        %v3949 = vadd.f32 %v3900, %v3948
        %v3950 = vpop.f32.mrb[0].mxu0
        %3951 = vdwg.mxu0
        %s3952 = scalar_lea.vmem %s4, 32
        %v3953 = vld [vmem:[%s3952] sm:$0xf]
        %v3954 = vld [vmem:[%s3952 + $0x4] sm:$0xf]
        %v3955 = vld [vmem:[%s3952 + $0x8] sm:$0xf]
        %v3956 = vld [vmem:[%s3952 + $0xc] sm:$0xf]
        %v3957 = vld [vmem:[%s3952 + $0x10] sm:$0xf]
        %v3958 = vld [vmem:[%s3952 + $0x14] sm:$0xf]
        %v3959 = vld [vmem:[%s3952 + $0x18] sm:$0xf]
        %v3960 = vld [vmem:[%s3952 + $0x1c] sm:$0xf]
        %s3961 = scalar_lea.vmem %s5, 32
        %v3962 = vld [vmem:[%s3961] sm:$0xf]
        %v3963 = vld [vmem:[%s3961 + $0x4] sm:$0xf]
        %v3964 = vld [vmem:[%s3961 + $0x8] sm:$0xf]
        %v3965 = vld [vmem:[%s3961 + $0xc] sm:$0xf]
        %v3966 = vld [vmem:[%s3961 + $0x10] sm:$0xf]
        %v3967 = vld [vmem:[%s3961 + $0x14] sm:$0xf]
        %v3968 = vld [vmem:[%s3961 + $0x18] sm:$0xf]
        %v3969 = vld [vmem:[%s3961 + $0x1c] sm:$0xf]
        %v3970 = vpack.c.bf16 %v3840, %v3836
        %v3971 = vpack.c.bf16 %v3842, %v3838
        %v3972 = vpack.c.bf16 %v3941, %v3938
        %v3973 = vpack.c.bf16 %v3850, %v3846
        %v3974 = vpack.c.bf16 %v3852, %v3848
        %v3975 = vpack.c.bf16 %v3949, %v3946
        %v3984 = vunpack.c.l.b16 %v3962
        %v3985 = vunpack.c.l.b16 %v3963
        %v3986 = vunpack.c.l.b16 %v3964
        %v3987 = vunpack.c.l.b16 %v3965
        %v3988 = vunpack.c.l.b16 %v3966
        %v3989 = vunpack.c.l.b16 %v3967
        %v3990 = vunpack.c.l.b16 %v3968
        %v3991 = vunpack.c.l.b16 %v3969
        %v3992 = vpack.c.b16 %v3985, %v3984
        %v3993 = vpack.c.b16 %v3987, %v3986
        %v3994 = vpack.c.b16 %v3989, %v3988
        %v3995 = vpack.c.b16 %v3991, %v3990
        %v3997 = vsel %vm2086, %v3992, 0
        %v4000 = vsel %vm2086, %v3993, 0
        %v4003 = vsel %vm2086, %v3994, 0
        %v4006 = vsel %vm2086, %v3995, 0
        %4008 = vmatprep.subr.bf16.mxu0 %v3971
        %4009 = vmatpush1.bf16.msra.mxu0 %v3970
        %4010 = vmatprep.subr.bf16.mxu0 %v3974
        %4011 = vmatpush1.bf16.msra.mxu0 %v3973
        %4012 = vmatprep.subr.bf16.mxu0 0
        %4013 = vmatpush1.bf16.msra.mxu0 0
        %4014 = vmatprep.subr.bf16.mxu0 0
        %4015 = vmatpush1.bf16.msra.mxu0 0
        %4016 = vmatprep.subr.bf16.mxu0 0
        %4017 = vmatpush1.bf16.msra.mxu0 0
        %4018 = vmatprep.subr.bf16.mxu0 0
        %4019 = vmatpush1.bf16.msra.mxu0 0
        %4020 = vmatprep.subr.bf16.mxu0 0
        %4021 = vmatpush1.bf16.msra.mxu0 0
        %4022 = vmatprep.subr.bf16.mxu0 0
        %4023 = vmatpush1.bf16.msra.mxu0 0
        %4024 = vmatprep.subr.bf16.mxu0 0
        %4025 = vmatpush1.bf16.msra.mxu0 0
        %4026 = vmatprep.subr.bf16.mxu0 0
        %4027 = vmatpush1.bf16.msra.mxu0 0
        %4028 = vmatprep.subr.bf16.mxu0 0
        %4029 = vmatpush1.bf16.msra.mxu0 0
        %4030 = vmatprep.subr.bf16.mxu0 0
        %4031 = vmatpush1.bf16.msra.mxu0 0
        %4032 = vmatprep.subr.bf16.mxu0 0
        %4033 = vmatpush1.bf16.msra.mxu0 0
        %4034 = vmatprep.subr.bf16.mxu0 0
        %4035 = vmatpush1.bf16.msra.mxu0 0
        %4036 = vmatprep.subr.bf16.mxu0 0
        %4037 = vmatpush1.bf16.msra.mxu0 0
        %4038 = vmatprep.subr.bf16.mxu0 0
        %4039 = vmatpush1.bf16.msra.mxu0 0
        %4040 = vmatprep.mubr.bf16.mxu0 0
        %4041 = vmatmul.mubr.bf16.gmra.mrb[0].mxu0 %v3997
        %v4042 = vpop.f32.mrb[0].mxu0
        %v4043 = vadd.f32 0.0, %v4042
        %v4044 = vpop.f32.mrb[0].mxu0
        %v4045 = vadd.f32 0.0, %v4044
        %v4046 = vpop.f32.mrb[0].mxu0
        %v4047 = vadd.f32 0.0, %v4046
        %v4048 = vpop.f32.mrb[0].mxu0
        %v4049 = vadd.f32 0.0, %v4048
        %4050 = vmatprep.mubr.bf16.mxu0 0
        %4051 = vmatmul.mubr.bf16.gmra.mrb[0].mxu0 %v4000
        %v4052 = vpop.f32.mrb[0].mxu0
        %v4053 = vadd.f32 0.0, %v4052
        %v4054 = vpop.f32.mrb[0].mxu0
        %v4055 = vadd.f32 0.0, %v4054
        %v4056 = vpop.f32.mrb[0].mxu0
        %v4057 = vadd.f32 0.0, %v4056
        %v4058 = vpop.f32.mrb[0].mxu0
        %v4059 = vadd.f32 0.0, %v4058
        %4060 = vmatprep.mubr.bf16.mxu0 0
        %4061 = vmatmul.mubr.bf16.gmra.mrb[0].mxu0 %v4003
        %v4062 = vpop.f32.mrb[0].mxu0
        %v4063 = vadd.f32 0.0, %v4062
        %v4064 = vpop.f32.mrb[0].mxu0
        %v4065 = vadd.f32 0.0, %v4064
        %v4066 = vpop.f32.mrb[0].mxu0
        %v4067 = vadd.f32 0.0, %v4066
        %v4068 = vpop.f32.mrb[0].mxu0
        %v4069 = vadd.f32 0.0, %v4068
        %4070 = vmatprep.mubr.bf16.mxu0 0
        %4071 = vmatmul.mubr.bf16.gmra.mrb[0].mxu0 %v4006
        %v4072 = vpop.f32.mrb[0].mxu0
        %v4073 = vadd.f32 0.0, %v4072
        %v4074 = vpop.f32.mrb[0].mxu0
        %v4075 = vadd.f32 0.0, %v4074
        %v4076 = vpop.f32.mrb[0].mxu0
        %v4077 = vadd.f32 0.0, %v4076
        %v4078 = vpop.f32.mrb[0].mxu0
        %v4079 = vadd.f32 0.0, %v4078
        %4080 = vdwg.mxu0
        %4081 = vmatprep.subr.bf16.mxu0 0
        %4082 = vmatpush1.bf16.msra.mxu0 %v3972
        %4083 = vmatprep.subr.bf16.mxu0 0
        %4084 = vmatpush1.bf16.msra.mxu0 %v3975
        %4085 = vmatprep.subr.bf16.mxu0 0
        %4086 = vmatpush1.bf16.msra.mxu0 0
        %4087 = vmatprep.subr.bf16.mxu0 0
        %4088 = vmatpush1.bf16.msra.mxu0 0
        %4089 = vmatprep.subr.bf16.mxu0 0
        %4090 = vmatpush1.bf16.msra.mxu0 0
        %4091 = vmatprep.subr.bf16.mxu0 0
        %4092 = vmatpush1.bf16.msra.mxu0 0
        %4093 = vmatprep.subr.bf16.mxu0 0
        %4094 = vmatpush1.bf16.msra.mxu0 0
        %4095 = vmatprep.subr.bf16.mxu0 0
        %4096 = vmatpush1.bf16.msra.mxu0 0
        %4097 = vmatprep.subr.bf16.mxu0 0
        %4098 = vmatpush1.bf16.msra.mxu0 0
        %4099 = vmatprep.subr.bf16.mxu0 0
        %4100 = vmatpush1.bf16.msra.mxu0 0
        %4101 = vmatprep.subr.bf16.mxu0 0
        %4102 = vmatpush1.bf16.msra.mxu0 0
        %4103 = vmatprep.subr.bf16.mxu0 0
        %4104 = vmatpush1.bf16.msra.mxu0 0
        %4105 = vmatprep.subr.bf16.mxu0 0
        %4106 = vmatpush1.bf16.msra.mxu0 0
        %4107 = vmatprep.subr.bf16.mxu0 0
        %4108 = vmatpush1.bf16.msra.mxu0 0
        %4109 = vmatprep.subr.bf16.mxu0 0
        %4110 = vmatpush1.bf16.msra.mxu0 0
        %4111 = vmatprep.subr.bf16.mxu0 0
        %4112 = vmatpush1.bf16.msra.mxu0 0
        %4113 = vmatprep.mubr.bf16.mxu0 0
        %4114 = vmatmul.mubr.bf16.gmra.mrb[0].mxu0 %v3997
        %v4115 = vpop.f32.mrb[0].mxu0
        %v4116 = vadd.f32 0.0, %v4115
        %v4117 = vpop.f32.mrb[0].mxu0
        %v4118 = vpop.f32.mrb[0].mxu0
        %v4119 = vadd.f32 0.0, %v4118
        %v4120 = vpop.f32.mrb[0].mxu0
        %4121 = vmatprep.mubr.bf16.mxu0 0
        %4122 = vmatmul.mubr.bf16.gmra.mrb[0].mxu0 %v4000
        %v4123 = vpop.f32.mrb[0].mxu0
        %v4124 = vadd.f32 0.0, %v4123
        %v4125 = vpop.f32.mrb[0].mxu0
        %v4126 = vpop.f32.mrb[0].mxu0
        %v4127 = vadd.f32 0.0, %v4126
        %v4128 = vpop.f32.mrb[0].mxu0
        %4129 = vmatprep.mubr.bf16.mxu0 0
        %4130 = vmatmul.mubr.bf16.gmra.mrb[0].mxu0 %v4003
        %v4131 = vpop.f32.mrb[0].mxu0
        %v4132 = vadd.f32 0.0, %v4131
        %v4133 = vpop.f32.mrb[0].mxu0
        %v4134 = vpop.f32.mrb[0].mxu0
        %v4135 = vadd.f32 0.0, %v4134
        %v4136 = vpop.f32.mrb[0].mxu0
        %4137 = vmatprep.mubr.bf16.mxu0 0
        %4138 = vmatmul.mubr.bf16.gmra.mrb[0].mxu0 %v4006
        %v4139 = vpop.f32.mrb[0].mxu0
        %v4140 = vadd.f32 0.0, %v4139
        %v4141 = vpop.f32.mrb[0].mxu0
        %v4142 = vpop.f32.mrb[0].mxu0
        %v4143 = vadd.f32 0.0, %v4142
        %v4144 = vpop.f32.mrb[0].mxu0
        %4145 = vdwg.mxu0
        %v4146 = vmul.f32 %v4043, 0.015625
        %v4147 = vmul.f32 %v4045, 0.015625
        %v4148 = vmul.f32 %v4116, 0.015625
        %v4149 = vmul.f32 %v4047, 0.015625
        %v4150 = vmul.f32 %v4049, 0.015625
        %v4151 = vmul.f32 %v4119, 0.015625
        %v4152 = vmul.f32 %v4053, 0.015625
        %v4153 = vmul.f32 %v4055, 0.015625
        %v4154 = vmul.f32 %v4124, 0.015625
        %v4155 = vmul.f32 %v4057, 0.015625
        %v4156 = vmul.f32 %v4059, 0.015625
        %v4157 = vmul.f32 %v4127, 0.015625
        %v4158 = vmul.f32 %v4063, 0.015625
        %v4159 = vmul.f32 %v4065, 0.015625
        %v4160 = vmul.f32 %v4132, 0.015625
        %v4161 = vmul.f32 %v4067, 0.015625
        %v4162 = vmul.f32 %v4069, 0.015625
        %v4163 = vmul.f32 %v4135, 0.015625
        %v4164 = vmul.f32 %v4073, 0.015625
        %v4165 = vmul.f32 %v4075, 0.015625
        %v4166 = vmul.f32 %v4140, 0.015625
        %v4167 = vmul.f32 %v4077, 0.015625
        %v4168 = vmul.f32 %v4079, 0.015625
        %v4169 = vmul.f32 %v4143, 0.015625
        %v4178 = vunpack.c.l.b16 %v3953
        %v4179 = vunpack.c.l.b16 %v3954
        %v4180 = vunpack.c.l.b16 %v3955
        %v4181 = vunpack.c.l.b16 %v3956
        %v4182 = vunpack.c.l.b16 %v3957
        %v4183 = vunpack.c.l.b16 %v3958
        %v4184 = vunpack.c.l.b16 %v3959
        %v4185 = vunpack.c.l.b16 %v3960
        %v4186 = vpack.c.b16 %v4179, %v4178
        %v4187 = vpack.c.b16 %v4181, %v4180
        %v4188 = vpack.c.b16 %v4183, %v4182
        %v4189 = vpack.c.b16 %v4185, %v4184
        %v4191 = vsel %vm2086, %v4186, 0
        %v4194 = vsel %vm2086, %v4187, 0
        %v4197 = vsel %vm2086, %v4188, 0
        %v4200 = vsel %vm2086, %v4189, 0
        %4202 = vmatprep.subr.bf16.mxu0 %v3743
        %4203 = vmatpush1.bf16.msra.mxu0 %v3742
        %4204 = vmatprep.subr.bf16.mxu0 %v3746
        %4205 = vmatpush1.bf16.msra.mxu0 %v3745
        %4206 = vmatprep.subr.bf16.mxu0 0
        %4207 = vmatpush1.bf16.msra.mxu0 0
        %4208 = vmatprep.subr.bf16.mxu0 0
        %4209 = vmatpush1.bf16.msra.mxu0 0
        %4210 = vmatprep.subr.bf16.mxu0 0
        %4211 = vmatpush1.bf16.msra.mxu0 0
        %4212 = vmatprep.subr.bf16.mxu0 0
        %4213 = vmatpush1.bf16.msra.mxu0 0
        %4214 = vmatprep.subr.bf16.mxu0 0
        %4215 = vmatpush1.bf16.msra.mxu0 0
        %4216 = vmatprep.subr.bf16.mxu0 0
        %4217 = vmatpush1.bf16.msra.mxu0 0
        %4218 = vmatprep.subr.bf16.mxu0 0
        %4219 = vmatpush1.bf16.msra.mxu0 0
        %4220 = vmatprep.subr.bf16.mxu0 0
        %4221 = vmatpush1.bf16.msra.mxu0 0
        %4222 = vmatprep.subr.bf16.mxu0 0
        %4223 = vmatpush1.bf16.msra.mxu0 0
        %4224 = vmatprep.subr.bf16.mxu0 0
        %4225 = vmatpush1.bf16.msra.mxu0 0
        %4226 = vmatprep.subr.bf16.mxu0 0
        %4227 = vmatpush1.bf16.msra.mxu0 0
        %4228 = vmatprep.subr.bf16.mxu0 0
        %4229 = vmatpush1.bf16.msra.mxu0 0
        %4230 = vmatprep.subr.bf16.mxu0 0
        %4231 = vmatpush1.bf16.msra.mxu0 0
        %4232 = vmatprep.subr.bf16.mxu0 0
        %4233 = vmatpush1.bf16.msra.mxu0 0
        %4234 = vmatprep.mubr.bf16.mxu0 0
        %4235 = vmatmul.mubr.bf16.gmra.mrb[0].mxu0 %v4191
        %v4236 = vpop.f32.mrb[0].mxu0
        %v4237 = vadd.f32 %v4146, %v4236
        %v4238 = vpop.f32.mrb[0].mxu0
        %v4239 = vadd.f32 %v4147, %v4238
        %v4240 = vpop.f32.mrb[0].mxu0
        %v4241 = vadd.f32 %v4149, %v4240
        %v4242 = vpop.f32.mrb[0].mxu0
        %v4243 = vadd.f32 %v4150, %v4242
        %4244 = vmatprep.mubr.bf16.mxu0 0
        %4245 = vmatmul.mubr.bf16.gmra.mrb[0].mxu0 %v4194
        %v4246 = vpop.f32.mrb[0].mxu0
        %v4247 = vadd.f32 %v4152, %v4246
        %v4248 = vpop.f32.mrb[0].mxu0
        %v4249 = vadd.f32 %v4153, %v4248
        %v4250 = vpop.f32.mrb[0].mxu0
        %v4251 = vadd.f32 %v4155, %v4250
        %v4252 = vpop.f32.mrb[0].mxu0
        %v4253 = vadd.f32 %v4156, %v4252
        %4254 = vmatprep.mubr.bf16.mxu0 0
        %4255 = vmatmul.mubr.bf16.gmra.mrb[0].mxu0 %v4197
        %v4256 = vpop.f32.mrb[0].mxu0
        %v4257 = vadd.f32 %v4158, %v4256
        %v4258 = vpop.f32.mrb[0].mxu0
        %v4259 = vadd.f32 %v4159, %v4258
        %v4260 = vpop.f32.mrb[0].mxu0
        %v4261 = vadd.f32 %v4161, %v4260
        %v4262 = vpop.f32.mrb[0].mxu0
        %v4263 = vadd.f32 %v4162, %v4262
        %4264 = vmatprep.mubr.bf16.mxu0 0
        %4265 = vmatmul.mubr.bf16.gmra.mrb[0].mxu0 %v4200
        %v4266 = vpop.f32.mrb[0].mxu0
        %v4267 = vadd.f32 %v4164, %v4266
        %v4268 = vpop.f32.mrb[0].mxu0
        %v4269 = vadd.f32 %v4165, %v4268
        %v4270 = vpop.f32.mrb[0].mxu0
        %v4271 = vadd.f32 %v4167, %v4270
        %v4272 = vpop.f32.mrb[0].mxu0
        %v4273 = vadd.f32 %v4168, %v4272
        %4274 = vdwg.mxu0
        %4275 = vmatprep.subr.bf16.mxu0 0
        %4276 = vmatpush1.bf16.msra.mxu0 %v3744
        %4277 = vmatprep.subr.bf16.mxu0 0
        %4278 = vmatpush1.bf16.msra.mxu0 %v3747
        %4279 = vmatprep.subr.bf16.mxu0 0
        %4280 = vmatpush1.bf16.msra.mxu0 0
        %4281 = vmatprep.subr.bf16.mxu0 0
        %4282 = vmatpush1.bf16.msra.mxu0 0
        %4283 = vmatprep.subr.bf16.mxu0 0
        %4284 = vmatpush1.bf16.msra.mxu0 0
        %4285 = vmatprep.subr.bf16.mxu0 0
        %4286 = vmatpush1.bf16.msra.mxu0 0
        %4287 = vmatprep.subr.bf16.mxu0 0
        %4288 = vmatpush1.bf16.msra.mxu0 0
        %4289 = vmatprep.subr.bf16.mxu0 0
        %4290 = vmatpush1.bf16.msra.mxu0 0
        %4291 = vmatprep.subr.bf16.mxu0 0
        %4292 = vmatpush1.bf16.msra.mxu0 0
        %4293 = vmatprep.subr.bf16.mxu0 0
        %4294 = vmatpush1.bf16.msra.mxu0 0
        %4295 = vmatprep.subr.bf16.mxu0 0
        %4296 = vmatpush1.bf16.msra.mxu0 0
        %4297 = vmatprep.subr.bf16.mxu0 0
        %4298 = vmatpush1.bf16.msra.mxu0 0
        %4299 = vmatprep.subr.bf16.mxu0 0
        %4300 = vmatpush1.bf16.msra.mxu0 0
        %4301 = vmatprep.subr.bf16.mxu0 0
        %4302 = vmatpush1.bf16.msra.mxu0 0
        %4303 = vmatprep.subr.bf16.mxu0 0
        %4304 = vmatpush1.bf16.msra.mxu0 0
        %4305 = vmatprep.subr.bf16.mxu0 0
        %4306 = vmatpush1.bf16.msra.mxu0 0
        %4307 = vmatprep.mubr.bf16.mxu0 0
        %4308 = vmatmul.mubr.bf16.gmra.mrb[0].mxu0 %v4191
        %v4309 = vpop.f32.mrb[0].mxu0
        %v4310 = vadd.f32 %v4148, %v4309
        %v4311 = vpop.f32.mrb[0].mxu0
        %v4312 = vpop.f32.mrb[0].mxu0
        %v4313 = vadd.f32 %v4151, %v4312
        %v4314 = vpop.f32.mrb[0].mxu0
        %4315 = vmatprep.mubr.bf16.mxu0 0
        %4316 = vmatmul.mubr.bf16.gmra.mrb[0].mxu0 %v4194
        %v4317 = vpop.f32.mrb[0].mxu0
        %v4318 = vadd.f32 %v4154, %v4317
        %v4319 = vpop.f32.mrb[0].mxu0
        %v4320 = vpop.f32.mrb[0].mxu0
        %v4321 = vadd.f32 %v4157, %v4320
        %v4322 = vpop.f32.mrb[0].mxu0
        %4323 = vmatprep.mubr.bf16.mxu0 0
        %4324 = vmatmul.mubr.bf16.gmra.mrb[0].mxu0 %v4197
        %v4325 = vpop.f32.mrb[0].mxu0
        %v4326 = vadd.f32 %v4160, %v4325
        %v4327 = vpop.f32.mrb[0].mxu0
        %v4328 = vpop.f32.mrb[0].mxu0
        %v4329 = vadd.f32 %v4163, %v4328
        %v4330 = vpop.f32.mrb[0].mxu0
        %4331 = vmatprep.mubr.bf16.mxu0 0
        %4332 = vmatmul.mubr.bf16.gmra.mrb[0].mxu0 %v4200
        %v4333 = vpop.f32.mrb[0].mxu0
        %v4334 = vadd.f32 %v4166, %v4333
        %v4335 = vpop.f32.mrb[0].mxu0
        %v4336 = vpop.f32.mrb[0].mxu0
        %v4337 = vadd.f32 %v4169, %v4336
        %v4338 = vpop.f32.mrb[0].mxu0
        %4339 = vdwg.mxu0
        %v4340 = vmul.f32 %v4237, %v4257
        %v4341 = vmul.f32 %v4241, %v4261
        %v4342 = vmul.f32 %v4247, %v4267
        %v4343 = vmul.f32 %v4251, %v4271
        %v4344 = vmul.f32 %v4239, %v4259
        %v4345 = vmul.f32 %v4243, %v4263
        %v4346 = vmul.f32 %v4249, %v4269
        %v4347 = vmul.f32 %v4253, %v4273
        %v4348 = vadd.f32 %v4340, %v4344
        %v4349 = vadd.f32 %v4341, %v4345
        %v4350 = vadd.f32 %v4342, %v4346
        %v4351 = vadd.f32 %v4343, %v4347
        %v4352 = vmul.f32 %v4310, %v4326
        %v4353 = vmul.f32 %v4313, %v4329
        %v4354 = vmul.f32 %v4318, %v4334
        %v4355 = vmul.f32 %v4321, %v4337
        %v4356 = vadd.f32 %v4348, %v4352
        %v4357 = vadd.f32 %v4349, %v4353
        %v4358 = vadd.f32 %v4350, %v4354
        %v4359 = vadd.f32 %v4351, %v4355
        %v4360 = vmul.f32 %v4257, %v4257
        %v4361 = vmul.f32 %v4261, %v4261
        %v4362 = vmul.f32 %v4267, %v4267
        %v4363 = vmul.f32 %v4271, %v4271
        %v4364 = vmul.f32 %v4259, %v4259
        %v4365 = vmul.f32 %v4263, %v4263
        %v4366 = vmul.f32 %v4269, %v4269
        %v4367 = vmul.f32 %v4273, %v4273
        %v4368 = vadd.f32 %v4360, %v4364
        %v4369 = vadd.f32 %v4361, %v4365
        %v4370 = vadd.f32 %v4362, %v4366
        %v4371 = vadd.f32 %v4363, %v4367
        %v4372 = vmul.f32 %v4326, %v4326
        %v4373 = vmul.f32 %v4329, %v4329
        %v4374 = vmul.f32 %v4334, %v4334
        %v4375 = vmul.f32 %v4337, %v4337
        %v4376 = vadd.f32 %v4368, %v4372
        %v4377 = vadd.f32 %v4369, %v4373
        %v4378 = vadd.f32 %v4370, %v4374
        %v4379 = vadd.f32 %v4371, %v4375
        %v4380 = vmin.f32 %v4356, 0.0
        %v4381 = vmin.f32 %v4357, 0.0
        %v4382 = vmin.f32 %v4358, 0.0
        %v4383 = vmin.f32 %v4359, 0.0
        %v4384 = vmax.f32 %v4376, 1e-06
        %v4385 = vmax.f32 %v4377, 1e-06
        %v4386 = vmax.f32 %v4378, 1e-06
        %v4387 = vmax.f32 %v4379, 1e-06
        %v4388 = vrcp.pop %v4384
        %v4389 = vrcp.pop %v4385
        %v4390 = vrcp.pop %v4386
        %v4391 = vrcp.pop %v4387
        %v4392 = vmul.f32 %v4380, %v4388
        %v4393 = vmul.f32 %v4381, %v4389
        %v4394 = vmul.f32 %v4382, %v4390
        %v4395 = vmul.f32 %v4383, %v4391
        %v4396 = vmul.f32 %v4392, %v4257
        %v4397 = vmul.f32 %v4393, %v4261
        %v4398 = vmul.f32 %v4394, %v4267
        %v4399 = vmul.f32 %v4395, %v4271
        %v4400 = vsub.f32 %v4237, %v4396
        %v4401 = vsub.f32 %v4241, %v4397
        %v4402 = vsub.f32 %v4247, %v4398
        %v4403 = vsub.f32 %v4251, %v4399
        %v4404 = vmul.f32 %v4392, %v4259
        %v4405 = vmul.f32 %v4393, %v4263
        %v4406 = vmul.f32 %v4394, %v4269
        %v4407 = vmul.f32 %v4395, %v4273
        %v4408 = vsub.f32 %v4239, %v4404
        %v4409 = vsub.f32 %v4243, %v4405
        %v4410 = vsub.f32 %v4249, %v4406
        %v4411 = vsub.f32 %v4253, %v4407
        %v4412 = vmul.f32 %v4392, %v4326
        %v4413 = vmul.f32 %v4393, %v4329
        %v4414 = vmul.f32 %v4394, %v4334
        %v4415 = vmul.f32 %v4395, %v4337
        %v4416 = vsub.f32 %v4310, %v4412
        %v4417 = vsub.f32 %v4313, %v4413
        %v4418 = vsub.f32 %v4318, %v4414
        %v4419 = vsub.f32 %v4321, %v4415
        %s4420 = scalar_lea.vmem [#allocation5], 16
        %v4421 = vld [vmem:[%s4420] sm:$0xf]
        %v4422 = vld [vmem:[%s4420 + $0x4] sm:$0xf]
        %v4423 = vld [vmem:[%s4420 + $0x8] sm:$0xf]
        %v4424 = vld [vmem:[%s4420 + $0xc] sm:$0xf]
        %v4425 = vpack.c.bf16 %v4401, %v4400
        %v4426 = vpack.c.bf16 %v4409, %v4408
        %v4427 = vpack.c.bf16 %v4417, %v4416
        %v4428 = vpack.c.bf16 %v4403, %v4402
        %v4429 = vpack.c.bf16 %v4411, %v4410
        %v4430 = vpack.c.bf16 %v4419, %v4418
        %v4435 = vunpack.c.l.b16 %v4421
        %v4436 = vunpack.c.l.b16 %v4422
        %v4437 = vunpack.c.l.b16 %v4423
        %v4438 = vunpack.c.l.b16 %v4424
        %v4439 = vpack.c.b16 %v4436, %v4435
        %v4440 = vpack.c.b16 %v4438, %v4437
        %v4442 = vsel %vm2086, %v4439, 0
        %v4445 = vsel %vm2086, %v4440, 0
        %4447 = vmatprep.subr.bf16.mxu0 %v4426
        %4448 = vmatpush1.bf16.msra.mxu0 %v4425
        %4449 = vmatprep.subr.bf16.mxu0 %v4429
        %4450 = vmatpush1.bf16.msra.mxu0 %v4428
        %4451 = vmatprep.subr.bf16.mxu0 0
        %4452 = vmatpush1.bf16.msra.mxu0 0
        %4453 = vmatprep.subr.bf16.mxu0 0
        %4454 = vmatpush1.bf16.msra.mxu0 0
        %4455 = vmatprep.subr.bf16.mxu0 0
        %4456 = vmatpush1.bf16.msra.mxu0 0
        %4457 = vmatprep.subr.bf16.mxu0 0
        %4458 = vmatpush1.bf16.msra.mxu0 0
        %4459 = vmatprep.subr.bf16.mxu0 0
        %4460 = vmatpush1.bf16.msra.mxu0 0
        %4461 = vmatprep.subr.bf16.mxu0 0
        %4462 = vmatpush1.bf16.msra.mxu0 0
        %4463 = vmatprep.subr.bf16.mxu0 0
        %4464 = vmatpush1.bf16.msra.mxu0 0
        %4465 = vmatprep.subr.bf16.mxu0 0
        %4466 = vmatpush1.bf16.msra.mxu0 0
        %4467 = vmatprep.subr.bf16.mxu0 0
        %4468 = vmatpush1.bf16.msra.mxu0 0
        %4469 = vmatprep.subr.bf16.mxu0 0
        %4470 = vmatpush1.bf16.msra.mxu0 0
        %4471 = vmatprep.subr.bf16.mxu0 0
        %4472 = vmatpush1.bf16.msra.mxu0 0
        %4473 = vmatprep.subr.bf16.mxu0 0
        %4474 = vmatpush1.bf16.msra.mxu0 0
        %4475 = vmatprep.subr.bf16.mxu0 0
        %4476 = vmatpush1.bf16.msra.mxu0 0
        %4477 = vmatprep.subr.bf16.mxu0 0
        %4478 = vmatpush1.bf16.msra.mxu0 0
        %4479 = vmatprep.mubr.bf16.mxu0 0
        %4480 = vmatmul.mubr.bf16.gmra.mrb[0].mxu0 %v4442
        %v4481 = vpop.f32.mrb[0].mxu0
        %v4482 = vadd.f32 0.0, %v4481
        %v4483 = vpop.f32.mrb[0].mxu0
        %v4484 = vadd.f32 0.0, %v4483
        %v4485 = vpop.f32.mrb[0].mxu0
        %v4486 = vadd.f32 0.0, %v4485
        %v4487 = vpop.f32.mrb[0].mxu0
        %v4488 = vadd.f32 0.0, %v4487
        %4489 = vmatprep.mubr.bf16.mxu0 0
        %4490 = vmatmul.mubr.bf16.gmra.mrb[0].mxu0 %v4445
        %v4491 = vpop.f32.mrb[0].mxu0
        %v4492 = vadd.f32 0.0, %v4491
        %v4493 = vpop.f32.mrb[0].mxu0
        %v4494 = vadd.f32 0.0, %v4493
        %v4495 = vpop.f32.mrb[0].mxu0
        %v4496 = vadd.f32 0.0, %v4495
        %v4497 = vpop.f32.mrb[0].mxu0
        %v4498 = vadd.f32 0.0, %v4497
        %4499 = vdwg.mxu0
        %4500 = vmatprep.subr.bf16.mxu0 0
        %4501 = vmatpush1.bf16.msra.mxu0 %v4427
        %4502 = vmatprep.subr.bf16.mxu0 0
        %4503 = vmatpush1.bf16.msra.mxu0 %v4430
        %4504 = vmatprep.subr.bf16.mxu0 0
        %4505 = vmatpush1.bf16.msra.mxu0 0
        %4506 = vmatprep.subr.bf16.mxu0 0
        %4507 = vmatpush1.bf16.msra.mxu0 0
        %4508 = vmatprep.subr.bf16.mxu0 0
        %4509 = vmatpush1.bf16.msra.mxu0 0
        %4510 = vmatprep.subr.bf16.mxu0 0
        %4511 = vmatpush1.bf16.msra.mxu0 0
        %4512 = vmatprep.subr.bf16.mxu0 0
        %4513 = vmatpush1.bf16.msra.mxu0 0
        %4514 = vmatprep.subr.bf16.mxu0 0
        %4515 = vmatpush1.bf16.msra.mxu0 0
        %4516 = vmatprep.subr.bf16.mxu0 0
        %4517 = vmatpush1.bf16.msra.mxu0 0
        %4518 = vmatprep.subr.bf16.mxu0 0
        %4519 = vmatpush1.bf16.msra.mxu0 0
        %4520 = vmatprep.subr.bf16.mxu0 0
        %4521 = vmatpush1.bf16.msra.mxu0 0
        %4522 = vmatprep.subr.bf16.mxu0 0
        %4523 = vmatpush1.bf16.msra.mxu0 0
        %4524 = vmatprep.subr.bf16.mxu0 0
        %4525 = vmatpush1.bf16.msra.mxu0 0
        %4526 = vmatprep.subr.bf16.mxu0 0
        %4527 = vmatpush1.bf16.msra.mxu0 0
        %4528 = vmatprep.subr.bf16.mxu0 0
        %4529 = vmatpush1.bf16.msra.mxu0 0
        %4530 = vmatprep.subr.bf16.mxu0 0
        %4531 = vmatpush1.bf16.msra.mxu0 0
        %4532 = vmatprep.mubr.bf16.mxu0 0
        %4533 = vmatmul.mubr.bf16.gmra.mrb[0].mxu0 %v4442
        %v4534 = vpop.f32.mrb[0].mxu0
        %v4535 = vadd.f32 0.0, %v4534
        %v4536 = vpop.f32.mrb[0].mxu0
        %v4537 = vpop.f32.mrb[0].mxu0
        %v4538 = vadd.f32 0.0, %v4537
        %v4539 = vpop.f32.mrb[0].mxu0
        %4540 = vmatprep.mubr.bf16.mxu0 0
        %4541 = vmatmul.mubr.bf16.gmra.mrb[0].mxu0 %v4445
        %v4542 = vpop.f32.mrb[0].mxu0
        %v4543 = vadd.f32 0.0, %v4542
        %v4544 = vpop.f32.mrb[0].mxu0
        %v4545 = vpop.f32.mrb[0].mxu0
        %v4546 = vadd.f32 0.0, %v4545
        %v4547 = vpop.f32.mrb[0].mxu0
        %4548 = vdwg.mxu0
        %v4553 = vunpack.c.l.b16 %v3473
        %v4554 = vunpack.c.l.b16 %v3474
        %v4555 = vunpack.c.l.b16 %v3475
        %v4556 = vunpack.c.l.b16 %v3476
        %v4557 = vpack.c.b16 %v4554, %v4553
        %v4558 = vpack.c.b16 %v4556, %v4555
        %v4560 = vsel %vm2086, %v4557, 0
        %v4563 = vsel %vm2086, %v4558, 0
        %4565 = vmatprep.subr.bf16.mxu0 %v3478
        %4566 = vmatpush1.bf16.msra.mxu0 %v3477
        %4567 = vmatprep.subr.bf16.mxu0 %v3481
        %4568 = vmatpush1.bf16.msra.mxu0 %v3480
        %4569 = vmatprep.subr.bf16.mxu0 0
        %4570 = vmatpush1.bf16.msra.mxu0 0
        %4571 = vmatprep.subr.bf16.mxu0 0
        %4572 = vmatpush1.bf16.msra.mxu0 0
        %4573 = vmatprep.subr.bf16.mxu0 0
        %4574 = vmatpush1.bf16.msra.mxu0 0
        %4575 = vmatprep.subr.bf16.mxu0 0
        %4576 = vmatpush1.bf16.msra.mxu0 0
        %4577 = vmatprep.subr.bf16.mxu0 0
        %4578 = vmatpush1.bf16.msra.mxu0 0
        %4579 = vmatprep.subr.bf16.mxu0 0
        %4580 = vmatpush1.bf16.msra.mxu0 0
        %4581 = vmatprep.subr.bf16.mxu0 0
        %4582 = vmatpush1.bf16.msra.mxu0 0
        %4583 = vmatprep.subr.bf16.mxu0 0
        %4584 = vmatpush1.bf16.msra.mxu0 0
        %4585 = vmatprep.subr.bf16.mxu0 0
        %4586 = vmatpush1.bf16.msra.mxu0 0
        %4587 = vmatprep.subr.bf16.mxu0 0
        %4588 = vmatpush1.bf16.msra.mxu0 0
        %4589 = vmatprep.subr.bf16.mxu0 0
        %4590 = vmatpush1.bf16.msra.mxu0 0
        %4591 = vmatprep.subr.bf16.mxu0 0
        %4592 = vmatpush1.bf16.msra.mxu0 0
        %4593 = vmatprep.subr.bf16.mxu0 0
        %4594 = vmatpush1.bf16.msra.mxu0 0
        %4595 = vmatprep.subr.bf16.mxu0 0
        %4596 = vmatpush1.bf16.msra.mxu0 0
        %4597 = vmatprep.mubr.bf16.mxu0 0
        %4598 = vmatmul.mubr.bf16.gmra.mrb[0].mxu0 %v4560
        %v4599 = vpop.f32.mrb[0].mxu0
        %v4600 = vadd.f32 %v4482, %v4599
        %v4601 = vpop.f32.mrb[0].mxu0
        %v4602 = vadd.f32 %v4484, %v4601
        %v4603 = vpop.f32.mrb[0].mxu0
        %v4604 = vadd.f32 %v4486, %v4603
        %v4605 = vpop.f32.mrb[0].mxu0
        %v4606 = vadd.f32 %v4488, %v4605
        %4607 = vmatprep.mubr.bf16.mxu0 0
        %4608 = vmatmul.mubr.bf16.gmra.mrb[0].mxu0 %v4563
        %v4609 = vpop.f32.mrb[0].mxu0
        %v4610 = vadd.f32 %v4492, %v4609
        %v4611 = vpop.f32.mrb[0].mxu0
        %v4612 = vadd.f32 %v4494, %v4611
        %v4613 = vpop.f32.mrb[0].mxu0
        %v4614 = vadd.f32 %v4496, %v4613
        %v4615 = vpop.f32.mrb[0].mxu0
        %v4616 = vadd.f32 %v4498, %v4615
        %4617 = vdwg.mxu0
        %4618 = vmatprep.subr.bf16.mxu0 0
        %4619 = vmatpush1.bf16.msra.mxu0 %v3479
        %4620 = vmatprep.subr.bf16.mxu0 0
        %4621 = vmatpush1.bf16.msra.mxu0 %v3482
        %4622 = vmatprep.subr.bf16.mxu0 0
        %4623 = vmatpush1.bf16.msra.mxu0 0
        %4624 = vmatprep.subr.bf16.mxu0 0
        %4625 = vmatpush1.bf16.msra.mxu0 0
        %4626 = vmatprep.subr.bf16.mxu0 0
        %4627 = vmatpush1.bf16.msra.mxu0 0
        %4628 = vmatprep.subr.bf16.mxu0 0
        %4629 = vmatpush1.bf16.msra.mxu0 0
        %4630 = vmatprep.subr.bf16.mxu0 0
        %4631 = vmatpush1.bf16.msra.mxu0 0
        %4632 = vmatprep.subr.bf16.mxu0 0
        %4633 = vmatpush1.bf16.msra.mxu0 0
        %4634 = vmatprep.subr.bf16.mxu0 0
        %4635 = vmatpush1.bf16.msra.mxu0 0
        %4636 = vmatprep.subr.bf16.mxu0 0
        %4637 = vmatpush1.bf16.msra.mxu0 0
        %4638 = vmatprep.subr.bf16.mxu0 0
        %4639 = vmatpush1.bf16.msra.mxu0 0
        %4640 = vmatprep.subr.bf16.mxu0 0
        %4641 = vmatpush1.bf16.msra.mxu0 0
        %4642 = vmatprep.subr.bf16.mxu0 0
        %4643 = vmatpush1.bf16.msra.mxu0 0
        %4644 = vmatprep.subr.bf16.mxu0 0
        %4645 = vmatpush1.bf16.msra.mxu0 0
        %4646 = vmatprep.subr.bf16.mxu0 0
        %4647 = vmatpush1.bf16.msra.mxu0 0
        %4648 = vmatprep.subr.bf16.mxu0 0
        %4649 = vmatpush1.bf16.msra.mxu0 0
        %4650 = vmatprep.mubr.bf16.mxu0 0
        %4651 = vmatmul.mubr.bf16.gmra.mrb[0].mxu0 %v4560
        %v4652 = vpop.f32.mrb[0].mxu0
        %v4653 = vadd.f32 %v4535, %v4652
        %v4654 = vpop.f32.mrb[0].mxu0
        %v4655 = vpop.f32.mrb[0].mxu0
        %v4656 = vadd.f32 %v4538, %v4655
        %v4657 = vpop.f32.mrb[0].mxu0
        %4658 = vmatprep.mubr.bf16.mxu0 0
        %4659 = vmatmul.mubr.bf16.gmra.mrb[0].mxu0 %v4563
        %v4660 = vpop.f32.mrb[0].mxu0
        %v4661 = vadd.f32 %v4543, %v4660
        %v4662 = vpop.f32.mrb[0].mxu0
        %v4663 = vpop.f32.mrb[0].mxu0
        %v4664 = vadd.f32 %v4546, %v4663
        %v4665 = vpop.f32.mrb[0].mxu0
        %4666 = vdwg.mxu0
        %4667 = vst [vmem:[%s311] sm:$0xff] %v4600
        %4668 = vst [vmem:[%s311 + $0x8] sm:$0xff] %v4602
        %4669 = vst [vmem:[%s311 + $0x10] sm:$0xff] %v4653
        %4670 = vst [vmem:[%s311 + $0x18] sm:$0xff] %v4604
        %4671 = vst [vmem:[%s311 + $0x20] sm:$0xff] %v4606
        %4672 = vst [vmem:[%s311 + $0x28] sm:$0xff] %v4656
        %4673 = vst [vmem:[%s311 + $0x30] sm:$0xff] %v4610
        %4674 = vst [vmem:[%s311 + $0x38] sm:$0xff] %v4612
        %4675 = vst [vmem:[%s311 + $0x40] sm:$0xff] %v4661
        %4676 = vst [vmem:[%s311 + $0x48] sm:$0xff] %v4614
        %4677 = vst [vmem:[%s311 + $0x50] sm:$0xff] %v4616
        %4678 = vst [vmem:[%s311 + $0x58] sm:$0xff] %v4664
        %s4679 = sand.u32 %s185, 1
        %s4680 = scalar_lea.sflag [#allocation4], %s4679
        %s4681 = sand.u32 %s185, 1
        %s4682 = smul.addr %s4681, 96
        %s4683 = scalar_lea.vmem [#allocation7], %s4682
        // Predicated region
        $region57: #{tpu_custom_call.1} parent=47 // pred_check
          %p4684 = pneg %p195
        $region58: #{tpu_custom_call.1} parent=47 // pred_check_branch
          %4686 = sbr.rel (%p4684) target = $region60
        $region59: #{tpu_custom_call.1} parent=47 // pred_region
          %s4688 = ssub.s32 1536, 1536
          %4689 = vsyncadd %s4680, %s4688
          %s4690 = smul.addr %s25, 12
          %s4691 = smul.addr %s4690, 128
          %s4692 = scalar_lea.hbm %s7, %s4691
          %s4693 = sshll.u32 %s4683, 4
          %s4694 = int_to_ptr.vmem [resolvable:$true] %s4693
          %4699 = dma.vmem_to_hbm [thread:$0]  %s4694, 1536, %s4692, %s4680, 384, 384, 24
        $region60: #{tpu_custom_call.1} parent=47 // pred_fallthru
          _
      $region48: #{tpu_custom_call.1} parent=5 // pred_fallthru
        _
      %p4700 = scmp.le.s32.totalorder 2, %s20
      // Predicated region
      $region61: #{tpu_custom_call.1} parent=5 // pred_check
        %p4701 = pneg %p4700
      $region62: #{tpu_custom_call.1} parent=5 // pred_check_branch
        %4703 = sbr.rel (%p4701) target = $region64
      $region63: #{tpu_custom_call.1} parent=5 // pred_region
        %s4704 = ssub.s32 %s20, 2
        // Predicated region
        $region65: #{tpu_custom_call.1} parent=63 // pred_check
          %p4705 = pneg %p201
        $region66: #{tpu_custom_call.1} parent=63 // pred_check_branch
          %4707 = sbr.rel (%p4705) target = $region68
        $region67: #{tpu_custom_call.1} parent=63 // pred_region
          %s4708 = sand.u32 %s186, 1
          %s4709 = scalar_lea.sflag [#allocation4], %s4708
          %s4710 = sand.u32 %s186, 1
          %s4711 = smul.addr %s4710, 96
          %s4712 = scalar_lea.vmem [#allocation7], %s4711
          %4713 = dma.done %s4709, 1536
        $region68: #{tpu_custom_call.1} parent=63 // pred_fallthru
          _
      $region64: #{tpu_custom_call.1} parent=5 // pred_fallthru
        _
    $region6: #{tpu_custom_call.1} parent=1 // loop_footer
      %s24 = sadd.s32 1, %s20
    $region7: #{tpu_custom_call.1} parent=1 // loop_footer_branch
      %19 = sbr.rel target = $region3
    $region8: #{tpu_custom_call.1} parent=1 // loop_exit
      _
    %4714 = vsyncpa [#allocation3], 1
    %s4715 = scalar_lea.sflag [#allocation3], 1
    %4716 = vsyncpa %s4715, 1
    %4717 = vsyncpa [#allocation6], 1
    %4718 = vsyncpa [#allocation4], 1
    %s4719 = scalar_lea.sflag [#allocation4], 1
    %4720 = vsyncpa %s4719, 1

// kernel: tpu_custom_call.1
$region0: #{tpu_custom_call.1}
  #allocation0 [shape = 'u32[]', space=smem, size = 0x4, offset = 0x4, fixed_abs, tag = 'smem constant byte address 0x4 - core index']
  #allocation1 [shape = 'u32[144,128]{1,0:T(1,128)}', space=vmem, size = 0x12000, scoped, tag = 'internal scratch']
  %s0 = inlined_call_operand.hbm [shape: bf16[2,24,384], index: 0, kind: input, shape index: {}]
  %s1 = inlined_call_operand.vmem [shape: bf16[384,384], index: 1, kind: input, shape index: {}]
  %s2 = inlined_call_operand.vmem [shape: bf16[512,24], index: 2, kind: input, shape index: {}]
  %s3 = inlined_call_operand.vmem [shape: bf16[2,64,32], index: 3, kind: input, shape index: {}]
  %s4 = inlined_call_operand.vmem [shape: bf16[2,64,32], index: 4, kind: input, shape index: {}]
  %s5 = inlined_call_operand.vmem [shape: bf16[2,64,32], index: 5, kind: input, shape index: {}]
  %s6 = inlined_call_operand.hbm [shape: bf16[2,32,32], index: 6, kind: input, shape index: {}]
  %s7 = inlined_call_operand.hbm [shape: f32[2,32,384], index: 7, kind: output, shape index: {}]
  %s8 = sld [smem:[#allocation0]]
  $region69: #{tpu_custom_call.1} parent=0
    _
  %s10 = ssub.s32 1, %s8
  %s11 = scalar_select 0, %s10, %s8
  $region1: #{tpu_custom_call.1} parent=0
    #allocation2 [shape = 'u8[36864]{0}', space=vmem, size = 0x9000, scoped, tag = 'input window, operand 0']
    #allocation3 [shape = 's32[2]{0}', space=sflag, size = 0x8, scoped, tag = 'scoped memory for tpu_custom_call.1']
    #allocation4 [shape = 's32[2]{0}', space=sflag, size = 0x8, scoped, tag = 'scoped memory for tpu_custom_call.1']
    #allocation5 [shape = 'u8[16384]{0}', space=vmem, size = 0x4000, scoped, tag = 'input window, operand 6, single buffered']
    #allocation6 [shape = 's32[1]{0}', space=sflag, size = 0x4, scoped, tag = 'scoped memory for tpu_custom_call.1']
    #allocation7 [shape = 'u8[98304]{0}', space=vmem, size = 0x18000, scoped, tag = 'output window, operand 0']
    %12 = vsyncpa [#allocation3], 0
    %s13 = scalar_lea.sflag [#allocation3], 1
    %14 = vsyncpa %s13, 0
    %15 = vsyncpa [#allocation6], 0
    %16 = vsyncpa [#allocation4], 0
    %s17 = scalar_lea.sflag [#allocation4], 1
    %18 = vsyncpa %s17, 0
    loop: start=0, step=1, limit=4
    $region2: #{tpu_custom_call.1} parent=1 // loop_pre_header
      _
    $region3: #{tpu_custom_call.1} parent=1 // loop_header
      %s20 = sphi 0, %s24
      %p21 = scmp.ge.s32.totalorder %s20, 4
      %s30 = sphi 0, %s32
      %s33 = sphi 0, %s30
      %s34 = sphi 0, %s33
      %s50 = sphi 0, %s34
      %s54 = sphi 0, %s54
      %s56 = sphi 0, %s54
      %s57 = sphi 0, %s56
      %s71 = sphi 0, %s57
      %s75 = sphi 0, %s75
      %s77 = sphi 0, %s75
      %s78 = sphi 0, %s77
      %s92 = sphi 0, %s78
      %s96 = sphi 0, %s96
      %s98 = sphi 0, %s96
      %s99 = sphi 0, %s98
      %s113 = sphi 0, %s99
      %s117 = sphi 0, %s117
      %s119 = sphi 0, %s117
      %s120 = sphi 0, %s119
      %s134 = sphi 0, %s120
      %s138 = sphi 0, %s138
      %s140 = sphi 0, %s138
      %s141 = sphi 0, %s140
      %s155 = sphi 0, %s141
      %s159 = sphi 0, %s159
      %s161 = sphi 0, %s159
      %s162 = sphi 0, %s161
      %s176 = sphi 0, %s162
      %s182 = sphi 0, %s184
      %s185 = sphi 0, %s182
      %s186 = sphi 0, %s185
      %s202 = sphi 0, %s186
    $region4: #{tpu_custom_call.1} parent=1 // loop_header_branch
      %23 = sbr.rel (%p21) target = $region8
    $region5: #{tpu_custom_call.1} parent=1 // loop_body
      %s25 = ssub.s32 %s20, 1
      %s26 = ssub.s32 %s20, 2
      %s27 = sadd.s32 %s20, 1
      %s28 = ssub.s32 %s20, %s27
      %p29 = scmp.eq.s32.totalorder %s28, 0
      %s31 = sadd.s32 %s30, 1
      %s32 = scalar_select %p29, %s30, %s31
      %p35 = pneg %p29
      %p36 = scmp.eq.s32.totalorder %s20, 1
      %p37 = por %p35, %p36
      %p38 = scmp.ne.s32.totalorder %s30, %s33
      %p39 = scmp.eq.s32.totalorder %s20, 0
      %p40 = por %p38, %p39
      %p41 = scmp.ne.s32.totalorder %s30, %s33
      %p42 = scmp.eq.s32.totalorder %s25, 1
      %p43 = por %p41, %p42
      %p44 = scmp.ne.s32.totalorder %s33, %s34
      %p45 = scmp.eq.s32.totalorder %s25, 0
      %p46 = por %p44, %p45
      %p47 = scmp.ne.s32.totalorder %s33, %s34
      %p48 = scmp.eq.s32.totalorder %s26, 1
      %p49 = por %p47, %p48
      %p51 = scmp.ne.s32.totalorder %s34, %s50
      %p52 = scmp.eq.s32.totalorder %s26, 0
      %p53 = por %p51, %p52
      %s55 = sadd.s32 %s54, 1
      %p58 = scmp.eq.s32.totalorder %s20, 1
      %p59 = scmp.ne.s32.totalorder %s54, %s56
      %p60 = scmp.eq.s32.totalorder %s20, 0
      %p61 = por %p59, %p60
      %p62 = scmp.ne.s32.totalorder %s54, %s56
      %p63 = scmp.eq.s32.totalorder %s25, 1
      %p64 = por %p62, %p63
      %p65 = scmp.ne.s32.totalorder %s56, %s57
      %p66 = scmp.eq.s32.totalorder %s25, 0
      %p67 = por %p65, %p66
      %p68 = scmp.ne.s32.totalorder %s56, %s57
      %p69 = scmp.eq.s32.totalorder %s26, 1
      %p70 = por %p68, %p69
      %p72 = scmp.ne.s32.totalorder %s57, %s71
      %p73 = scmp.eq.s32.totalorder %s26, 0
      %p74 = por %p72, %p73
      %s76 = sadd.s32 %s75, 1
      %p79 = scmp.eq.s32.totalorder %s20, 1
      %p80 = scmp.ne.s32.totalorder %s75, %s77
      %p81 = scmp.eq.s32.totalorder %s20, 0
      %p82 = por %p80, %p81
      %p83 = scmp.ne.s32.totalorder %s75, %s77
      %p84 = scmp.eq.s32.totalorder %s25, 1
      %p85 = por %p83, %p84
      %p86 = scmp.ne.s32.totalorder %s77, %s78
      %p87 = scmp.eq.s32.totalorder %s25, 0
      %p88 = por %p86, %p87
      %p89 = scmp.ne.s32.totalorder %s77, %s78
      %p90 = scmp.eq.s32.totalorder %s26, 1
      %p91 = por %p89, %p90
      %p93 = scmp.ne.s32.totalorder %s78, %s92
      %p94 = scmp.eq.s32.totalorder %s26, 0
      %p95 = por %p93, %p94
      %s97 = sadd.s32 %s96, 1
      %p100 = scmp.eq.s32.totalorder %s20, 1
      %p101 = scmp.ne.s32.totalorder %s96, %s98
      %p102 = scmp.eq.s32.totalorder %s20, 0
      %p103 = por %p101, %p102
      %p104 = scmp.ne.s32.totalorder %s96, %s98
      %p105 = scmp.eq.s32.totalorder %s25, 1
      %p106 = por %p104, %p105
      %p107 = scmp.ne.s32.totalorder %s98, %s99
      %p108 = scmp.eq.s32.totalorder %s25, 0
      %p109 = por %p107, %p108
      %p110 = scmp.ne.s32.totalorder %s98, %s99
      %p111 = scmp.eq.s32.totalorder %s26, 1
      %p112 = por %p110, %p111
      %p114 = scmp.ne.s32.totalorder %s99, %s113
      %p115 = scmp.eq.s32.totalorder %s26, 0
      %p116 = por %p114, %p115
      %s118 = sadd.s32 %s117, 1
      %p121 = scmp.eq.s32.totalorder %s20, 1
      %p122 = scmp.ne.s32.totalorder %s117, %s119
      %p123 = scmp.eq.s32.totalorder %s20, 0
      %p124 = por %p122, %p123
      %p125 = scmp.ne.s32.totalorder %s117, %s119
      %p126 = scmp.eq.s32.totalorder %s25, 1
      %p127 = por %p125, %p126
      %p128 = scmp.ne.s32.totalorder %s119, %s120
      %p129 = scmp.eq.s32.totalorder %s25, 0
      %p130 = por %p128, %p129
      %p131 = scmp.ne.s32.totalorder %s119, %s120
      %p132 = scmp.eq.s32.totalorder %s26, 1
      %p133 = por %p131, %p132
      %p135 = scmp.ne.s32.totalorder %s120, %s134
      %p136 = scmp.eq.s32.totalorder %s26, 0
      %p137 = por %p135, %p136
      %s139 = sadd.s32 %s138, 1
      %p142 = scmp.eq.s32.totalorder %s20, 1
      %p143 = scmp.ne.s32.totalorder %s138, %s140
      %p144 = scmp.eq.s32.totalorder %s20, 0
      %p145 = por %p143, %p144
      %p146 = scmp.ne.s32.totalorder %s138, %s140
      %p147 = scmp.eq.s32.totalorder %s25, 1
      %p148 = por %p146, %p147
      %p149 = scmp.ne.s32.totalorder %s140, %s141
      %p150 = scmp.eq.s32.totalorder %s25, 0
      %p151 = por %p149, %p150
      %p152 = scmp.ne.s32.totalorder %s140, %s141
      %p153 = scmp.eq.s32.totalorder %s26, 1
      %p154 = por %p152, %p153
      %p156 = scmp.ne.s32.totalorder %s141, %s155
      %p157 = scmp.eq.s32.totalorder %s26, 0
      %p158 = por %p156, %p157
      %s160 = sadd.s32 %s159, 1
      %p163 = scmp.eq.s32.totalorder %s20, 1
      %p164 = scmp.ne.s32.totalorder %s159, %s161
      %p165 = scmp.eq.s32.totalorder %s20, 0
      %p166 = por %p164, %p165
      %p167 = scmp.ne.s32.totalorder %s159, %s161
      %p168 = scmp.eq.s32.totalorder %s25, 1
      %p169 = por %p167, %p168
      %p170 = scmp.ne.s32.totalorder %s161, %s162
      %p171 = scmp.eq.s32.totalorder %s25, 0
      %p172 = por %p170, %p171
      %p173 = scmp.ne.s32.totalorder %s161, %s162
      %p174 = scmp.eq.s32.totalorder %s26, 1
      %p175 = por %p173, %p174
      %p177 = scmp.ne.s32.totalorder %s162, %s176
      %p178 = scmp.eq.s32.totalorder %s26, 0
      %p179 = por %p177, %p178
      %s180 = ssub.s32 %s20, %s27
      %p181 = scmp.eq.s32.totalorder %s180, 0
      %s183 = sadd.s32 %s182, 1
      %s184 = scalar_select %p181, %s182, %s183
      %p187 = pneg %p181
      %p188 = scmp.eq.s32.totalorder %s20, 1
      %p189 = por %p187, %p188
      %p190 = scmp.ne.s32.totalorder %s182, %s185
      %p191 = scmp.eq.s32.totalorder %s20, 0
      %p192 = por %p190, %p191
      %p193 = scmp.ne.s32.totalorder %s182, %s185
      %p194 = scmp.eq.s32.totalorder %s25, 1
      %p195 = por %p193, %p194
      %p196 = scmp.ne.s32.totalorder %s185, %s186
      %p197 = scmp.eq.s32.totalorder %s25, 0
      %p198 = por %p196, %p197
      %p199 = scmp.ne.s32.totalorder %s185, %s186
      %p200 = scmp.eq.s32.totalorder %s26, 1
      %p201 = por %p199, %p200
      %p203 = scmp.ne.s32.totalorder %s186, %s202
      %p204 = scmp.eq.s32.totalorder %s26, 0
      %p205 = por %p203, %p204
      %p206 = scmp.le.s32.totalorder 1, %s20
      %p207 = scmp.lt.s32.totalorder %s20, 3
      %p208 = pnand %p206, %p207
      %p209 = pneg %p208
      // Predicated region
      $region9: #{tpu_custom_call.1} parent=5 // pred_check
        _
      $region10: #{tpu_custom_call.1} parent=5 // pred_check_branch
        %211 = sbr.rel (%p208) target = $region12
      $region11: #{tpu_custom_call.1} parent=5 // pred_region
        %s212 = ssub.s32 %s20, 1
        // Predicated region
        $region13: #{tpu_custom_call.1} parent=11 // pred_check
          %p213 = pneg %p67
        $region14: #{tpu_custom_call.1} parent=11 // pred_check_branch
          %215 = sbr.rel (%p213) target = $region16
        $region15: #{tpu_custom_call.1} parent=11 // pred_region
          _
        $region16: #{tpu_custom_call.1} parent=11 // pred_fallthru
          _
        // Predicated region
        $region17: #{tpu_custom_call.1} parent=11 // pred_check
          %p216 = pneg %p88
        $region18: #{tpu_custom_call.1} parent=11 // pred_check_branch
          %218 = sbr.rel (%p216) target = $region20
        $region19: #{tpu_custom_call.1} parent=11 // pred_region
          _
        $region20: #{tpu_custom_call.1} parent=11 // pred_fallthru
          _
        // Predicated region
        $region21: #{tpu_custom_call.1} parent=11 // pred_check
          %p219 = pneg %p109
        $region22: #{tpu_custom_call.1} parent=11 // pred_check_branch
          %221 = sbr.rel (%p219) target = $region24
        $region23: #{tpu_custom_call.1} parent=11 // pred_region
          _
        $region24: #{tpu_custom_call.1} parent=11 // pred_fallthru
          _
        // Predicated region
        $region25: #{tpu_custom_call.1} parent=11 // pred_check
          %p222 = pneg %p130
        $region26: #{tpu_custom_call.1} parent=11 // pred_check_branch
          %224 = sbr.rel (%p222) target = $region28
        $region27: #{tpu_custom_call.1} parent=11 // pred_region
          _
        $region28: #{tpu_custom_call.1} parent=11 // pred_fallthru
          _
        // Predicated region
        $region29: #{tpu_custom_call.1} parent=11 // pred_check
          %p225 = pneg %p151
        $region30: #{tpu_custom_call.1} parent=11 // pred_check_branch
          %227 = sbr.rel (%p225) target = $region32
        $region31: #{tpu_custom_call.1} parent=11 // pred_region
          _
        $region32: #{tpu_custom_call.1} parent=11 // pred_fallthru
          _
        // Predicated region
        $region33: #{tpu_custom_call.1} parent=11 // pred_check
          %p228 = pneg %p172
        $region34: #{tpu_custom_call.1} parent=11 // pred_check_branch
          %230 = sbr.rel (%p228) target = $region36
        $region35: #{tpu_custom_call.1} parent=11 // pred_region
          %s232 = ssub.s32 512, 512
          %233 = vsyncadd [#allocation6], %s232
          %s234 = sshll.u32 [#allocation5], 4
          %s235 = int_to_ptr.vmem [resolvable:$true] %s234
          %240 = dma.hbm_to_vmem [thread:$0]  %s6, 512, %s235, [#allocation6], 64, 64, 4
        $region36: #{tpu_custom_call.1} parent=11 // pred_fallthru
          _
      $region12: #{tpu_custom_call.1} parent=5 // pred_fallthru
        _
      %p241 = scmp.lt.s32.totalorder %s20, 2
      // Predicated region
      $region37: #{tpu_custom_call.1} parent=5 // pred_check
        %p242 = pneg %p241
      $region38: #{tpu_custom_call.1} parent=5 // pred_check_branch
        %244 = sbr.rel (%p242) target = $region40
      $region39: #{tpu_custom_call.1} parent=5 // pred_region
        // Predicated region
        $region41: #{tpu_custom_call.1} parent=39 // pred_check
          %p245 = pneg %p40
        $region42: #{tpu_custom_call.1} parent=39 // pred_check_branch
          %247 = sbr.rel (%p245) target = $region44
        $region43: #{tpu_custom_call.1} parent=39 // pred_region
          %s248 = sand.u32 %s30, 1
          %s249 = scalar_lea.sflag [#allocation3], %s248
          %s250 = sand.u32 %s30, 1
          %s251 = smul.addr %s250, 36
          %s252 = scalar_lea.vmem [#allocation2], %s251
          %s254 = ssub.s32 576, 576
          %255 = vsyncadd %s249, %s254
          %s256 = smul.addr %s20, 9
          %s257 = smul.addr %s256, 64
          %s258 = scalar_lea.hbm %s0, %s257
          %s259 = sshll.u32 %s252, 4
          %s260 = int_to_ptr.vmem [resolvable:$true] %s259
          %265 = dma.hbm_to_vmem [thread:$0]  %s258, 576, %s260, %s249, 192, 192, 12
        $region44: #{tpu_custom_call.1} parent=39 // pred_fallthru
          _
      $region40: #{tpu_custom_call.1} parent=5 // pred_fallthru
        _
      %p266 = scmp.le.s32.totalorder 1, %s20
      %p267 = scmp.lt.s32.totalorder %s20, 3
      %p268 = pnand %p266, %p267
      %p269 = pneg %p268
      // Predicated region
      $region45: #{tpu_custom_call.1} parent=5 // pred_check
        _
      $region46: #{tpu_custom_call.1} parent=5 // pred_check_branch
        %271 = sbr.rel (%p268) target = $region48
      $region47: #{tpu_custom_call.1} parent=5 // pred_region
        %s272 = ssub.s32 %s20, 1
        %s273 = sand.u32 %s33, 1
        %s274 = scalar_lea.sflag [#allocation3], %s273
        %s275 = sand.u32 %s33, 1
        %s276 = smul.addr %s275, 36
        %s277 = scalar_lea.vmem [#allocation2], %s276
        // Predicated region
        $region49: #{tpu_custom_call.1} parent=47 // pred_check
          %p278 = pneg %p46
        $region50: #{tpu_custom_call.1} parent=47 // pred_check_branch
          %280 = sbr.rel (%p278) target = $region52
        $region51: #{tpu_custom_call.1} parent=47 // pred_region
          %281 = dma.done %s274, 576
        $region52: #{tpu_custom_call.1} parent=47 // pred_fallthru
          _
        // Predicated region
        $region53: #{tpu_custom_call.1} parent=47 // pred_check
          %p282 = pneg %p172
        $region54: #{tpu_custom_call.1} parent=47 // pred_check_branch
          %284 = sbr.rel (%p282) target = $region56
        $region55: #{tpu_custom_call.1} parent=47 // pred_region
          %285 = dma.done [#allocation6], 512
        $region56: #{tpu_custom_call.1} parent=47 // pred_fallthru
          _
        %s286 = sand.u32 %s33, 1
        %s287 = scalar_lea.sflag [#allocation3], %s286
        %s288 = sand.u32 %s33, 1
        %s289 = smul.addr %s288, 36
        %s290 = scalar_lea.vmem [#allocation2], %s289
        %p291 = pneg %p46
        %p292 = pneg %p43
        %p293 = pneg %p67
        %p294 = pneg %p64
        %p295 = pneg %p88
        %p296 = pneg %p85
        %p297 = pneg %p109
        %p298 = pneg %p106
        %p299 = pneg %p130
        %p300 = pneg %p127
        %p301 = pneg %p151
        %p302 = pneg %p148
        %p303 = pneg %p172
        %p304 = pneg %p169
        %p305 = pneg %p198
        %p306 = pneg %p195
        %s307 = sand.u32 %s185, 1
        %s308 = scalar_lea.sflag [#allocation4], %s307
        %s309 = sand.u32 %s185, 1
        %s310 = smul.addr %s309, 96
        %s311 = scalar_lea.vmem [#allocation7], %s310
        %v313 = vld [vmem:[%s277] sm:$0xff]
        %v314 = vld [vmem:[%s277 + $0x8] sm:$0xf]
        %v315 = vld [vmem:[%s277 + $0xc] sm:$0xff]
        %v316 = vld [vmem:[%s277 + $0x14] sm:$0xf]
        %v317 = vld [vmem:[%s277 + $0x18] sm:$0xff]
        %v318 = vld [vmem:[%s277 + $0x20] sm:$0xf]
        %v319 = vld [vmem:[%s2] sm:$0xf]
        %v320 = vld [vmem:[%s2 + $0x4] sm:$0xf]
        %v321 = vld [vmem:[%s2 + $0x8] sm:$0xf]
        %v322 = vld [vmem:[%s2 + $0xc] sm:$0xf]
        %v323 = vld [vmem:[%s2 + $0x10] sm:$0xf]
        %v324 = vld [vmem:[%s2 + $0x14] sm:$0xf]
        %v325 = vld [vmem:[%s2 + $0x18] sm:$0xf]
        %v326 = vld [vmem:[%s2 + $0x1c] sm:$0xf]
        %v327 = vld [vmem:[%s2 + $0x20] sm:$0xf]
        %v328 = vld [vmem:[%s2 + $0x24] sm:$0xf]
        %v329 = vld [vmem:[%s2 + $0x28] sm:$0xf]
        %v330 = vld [vmem:[%s2 + $0x2c] sm:$0xf]
        %v331 = vld [vmem:[%s2 + $0x30] sm:$0xf]
        %v332 = vld [vmem:[%s2 + $0x34] sm:$0xf]
        %v333 = vld [vmem:[%s2 + $0x38] sm:$0xf]
        %v334 = vld [vmem:[%s2 + $0x3c] sm:$0xf]
        %v335 = vld [vmem:[%s2 + $0x40] sm:$0xf]
        %v336 = vld [vmem:[%s2 + $0x44] sm:$0xf]
        %v337 = vld [vmem:[%s2 + $0x48] sm:$0xf]
        %v338 = vld [vmem:[%s2 + $0x4c] sm:$0xf]
        %v339 = vld [vmem:[%s2 + $0x50] sm:$0xf]
        %v340 = vld [vmem:[%s2 + $0x54] sm:$0xf]
        %v341 = vld [vmem:[%s2 + $0x58] sm:$0xf]
        %v342 = vld [vmem:[%s2 + $0x5c] sm:$0xf]
        %v343 = vld [vmem:[%s2 + $0x60] sm:$0xf]
        %v344 = vld [vmem:[%s2 + $0x64] sm:$0xf]
        %v345 = vld [vmem:[%s2 + $0x68] sm:$0xf]
        %v346 = vld [vmem:[%s2 + $0x6c] sm:$0xf]
        %v347 = vld [vmem:[%s2 + $0x70] sm:$0xf]
        %v348 = vld [vmem:[%s2 + $0x74] sm:$0xf]
        %v349 = vld [vmem:[%s2 + $0x78] sm:$0xf]
        %v350 = vld [vmem:[%s2 + $0x7c] sm:$0xf]
        %v351 = vld [vmem:[%s2 + $0x80] sm:$0xf]
        %v352 = vld [vmem:[%s2 + $0x84] sm:$0xf]
        %v353 = vld [vmem:[%s2 + $0x88] sm:$0xf]
        %v354 = vld [vmem:[%s2 + $0x8c] sm:$0xf]
        %v355 = vld [vmem:[%s2 + $0x90] sm:$0xf]
        %v356 = vld [vmem:[%s2 + $0x94] sm:$0xf]
        %v357 = vld [vmem:[%s2 + $0x98] sm:$0xf]
        %v358 = vld [vmem:[%s2 + $0x9c] sm:$0xf]
        %v359 = vld [vmem:[%s2 + $0xa0] sm:$0xf]
        %v360 = vld [vmem:[%s2 + $0xa4] sm:$0xf]
        %v361 = vld [vmem:[%s2 + $0xa8] sm:$0xf]
        %v362 = vld [vmem:[%s2 + $0xac] sm:$0xf]
        %v363 = vld [vmem:[%s2 + $0xb0] sm:$0xf]
        %v364 = vld [vmem:[%s2 + $0xb4] sm:$0xf]
        %v365 = vld [vmem:[%s2 + $0xb8] sm:$0xf]
        %v366 = vld [vmem:[%s2 + $0xbc] sm:$0xf]
        %v367 = vld [vmem:[%s2 + $0xc0] sm:$0xf]
        %v368 = vld [vmem:[%s2 + $0xc4] sm:$0xf]
        %v369 = vld [vmem:[%s2 + $0xc8] sm:$0xf]
        %v370 = vld [vmem:[%s2 + $0xcc] sm:$0xf]
        %v371 = vld [vmem:[%s2 + $0xd0] sm:$0xf]
        %v372 = vld [vmem:[%s2 + $0xd4] sm:$0xf]
        %v373 = vld [vmem:[%s2 + $0xd8] sm:$0xf]
        %v374 = vld [vmem:[%s2 + $0xdc] sm:$0xf]
        %v375 = vld [vmem:[%s2 + $0xe0] sm:$0xf]
        %v376 = vld [vmem:[%s2 + $0xe4] sm:$0xf]
        %v377 = vld [vmem:[%s2 + $0xe8] sm:$0xf]
        %v378 = vld [vmem:[%s2 + $0xec] sm:$0xf]
        %v379 = vld [vmem:[%s2 + $0xf0] sm:$0xf]
        %v380 = vld [vmem:[%s2 + $0xf4] sm:$0xf]
        %v381 = vld [vmem:[%s2 + $0xf8] sm:$0xf]
        %v382 = vld [vmem:[%s2 + $0xfc] sm:$0xf]
        %v447 = vunpack.c.l.b16 %v319
        %v448 = vunpack.c.l.b16 %v320
        %v449 = vunpack.c.l.b16 %v321
        %v450 = vunpack.c.l.b16 %v322
        %v451 = vunpack.c.l.b16 %v323
        %v452 = vunpack.c.l.b16 %v324
        %v453 = vunpack.c.l.b16 %v325
        %v454 = vunpack.c.l.b16 %v326
        %v455 = vunpack.c.l.b16 %v327
        %v456 = vunpack.c.l.b16 %v328
        %v457 = vunpack.c.l.b16 %v329
        %v458 = vunpack.c.l.b16 %v330
        %v459 = vunpack.c.l.b16 %v331
        %v460 = vunpack.c.l.b16 %v332
        %v461 = vunpack.c.l.b16 %v333
        %v462 = vunpack.c.l.b16 %v334
        %v463 = vunpack.c.l.b16 %v335
        %v464 = vunpack.c.l.b16 %v336
        %v465 = vunpack.c.l.b16 %v337
        %v466 = vunpack.c.l.b16 %v338
        %v467 = vunpack.c.l.b16 %v339
        %v468 = vunpack.c.l.b16 %v340
        %v469 = vunpack.c.l.b16 %v341
        %v470 = vunpack.c.l.b16 %v342
        %v471 = vunpack.c.l.b16 %v343
        %v472 = vunpack.c.l.b16 %v344
        %v473 = vunpack.c.l.b16 %v345
        %v474 = vunpack.c.l.b16 %v346
        %v475 = vunpack.c.l.b16 %v347
        %v476 = vunpack.c.l.b16 %v348
        %v477 = vunpack.c.l.b16 %v349
        %v478 = vunpack.c.l.b16 %v350
        %v479 = vunpack.c.l.b16 %v351
        %v480 = vunpack.c.l.b16 %v352
        %v481 = vunpack.c.l.b16 %v353
        %v482 = vunpack.c.l.b16 %v354
        %v483 = vunpack.c.l.b16 %v355
        %v484 = vunpack.c.l.b16 %v356
        %v485 = vunpack.c.l.b16 %v357
        %v486 = vunpack.c.l.b16 %v358
        %v487 = vunpack.c.l.b16 %v359
        %v488 = vunpack.c.l.b16 %v360
        %v489 = vunpack.c.l.b16 %v361
        %v490 = vunpack.c.l.b16 %v362
        %v491 = vunpack.c.l.b16 %v363
        %v492 = vunpack.c.l.b16 %v364
        %v493 = vunpack.c.l.b16 %v365
        %v494 = vunpack.c.l.b16 %v366
        %v495 = vunpack.c.l.b16 %v367
        %v496 = vunpack.c.l.b16 %v368
        %v497 = vunpack.c.l.b16 %v369
        %v498 = vunpack.c.l.b16 %v370
        %v499 = vunpack.c.l.b16 %v371
        %v500 = vunpack.c.l.b16 %v372
        %v501 = vunpack.c.l.b16 %v373
        %v502 = vunpack.c.l.b16 %v374
        %v503 = vunpack.c.l.b16 %v375
        %v504 = vunpack.c.l.b16 %v376
        %v505 = vunpack.c.l.b16 %v377
        %v506 = vunpack.c.l.b16 %v378
        %v507 = vunpack.c.l.b16 %v379
        %v508 = vunpack.c.l.b16 %v380
        %v509 = vunpack.c.l.b16 %v381
        %v510 = vunpack.c.l.b16 %v382
        %v511 = vpack.c.b16 %v448, %v447
        %v512 = vpack.c.b16 %v450, %v449
        %v513 = vpack.c.b16 %v452, %v451
        %v514 = vpack.c.b16 %v454, %v453
        %v515 = vpack.c.b16 %v456, %v455
        %v516 = vpack.c.b16 %v458, %v457
        %v517 = vpack.c.b16 %v460, %v459
        %v518 = vpack.c.b16 %v462, %v461
        %v519 = vpack.c.b16 %v464, %v463
        %v520 = vpack.c.b16 %v466, %v465
        %v521 = vpack.c.b16 %v468, %v467
        %v522 = vpack.c.b16 %v470, %v469
        %v523 = vpack.c.b16 %v472, %v471
        %v524 = vpack.c.b16 %v474, %v473
        %v525 = vpack.c.b16 %v476, %v475
        %v526 = vpack.c.b16 %v478, %v477
        %v527 = vpack.c.b16 %v480, %v479
        %v528 = vpack.c.b16 %v482, %v481
        %v529 = vpack.c.b16 %v484, %v483
        %v530 = vpack.c.b16 %v486, %v485
        %v531 = vpack.c.b16 %v488, %v487
        %v532 = vpack.c.b16 %v490, %v489
        %v533 = vpack.c.b16 %v492, %v491
        %v534 = vpack.c.b16 %v494, %v493
        %v535 = vpack.c.b16 %v496, %v495
        %v536 = vpack.c.b16 %v498, %v497
        %v537 = vpack.c.b16 %v500, %v499
        %v538 = vpack.c.b16 %v502, %v501
        %v539 = vpack.c.b16 %v504, %v503
        %v540 = vpack.c.b16 %v506, %v505
        %v541 = vpack.c.b16 %v508, %v507
        %v542 = vpack.c.b16 %v510, %v509
        %v549 = vunpack.c.l.b16 %v313
        %v550 = vunpack.c.h.b16 %v313
        %v551 = vunpack.c.l.b16 %v314
        %v552 = vunpack.c.l.b16 %v315
        %v553 = vunpack.c.h.b16 %v315
        %v554 = vunpack.c.l.b16 %v316
        %v555 = vunpack.c.l.b16 %v317
        %v556 = vunpack.c.h.b16 %v317
        %v557 = vunpack.c.l.b16 %v318
        %v558 = vpack.c.b16 %v552, %v549
        %v559 = vpack.c.b16 %v553, %v550
        %v560 = vpack.c.b16 %v554, %v551
        %v561 = vpack.c.b16 %v555, %v555
        %v562 = vpack.c.b16 %v556, %v556
        %v563 = vpack.c.b16 %v557, %v557
        %vm567 = vcmask 195584
        %v569 = vsel %vm567, %v511, 0
        %v572 = vsel %vm567, %v512, 0
        %v575 = vsel %vm567, %v513, 0
        %v578 = vsel %vm567, %v514, 0
        %v581 = vsel %vm567, %v515, 0
        %v584 = vsel %vm567, %v516, 0
        %v587 = vsel %vm567, %v517, 0
        %v590 = vsel %vm567, %v518, 0
        %v593 = vsel %vm567, %v519, 0
        %v596 = vsel %vm567, %v520, 0
        %v599 = vsel %vm567, %v521, 0
        %v602 = vsel %vm567, %v522, 0
        %v605 = vsel %vm567, %v523, 0
        %v608 = vsel %vm567, %v524, 0
        %v611 = vsel %vm567, %v525, 0
        %v614 = vsel %vm567, %v526, 0
        %v617 = vsel %vm567, %v527, 0
        %v620 = vsel %vm567, %v528, 0
        %v623 = vsel %vm567, %v529, 0
        %v626 = vsel %vm567, %v530, 0
        %v629 = vsel %vm567, %v531, 0
        %v632 = vsel %vm567, %v532, 0
        %v635 = vsel %vm567, %v533, 0
        %v638 = vsel %vm567, %v534, 0
        %v641 = vsel %vm567, %v535, 0
        %v644 = vsel %vm567, %v536, 0
        %v647 = vsel %vm567, %v537, 0
        %v650 = vsel %vm567, %v538, 0
        %v653 = vsel %vm567, %v539, 0
        %v656 = vsel %vm567, %v540, 0
        %v659 = vsel %vm567, %v541, 0
        %v662 = vsel %vm567, %v542, 0
        %vm664 = vcmask 1043456
        %v666 = vsel %vm664, %v561, 0
        %v669 = vsel %vm664, %v562, 0
        %v672 = vsel %vm664, %v563, 0
        %674 = vmatprep.subr.bf16.mxu0 %v559
        %675 = vmatpush1.bf16.msra.mxu0 %v558
        %676 = vmatprep.subr.bf16.mxu0 %v669
        %677 = vmatpush1.bf16.msra.mxu0 %v666
        %678 = vmatprep.subr.bf16.mxu0 0
        %679 = vmatpush1.bf16.msra.mxu0 0
        %680 = vmatprep.subr.bf16.mxu0 0
        %681 = vmatpush1.bf16.msra.mxu0 0
        %682 = vmatprep.subr.bf16.mxu0 0
        %683 = vmatpush1.bf16.msra.mxu0 0
        %684 = vmatprep.subr.bf16.mxu0 0
        %685 = vmatpush1.bf16.msra.mxu0 0
        %686 = vmatprep.subr.bf16.mxu0 0
        %687 = vmatpush1.bf16.msra.mxu0 0
        %688 = vmatprep.subr.bf16.mxu0 0
        %689 = vmatpush1.bf16.msra.mxu0 0
        %690 = vmatprep.subr.bf16.mxu0 0
        %691 = vmatpush1.bf16.msra.mxu0 0
        %692 = vmatprep.subr.bf16.mxu0 0
        %693 = vmatpush1.bf16.msra.mxu0 0
        %694 = vmatprep.subr.bf16.mxu0 0
        %695 = vmatpush1.bf16.msra.mxu0 0
        %696 = vmatprep.subr.bf16.mxu0 0
        %697 = vmatpush1.bf16.msra.mxu0 0
        %698 = vmatprep.subr.bf16.mxu0 0
        %699 = vmatpush1.bf16.msra.mxu0 0
        %700 = vmatprep.subr.bf16.mxu0 0
        %701 = vmatpush1.bf16.msra.mxu0 0
        %702 = vmatprep.subr.bf16.mxu0 0
        %703 = vmatpush1.bf16.msra.mxu0 0
        %704 = vmatprep.subr.bf16.mxu0 0
        %705 = vmatpush1.bf16.msra.mxu0 0
        %706 = vmatprep.mubr.bf16.mxu0 0
        %707 = vmatmul.mubr.bf16.gmra.mrb[0].mxu0 %v569
        %v708 = vpop.f32.mrb[0].mxu0
        %v709 = vadd.f32 0.0, %v708
        %v710 = vpop.f32.mrb[0].mxu0
        %v711 = vadd.f32 0.0, %v710
        %v712 = vpop.f32.mrb[0].mxu0
        %v713 = vadd.f32 0.0, %v712
        %v714 = vpop.f32.mrb[0].mxu0
        %v715 = vadd.f32 0.0, %v714
        %716 = vmatprep.mubr.bf16.mxu0 0
        %717 = vmatmul.mubr.bf16.gmra.mrb[0].mxu0 %v572
        %v718 = vpop.f32.mrb[0].mxu0
        %v719 = vadd.f32 0.0, %v718
        %v720 = vpop.f32.mrb[0].mxu0
        %v721 = vadd.f32 0.0, %v720
        %v722 = vpop.f32.mrb[0].mxu0
        %v723 = vadd.f32 0.0, %v722
        %v724 = vpop.f32.mrb[0].mxu0
        %v725 = vadd.f32 0.0, %v724
        %726 = vmatprep.mubr.bf16.mxu0 0
        %727 = vmatmul.mubr.bf16.gmra.mrb[0].mxu0 %v575
        %v728 = vpop.f32.mrb[0].mxu0
        %v729 = vadd.f32 0.0, %v728
        %v730 = vpop.f32.mrb[0].mxu0
        %v731 = vadd.f32 0.0, %v730
        %v732 = vpop.f32.mrb[0].mxu0
        %v733 = vadd.f32 0.0, %v732
        %v734 = vpop.f32.mrb[0].mxu0
        %v735 = vadd.f32 0.0, %v734
        %736 = vmatprep.mubr.bf16.mxu0 0
        %737 = vmatmul.mubr.bf16.gmra.mrb[0].mxu0 %v578
        %v738 = vpop.f32.mrb[0].mxu0
        %v739 = vadd.f32 0.0, %v738
        %v740 = vpop.f32.mrb[0].mxu0
        %v741 = vadd.f32 0.0, %v740
        %v742 = vpop.f32.mrb[0].mxu0
        %v743 = vadd.f32 0.0, %v742
        %v744 = vpop.f32.mrb[0].mxu0
        %v745 = vadd.f32 0.0, %v744
        %746 = vmatprep.mubr.bf16.mxu0 0
        %747 = vmatmul.mubr.bf16.gmra.mrb[0].mxu0 %v581
        %v748 = vpop.f32.mrb[0].mxu0
        %v749 = vadd.f32 0.0, %v748
        %v750 = vpop.f32.mrb[0].mxu0
        %v751 = vadd.f32 0.0, %v750
        %v752 = vpop.f32.mrb[0].mxu0
        %v753 = vadd.f32 0.0, %v752
        %v754 = vpop.f32.mrb[0].mxu0
        %v755 = vadd.f32 0.0, %v754
        %756 = vmatprep.mubr.bf16.mxu0 0
        %757 = vmatmul.mubr.bf16.gmra.mrb[0].mxu0 %v584
        %v758 = vpop.f32.mrb[0].mxu0
        %v759 = vadd.f32 0.0, %v758
        %v760 = vpop.f32.mrb[0].mxu0
        %v761 = vadd.f32 0.0, %v760
        %v762 = vpop.f32.mrb[0].mxu0
        %v763 = vadd.f32 0.0, %v762
        %v764 = vpop.f32.mrb[0].mxu0
        %v765 = vadd.f32 0.0, %v764
        %766 = vmatprep.mubr.bf16.mxu0 0
        %767 = vmatmul.mubr.bf16.gmra.mrb[0].mxu0 %v587
        %v768 = vpop.f32.mrb[0].mxu0
        %v769 = vadd.f32 0.0, %v768
        %v770 = vpop.f32.mrb[0].mxu0
        %v771 = vadd.f32 0.0, %v770
        %v772 = vpop.f32.mrb[0].mxu0
        %v773 = vadd.f32 0.0, %v772
        %v774 = vpop.f32.mrb[0].mxu0
        %v775 = vadd.f32 0.0, %v774
        %776 = vmatprep.mubr.bf16.mxu0 0
        %777 = vmatmul.mubr.bf16.gmra.mrb[0].mxu0 %v590
        %v778 = vpop.f32.mrb[0].mxu0
        %v779 = vadd.f32 0.0, %v778
        %v780 = vpop.f32.mrb[0].mxu0
        %v781 = vadd.f32 0.0, %v780
        %v782 = vpop.f32.mrb[0].mxu0
        %v783 = vadd.f32 0.0, %v782
        %v784 = vpop.f32.mrb[0].mxu0
        %v785 = vadd.f32 0.0, %v784
        %786 = vmatprep.mubr.bf16.mxu0 0
        %787 = vmatmul.mubr.bf16.gmra.mrb[0].mxu0 %v593
        %v788 = vpop.f32.mrb[0].mxu0
        %v789 = vadd.f32 0.0, %v788
        %v790 = vpop.f32.mrb[0].mxu0
        %v791 = vadd.f32 0.0, %v790
        %v792 = vpop.f32.mrb[0].mxu0
        %v793 = vadd.f32 0.0, %v792
        %v794 = vpop.f32.mrb[0].mxu0
        %v795 = vadd.f32 0.0, %v794
        %796 = vmatprep.mubr.bf16.mxu0 0
        %797 = vmatmul.mubr.bf16.gmra.mrb[0].mxu0 %v596
        %v798 = vpop.f32.mrb[0].mxu0
        %v799 = vadd.f32 0.0, %v798
        %v800 = vpop.f32.mrb[0].mxu0
        %v801 = vadd.f32 0.0, %v800
        %v802 = vpop.f32.mrb[0].mxu0
        %v803 = vadd.f32 0.0, %v802
        %v804 = vpop.f32.mrb[0].mxu0
        %v805 = vadd.f32 0.0, %v804
        %806 = vmatprep.mubr.bf16.mxu0 0
        %807 = vmatmul.mubr.bf16.gmra.mrb[0].mxu0 %v599
        %v808 = vpop.f32.mrb[0].mxu0
        %v809 = vadd.f32 0.0, %v808
        %v810 = vpop.f32.mrb[0].mxu0
        %v811 = vadd.f32 0.0, %v810
        %v812 = vpop.f32.mrb[0].mxu0
        %v813 = vadd.f32 0.0, %v812
        %v814 = vpop.f32.mrb[0].mxu0
        %v815 = vadd.f32 0.0, %v814
        %816 = vmatprep.mubr.bf16.mxu0 0
        %817 = vmatmul.mubr.bf16.gmra.mrb[0].mxu0 %v602
        %v818 = vpop.f32.mrb[0].mxu0
        %v819 = vadd.f32 0.0, %v818
        %v820 = vpop.f32.mrb[0].mxu0
        %v821 = vadd.f32 0.0, %v820
        %v822 = vpop.f32.mrb[0].mxu0
        %v823 = vadd.f32 0.0, %v822
        %v824 = vpop.f32.mrb[0].mxu0
        %v825 = vadd.f32 0.0, %v824
        %826 = vmatprep.mubr.bf16.mxu0 0
        %827 = vmatmul.mubr.bf16.gmra.mrb[0].mxu0 %v605
        %v828 = vpop.f32.mrb[0].mxu0
        %v829 = vadd.f32 0.0, %v828
        %v830 = vpop.f32.mrb[0].mxu0
        %v831 = vadd.f32 0.0, %v830
        %v832 = vpop.f32.mrb[0].mxu0
        %v833 = vadd.f32 0.0, %v832
        %v834 = vpop.f32.mrb[0].mxu0
        %v835 = vadd.f32 0.0, %v834
        %836 = vmatprep.mubr.bf16.mxu0 0
        %837 = vmatmul.mubr.bf16.gmra.mrb[0].mxu0 %v608
        %v838 = vpop.f32.mrb[0].mxu0
        %v839 = vadd.f32 0.0, %v838
        %v840 = vpop.f32.mrb[0].mxu0
        %v841 = vadd.f32 0.0, %v840
        %v842 = vpop.f32.mrb[0].mxu0
        %v843 = vadd.f32 0.0, %v842
        %v844 = vpop.f32.mrb[0].mxu0
        %v845 = vadd.f32 0.0, %v844
        %846 = vmatprep.mubr.bf16.mxu0 0
        %847 = vmatmul.mubr.bf16.gmra.mrb[0].mxu0 %v611
        %v848 = vpop.f32.mrb[0].mxu0
        %v849 = vadd.f32 0.0, %v848
        %v850 = vpop.f32.mrb[0].mxu0
        %v851 = vadd.f32 0.0, %v850
        %v852 = vpop.f32.mrb[0].mxu0
        %v853 = vadd.f32 0.0, %v852
        %v854 = vpop.f32.mrb[0].mxu0
        %v855 = vadd.f32 0.0, %v854
        %856 = vmatprep.mubr.bf16.mxu0 0
        %857 = vmatmul.mubr.bf16.gmra.mrb[0].mxu0 %v614
        %v858 = vpop.f32.mrb[0].mxu0
        %v859 = vadd.f32 0.0, %v858
        %v860 = vpop.f32.mrb[0].mxu0
        %v861 = vadd.f32 0.0, %v860
        %v862 = vpop.f32.mrb[0].mxu0
        %v863 = vadd.f32 0.0, %v862
        %v864 = vpop.f32.mrb[0].mxu0
        %v865 = vadd.f32 0.0, %v864
        %866 = vmatprep.mubr.bf16.mxu0 0
        %867 = vmatmul.mubr.bf16.gmra.mrb[0].mxu0 %v617
        %v868 = vpop.f32.mrb[0].mxu0
        %v869 = vadd.f32 0.0, %v868
        %v870 = vpop.f32.mrb[0].mxu0
        %v871 = vadd.f32 0.0, %v870
        %v872 = vpop.f32.mrb[0].mxu0
        %v873 = vadd.f32 0.0, %v872
        %v874 = vpop.f32.mrb[0].mxu0
        %v875 = vadd.f32 0.0, %v874
        %876 = vmatprep.mubr.bf16.mxu0 0
        %877 = vmatmul.mubr.bf16.gmra.mrb[0].mxu0 %v620
        %v878 = vpop.f32.mrb[0].mxu0
        %v879 = vadd.f32 0.0, %v878
        %v880 = vpop.f32.mrb[0].mxu0
        %v881 = vadd.f32 0.0, %v880
        %v882 = vpop.f32.mrb[0].mxu0
        %v883 = vadd.f32 0.0, %v882
        %v884 = vpop.f32.mrb[0].mxu0
        %v885 = vadd.f32 0.0, %v884
        %886 = vmatprep.mubr.bf16.mxu0 0
        %887 = vmatmul.mubr.bf16.gmra.mrb[0].mxu0 %v623
        %v888 = vpop.f32.mrb[0].mxu0
        %v889 = vadd.f32 0.0, %v888
        %v890 = vpop.f32.mrb[0].mxu0
        %v891 = vadd.f32 0.0, %v890
        %v892 = vpop.f32.mrb[0].mxu0
        %v893 = vadd.f32 0.0, %v892
        %v894 = vpop.f32.mrb[0].mxu0
        %v895 = vadd.f32 0.0, %v894
        %896 = vmatprep.mubr.bf16.mxu0 0
        %897 = vmatmul.mubr.bf16.gmra.mrb[0].mxu0 %v626
        %v898 = vpop.f32.mrb[0].mxu0
        %v899 = vadd.f32 0.0, %v898
        %v900 = vpop.f32.mrb[0].mxu0
        %v901 = vadd.f32 0.0, %v900
        %v902 = vpop.f32.mrb[0].mxu0
        %v903 = vadd.f32 0.0, %v902
        %v904 = vpop.f32.mrb[0].mxu0
        %v905 = vadd.f32 0.0, %v904
        %906 = vmatprep.mubr.bf16.mxu0 0
        %907 = vmatmul.mubr.bf16.gmra.mrb[0].mxu0 %v629
        %v908 = vpop.f32.mrb[0].mxu0
        %v909 = vadd.f32 0.0, %v908
        %v910 = vpop.f32.mrb[0].mxu0
        %v911 = vadd.f32 0.0, %v910
        %v912 = vpop.f32.mrb[0].mxu0
        %v913 = vadd.f32 0.0, %v912
        %v914 = vpop.f32.mrb[0].mxu0
        %v915 = vadd.f32 0.0, %v914
        %916 = vmatprep.mubr.bf16.mxu0 0
        %917 = vmatmul.mubr.bf16.gmra.mrb[0].mxu0 %v632
        %v918 = vpop.f32.mrb[0].mxu0
        %v919 = vadd.f32 0.0, %v918
        %v920 = vpop.f32.mrb[0].mxu0
        %v921 = vadd.f32 0.0, %v920
        %v922 = vpop.f32.mrb[0].mxu0
        %v923 = vadd.f32 0.0, %v922
        %v924 = vpop.f32.mrb[0].mxu0
        %v925 = vadd.f32 0.0, %v924
        %926 = vmatprep.mubr.bf16.mxu0 0
        %927 = vmatmul.mubr.bf16.gmra.mrb[0].mxu0 %v635
        %v928 = vpop.f32.mrb[0].mxu0
        %v929 = vadd.f32 0.0, %v928
        %v930 = vpop.f32.mrb[0].mxu0
        %v931 = vadd.f32 0.0, %v930
        %v932 = vpop.f32.mrb[0].mxu0
        %v933 = vadd.f32 0.0, %v932
        %v934 = vpop.f32.mrb[0].mxu0
        %v935 = vadd.f32 0.0, %v934
        %936 = vmatprep.mubr.bf16.mxu0 0
        %937 = vmatmul.mubr.bf16.gmra.mrb[0].mxu0 %v638
        %v938 = vpop.f32.mrb[0].mxu0
        %v939 = vadd.f32 0.0, %v938
        %v940 = vpop.f32.mrb[0].mxu0
        %v941 = vadd.f32 0.0, %v940
        %v942 = vpop.f32.mrb[0].mxu0
        %v943 = vadd.f32 0.0, %v942
        %v944 = vpop.f32.mrb[0].mxu0
        %v945 = vadd.f32 0.0, %v944
        %946 = vmatprep.mubr.bf16.mxu0 0
        %947 = vmatmul.mubr.bf16.gmra.mrb[0].mxu0 %v641
        %v948 = vpop.f32.mrb[0].mxu0
        %v949 = vadd.f32 0.0, %v948
        %v950 = vpop.f32.mrb[0].mxu0
        %v951 = vadd.f32 0.0, %v950
        %v952 = vpop.f32.mrb[0].mxu0
        %v953 = vadd.f32 0.0, %v952
        %v954 = vpop.f32.mrb[0].mxu0
        %v955 = vadd.f32 0.0, %v954
        %956 = vmatprep.mubr.bf16.mxu0 0
        %957 = vmatmul.mubr.bf16.gmra.mrb[0].mxu0 %v644
        %v958 = vpop.f32.mrb[0].mxu0
        %v959 = vadd.f32 0.0, %v958
        %v960 = vpop.f32.mrb[0].mxu0
        %v961 = vadd.f32 0.0, %v960
        %v962 = vpop.f32.mrb[0].mxu0
        %v963 = vadd.f32 0.0, %v962
        %v964 = vpop.f32.mrb[0].mxu0
        %v965 = vadd.f32 0.0, %v964
        %966 = vmatprep.mubr.bf16.mxu0 0
        %967 = vmatmul.mubr.bf16.gmra.mrb[0].mxu0 %v647
        %v968 = vpop.f32.mrb[0].mxu0
        %v969 = vadd.f32 0.0, %v968
        %v970 = vpop.f32.mrb[0].mxu0
        %v971 = vadd.f32 0.0, %v970
        %v972 = vpop.f32.mrb[0].mxu0
        %v973 = vadd.f32 0.0, %v972
        %v974 = vpop.f32.mrb[0].mxu0
        %v975 = vadd.f32 0.0, %v974
        %976 = vmatprep.mubr.bf16.mxu0 0
        %977 = vmatmul.mubr.bf16.gmra.mrb[0].mxu0 %v650
        %v978 = vpop.f32.mrb[0].mxu0
        %v979 = vadd.f32 0.0, %v978
        %v980 = vpop.f32.mrb[0].mxu0
        %v981 = vadd.f32 0.0, %v980
        %v982 = vpop.f32.mrb[0].mxu0
        %v983 = vadd.f32 0.0, %v982
        %v984 = vpop.f32.mrb[0].mxu0
        %v985 = vadd.f32 0.0, %v984
        %986 = vmatprep.mubr.bf16.mxu0 0
        %987 = vmatmul.mubr.bf16.gmra.mrb[0].mxu0 %v653
        %v988 = vpop.f32.mrb[0].mxu0
        %v989 = vadd.f32 0.0, %v988
        %v990 = vpop.f32.mrb[0].mxu0
        %v991 = vadd.f32 0.0, %v990
        %v992 = vpop.f32.mrb[0].mxu0
        %v993 = vadd.f32 0.0, %v992
        %v994 = vpop.f32.mrb[0].mxu0
        %v995 = vadd.f32 0.0, %v994
        %996 = vmatprep.mubr.bf16.mxu0 0
        %997 = vmatmul.mubr.bf16.gmra.mrb[0].mxu0 %v656
        %v998 = vpop.f32.mrb[0].mxu0
        %v999 = vadd.f32 0.0, %v998
        %v1000 = vpop.f32.mrb[0].mxu0
        %v1001 = vadd.f32 0.0, %v1000
        %v1002 = vpop.f32.mrb[0].mxu0
        %v1003 = vadd.f32 0.0, %v1002
        %v1004 = vpop.f32.mrb[0].mxu0
        %v1005 = vadd.f32 0.0, %v1004
        %1006 = vmatprep.mubr.bf16.mxu0 0
        %1007 = vmatmul.mubr.bf16.gmra.mrb[0].mxu0 %v659
        %v1008 = vpop.f32.mrb[0].mxu0
        %v1009 = vadd.f32 0.0, %v1008
        %v1010 = vpop.f32.mrb[0].mxu0
        %v1011 = vadd.f32 0.0, %v1010
        %v1012 = vpop.f32.mrb[0].mxu0
        %v1013 = vadd.f32 0.0, %v1012
        %v1014 = vpop.f32.mrb[0].mxu0
        %v1015 = vadd.f32 0.0, %v1014
        %1016 = vmatprep.mubr.bf16.mxu0 0
        %1017 = vmatmul.mubr.bf16.gmra.mrb[0].mxu0 %v662
        %v1018 = vpop.f32.mrb[0].mxu0
        %v1019 = vadd.f32 0.0, %v1018
        %v1020 = vpop.f32.mrb[0].mxu0
        %v1021 = vadd.f32 0.0, %v1020
        %v1022 = vpop.f32.mrb[0].mxu0
        %v1023 = vadd.f32 0.0, %v1022
        %v1024 = vpop.f32.mrb[0].mxu0
        %v1025 = vadd.f32 0.0, %v1024
        %1026 = vdwg.mxu0
        %1027 = vmatprep.subr.bf16.mxu0 0
        %1028 = vmatpush1.bf16.msra.mxu0 %v560
        %1029 = vmatprep.subr.bf16.mxu0 0
        %1030 = vmatpush1.bf16.msra.mxu0 %v672
        %1031 = vmatprep.subr.bf16.mxu0 0
        %1032 = vmatpush1.bf16.msra.mxu0 0
        %1033 = vmatprep.subr.bf16.mxu0 0
        %1034 = vmatpush1.bf16.msra.mxu0 0
        %1035 = vmatprep.subr.bf16.mxu0 0
        %1036 = vmatpush1.bf16.msra.mxu0 0
        %1037 = vmatprep.subr.bf16.mxu0 0
        %1038 = vmatpush1.bf16.msra.mxu0 0
        %1039 = vmatprep.subr.bf16.mxu0 0
        %1040 = vmatpush1.bf16.msra.mxu0 0
        %1041 = vmatprep.subr.bf16.mxu0 0
        %1042 = vmatpush1.bf16.msra.mxu0 0
        %1043 = vmatprep.subr.bf16.mxu0 0
        %1044 = vmatpush1.bf16.msra.mxu0 0
        %1045 = vmatprep.subr.bf16.mxu0 0
        %1046 = vmatpush1.bf16.msra.mxu0 0
        %1047 = vmatprep.subr.bf16.mxu0 0
        %1048 = vmatpush1.bf16.msra.mxu0 0
        %1049 = vmatprep.subr.bf16.mxu0 0
        %1050 = vmatpush1.bf16.msra.mxu0 0
        %1051 = vmatprep.subr.bf16.mxu0 0
        %1052 = vmatpush1.bf16.msra.mxu0 0
        %1053 = vmatprep.subr.bf16.mxu0 0
        %1054 = vmatpush1.bf16.msra.mxu0 0
        %1055 = vmatprep.subr.bf16.mxu0 0
        %1056 = vmatpush1.bf16.msra.mxu0 0
        %1057 = vmatprep.subr.bf16.mxu0 0
        %1058 = vmatpush1.bf16.msra.mxu0 0
        %1059 = vmatprep.mubr.bf16.mxu0 0
        %1060 = vmatmul.mubr.bf16.gmra.mrb[0].mxu0 %v569
        %v1061 = vpop.f32.mrb[0].mxu0
        %v1062 = vadd.f32 0.0, %v1061
        %v1063 = vpop.f32.mrb[0].mxu0
        %v1064 = vpop.f32.mrb[0].mxu0
        %v1065 = vadd.f32 0.0, %v1064
        %v1066 = vpop.f32.mrb[0].mxu0
        %1067 = vmatprep.mubr.bf16.mxu0 0
        %1068 = vmatmul.mubr.bf16.gmra.mrb[0].mxu0 %v572
        %v1069 = vpop.f32.mrb[0].mxu0
        %v1070 = vadd.f32 0.0, %v1069
        %v1071 = vpop.f32.mrb[0].mxu0
        %v1072 = vpop.f32.mrb[0].mxu0
        %v1073 = vadd.f32 0.0, %v1072
        %v1074 = vpop.f32.mrb[0].mxu0
        %1075 = vmatprep.mubr.bf16.mxu0 0
        %1076 = vmatmul.mubr.bf16.gmra.mrb[0].mxu0 %v575
        %v1077 = vpop.f32.mrb[0].mxu0
        %v1078 = vadd.f32 0.0, %v1077
        %v1079 = vpop.f32.mrb[0].mxu0
        %v1080 = vpop.f32.mrb[0].mxu0
        %v1081 = vadd.f32 0.0, %v1080
        %v1082 = vpop.f32.mrb[0].mxu0
        %1083 = vmatprep.mubr.bf16.mxu0 0
        %1084 = vmatmul.mubr.bf16.gmra.mrb[0].mxu0 %v578
        %v1085 = vpop.f32.mrb[0].mxu0
        %v1086 = vadd.f32 0.0, %v1085
        %v1087 = vpop.f32.mrb[0].mxu0
        %v1088 = vpop.f32.mrb[0].mxu0
        %v1089 = vadd.f32 0.0, %v1088
        %v1090 = vpop.f32.mrb[0].mxu0
        %1091 = vmatprep.mubr.bf16.mxu0 0
        %1092 = vmatmul.mubr.bf16.gmra.mrb[0].mxu0 %v581
        %v1093 = vpop.f32.mrb[0].mxu0
        %v1094 = vadd.f32 0.0, %v1093
        %v1095 = vpop.f32.mrb[0].mxu0
        %v1096 = vpop.f32.mrb[0].mxu0
        %v1097 = vadd.f32 0.0, %v1096
        %v1098 = vpop.f32.mrb[0].mxu0
        %1099 = vmatprep.mubr.bf16.mxu0 0
        %1100 = vmatmul.mubr.bf16.gmra.mrb[0].mxu0 %v584
        %v1101 = vpop.f32.mrb[0].mxu0
        %v1102 = vadd.f32 0.0, %v1101
        %v1103 = vpop.f32.mrb[0].mxu0
        %v1104 = vpop.f32.mrb[0].mxu0
        %v1105 = vadd.f32 0.0, %v1104
        %v1106 = vpop.f32.mrb[0].mxu0
        %1107 = vmatprep.mubr.bf16.mxu0 0
        %1108 = vmatmul.mubr.bf16.gmra.mrb[0].mxu0 %v587
        %v1109 = vpop.f32.mrb[0].mxu0
        %v1110 = vadd.f32 0.0, %v1109
        %v1111 = vpop.f32.mrb[0].mxu0
        %v1112 = vpop.f32.mrb[0].mxu0
        %v1113 = vadd.f32 0.0, %v1112
        %v1114 = vpop.f32.mrb[0].mxu0
        %1115 = vmatprep.mubr.bf16.mxu0 0
        %1116 = vmatmul.mubr.bf16.gmra.mrb[0].mxu0 %v590
        %v1117 = vpop.f32.mrb[0].mxu0
        %v1118 = vadd.f32 0.0, %v1117
        %v1119 = vpop.f32.mrb[0].mxu0
        %v1120 = vpop.f32.mrb[0].mxu0
        %v1121 = vadd.f32 0.0, %v1120
        %v1122 = vpop.f32.mrb[0].mxu0
        %1123 = vmatprep.mubr.bf16.mxu0 0
        %1124 = vmatmul.mubr.bf16.gmra.mrb[0].mxu0 %v593
        %v1125 = vpop.f32.mrb[0].mxu0
        %v1126 = vadd.f32 0.0, %v1125
        %v1127 = vpop.f32.mrb[0].mxu0
        %v1128 = vpop.f32.mrb[0].mxu0
        %v1129 = vadd.f32 0.0, %v1128
        %v1130 = vpop.f32.mrb[0].mxu0
        %1131 = vmatprep.mubr.bf16.mxu0 0
        %1132 = vmatmul.mubr.bf16.gmra.mrb[0].mxu0 %v596
        %v1133 = vpop.f32.mrb[0].mxu0
        %v1134 = vadd.f32 0.0, %v1133
        %v1135 = vpop.f32.mrb[0].mxu0
        %v1136 = vpop.f32.mrb[0].mxu0
        %v1137 = vadd.f32 0.0, %v1136
        %v1138 = vpop.f32.mrb[0].mxu0
        %1139 = vmatprep.mubr.bf16.mxu0 0
        %1140 = vmatmul.mubr.bf16.gmra.mrb[0].mxu0 %v599
        %v1141 = vpop.f32.mrb[0].mxu0
        %v1142 = vadd.f32 0.0, %v1141
        %v1143 = vpop.f32.mrb[0].mxu0
        %v1144 = vpop.f32.mrb[0].mxu0
        %v1145 = vadd.f32 0.0, %v1144
        %v1146 = vpop.f32.mrb[0].mxu0
        %1147 = vmatprep.mubr.bf16.mxu0 0
        %1148 = vmatmul.mubr.bf16.gmra.mrb[0].mxu0 %v602
        %v1149 = vpop.f32.mrb[0].mxu0
        %v1150 = vadd.f32 0.0, %v1149
        %v1151 = vpop.f32.mrb[0].mxu0
        %v1152 = vpop.f32.mrb[0].mxu0
        %v1153 = vadd.f32 0.0, %v1152
        %v1154 = vpop.f32.mrb[0].mxu0
        %1155 = vmatprep.mubr.bf16.mxu0 0
        %1156 = vmatmul.mubr.bf16.gmra.mrb[0].mxu0 %v605
        %v1157 = vpop.f32.mrb[0].mxu0
        %v1158 = vadd.f32 0.0, %v1157
        %v1159 = vpop.f32.mrb[0].mxu0
        %v1160 = vpop.f32.mrb[0].mxu0
        %v1161 = vadd.f32 0.0, %v1160
        %v1162 = vpop.f32.mrb[0].mxu0
        %1163 = vmatprep.mubr.bf16.mxu0 0
        %1164 = vmatmul.mubr.bf16.gmra.mrb[0].mxu0 %v608
        %v1165 = vpop.f32.mrb[0].mxu0
        %v1166 = vadd.f32 0.0, %v1165
        %v1167 = vpop.f32.mrb[0].mxu0
        %v1168 = vpop.f32.mrb[0].mxu0
        %v1169 = vadd.f32 0.0, %v1168
        %v1170 = vpop.f32.mrb[0].mxu0
        %1171 = vmatprep.mubr.bf16.mxu0 0
        %1172 = vmatmul.mubr.bf16.gmra.mrb[0].mxu0 %v611
        %v1173 = vpop.f32.mrb[0].mxu0
        %v1174 = vadd.f32 0.0, %v1173
        %v1175 = vpop.f32.mrb[0].mxu0
        %v1176 = vpop.f32.mrb[0].mxu0
        %v1177 = vadd.f32 0.0, %v1176
        %v1178 = vpop.f32.mrb[0].mxu0
        %1179 = vmatprep.mubr.bf16.mxu0 0
        %1180 = vmatmul.mubr.bf16.gmra.mrb[0].mxu0 %v614
        %v1181 = vpop.f32.mrb[0].mxu0
        %v1182 = vadd.f32 0.0, %v1181
        %v1183 = vpop.f32.mrb[0].mxu0
        %v1184 = vpop.f32.mrb[0].mxu0
        %v1185 = vadd.f32 0.0, %v1184
        %v1186 = vpop.f32.mrb[0].mxu0
        %1187 = vmatprep.mubr.bf16.mxu0 0
        %1188 = vmatmul.mubr.bf16.gmra.mrb[0].mxu0 %v617
        %v1189 = vpop.f32.mrb[0].mxu0
        %v1190 = vadd.f32 0.0, %v1189
        %v1191 = vpop.f32.mrb[0].mxu0
        %v1192 = vpop.f32.mrb[0].mxu0
        %v1193 = vadd.f32 0.0, %v1192
        %v1194 = vpop.f32.mrb[0].mxu0
        %1195 = vmatprep.mubr.bf16.mxu0 0
        %1196 = vmatmul.mubr.bf16.gmra.mrb[0].mxu0 %v620
        %v1197 = vpop.f32.mrb[0].mxu0
        %v1198 = vadd.f32 0.0, %v1197
        %v1199 = vpop.f32.mrb[0].mxu0
        %v1200 = vpop.f32.mrb[0].mxu0
        %v1201 = vadd.f32 0.0, %v1200
        %v1202 = vpop.f32.mrb[0].mxu0
        %1203 = vmatprep.mubr.bf16.mxu0 0
        %1204 = vmatmul.mubr.bf16.gmra.mrb[0].mxu0 %v623
        %v1205 = vpop.f32.mrb[0].mxu0
        %v1206 = vadd.f32 0.0, %v1205
        %v1207 = vpop.f32.mrb[0].mxu0
        %v1208 = vpop.f32.mrb[0].mxu0
        %v1209 = vadd.f32 0.0, %v1208
        %v1210 = vpop.f32.mrb[0].mxu0
        %1211 = vmatprep.mubr.bf16.mxu0 0
        %1212 = vmatmul.mubr.bf16.gmra.mrb[0].mxu0 %v626
        %v1213 = vpop.f32.mrb[0].mxu0
        %v1214 = vadd.f32 0.0, %v1213
        %v1215 = vpop.f32.mrb[0].mxu0
        %v1216 = vpop.f32.mrb[0].mxu0
        %v1217 = vadd.f32 0.0, %v1216
        %v1218 = vpop.f32.mrb[0].mxu0
        %1219 = vmatprep.mubr.bf16.mxu0 0
        %1220 = vmatmul.mubr.bf16.gmra.mrb[0].mxu0 %v629
        %v1221 = vpop.f32.mrb[0].mxu0
        %v1222 = vadd.f32 0.0, %v1221
        %v1223 = vpop.f32.mrb[0].mxu0
        %v1224 = vpop.f32.mrb[0].mxu0
        %v1225 = vadd.f32 0.0, %v1224
        %v1226 = vpop.f32.mrb[0].mxu0
        %1227 = vmatprep.mubr.bf16.mxu0 0
        %1228 = vmatmul.mubr.bf16.gmra.mrb[0].mxu0 %v632
        %v1229 = vpop.f32.mrb[0].mxu0
        %v1230 = vadd.f32 0.0, %v1229
        %v1231 = vpop.f32.mrb[0].mxu0
        %v1232 = vpop.f32.mrb[0].mxu0
        %v1233 = vadd.f32 0.0, %v1232
        %v1234 = vpop.f32.mrb[0].mxu0
        %1235 = vmatprep.mubr.bf16.mxu0 0
        %1236 = vmatmul.mubr.bf16.gmra.mrb[0].mxu0 %v635
        %v1237 = vpop.f32.mrb[0].mxu0
        %v1238 = vadd.f32 0.0, %v1237
        %v1239 = vpop.f32.mrb[0].mxu0
        %v1240 = vpop.f32.mrb[0].mxu0
        %v1241 = vadd.f32 0.0, %v1240
        %v1242 = vpop.f32.mrb[0].mxu0
        %1243 = vmatprep.mubr.bf16.mxu0 0
        %1244 = vmatmul.mubr.bf16.gmra.mrb[0].mxu0 %v638
        %v1245 = vpop.f32.mrb[0].mxu0
        %v1246 = vadd.f32 0.0, %v1245
        %v1247 = vpop.f32.mrb[0].mxu0
        %v1248 = vpop.f32.mrb[0].mxu0
        %v1249 = vadd.f32 0.0, %v1248
        %v1250 = vpop.f32.mrb[0].mxu0
        %1251 = vmatprep.mubr.bf16.mxu0 0
        %1252 = vmatmul.mubr.bf16.gmra.mrb[0].mxu0 %v641
        %v1253 = vpop.f32.mrb[0].mxu0
        %v1254 = vadd.f32 0.0, %v1253
        %v1255 = vpop.f32.mrb[0].mxu0
        %v1256 = vpop.f32.mrb[0].mxu0
        %v1257 = vadd.f32 0.0, %v1256
        %v1258 = vpop.f32.mrb[0].mxu0
        %1259 = vmatprep.mubr.bf16.mxu0 0
        %1260 = vmatmul.mubr.bf16.gmra.mrb[0].mxu0 %v644
        %v1261 = vpop.f32.mrb[0].mxu0
        %v1262 = vadd.f32 0.0, %v1261
        %v1263 = vpop.f32.mrb[0].mxu0
        %v1264 = vpop.f32.mrb[0].mxu0
        %v1265 = vadd.f32 0.0, %v1264
        %v1266 = vpop.f32.mrb[0].mxu0
        %1267 = vmatprep.mubr.bf16.mxu0 0
        %1268 = vmatmul.mubr.bf16.gmra.mrb[0].mxu0 %v647
        %v1269 = vpop.f32.mrb[0].mxu0
        %v1270 = vadd.f32 0.0, %v1269
        %v1271 = vpop.f32.mrb[0].mxu0
        %v1272 = vpop.f32.mrb[0].mxu0
        %v1273 = vadd.f32 0.0, %v1272
        %v1274 = vpop.f32.mrb[0].mxu0
        %1275 = vmatprep.mubr.bf16.mxu0 0
        %1276 = vmatmul.mubr.bf16.gmra.mrb[0].mxu0 %v650
        %v1277 = vpop.f32.mrb[0].mxu0
        %v1278 = vadd.f32 0.0, %v1277
        %v1279 = vpop.f32.mrb[0].mxu0
        %v1280 = vpop.f32.mrb[0].mxu0
        %v1281 = vadd.f32 0.0, %v1280
        %v1282 = vpop.f32.mrb[0].mxu0
        %1283 = vmatprep.mubr.bf16.mxu0 0
        %1284 = vmatmul.mubr.bf16.gmra.mrb[0].mxu0 %v653
        %v1285 = vpop.f32.mrb[0].mxu0
        %v1286 = vadd.f32 0.0, %v1285
        %v1287 = vpop.f32.mrb[0].mxu0
        %v1288 = vpop.f32.mrb[0].mxu0
        %v1289 = vadd.f32 0.0, %v1288
        %v1290 = vpop.f32.mrb[0].mxu0
        %1291 = vmatprep.mubr.bf16.mxu0 0
        %1292 = vmatmul.mubr.bf16.gmra.mrb[0].mxu0 %v656
        %v1293 = vpop.f32.mrb[0].mxu0
        %v1294 = vadd.f32 0.0, %v1293
        %v1295 = vpop.f32.mrb[0].mxu0
        %v1296 = vpop.f32.mrb[0].mxu0
        %v1297 = vadd.f32 0.0, %v1296
        %v1298 = vpop.f32.mrb[0].mxu0
        %1299 = vmatprep.mubr.bf16.mxu0 0
        %1300 = vmatmul.mubr.bf16.gmra.mrb[0].mxu0 %v659
        %v1301 = vpop.f32.mrb[0].mxu0
        %v1302 = vadd.f32 0.0, %v1301
        %v1303 = vpop.f32.mrb[0].mxu0
        %v1304 = vpop.f32.mrb[0].mxu0
        %v1305 = vadd.f32 0.0, %v1304
        %v1306 = vpop.f32.mrb[0].mxu0
        %1307 = vmatprep.mubr.bf16.mxu0 0
        %1308 = vmatmul.mubr.bf16.gmra.mrb[0].mxu0 %v662
        %v1309 = vpop.f32.mrb[0].mxu0
        %v1310 = vadd.f32 0.0, %v1309
        %v1311 = vpop.f32.mrb[0].mxu0
        %v1312 = vpop.f32.mrb[0].mxu0
        %v1313 = vadd.f32 0.0, %v1312
        %v1314 = vpop.f32.mrb[0].mxu0
        %1315 = vdwg.mxu0
        %v1316 = vmul.f32 %v709, %v869
        %v1317 = vmul.f32 %v713, %v873
        %v1318 = vmul.f32 %v719, %v879
        %v1319 = vmul.f32 %v723, %v883
        %v1320 = vmul.f32 %v729, %v889
        %v1321 = vmul.f32 %v733, %v893
        %v1322 = vmul.f32 %v739, %v899
        %v1323 = vmul.f32 %v743, %v903
        %v1324 = vmul.f32 %v749, %v909
        %v1325 = vmul.f32 %v753, %v913
        %v1326 = vmul.f32 %v759, %v919
        %v1327 = vmul.f32 %v763, %v923
        %v1328 = vmul.f32 %v769, %v929
        %v1329 = vmul.f32 %v773, %v933
        %v1330 = vmul.f32 %v779, %v939
        %v1331 = vmul.f32 %v783, %v943
        %v1332 = vmul.f32 %v789, %v949
        %v1333 = vmul.f32 %v793, %v953
        %v1334 = vmul.f32 %v799, %v959
        %v1335 = vmul.f32 %v803, %v963
        %v1336 = vmul.f32 %v809, %v969
        %v1337 = vmul.f32 %v813, %v973
        %v1338 = vmul.f32 %v819, %v979
        %v1339 = vmul.f32 %v823, %v983
        %v1340 = vmul.f32 %v829, %v989
        %v1341 = vmul.f32 %v833, %v993
        %v1342 = vmul.f32 %v839, %v999
        %v1343 = vmul.f32 %v843, %v1003
        %v1344 = vmul.f32 %v849, %v1009
        %v1345 = vmul.f32 %v853, %v1013
        %v1346 = vmul.f32 %v859, %v1019
        %v1347 = vmul.f32 %v863, %v1023
        %v1348 = vmul.f32 %v711, %v871
        %v1349 = vmul.f32 %v715, %v875
        %v1350 = vmul.f32 %v721, %v881
        %v1351 = vmul.f32 %v725, %v885
        %v1352 = vmul.f32 %v731, %v891
        %v1353 = vmul.f32 %v735, %v895
        %v1354 = vmul.f32 %v741, %v901
        %v1355 = vmul.f32 %v745, %v905
        %v1356 = vmul.f32 %v751, %v911
        %v1357 = vmul.f32 %v755, %v915
        %v1358 = vmul.f32 %v761, %v921
        %v1359 = vmul.f32 %v765, %v925
        %v1360 = vmul.f32 %v771, %v931
        %v1361 = vmul.f32 %v775, %v935
        %v1362 = vmul.f32 %v781, %v941
        %v1363 = vmul.f32 %v785, %v945
        %v1364 = vmul.f32 %v791, %v951
        %v1365 = vmul.f32 %v795, %v955
        %v1366 = vmul.f32 %v801, %v961
        %v1367 = vmul.f32 %v805, %v965
        %v1368 = vmul.f32 %v811, %v971
        %v1369 = vmul.f32 %v815, %v975
        %v1370 = vmul.f32 %v821, %v981
        %v1371 = vmul.f32 %v825, %v985
        %v1372 = vmul.f32 %v831, %v991
        %v1373 = vmul.f32 %v835, %v995
        %v1374 = vmul.f32 %v841, %v1001
        %v1375 = vmul.f32 %v845, %v1005
        %v1376 = vmul.f32 %v851, %v1011
        %v1377 = vmul.f32 %v855, %v1015
        %v1378 = vmul.f32 %v861, %v1021
        %v1379 = vmul.f32 %v865, %v1025
        %v1380 = vadd.f32 %v1316, %v1348
        %v1381 = vadd.f32 %v1317, %v1349
        %v1382 = vadd.f32 %v1318, %v1350
        %v1383 = vadd.f32 %v1319, %v1351
        %v1384 = vadd.f32 %v1320, %v1352
        %v1385 = vadd.f32 %v1321, %v1353
        %v1386 = vadd.f32 %v1322, %v1354
        %v1387 = vadd.f32 %v1323, %v1355
        %v1388 = vadd.f32 %v1324, %v1356
        %v1389 = vadd.f32 %v1325, %v1357
        %v1390 = vadd.f32 %v1326, %v1358
        %v1391 = vadd.f32 %v1327, %v1359
        %v1392 = vadd.f32 %v1328, %v1360
        %v1393 = vadd.f32 %v1329, %v1361
        %v1394 = vadd.f32 %v1330, %v1362
        %v1395 = vadd.f32 %v1331, %v1363
        %v1396 = vadd.f32 %v1332, %v1364
        %v1397 = vadd.f32 %v1333, %v1365
        %v1398 = vadd.f32 %v1334, %v1366
        %v1399 = vadd.f32 %v1335, %v1367
        %v1400 = vadd.f32 %v1336, %v1368
        %v1401 = vadd.f32 %v1337, %v1369
        %v1402 = vadd.f32 %v1338, %v1370
        %v1403 = vadd.f32 %v1339, %v1371
        %v1404 = vadd.f32 %v1340, %v1372
        %v1405 = vadd.f32 %v1341, %v1373
        %v1406 = vadd.f32 %v1342, %v1374
        %v1407 = vadd.f32 %v1343, %v1375
        %v1408 = vadd.f32 %v1344, %v1376
        %v1409 = vadd.f32 %v1345, %v1377
        %v1410 = vadd.f32 %v1346, %v1378
        %v1411 = vadd.f32 %v1347, %v1379
        %v1412 = vmul.f32 %v1062, %v1190
        %v1413 = vmul.f32 %v1065, %v1193
        %v1414 = vmul.f32 %v1070, %v1198
        %v1415 = vmul.f32 %v1073, %v1201
        %v1416 = vmul.f32 %v1078, %v1206
        %v1417 = vmul.f32 %v1081, %v1209
        %v1418 = vmul.f32 %v1086, %v1214
        %v1419 = vmul.f32 %v1089, %v1217
        %v1420 = vmul.f32 %v1094, %v1222
        %v1421 = vmul.f32 %v1097, %v1225
        %v1422 = vmul.f32 %v1102, %v1230
        %v1423 = vmul.f32 %v1105, %v1233
        %v1424 = vmul.f32 %v1110, %v1238
        %v1425 = vmul.f32 %v1113, %v1241
        %v1426 = vmul.f32 %v1118, %v1246
        %v1427 = vmul.f32 %v1121, %v1249
        %v1428 = vmul.f32 %v1126, %v1254
        %v1429 = vmul.f32 %v1129, %v1257
        %v1430 = vmul.f32 %v1134, %v1262
        %v1431 = vmul.f32 %v1137, %v1265
        %v1432 = vmul.f32 %v1142, %v1270
        %v1433 = vmul.f32 %v1145, %v1273
        %v1434 = vmul.f32 %v1150, %v1278
        %v1435 = vmul.f32 %v1153, %v1281
        %v1436 = vmul.f32 %v1158, %v1286
        %v1437 = vmul.f32 %v1161, %v1289
        %v1438 = vmul.f32 %v1166, %v1294
        %v1439 = vmul.f32 %v1169, %v1297
        %v1440 = vmul.f32 %v1174, %v1302
        %v1441 = vmul.f32 %v1177, %v1305
        %v1442 = vmul.f32 %v1182, %v1310
        %v1443 = vmul.f32 %v1185, %v1313
        %v1444 = vadd.f32 %v1380, %v1412
        %v1445 = vadd.f32 %v1381, %v1413
        %v1446 = vadd.f32 %v1382, %v1414
        %v1447 = vadd.f32 %v1383, %v1415
        %v1448 = vadd.f32 %v1384, %v1416
        %v1449 = vadd.f32 %v1385, %v1417
        %v1450 = vadd.f32 %v1386, %v1418
        %v1451 = vadd.f32 %v1387, %v1419
        %v1452 = vadd.f32 %v1388, %v1420
        %v1453 = vadd.f32 %v1389, %v1421
        %v1454 = vadd.f32 %v1390, %v1422
        %v1455 = vadd.f32 %v1391, %v1423
        %v1456 = vadd.f32 %v1392, %v1424
        %v1457 = vadd.f32 %v1393, %v1425
        %v1458 = vadd.f32 %v1394, %v1426
        %v1459 = vadd.f32 %v1395, %v1427
        %v1460 = vadd.f32 %v1396, %v1428
        %v1461 = vadd.f32 %v1397, %v1429
        %v1462 = vadd.f32 %v1398, %v1430
        %v1463 = vadd.f32 %v1399, %v1431
        %v1464 = vadd.f32 %v1400, %v1432
        %v1465 = vadd.f32 %v1401, %v1433
        %v1466 = vadd.f32 %v1402, %v1434
        %v1467 = vadd.f32 %v1403, %v1435
        %v1468 = vadd.f32 %v1404, %v1436
        %v1469 = vadd.f32 %v1405, %v1437
        %v1470 = vadd.f32 %v1406, %v1438
        %v1471 = vadd.f32 %v1407, %v1439
        %v1472 = vadd.f32 %v1408, %v1440
        %v1473 = vadd.f32 %v1409, %v1441
        %v1474 = vadd.f32 %v1410, %v1442
        %v1475 = vadd.f32 %v1411, %v1443
        %v1476 = vmul.f32 %v869, %v869
        %v1477 = vmul.f32 %v873, %v873
        %v1478 = vmul.f32 %v879, %v879
        %v1479 = vmul.f32 %v883, %v883
        %v1480 = vmul.f32 %v889, %v889
        %v1481 = vmul.f32 %v893, %v893
        %v1482 = vmul.f32 %v899, %v899
        %v1483 = vmul.f32 %v903, %v903
        %v1484 = vmul.f32 %v909, %v909
        %v1485 = vmul.f32 %v913, %v913
        %v1486 = vmul.f32 %v919, %v919
        %v1487 = vmul.f32 %v923, %v923
        %v1488 = vmul.f32 %v929, %v929
        %v1489 = vmul.f32 %v933, %v933
        %v1490 = vmul.f32 %v939, %v939
        %v1491 = vmul.f32 %v943, %v943
        %v1492 = vmul.f32 %v949, %v949
        %v1493 = vmul.f32 %v953, %v953
        %v1494 = vmul.f32 %v959, %v959
        %v1495 = vmul.f32 %v963, %v963
        %v1496 = vmul.f32 %v969, %v969
        %v1497 = vmul.f32 %v973, %v973
        %v1498 = vmul.f32 %v979, %v979
        %v1499 = vmul.f32 %v983, %v983
        %v1500 = vmul.f32 %v989, %v989
        %v1501 = vmul.f32 %v993, %v993
        %v1502 = vmul.f32 %v999, %v999
        %v1503 = vmul.f32 %v1003, %v1003
        %v1504 = vmul.f32 %v1009, %v1009
        %v1505 = vmul.f32 %v1013, %v1013
        %v1506 = vmul.f32 %v1019, %v1019
        %v1507 = vmul.f32 %v1023, %v1023
        %v1508 = vmul.f32 %v871, %v871
        %v1509 = vmul.f32 %v875, %v875
        %v1510 = vmul.f32 %v881, %v881
        %v1511 = vmul.f32 %v885, %v885
        %v1512 = vmul.f32 %v891, %v891
        %v1513 = vmul.f32 %v895, %v895
        %v1514 = vmul.f32 %v901, %v901
        %v1515 = vmul.f32 %v905, %v905
        %v1516 = vmul.f32 %v911, %v911
        %v1517 = vmul.f32 %v915, %v915
        %v1518 = vmul.f32 %v921, %v921
        %v1519 = vmul.f32 %v925, %v925
        %v1520 = vmul.f32 %v931, %v931
        %v1521 = vmul.f32 %v935, %v935
        %v1522 = vmul.f32 %v941, %v941
        %v1523 = vmul.f32 %v945, %v945
        %v1524 = vmul.f32 %v951, %v951
        %v1525 = vmul.f32 %v955, %v955
        %v1526 = vmul.f32 %v961, %v961
        %v1527 = vmul.f32 %v965, %v965
        %v1528 = vmul.f32 %v971, %v971
        %v1529 = vmul.f32 %v975, %v975
        %v1530 = vmul.f32 %v981, %v981
        %v1531 = vmul.f32 %v985, %v985
        %v1532 = vmul.f32 %v991, %v991
        %v1533 = vmul.f32 %v995, %v995
        %v1534 = vmul.f32 %v1001, %v1001
        %v1535 = vmul.f32 %v1005, %v1005
        %v1536 = vmul.f32 %v1011, %v1011
        %v1537 = vmul.f32 %v1015, %v1015
        %v1538 = vmul.f32 %v1021, %v1021
        %v1539 = vmul.f32 %v1025, %v1025
        %v1540 = vadd.f32 %v1476, %v1508
        %v1541 = vadd.f32 %v1477, %v1509
        %v1542 = vadd.f32 %v1478, %v1510
        %v1543 = vadd.f32 %v1479, %v1511
        %v1544 = vadd.f32 %v1480, %v1512
        %v1545 = vadd.f32 %v1481, %v1513
        %v1546 = vadd.f32 %v1482, %v1514
        %v1547 = vadd.f32 %v1483, %v1515
        %v1548 = vadd.f32 %v1484, %v1516
        %v1549 = vadd.f32 %v1485, %v1517
        %v1550 = vadd.f32 %v1486, %v1518
        %v1551 = vadd.f32 %v1487, %v1519
        %v1552 = vadd.f32 %v1488, %v1520
        %v1553 = vadd.f32 %v1489, %v1521
        %v1554 = vadd.f32 %v1490, %v1522
        %v1555 = vadd.f32 %v1491, %v1523
        %v1556 = vadd.f32 %v1492, %v1524
        %v1557 = vadd.f32 %v1493, %v1525
        %v1558 = vadd.f32 %v1494, %v1526
        %v1559 = vadd.f32 %v1495, %v1527
        %v1560 = vadd.f32 %v1496, %v1528
        %v1561 = vadd.f32 %v1497, %v1529
        %v1562 = vadd.f32 %v1498, %v1530
        %v1563 = vadd.f32 %v1499, %v1531
        %v1564 = vadd.f32 %v1500, %v1532
        %v1565 = vadd.f32 %v1501, %v1533
        %v1566 = vadd.f32 %v1502, %v1534
        %v1567 = vadd.f32 %v1503, %v1535
        %v1568 = vadd.f32 %v1504, %v1536
        %v1569 = vadd.f32 %v1505, %v1537
        %v1570 = vadd.f32 %v1506, %v1538
        %v1571 = vadd.f32 %v1507, %v1539
        %v1572 = vmul.f32 %v1190, %v1190
        %v1573 = vmul.f32 %v1193, %v1193
        %v1574 = vmul.f32 %v1198, %v1198
        %v1575 = vmul.f32 %v1201, %v1201
        %v1576 = vmul.f32 %v1206, %v1206
        %v1577 = vmul.f32 %v1209, %v1209
        %v1578 = vmul.f32 %v1214, %v1214
        %v1579 = vmul.f32 %v1217, %v1217
        %v1580 = vmul.f32 %v1222, %v1222
        %v1581 = vmul.f32 %v1225, %v1225
        %v1582 = vmul.f32 %v1230, %v1230
        %v1583 = vmul.f32 %v1233, %v1233
        %v1584 = vmul.f32 %v1238, %v1238
        %v1585 = vmul.f32 %v1241, %v1241
        %v1586 = vmul.f32 %v1246, %v1246
        %v1587 = vmul.f32 %v1249, %v1249
        %v1588 = vmul.f32 %v1254, %v1254
        %v1589 = vmul.f32 %v1257, %v1257
        %v1590 = vmul.f32 %v1262, %v1262
        %v1591 = vmul.f32 %v1265, %v1265
        %v1592 = vmul.f32 %v1270, %v1270
        %v1593 = vmul.f32 %v1273, %v1273
        %v1594 = vmul.f32 %v1278, %v1278
        %v1595 = vmul.f32 %v1281, %v1281
        %v1596 = vmul.f32 %v1286, %v1286
        %v1597 = vmul.f32 %v1289, %v1289
        %v1598 = vmul.f32 %v1294, %v1294
        %v1599 = vmul.f32 %v1297, %v1297
        %v1600 = vmul.f32 %v1302, %v1302
        %v1601 = vmul.f32 %v1305, %v1305
        %v1602 = vmul.f32 %v1310, %v1310
        %v1603 = vmul.f32 %v1313, %v1313
        %v1604 = vadd.f32 %v1540, %v1572
        %v1605 = vadd.f32 %v1541, %v1573
        %v1606 = vadd.f32 %v1542, %v1574
        %v1607 = vadd.f32 %v1543, %v1575
        %v1608 = vadd.f32 %v1544, %v1576
        %v1609 = vadd.f32 %v1545, %v1577
        %v1610 = vadd.f32 %v1546, %v1578
        %v1611 = vadd.f32 %v1547, %v1579
        %v1612 = vadd.f32 %v1548, %v1580
        %v1613 = vadd.f32 %v1549, %v1581
        %v1614 = vadd.f32 %v1550, %v1582
        %v1615 = vadd.f32 %v1551, %v1583
        %v1616 = vadd.f32 %v1552, %v1584
        %v1617 = vadd.f32 %v1553, %v1585
        %v1618 = vadd.f32 %v1554, %v1586
        %v1619 = vadd.f32 %v1555, %v1587
        %v1620 = vadd.f32 %v1556, %v1588
        %v1621 = vadd.f32 %v1557, %v1589
        %v1622 = vadd.f32 %v1558, %v1590
        %v1623 = vadd.f32 %v1559, %v1591
        %v1624 = vadd.f32 %v1560, %v1592
        %v1625 = vadd.f32 %v1561, %v1593
        %v1626 = vadd.f32 %v1562, %v1594
        %v1627 = vadd.f32 %v1563, %v1595
        %v1628 = vadd.f32 %v1564, %v1596
        %v1629 = vadd.f32 %v1565, %v1597
        %v1630 = vadd.f32 %v1566, %v1598
        %v1631 = vadd.f32 %v1567, %v1599
        %v1632 = vadd.f32 %v1568, %v1600
        %v1633 = vadd.f32 %v1569, %v1601
        %v1634 = vadd.f32 %v1570, %v1602
        %v1635 = vadd.f32 %v1571, %v1603
        %v1636 = vmin.f32 %v1444, 0.0
        %v1637 = vmin.f32 %v1445, 0.0
        %v1638 = vmin.f32 %v1446, 0.0
        %v1639 = vmin.f32 %v1447, 0.0
        %v1640 = vmin.f32 %v1448, 0.0
        %v1641 = vmin.f32 %v1449, 0.0
        %v1642 = vmin.f32 %v1450, 0.0
        %v1643 = vmin.f32 %v1451, 0.0
        %v1644 = vmin.f32 %v1452, 0.0
        %v1645 = vmin.f32 %v1453, 0.0
        %v1646 = vmin.f32 %v1454, 0.0
        %v1647 = vmin.f32 %v1455, 0.0
        %v1648 = vmin.f32 %v1456, 0.0
        %v1649 = vmin.f32 %v1457, 0.0
        %v1650 = vmin.f32 %v1458, 0.0
        %v1651 = vmin.f32 %v1459, 0.0
        %v1652 = vmin.f32 %v1460, 0.0
        %v1653 = vmin.f32 %v1461, 0.0
        %v1654 = vmin.f32 %v1462, 0.0
        %v1655 = vmin.f32 %v1463, 0.0
        %v1656 = vmin.f32 %v1464, 0.0
        %v1657 = vmin.f32 %v1465, 0.0
        %v1658 = vmin.f32 %v1466, 0.0
        %v1659 = vmin.f32 %v1467, 0.0
        %v1660 = vmin.f32 %v1468, 0.0
        %v1661 = vmin.f32 %v1469, 0.0
        %v1662 = vmin.f32 %v1470, 0.0
        %v1663 = vmin.f32 %v1471, 0.0
        %v1664 = vmin.f32 %v1472, 0.0
        %v1665 = vmin.f32 %v1473, 0.0
        %v1666 = vmin.f32 %v1474, 0.0
        %v1667 = vmin.f32 %v1475, 0.0
        %v1668 = vmax.f32 %v1604, 1e-06
        %v1669 = vmax.f32 %v1605, 1e-06
        %v1670 = vmax.f32 %v1606, 1e-06
        %v1671 = vmax.f32 %v1607, 1e-06
        %v1672 = vmax.f32 %v1608, 1e-06
        %v1673 = vmax.f32 %v1609, 1e-06
        %v1674 = vmax.f32 %v1610, 1e-06
        %v1675 = vmax.f32 %v1611, 1e-06
        %v1676 = vmax.f32 %v1612, 1e-06
        %v1677 = vmax.f32 %v1613, 1e-06
        %v1678 = vmax.f32 %v1614, 1e-06
        %v1679 = vmax.f32 %v1615, 1e-06
        %v1680 = vmax.f32 %v1616, 1e-06
        %v1681 = vmax.f32 %v1617, 1e-06
        %v1682 = vmax.f32 %v1618, 1e-06
        %v1683 = vmax.f32 %v1619, 1e-06
        %v1684 = vmax.f32 %v1620, 1e-06
        %v1685 = vmax.f32 %v1621, 1e-06
        %v1686 = vmax.f32 %v1622, 1e-06
        %v1687 = vmax.f32 %v1623, 1e-06
        %v1688 = vmax.f32 %v1624, 1e-06
        %v1689 = vmax.f32 %v1625, 1e-06
        %v1690 = vmax.f32 %v1626, 1e-06
        %v1691 = vmax.f32 %v1627, 1e-06
        %v1692 = vmax.f32 %v1628, 1e-06
        %v1693 = vmax.f32 %v1629, 1e-06
        %v1694 = vmax.f32 %v1630, 1e-06
        %v1695 = vmax.f32 %v1631, 1e-06
        %v1696 = vmax.f32 %v1632, 1e-06
        %v1697 = vmax.f32 %v1633, 1e-06
        %v1698 = vmax.f32 %v1634, 1e-06
        %v1699 = vmax.f32 %v1635, 1e-06
        %v1700 = vrcp.pop %v1668
        %v1701 = vrcp.pop %v1669
        %v1702 = vrcp.pop %v1670
        %v1703 = vrcp.pop %v1671
        %v1704 = vrcp.pop %v1672
        %v1705 = vrcp.pop %v1673
        %v1706 = vrcp.pop %v1674
        %v1707 = vrcp.pop %v1675
        %v1708 = vrcp.pop %v1676
        %v1709 = vrcp.pop %v1677
        %v1710 = vrcp.pop %v1678
        %v1711 = vrcp.pop %v1679
        %v1712 = vrcp.pop %v1680
        %v1713 = vrcp.pop %v1681
        %v1714 = vrcp.pop %v1682
        %v1715 = vrcp.pop %v1683
        %v1716 = vrcp.pop %v1684
        %v1717 = vrcp.pop %v1685
        %v1718 = vrcp.pop %v1686
        %v1719 = vrcp.pop %v1687
        %v1720 = vrcp.pop %v1688
        %v1721 = vrcp.pop %v1689
        %v1722 = vrcp.pop %v1690
        %v1723 = vrcp.pop %v1691
        %v1724 = vrcp.pop %v1692
        %v1725 = vrcp.pop %v1693
        %v1726 = vrcp.pop %v1694
        %v1727 = vrcp.pop %v1695
        %v1728 = vrcp.pop %v1696
        %v1729 = vrcp.pop %v1697
        %v1730 = vrcp.pop %v1698
        %v1731 = vrcp.pop %v1699
        %v1732 = vmul.f32 %v1636, %v1700
        %v1733 = vmul.f32 %v1637, %v1701
        %v1734 = vmul.f32 %v1638, %v1702
        %v1735 = vmul.f32 %v1639, %v1703
        %v1736 = vmul.f32 %v1640, %v1704
        %v1737 = vmul.f32 %v1641, %v1705
        %v1738 = vmul.f32 %v1642, %v1706
        %v1739 = vmul.f32 %v1643, %v1707
        %v1740 = vmul.f32 %v1644, %v1708
        %v1741 = vmul.f32 %v1645, %v1709
        %v1742 = vmul.f32 %v1646, %v1710
        %v1743 = vmul.f32 %v1647, %v1711
        %v1744 = vmul.f32 %v1648, %v1712
        %v1745 = vmul.f32 %v1649, %v1713
        %v1746 = vmul.f32 %v1650, %v1714
        %v1747 = vmul.f32 %v1651, %v1715
        %v1748 = vmul.f32 %v1652, %v1716
        %v1749 = vmul.f32 %v1653, %v1717
        %v1750 = vmul.f32 %v1654, %v1718
        %v1751 = vmul.f32 %v1655, %v1719
        %v1752 = vmul.f32 %v1656, %v1720
        %v1753 = vmul.f32 %v1657, %v1721
        %v1754 = vmul.f32 %v1658, %v1722
        %v1755 = vmul.f32 %v1659, %v1723
        %v1756 = vmul.f32 %v1660, %v1724
        %v1757 = vmul.f32 %v1661, %v1725
        %v1758 = vmul.f32 %v1662, %v1726
        %v1759 = vmul.f32 %v1663, %v1727
        %v1760 = vmul.f32 %v1664, %v1728
        %v1761 = vmul.f32 %v1665, %v1729
        %v1762 = vmul.f32 %v1666, %v1730
        %v1763 = vmul.f32 %v1667, %v1731
        %v1764 = vmul.f32 %v1732, %v869
        %v1765 = vmul.f32 %v1733, %v873
        %v1766 = vmul.f32 %v1734, %v879
        %v1767 = vmul.f32 %v1735, %v883
        %v1768 = vmul.f32 %v1736, %v889
        %v1769 = vmul.f32 %v1737, %v893
        %v1770 = vmul.f32 %v1738, %v899
        %v1771 = vmul.f32 %v1739, %v903
        %v1772 = vmul.f32 %v1740, %v909
        %v1773 = vmul.f32 %v1741, %v913
        %v1774 = vmul.f32 %v1742, %v919
        %v1775 = vmul.f32 %v1743, %v923
        %v1776 = vmul.f32 %v1744, %v929
        %v1777 = vmul.f32 %v1745, %v933
        %v1778 = vmul.f32 %v1746, %v939
        %v1779 = vmul.f32 %v1747, %v943
        %v1780 = vmul.f32 %v1748, %v949
        %v1781 = vmul.f32 %v1749, %v953
        %v1782 = vmul.f32 %v1750, %v959
        %v1783 = vmul.f32 %v1751, %v963
        %v1784 = vmul.f32 %v1752, %v969
        %v1785 = vmul.f32 %v1753, %v973
        %v1786 = vmul.f32 %v1754, %v979
        %v1787 = vmul.f32 %v1755, %v983
        %v1788 = vmul.f32 %v1756, %v989
        %v1789 = vmul.f32 %v1757, %v993
        %v1790 = vmul.f32 %v1758, %v999
        %v1791 = vmul.f32 %v1759, %v1003
        %v1792 = vmul.f32 %v1760, %v1009
        %v1793 = vmul.f32 %v1761, %v1013
        %v1794 = vmul.f32 %v1762, %v1019
        %v1795 = vmul.f32 %v1763, %v1023
        %v1796 = vsub.f32 %v709, %v1764
        %v1797 = vsub.f32 %v713, %v1765
        %v1798 = vsub.f32 %v719, %v1766
        %v1799 = vsub.f32 %v723, %v1767
        %v1800 = vsub.f32 %v729, %v1768
        %v1801 = vsub.f32 %v733, %v1769
        %v1802 = vsub.f32 %v739, %v1770
        %v1803 = vsub.f32 %v743, %v1771
        %v1804 = vsub.f32 %v749, %v1772
        %v1805 = vsub.f32 %v753, %v1773
        %v1806 = vsub.f32 %v759, %v1774
        %v1807 = vsub.f32 %v763, %v1775
        %v1808 = vsub.f32 %v769, %v1776
        %v1809 = vsub.f32 %v773, %v1777
        %v1810 = vsub.f32 %v779, %v1778
        %v1811 = vsub.f32 %v783, %v1779
        %v1812 = vsub.f32 %v789, %v1780
        %v1813 = vsub.f32 %v793, %v1781
        %v1814 = vsub.f32 %v799, %v1782
        %v1815 = vsub.f32 %v803, %v1783
        %v1816 = vsub.f32 %v809, %v1784
        %v1817 = vsub.f32 %v813, %v1785
        %v1818 = vsub.f32 %v819, %v1786
        %v1819 = vsub.f32 %v823, %v1787
        %v1820 = vsub.f32 %v829, %v1788
        %v1821 = vsub.f32 %v833, %v1789
        %v1822 = vsub.f32 %v839, %v1790
        %v1823 = vsub.f32 %v843, %v1791
        %v1824 = vsub.f32 %v849, %v1792
        %v1825 = vsub.f32 %v853, %v1793
        %v1826 = vsub.f32 %v859, %v1794
        %v1827 = vsub.f32 %v863, %v1795
        %v1828 = vmul.f32 %v1732, %v871
        %v1829 = vmul.f32 %v1733, %v875
        %v1830 = vmul.f32 %v1734, %v881
        %v1831 = vmul.f32 %v1735, %v885
        %v1832 = vmul.f32 %v1736, %v891
        %v1833 = vmul.f32 %v1737, %v895
        %v1834 = vmul.f32 %v1738, %v901
        %v1835 = vmul.f32 %v1739, %v905
        %v1836 = vmul.f32 %v1740, %v911
        %v1837 = vmul.f32 %v1741, %v915
        %v1838 = vmul.f32 %v1742, %v921
        %v1839 = vmul.f32 %v1743, %v925
        %v1840 = vmul.f32 %v1744, %v931
        %v1841 = vmul.f32 %v1745, %v935
        %v1842 = vmul.f32 %v1746, %v941
        %v1843 = vmul.f32 %v1747, %v945
        %v1844 = vmul.f32 %v1748, %v951
        %v1845 = vmul.f32 %v1749, %v955
        %v1846 = vmul.f32 %v1750, %v961
        %v1847 = vmul.f32 %v1751, %v965
        %v1848 = vmul.f32 %v1752, %v971
        %v1849 = vmul.f32 %v1753, %v975
        %v1850 = vmul.f32 %v1754, %v981
        %v1851 = vmul.f32 %v1755, %v985
        %v1852 = vmul.f32 %v1756, %v991
        %v1853 = vmul.f32 %v1757, %v995
        %v1854 = vmul.f32 %v1758, %v1001
        %v1855 = vmul.f32 %v1759, %v1005
        %v1856 = vmul.f32 %v1760, %v1011
        %v1857 = vmul.f32 %v1761, %v1015
        %v1858 = vmul.f32 %v1762, %v1021
        %v1859 = vmul.f32 %v1763, %v1025
        %v1860 = vsub.f32 %v711, %v1828
        %v1861 = vsub.f32 %v715, %v1829
        %v1862 = vsub.f32 %v721, %v1830
        %v1863 = vsub.f32 %v725, %v1831
        %v1864 = vsub.f32 %v731, %v1832
        %v1865 = vsub.f32 %v735, %v1833
        %v1866 = vsub.f32 %v741, %v1834
        %v1867 = vsub.f32 %v745, %v1835
        %v1868 = vsub.f32 %v751, %v1836
        %v1869 = vsub.f32 %v755, %v1837
        %v1870 = vsub.f32 %v761, %v1838
        %v1871 = vsub.f32 %v765, %v1839
        %v1872 = vsub.f32 %v771, %v1840
        %v1873 = vsub.f32 %v775, %v1841
        %v1874 = vsub.f32 %v781, %v1842
        %v1875 = vsub.f32 %v785, %v1843
        %v1876 = vsub.f32 %v791, %v1844
        %v1877 = vsub.f32 %v795, %v1845
        %v1878 = vsub.f32 %v801, %v1846
        %v1879 = vsub.f32 %v805, %v1847
        %v1880 = vsub.f32 %v811, %v1848
        %v1881 = vsub.f32 %v815, %v1849
        %v1882 = vsub.f32 %v821, %v1850
        %v1883 = vsub.f32 %v825, %v1851
        %v1884 = vsub.f32 %v831, %v1852
        %v1885 = vsub.f32 %v835, %v1853
        %v1886 = vsub.f32 %v841, %v1854
        %v1887 = vsub.f32 %v845, %v1855
        %v1888 = vsub.f32 %v851, %v1856
        %v1889 = vsub.f32 %v855, %v1857
        %v1890 = vsub.f32 %v861, %v1858
        %v1891 = vsub.f32 %v865, %v1859
        %v1892 = vmul.f32 %v1732, %v1190
        %v1893 = vmul.f32 %v1733, %v1193
        %v1894 = vmul.f32 %v1734, %v1198
        %v1895 = vmul.f32 %v1735, %v1201
        %v1896 = vmul.f32 %v1736, %v1206
        %v1897 = vmul.f32 %v1737, %v1209
        %v1898 = vmul.f32 %v1738, %v1214
        %v1899 = vmul.f32 %v1739, %v1217
        %v1900 = vmul.f32 %v1740, %v1222
        %v1901 = vmul.f32 %v1741, %v1225
        %v1902 = vmul.f32 %v1742, %v1230
        %v1903 = vmul.f32 %v1743, %v1233
        %v1904 = vmul.f32 %v1744, %v1238
        %v1905 = vmul.f32 %v1745, %v1241
        %v1906 = vmul.f32 %v1746, %v1246
        %v1907 = vmul.f32 %v1747, %v1249
        %v1908 = vmul.f32 %v1748, %v1254
        %v1909 = vmul.f32 %v1749, %v1257
        %v1910 = vmul.f32 %v1750, %v1262
        %v1911 = vmul.f32 %v1751, %v1265
        %v1912 = vmul.f32 %v1752, %v1270
        %v1913 = vmul.f32 %v1753, %v1273
        %v1914 = vmul.f32 %v1754, %v1278
        %v1915 = vmul.f32 %v1755, %v1281
        %v1916 = vmul.f32 %v1756, %v1286
        %v1917 = vmul.f32 %v1757, %v1289
        %v1918 = vmul.f32 %v1758, %v1294
        %v1919 = vmul.f32 %v1759, %v1297
        %v1920 = vmul.f32 %v1760, %v1302
        %v1921 = vmul.f32 %v1761, %v1305
        %v1922 = vmul.f32 %v1762, %v1310
        %v1923 = vmul.f32 %v1763, %v1313
        %v1924 = vsub.f32 %v1062, %v1892
        %v1925 = vsub.f32 %v1065, %v1893
        %v1926 = vsub.f32 %v1070, %v1894
        %v1927 = vsub.f32 %v1073, %v1895
        %v1928 = vsub.f32 %v1078, %v1896
        %v1929 = vsub.f32 %v1081, %v1897
        %v1930 = vsub.f32 %v1086, %v1898
        %v1931 = vsub.f32 %v1089, %v1899
        %v1932 = vsub.f32 %v1094, %v1900
        %v1933 = vsub.f32 %v1097, %v1901
        %v1934 = vsub.f32 %v1102, %v1902
        %v1935 = vsub.f32 %v1105, %v1903
        %v1936 = vsub.f32 %v1110, %v1904
        %v1937 = vsub.f32 %v1113, %v1905
        %v1938 = vsub.f32 %v1118, %v1906
        %v1939 = vsub.f32 %v1121, %v1907
        %v1940 = vsub.f32 %v1126, %v1908
        %v1941 = vsub.f32 %v1129, %v1909
        %v1942 = vsub.f32 %v1134, %v1910
        %v1943 = vsub.f32 %v1137, %v1911
        %v1944 = vsub.f32 %v1142, %v1912
        %v1945 = vsub.f32 %v1145, %v1913
        %v1946 = vsub.f32 %v1150, %v1914
        %v1947 = vsub.f32 %v1153, %v1915
        %v1948 = vsub.f32 %v1158, %v1916
        %v1949 = vsub.f32 %v1161, %v1917
        %v1950 = vsub.f32 %v1166, %v1918
        %v1951 = vsub.f32 %v1169, %v1919
        %v1952 = vsub.f32 %v1174, %v1920
        %v1953 = vsub.f32 %v1177, %v1921
        %v1954 = vsub.f32 %v1182, %v1922
        %v1955 = vsub.f32 %v1185, %v1923
        %v1956 = vadd.f32 %v1796, %v1800
        %v1957 = vadd.f32 %v1860, %v1864
        %v1958 = vadd.f32 %v1924, %v1928
        %v1959 = vadd.f32 %v1797, %v1801
        %v1960 = vadd.f32 %v1861, %v1865
        %v1961 = vadd.f32 %v1925, %v1929
        %v1962 = vadd.f32 %v1798, %v1802
        %v1963 = vadd.f32 %v1862, %v1866
        %v1964 = vadd.f32 %v1926, %v1930
        %v1965 = vadd.f32 %v1799, %v1803
        %v1966 = vadd.f32 %v1863, %v1867
        %v1967 = vadd.f32 %v1927, %v1931
        %v1968 = vadd.f32 %v1956, %v1804
        %v1969 = vadd.f32 %v1957, %v1868
        %v1970 = vadd.f32 %v1958, %v1932
        %v1971 = vadd.f32 %v1959, %v1805
        %v1972 = vadd.f32 %v1960, %v1869
        %v1973 = vadd.f32 %v1961, %v1933
        %v1974 = vadd.f32 %v1962, %v1806
        %v1975 = vadd.f32 %v1963, %v1870
        %v1976 = vadd.f32 %v1964, %v1934
        %v1977 = vadd.f32 %v1965, %v1807
        %v1978 = vadd.f32 %v1966, %v1871
        %v1979 = vadd.f32 %v1967, %v1935
        %v1980 = vadd.f32 %v1968, %v1808
        %v1981 = vadd.f32 %v1969, %v1872
        %v1982 = vadd.f32 %v1970, %v1936
        %v1983 = vadd.f32 %v1971, %v1809
        %v1984 = vadd.f32 %v1972, %v1873
        %v1985 = vadd.f32 %v1973, %v1937
        %v1986 = vadd.f32 %v1974, %v1810
        %v1987 = vadd.f32 %v1975, %v1874
        %v1988 = vadd.f32 %v1976, %v1938
        %v1989 = vadd.f32 %v1977, %v1811
        %v1990 = vadd.f32 %v1978, %v1875
        %v1991 = vadd.f32 %v1979, %v1939
        %v1992 = vadd.f32 %v1980, %v1812
        %v1993 = vadd.f32 %v1981, %v1876
        %v1994 = vadd.f32 %v1982, %v1940
        %v1995 = vadd.f32 %v1983, %v1813
        %v1996 = vadd.f32 %v1984, %v1877
        %v1997 = vadd.f32 %v1985, %v1941
        %v1998 = vadd.f32 %v1986, %v1814
        %v1999 = vadd.f32 %v1987, %v1878
        %v2000 = vadd.f32 %v1988, %v1942
        %v2001 = vadd.f32 %v1989, %v1815
        %v2002 = vadd.f32 %v1990, %v1879
        %v2003 = vadd.f32 %v1991, %v1943
        %v2004 = vadd.f32 %v1992, %v1816
        %v2005 = vadd.f32 %v1993, %v1880
        %v2006 = vadd.f32 %v1994, %v1944
        %v2007 = vadd.f32 %v1995, %v1817
        %v2008 = vadd.f32 %v1996, %v1881
        %v2009 = vadd.f32 %v1997, %v1945
        %v2010 = vadd.f32 %v1998, %v1818
        %v2011 = vadd.f32 %v1999, %v1882
        %v2012 = vadd.f32 %v2000, %v1946
        %v2013 = vadd.f32 %v2001, %v1819
        %v2014 = vadd.f32 %v2002, %v1883
        %v2015 = vadd.f32 %v2003, %v1947
        %v2016 = vadd.f32 %v2004, %v1820
        %v2017 = vadd.f32 %v2005, %v1884
        %v2018 = vadd.f32 %v2006, %v1948
        %v2019 = vadd.f32 %v2007, %v1821
        %v2020 = vadd.f32 %v2008, %v1885
        %v2021 = vadd.f32 %v2009, %v1949
        %v2022 = vadd.f32 %v2010, %v1822
        %v2023 = vadd.f32 %v2011, %v1886
        %v2024 = vadd.f32 %v2012, %v1950
        %v2025 = vadd.f32 %v2013, %v1823
        %v2026 = vadd.f32 %v2014, %v1887
        %v2027 = vadd.f32 %v2015, %v1951
        %v2028 = vadd.f32 %v2016, %v1824
        %v2029 = vadd.f32 %v2017, %v1888
        %v2030 = vadd.f32 %v2018, %v1952
        %v2031 = vadd.f32 %v2019, %v1825
        %v2032 = vadd.f32 %v2020, %v1889
        %v2033 = vadd.f32 %v2021, %v1953
        %v2034 = vadd.f32 %v2022, %v1826
        %v2035 = vadd.f32 %v2023, %v1890
        %v2036 = vadd.f32 %v2024, %v1954
        %v2037 = vadd.f32 %v2025, %v1827
        %v2038 = vadd.f32 %v2026, %v1891
        %v2039 = vadd.f32 %v2027, %v1955
        %v2040 = vmul.f32 %v2028, 0.125
        %v2041 = vmul.f32 %v2029, 0.125
        %v2042 = vmul.f32 %v2030, 0.125
        %v2043 = vmul.f32 %v2031, 0.125
        %v2044 = vmul.f32 %v2032, 0.125
        %v2045 = vmul.f32 %v2033, 0.125
        %v2046 = vmul.f32 %v2034, 0.125
        %v2047 = vmul.f32 %v2035, 0.125
        %v2048 = vmul.f32 %v2036, 0.125
        %v2049 = vmul.f32 %v2037, 0.125
        %v2050 = vmul.f32 %v2038, 0.125
        %v2051 = vmul.f32 %v2039, 0.125
        %v2052 = vpack.c.bf16 %v2043, %v2040
        %v2053 = vpack.c.bf16 %v2044, %v2041
        %v2054 = vpack.c.bf16 %v2045, %v2042
        %v2055 = vpack.c.bf16 %v2049, %v2046
        %v2056 = vpack.c.bf16 %v2050, %v2047
        %v2057 = vpack.c.bf16 %v2051, %v2048
        %v2058 = vld [vmem:[%s3] sm:$0xf]
        %v2059 = vld [vmem:[%s3 + $0x4] sm:$0xf]
        %v2060 = vld [vmem:[%s3 + $0x8] sm:$0xf]
        %v2061 = vld [vmem:[%s3 + $0xc] sm:$0xf]
        %v2062 = vld [vmem:[%s3 + $0x10] sm:$0xf]
        %v2063 = vld [vmem:[%s3 + $0x14] sm:$0xf]
        %v2064 = vld [vmem:[%s3 + $0x18] sm:$0xf]
        %v2065 = vld [vmem:[%s3 + $0x1c] sm:$0xf]
        %v2074 = vunpack.c.l.b16 %v2058
        %v2075 = vunpack.c.l.b16 %v2059
        %v2076 = vunpack.c.l.b16 %v2060
        %v2077 = vunpack.c.l.b16 %v2061
        %v2078 = vunpack.c.l.b16 %v2062
        %v2079 = vunpack.c.l.b16 %v2063
        %v2080 = vunpack.c.l.b16 %v2064
        %v2081 = vunpack.c.l.b16 %v2065
        %v2082 = vpack.c.b16 %v2075, %v2074
        %v2083 = vpack.c.b16 %v2077, %v2076
        %v2084 = vpack.c.b16 %v2079, %v2078
        %v2085 = vpack.c.b16 %v2081, %v2080
        %vm2086 = vcmask 261120
        %v2088 = vsel %vm2086, %v2082, 0
        %v2091 = vsel %vm2086, %v2083, 0
        %v2094 = vsel %vm2086, %v2084, 0
        %v2097 = vsel %vm2086, %v2085, 0
        %2099 = vmatprep.subr.bf16.mxu0 %v2053
        %2100 = vmatpush1.bf16.msra.mxu0 %v2052
        %2101 = vmatprep.subr.bf16.mxu0 %v2056
        %2102 = vmatpush1.bf16.msra.mxu0 %v2055
        %2103 = vmatprep.subr.bf16.mxu0 0
        %2104 = vmatpush1.bf16.msra.mxu0 0
        %2105 = vmatprep.subr.bf16.mxu0 0
        %2106 = vmatpush1.bf16.msra.mxu0 0
        %2107 = vmatprep.subr.bf16.mxu0 0
        %2108 = vmatpush1.bf16.msra.mxu0 0
        %2109 = vmatprep.subr.bf16.mxu0 0
        %2110 = vmatpush1.bf16.msra.mxu0 0
        %2111 = vmatprep.subr.bf16.mxu0 0
        %2112 = vmatpush1.bf16.msra.mxu0 0
        %2113 = vmatprep.subr.bf16.mxu0 0
        %2114 = vmatpush1.bf16.msra.mxu0 0
        %2115 = vmatprep.subr.bf16.mxu0 0
        %2116 = vmatpush1.bf16.msra.mxu0 0
        %2117 = vmatprep.subr.bf16.mxu0 0
        %2118 = vmatpush1.bf16.msra.mxu0 0
        %2119 = vmatprep.subr.bf16.mxu0 0
        %2120 = vmatpush1.bf16.msra.mxu0 0
        %2121 = vmatprep.subr.bf16.mxu0 0
        %2122 = vmatpush1.bf16.msra.mxu0 0
        %2123 = vmatprep.subr.bf16.mxu0 0
        %2124 = vmatpush1.bf16.msra.mxu0 0
        %2125 = vmatprep.subr.bf16.mxu0 0
        %2126 = vmatpush1.bf16.msra.mxu0 0
        %2127 = vmatprep.subr.bf16.mxu0 0
        %2128 = vmatpush1.bf16.msra.mxu0 0
        %2129 = vmatprep.subr.bf16.mxu0 0
        %2130 = vmatpush1.bf16.msra.mxu0 0
        %2131 = vmatprep.mubr.bf16.mxu0 0
        %2132 = vmatmul.mubr.bf16.gmra.mrb[0].mxu0 %v2088
        %v2133 = vpop.f32.mrb[0].mxu0
        %v2134 = vadd.f32 0.0, %v2133
        %v2135 = vpop.f32.mrb[0].mxu0
        %v2136 = vadd.f32 0.0, %v2135
        %v2137 = vpop.f32.mrb[0].mxu0
        %v2138 = vadd.f32 0.0, %v2137
        %v2139 = vpop.f32.mrb[0].mxu0
        %v2140 = vadd.f32 0.0, %v2139
        %2141 = vmatprep.mubr.bf16.mxu0 0
        %2142 = vmatmul.mubr.bf16.gmra.mrb[0].mxu0 %v2091
        %v2143 = vpop.f32.mrb[0].mxu0
        %v2144 = vadd.f32 0.0, %v2143
        %v2145 = vpop.f32.mrb[0].mxu0
        %v2146 = vadd.f32 0.0, %v2145
        %v2147 = vpop.f32.mrb[0].mxu0
        %v2148 = vadd.f32 0.0, %v2147
        %v2149 = vpop.f32.mrb[0].mxu0
        %v2150 = vadd.f32 0.0, %v2149
        %2151 = vmatprep.mubr.bf16.mxu0 0
        %2152 = vmatmul.mubr.bf16.gmra.mrb[0].mxu0 %v2094
        %v2153 = vpop.f32.mrb[0].mxu0
        %v2154 = vadd.f32 0.0, %v2153
        %v2155 = vpop.f32.mrb[0].mxu0
        %v2156 = vadd.f32 0.0, %v2155
        %v2157 = vpop.f32.mrb[0].mxu0
        %v2158 = vadd.f32 0.0, %v2157
        %v2159 = vpop.f32.mrb[0].mxu0
        %v2160 = vadd.f32 0.0, %v2159
        %2161 = vmatprep.mubr.bf16.mxu0 0
        %2162 = vmatmul.mubr.bf16.gmra.mrb[0].mxu0 %v2097
        %v2163 = vpop.f32.mrb[0].mxu0
        %v2164 = vadd.f32 0.0, %v2163
        %v2165 = vpop.f32.mrb[0].mxu0
        %v2166 = vadd.f32 0.0, %v2165
        %v2167 = vpop.f32.mrb[0].mxu0
        %v2168 = vadd.f32 0.0, %v2167
        %v2169 = vpop.f32.mrb[0].mxu0
        %v2170 = vadd.f32 0.0, %v2169
        %2171 = vdwg.mxu0
        %2172 = vmatprep.subr.bf16.mxu0 0
        %2173 = vmatpush1.bf16.msra.mxu0 %v2054
        %2174 = vmatprep.subr.bf16.mxu0 0
        %2175 = vmatpush1.bf16.msra.mxu0 %v2057
        %2176 = vmatprep.subr.bf16.mxu0 0
        %2177 = vmatpush1.bf16.msra.mxu0 0
        %2178 = vmatprep.subr.bf16.mxu0 0
        %2179 = vmatpush1.bf16.msra.mxu0 0
        %2180 = vmatprep.subr.bf16.mxu0 0
        %2181 = vmatpush1.bf16.msra.mxu0 0
        %2182 = vmatprep.subr.bf16.mxu0 0
        %2183 = vmatpush1.bf16.msra.mxu0 0
        %2184 = vmatprep.subr.bf16.mxu0 0
        %2185 = vmatpush1.bf16.msra.mxu0 0
        %2186 = vmatprep.subr.bf16.mxu0 0
        %2187 = vmatpush1.bf16.msra.mxu0 0
        %2188 = vmatprep.subr.bf16.mxu0 0
        %2189 = vmatpush1.bf16.msra.mxu0 0
        %2190 = vmatprep.subr.bf16.mxu0 0
        %2191 = vmatpush1.bf16.msra.mxu0 0
        %2192 = vmatprep.subr.bf16.mxu0 0
        %2193 = vmatpush1.bf16.msra.mxu0 0
        %2194 = vmatprep.subr.bf16.mxu0 0
        %2195 = vmatpush1.bf16.msra.mxu0 0
        %2196 = vmatprep.subr.bf16.mxu0 0
        %2197 = vmatpush1.bf16.msra.mxu0 0
        %2198 = vmatprep.subr.bf16.mxu0 0
        %2199 = vmatpush1.bf16.msra.mxu0 0
        %2200 = vmatprep.subr.bf16.mxu0 0
        %2201 = vmatpush1.bf16.msra.mxu0 0
        %2202 = vmatprep.subr.bf16.mxu0 0
        %2203 = vmatpush1.bf16.msra.mxu0 0
        %2204 = vmatprep.mubr.bf16.mxu0 0
        %2205 = vmatmul.mubr.bf16.gmra.mrb[0].mxu0 %v2088
        %v2206 = vpop.f32.mrb[0].mxu0
        %v2207 = vadd.f32 0.0, %v2206
        %v2208 = vpop.f32.mrb[0].mxu0
        %v2209 = vpop.f32.mrb[0].mxu0
        %v2210 = vadd.f32 0.0, %v2209
        %v2211 = vpop.f32.mrb[0].mxu0
        %2212 = vmatprep.mubr.bf16.mxu0 0
        %2213 = vmatmul.mubr.bf16.gmra.mrb[0].mxu0 %v2091
        %v2214 = vpop.f32.mrb[0].mxu0
        %v2215 = vadd.f32 0.0, %v2214
        %v2216 = vpop.f32.mrb[0].mxu0
        %v2217 = vpop.f32.mrb[0].mxu0
        %v2218 = vadd.f32 0.0, %v2217
        %v2219 = vpop.f32.mrb[0].mxu0
        %2220 = vmatprep.mubr.bf16.mxu0 0
        %2221 = vmatmul.mubr.bf16.gmra.mrb[0].mxu0 %v2094
        %v2222 = vpop.f32.mrb[0].mxu0
        %v2223 = vadd.f32 0.0, %v2222
        %v2224 = vpop.f32.mrb[0].mxu0
        %v2225 = vpop.f32.mrb[0].mxu0
        %v2226 = vadd.f32 0.0, %v2225
        %v2227 = vpop.f32.mrb[0].mxu0
        %2228 = vmatprep.mubr.bf16.mxu0 0
        %2229 = vmatmul.mubr.bf16.gmra.mrb[0].mxu0 %v2097
        %v2230 = vpop.f32.mrb[0].mxu0
        %v2231 = vadd.f32 0.0, %v2230
        %v2232 = vpop.f32.mrb[0].mxu0
        %v2233 = vpop.f32.mrb[0].mxu0
        %v2234 = vadd.f32 0.0, %v2233
        %v2235 = vpop.f32.mrb[0].mxu0
        %2236 = vdwg.mxu0
        %v2237 = vmul.f32 %v2134, %v2154
        %v2238 = vmul.f32 %v2138, %v2158
        %v2239 = vmul.f32 %v2144, %v2164
        %v2240 = vmul.f32 %v2148, %v2168
        %v2241 = vmul.f32 %v2136, %v2156
        %v2242 = vmul.f32 %v2140, %v2160
        %v2243 = vmul.f32 %v2146, %v2166
        %v2244 = vmul.f32 %v2150, %v2170
        %v2245 = vadd.f32 %v2237, %v2241
        %v2246 = vadd.f32 %v2238, %v2242
        %v2247 = vadd.f32 %v2239, %v2243
        %v2248 = vadd.f32 %v2240, %v2244
        %v2249 = vmul.f32 %v2207, %v2223
        %v2250 = vmul.f32 %v2210, %v2226
        %v2251 = vmul.f32 %v2215, %v2231
        %v2252 = vmul.f32 %v2218, %v2234
        %v2253 = vadd.f32 %v2245, %v2249
        %v2254 = vadd.f32 %v2246, %v2250
        %v2255 = vadd.f32 %v2247, %v2251
        %v2256 = vadd.f32 %v2248, %v2252
        %v2257 = vmul.f32 %v2154, %v2154
        %v2258 = vmul.f32 %v2158, %v2158
        %v2259 = vmul.f32 %v2164, %v2164
        %v2260 = vmul.f32 %v2168, %v2168
        %v2261 = vmul.f32 %v2156, %v2156
        %v2262 = vmul.f32 %v2160, %v2160
        %v2263 = vmul.f32 %v2166, %v2166
        %v2264 = vmul.f32 %v2170, %v2170
        %v2265 = vadd.f32 %v2257, %v2261
        %v2266 = vadd.f32 %v2258, %v2262
        %v2267 = vadd.f32 %v2259, %v2263
        %v2268 = vadd.f32 %v2260, %v2264
        %v2269 = vmul.f32 %v2223, %v2223
        %v2270 = vmul.f32 %v2226, %v2226
        %v2271 = vmul.f32 %v2231, %v2231
        %v2272 = vmul.f32 %v2234, %v2234
        %v2273 = vadd.f32 %v2265, %v2269
        %v2274 = vadd.f32 %v2266, %v2270
        %v2275 = vadd.f32 %v2267, %v2271
        %v2276 = vadd.f32 %v2268, %v2272
        %v2277 = vmin.f32 %v2253, 0.0
        %v2278 = vmin.f32 %v2254, 0.0
        %v2279 = vmin.f32 %v2255, 0.0
        %v2280 = vmin.f32 %v2256, 0.0
        %v2281 = vmax.f32 %v2273, 1e-06
        %v2282 = vmax.f32 %v2274, 1e-06
        %v2283 = vmax.f32 %v2275, 1e-06
        %v2284 = vmax.f32 %v2276, 1e-06
        %v2285 = vrcp.pop %v2281
        %v2286 = vrcp.pop %v2282
        %v2287 = vrcp.pop %v2283
        %v2288 = vrcp.pop %v2284
        %v2289 = vmul.f32 %v2277, %v2285
        %v2290 = vmul.f32 %v2278, %v2286
        %v2291 = vmul.f32 %v2279, %v2287
        %v2292 = vmul.f32 %v2280, %v2288
        %v2293 = vmul.f32 %v2289, %v2154
        %v2294 = vmul.f32 %v2290, %v2158
        %v2295 = vmul.f32 %v2291, %v2164
        %v2296 = vmul.f32 %v2292, %v2168
        %v2297 = vsub.f32 %v2134, %v2293
        %v2298 = vsub.f32 %v2138, %v2294
        %v2299 = vsub.f32 %v2144, %v2295
        %v2300 = vsub.f32 %v2148, %v2296
        %v2301 = vmul.f32 %v2289, %v2156
        %v2302 = vmul.f32 %v2290, %v2160
        %v2303 = vmul.f32 %v2291, %v2166
        %v2304 = vmul.f32 %v2292, %v2170
        %v2305 = vsub.f32 %v2136, %v2301
        %v2306 = vsub.f32 %v2140, %v2302
        %v2307 = vsub.f32 %v2146, %v2303
        %v2308 = vsub.f32 %v2150, %v2304
        %v2309 = vmul.f32 %v2289, %v2223
        %v2310 = vmul.f32 %v2290, %v2226
        %v2311 = vmul.f32 %v2291, %v2231
        %v2312 = vmul.f32 %v2292, %v2234
        %v2313 = vsub.f32 %v2207, %v2309
        %v2314 = vsub.f32 %v2210, %v2310
        %v2315 = vsub.f32 %v2215, %v2311
        %v2316 = vsub.f32 %v2218, %v2312
        %v2317 = vpack.c.bf16 %v2298, %v2297
        %v2318 = vpack.c.bf16 %v2306, %v2305
        %v2319 = vpack.c.bf16 %v2314, %v2313
        %v2320 = vpack.c.bf16 %v2300, %v2299
        %v2321 = vpack.c.bf16 %v2308, %v2307
        %v2322 = vpack.c.bf16 %v2316, %v2315
        %v2323 = vld [vmem:[%s1] sm:$0xff]
        %v2324 = vld [vmem:[%s1 + $0x8] sm:$0xf]
        %v2325 = vld [vmem:[%s1 + $0xc] sm:$0xff]
        %v2326 = vld [vmem:[%s1 + $0x14] sm:$0xf]
        %v2327 = vld [vmem:[%s1 + $0x18] sm:$0xff]
        %v2328 = vld [vmem:[%s1 + $0x20] sm:$0xf]
        %v2329 = vld [vmem:[%s1 + $0x24] sm:$0xff]
        %v2330 = vld [vmem:[%s1 + $0x2c] sm:$0xf]
        %v2331 = vld [vmem:[%s1 + $0x30] sm:$0xff]
        %v2332 = vld [vmem:[%s1 + $0x38] sm:$0xf]
        %v2333 = vld [vmem:[%s1 + $0x3c] sm:$0xff]
        %v2334 = vld [vmem:[%s1 + $0x44] sm:$0xf]
        %v2335 = vld [vmem:[%s1 + $0x48] sm:$0xff]
        %v2336 = vld [vmem:[%s1 + $0x50] sm:$0xf]
        %v2337 = vld [vmem:[%s1 + $0x54] sm:$0xff]
        %v2338 = vld [vmem:[%s1 + $0x5c] sm:$0xf]
        %v2339 = vld [vmem:[%s1 + $0x60] sm:$0xff]
        %v2340 = vld [vmem:[%s1 + $0x68] sm:$0xf]
        %v2341 = vld [vmem:[%s1 + $0x6c] sm:$0xff]
        %v2342 = vld [vmem:[%s1 + $0x74] sm:$0xf]
        %v2343 = vld [vmem:[%s1 + $0x78] sm:$0xff]
        %v2344 = vld [vmem:[%s1 + $0x80] sm:$0xf]
        %v2345 = vld [vmem:[%s1 + $0x84] sm:$0xff]
        %v2346 = vld [vmem:[%s1 + $0x8c] sm:$0xf]
        %v2347 = vld [vmem:[%s1 + $0x90] sm:$0xff]
        %v2348 = vld [vmem:[%s1 + $0x98] sm:$0xf]
        %v2349 = vld [vmem:[%s1 + $0x9c] sm:$0xff]
        %v2350 = vld [vmem:[%s1 + $0xa4] sm:$0xf]
        %v2351 = vld [vmem:[%s1 + $0xa8] sm:$0xff]
        %v2352 = vld [vmem:[%s1 + $0xb0] sm:$0xf]
        %v2353 = vld [vmem:[%s1 + $0xb4] sm:$0xff]
        %v2354 = vld [vmem:[%s1 + $0xbc] sm:$0xf]
        %v2355 = vld [vmem:[%s1 + $0xc0] sm:$0xff]
        %v2356 = vld [vmem:[%s1 + $0xc8] sm:$0xf]
        %v2357 = vld [vmem:[%s1 + $0xcc] sm:$0xff]
        %v2358 = vld [vmem:[%s1 + $0xd4] sm:$0xf]
        %v2359 = vld [vmem:[%s1 + $0xd8] sm:$0xff]
        %v2360 = vld [vmem:[%s1 + $0xe0] sm:$0xf]
        %v2361 = vld [vmem:[%s1 + $0xe4] sm:$0xff]
        %v2362 = vld [vmem:[%s1 + $0xec] sm:$0xf]
        %v2363 = vld [vmem:[%s1 + $0xf0] sm:$0xff]
        %v2364 = vld [vmem:[%s1 + $0xf8] sm:$0xf]
        %v2365 = vld [vmem:[%s1 + $0xfc] sm:$0xff]
        %v2366 = vld [vmem:[%s1 + $0x104] sm:$0xf]
        %v2367 = vld [vmem:[%s1 + $0x108] sm:$0xff]
        %v2368 = vld [vmem:[%s1 + $0x110] sm:$0xf]
        %v2369 = vld [vmem:[%s1 + $0x114] sm:$0xff]
        %v2370 = vld [vmem:[%s1 + $0x11c] sm:$0xf]
        %v2371 = vld [vmem:[%s1 + $0x120] sm:$0xff]
        %v2372 = vld [vmem:[%s1 + $0x128] sm:$0xf]
        %v2373 = vld [vmem:[%s1 + $0x12c] sm:$0xff]
        %v2374 = vld [vmem:[%s1 + $0x134] sm:$0xf]
        %v2375 = vld [vmem:[%s1 + $0x138] sm:$0xff]
        %v2376 = vld [vmem:[%s1 + $0x140] sm:$0xf]
        %v2377 = vld [vmem:[%s1 + $0x144] sm:$0xff]
        %v2378 = vld [vmem:[%s1 + $0x14c] sm:$0xf]
        %v2379 = vld [vmem:[%s1 + $0x150] sm:$0xff]
        %v2380 = vld [vmem:[%s1 + $0x158] sm:$0xf]
        %v2381 = vld [vmem:[%s1 + $0x15c] sm:$0xff]
        %v2382 = vld [vmem:[%s1 + $0x164] sm:$0xf]
        %v2383 = vld [vmem:[%s1 + $0x168] sm:$0xff]
        %v2384 = vld [vmem:[%s1 + $0x170] sm:$0xf]
        %v2385 = vld [vmem:[%s1 + $0x174] sm:$0xff]
        %v2386 = vld [vmem:[%s1 + $0x17c] sm:$0xf]
        %v2387 = vld [vmem:[%s1 + $0x180] sm:$0xff]
        %v2388 = vld [vmem:[%s1 + $0x188] sm:$0xf]
        %v2389 = vld [vmem:[%s1 + $0x18c] sm:$0xff]
        %v2390 = vld [vmem:[%s1 + $0x194] sm:$0xf]
        %v2391 = vld [vmem:[%s1 + $0x198] sm:$0xff]
        %v2392 = vld [vmem:[%s1 + $0x1a0] sm:$0xf]
        %v2393 = vld [vmem:[%s1 + $0x1a4] sm:$0xff]
        %v2394 = vld [vmem:[%s1 + $0x1ac] sm:$0xf]
        %v2395 = vld [vmem:[%s1 + $0x1b0] sm:$0xff]
        %v2396 = vld [vmem:[%s1 + $0x1b8] sm:$0xf]
        %v2397 = vld [vmem:[%s1 + $0x1bc] sm:$0xff]
        %v2398 = vld [vmem:[%s1 + $0x1c4] sm:$0xf]
        %v2399 = vld [vmem:[%s1 + $0x1c8] sm:$0xff]
        %v2400 = vld [vmem:[%s1 + $0x1d0] sm:$0xf]
        %v2401 = vld [vmem:[%s1 + $0x1d4] sm:$0xff]
        %v2402 = vld [vmem:[%s1 + $0x1dc] sm:$0xf]
        %v2403 = vld [vmem:[%s1 + $0x1e0] sm:$0xff]
        %v2404 = vld [vmem:[%s1 + $0x1e8] sm:$0xf]
        %v2405 = vld [vmem:[%s1 + $0x1ec] sm:$0xff]
        %v2406 = vld [vmem:[%s1 + $0x1f4] sm:$0xf]
        %v2407 = vld [vmem:[%s1 + $0x1f8] sm:$0xff]
        %v2408 = vld [vmem:[%s1 + $0x200] sm:$0xf]
        %v2409 = vld [vmem:[%s1 + $0x204] sm:$0xff]
        %v2410 = vld [vmem:[%s1 + $0x20c] sm:$0xf]
        %v2411 = vld [vmem:[%s1 + $0x210] sm:$0xff]
        %v2412 = vld [vmem:[%s1 + $0x218] sm:$0xf]
        %v2413 = vld [vmem:[%s1 + $0x21c] sm:$0xff]
        %v2414 = vld [vmem:[%s1 + $0x224] sm:$0xf]
        %v2415 = vld [vmem:[%s1 + $0x228] sm:$0xff]
        %v2416 = vld [vmem:[%s1 + $0x230] sm:$0xf]
        %v2417 = vld [vmem:[%s1 + $0x234] sm:$0xff]
        %v2418 = vld [vmem:[%s1 + $0x23c] sm:$0xf]
        %v2515 = vunpack.c.l.b16 %v2323
        %v2516 = vunpack.c.h.b16 %v2323
        %v2517 = vunpack.c.l.b16 %v2324
        %v2518 = vunpack.c.l.b16 %v2325
        %v2519 = vunpack.c.h.b16 %v2325
        %v2520 = vunpack.c.l.b16 %v2326
        %v2521 = vunpack.c.l.b16 %v2327
        %v2522 = vunpack.c.h.b16 %v2327
        %v2523 = vunpack.c.l.b16 %v2328
        %v2524 = vunpack.c.l.b16 %v2329
        %v2525 = vunpack.c.h.b16 %v2329
        %v2526 = vunpack.c.l.b16 %v2330
        %v2527 = vunpack.c.l.b16 %v2331
        %v2528 = vunpack.c.h.b16 %v2331
        %v2529 = vunpack.c.l.b16 %v2332
        %v2530 = vunpack.c.l.b16 %v2333
        %v2531 = vunpack.c.h.b16 %v2333
        %v2532 = vunpack.c.l.b16 %v2334
        %v2533 = vunpack.c.l.b16 %v2335
        %v2534 = vunpack.c.h.b16 %v2335
        %v2535 = vunpack.c.l.b16 %v2336
        %v2536 = vunpack.c.l.b16 %v2337
        %v2537 = vunpack.c.h.b16 %v2337
        %v2538 = vunpack.c.l.b16 %v2338
        %v2539 = vunpack.c.l.b16 %v2339
        %v2540 = vunpack.c.h.b16 %v2339
        %v2541 = vunpack.c.l.b16 %v2340
        %v2542 = vunpack.c.l.b16 %v2341
        %v2543 = vunpack.c.h.b16 %v2341
        %v2544 = vunpack.c.l.b16 %v2342
        %v2545 = vunpack.c.l.b16 %v2343
        %v2546 = vunpack.c.h.b16 %v2343
        %v2547 = vunpack.c.l.b16 %v2344
        %v2548 = vunpack.c.l.b16 %v2345
        %v2549 = vunpack.c.h.b16 %v2345
        %v2550 = vunpack.c.l.b16 %v2346
        %v2551 = vunpack.c.l.b16 %v2347
        %v2552 = vunpack.c.h.b16 %v2347
        %v2553 = vunpack.c.l.b16 %v2348
        %v2554 = vunpack.c.l.b16 %v2349
        %v2555 = vunpack.c.h.b16 %v2349
        %v2556 = vunpack.c.l.b16 %v2350
        %v2557 = vunpack.c.l.b16 %v2351
        %v2558 = vunpack.c.h.b16 %v2351
        %v2559 = vunpack.c.l.b16 %v2352
        %v2560 = vunpack.c.l.b16 %v2353
        %v2561 = vunpack.c.h.b16 %v2353
        %v2562 = vunpack.c.l.b16 %v2354
        %v2563 = vunpack.c.l.b16 %v2355
        %v2564 = vunpack.c.h.b16 %v2355
        %v2565 = vunpack.c.l.b16 %v2356
        %v2566 = vunpack.c.l.b16 %v2357
        %v2567 = vunpack.c.h.b16 %v2357
        %v2568 = vunpack.c.l.b16 %v2358
        %v2569 = vunpack.c.l.b16 %v2359
        %v2570 = vunpack.c.h.b16 %v2359
        %v2571 = vunpack.c.l.b16 %v2360
        %v2572 = vunpack.c.l.b16 %v2361
        %v2573 = vunpack.c.h.b16 %v2361
        %v2574 = vunpack.c.l.b16 %v2362
        %v2575 = vunpack.c.l.b16 %v2363
        %v2576 = vunpack.c.h.b16 %v2363
        %v2577 = vunpack.c.l.b16 %v2364
        %v2578 = vunpack.c.l.b16 %v2365
        %v2579 = vunpack.c.h.b16 %v2365
        %v2580 = vunpack.c.l.b16 %v2366
        %v2581 = vunpack.c.l.b16 %v2367
        %v2582 = vunpack.c.h.b16 %v2367
        %v2583 = vunpack.c.l.b16 %v2368
        %v2584 = vunpack.c.l.b16 %v2369
        %v2585 = vunpack.c.h.b16 %v2369
        %v2586 = vunpack.c.l.b16 %v2370
        %v2587 = vunpack.c.l.b16 %v2371
        %v2588 = vunpack.c.h.b16 %v2371
        %v2589 = vunpack.c.l.b16 %v2372
        %v2590 = vunpack.c.l.b16 %v2373
        %v2591 = vunpack.c.h.b16 %v2373
        %v2592 = vunpack.c.l.b16 %v2374
        %v2593 = vunpack.c.l.b16 %v2375
        %v2594 = vunpack.c.h.b16 %v2375
        %v2595 = vunpack.c.l.b16 %v2376
        %v2596 = vunpack.c.l.b16 %v2377
        %v2597 = vunpack.c.h.b16 %v2377
        %v2598 = vunpack.c.l.b16 %v2378
        %v2599 = vunpack.c.l.b16 %v2379
        %v2600 = vunpack.c.h.b16 %v2379
        %v2601 = vunpack.c.l.b16 %v2380
        %v2602 = vunpack.c.l.b16 %v2381
        %v2603 = vunpack.c.h.b16 %v2381
        %v2604 = vunpack.c.l.b16 %v2382
        %v2605 = vunpack.c.l.b16 %v2383
        %v2606 = vunpack.c.h.b16 %v2383
        %v2607 = vunpack.c.l.b16 %v2384
        %v2608 = vunpack.c.l.b16 %v2385
        %v2609 = vunpack.c.h.b16 %v2385
        %v2610 = vunpack.c.l.b16 %v2386
        %v2611 = vunpack.c.l.b16 %v2387
        %v2612 = vunpack.c.h.b16 %v2387
        %v2613 = vunpack.c.l.b16 %v2388
        %v2614 = vunpack.c.l.b16 %v2389
        %v2615 = vunpack.c.h.b16 %v2389
        %v2616 = vunpack.c.l.b16 %v2390
        %v2617 = vunpack.c.l.b16 %v2391
        %v2618 = vunpack.c.h.b16 %v2391
        %v2619 = vunpack.c.l.b16 %v2392
        %v2620 = vunpack.c.l.b16 %v2393
        %v2621 = vunpack.c.h.b16 %v2393
        %v2622 = vunpack.c.l.b16 %v2394
        %v2623 = vunpack.c.l.b16 %v2395
        %v2624 = vunpack.c.h.b16 %v2395
        %v2625 = vunpack.c.l.b16 %v2396
        %v2626 = vunpack.c.l.b16 %v2397
        %v2627 = vunpack.c.h.b16 %v2397
        %v2628 = vunpack.c.l.b16 %v2398
        %v2629 = vunpack.c.l.b16 %v2399
        %v2630 = vunpack.c.h.b16 %v2399
        %v2631 = vunpack.c.l.b16 %v2400
        %v2632 = vunpack.c.l.b16 %v2401
        %v2633 = vunpack.c.h.b16 %v2401
        %v2634 = vunpack.c.l.b16 %v2402
        %v2635 = vunpack.c.l.b16 %v2403
        %v2636 = vunpack.c.h.b16 %v2403
        %v2637 = vunpack.c.l.b16 %v2404
        %v2638 = vunpack.c.l.b16 %v2405
        %v2639 = vunpack.c.h.b16 %v2405
        %v2640 = vunpack.c.l.b16 %v2406
        %v2641 = vunpack.c.l.b16 %v2407
        %v2642 = vunpack.c.h.b16 %v2407
        %v2643 = vunpack.c.l.b16 %v2408
        %v2644 = vunpack.c.l.b16 %v2409
        %v2645 = vunpack.c.h.b16 %v2409
        %v2646 = vunpack.c.l.b16 %v2410
        %v2647 = vunpack.c.l.b16 %v2411
        %v2648 = vunpack.c.h.b16 %v2411
        %v2649 = vunpack.c.l.b16 %v2412
        %v2650 = vunpack.c.l.b16 %v2413
        %v2651 = vunpack.c.h.b16 %v2413
        %v2652 = vunpack.c.l.b16 %v2414
        %v2653 = vunpack.c.l.b16 %v2415
        %v2654 = vunpack.c.h.b16 %v2415
        %v2655 = vunpack.c.l.b16 %v2416
        %v2656 = vunpack.c.l.b16 %v2417
        %v2657 = vunpack.c.h.b16 %v2417
        %v2658 = vunpack.c.l.b16 %v2418
        %v2659 = vpack.c.b16 %v2518, %v2515
        %v2660 = vpack.c.b16 %v2519, %v2516
        %v2661 = vpack.c.b16 %v2520, %v2517
        %v2662 = vpack.c.b16 %v2524, %v2521
        %v2663 = vpack.c.b16 %v2525, %v2522
        %v2664 = vpack.c.b16 %v2526, %v2523
        %v2665 = vpack.c.b16 %v2530, %v2527
        %v2666 = vpack.c.b16 %v2531, %v2528
        %v2667 = vpack.c.b16 %v2532, %v2529
        %v2668 = vpack.c.b16 %v2536, %v2533
        %v2669 = vpack.c.b16 %v2537, %v2534
        %v2670 = vpack.c.b16 %v2538, %v2535
        %v2671 = vpack.c.b16 %v2542, %v2539
        %v2672 = vpack.c.b16 %v2543, %v2540
        %v2673 = vpack.c.b16 %v2544, %v2541
        %v2674 = vpack.c.b16 %v2548, %v2545
        %v2675 = vpack.c.b16 %v2549, %v2546
        %v2676 = vpack.c.b16 %v2550, %v2547
        %v2677 = vpack.c.b16 %v2554, %v2551
        %v2678 = vpack.c.b16 %v2555, %v2552
        %v2679 = vpack.c.b16 %v2556, %v2553
        %v2680 = vpack.c.b16 %v2560, %v2557
        %v2681 = vpack.c.b16 %v2561, %v2558
        %v2682 = vpack.c.b16 %v2562, %v2559
        %v2683 = vpack.c.b16 %v2566, %v2563
        %v2684 = vpack.c.b16 %v2567, %v2564
        %v2685 = vpack.c.b16 %v2568, %v2565
        %v2686 = vpack.c.b16 %v2572, %v2569
        %v2687 = vpack.c.b16 %v2573, %v2570
        %v2688 = vpack.c.b16 %v2574, %v2571
        %v2689 = vpack.c.b16 %v2578, %v2575
        %v2690 = vpack.c.b16 %v2579, %v2576
        %v2691 = vpack.c.b16 %v2580, %v2577
        %v2692 = vpack.c.b16 %v2584, %v2581
        %v2693 = vpack.c.b16 %v2585, %v2582
        %v2694 = vpack.c.b16 %v2586, %v2583
        %v2695 = vpack.c.b16 %v2590, %v2587
        %v2696 = vpack.c.b16 %v2591, %v2588
        %v2697 = vpack.c.b16 %v2592, %v2589
        %v2698 = vpack.c.b16 %v2596, %v2593
        %v2699 = vpack.c.b16 %v2597, %v2594
        %v2700 = vpack.c.b16 %v2598, %v2595
        %v2701 = vpack.c.b16 %v2602, %v2599
        %v2702 = vpack.c.b16 %v2603, %v2600
        %v2703 = vpack.c.b16 %v2604, %v2601
        %v2704 = vpack.c.b16 %v2608, %v2605
        %v2705 = vpack.c.b16 %v2609, %v2606
        %v2706 = vpack.c.b16 %v2610, %v2607
        %v2707 = vpack.c.b16 %v2614, %v2611
        %v2708 = vpack.c.b16 %v2615, %v2612
        %v2709 = vpack.c.b16 %v2616, %v2613
        %v2710 = vpack.c.b16 %v2620, %v2617
        %v2711 = vpack.c.b16 %v2621, %v2618
        %v2712 = vpack.c.b16 %v2622, %v2619
        %v2713 = vpack.c.b16 %v2626, %v2623
        %v2714 = vpack.c.b16 %v2627, %v2624
        %v2715 = vpack.c.b16 %v2628, %v2625
        %v2716 = vpack.c.b16 %v2632, %v2629
        %v2717 = vpack.c.b16 %v2633, %v2630
        %v2718 = vpack.c.b16 %v2634, %v2631
        %v2719 = vpack.c.b16 %v2638, %v2635
        %v2720 = vpack.c.b16 %v2639, %v2636
        %v2721 = vpack.c.b16 %v2640, %v2637
        %v2722 = vpack.c.b16 %v2644, %v2641
        %v2723 = vpack.c.b16 %v2645, %v2642
        %v2724 = vpack.c.b16 %v2646, %v2643
        %v2725 = vpack.c.b16 %v2650, %v2647
        %v2726 = vpack.c.b16 %v2651, %v2648
        %v2727 = vpack.c.b16 %v2652, %v2649
        %v2728 = vpack.c.b16 %v2656, %v2653
        %v2729 = vpack.c.b16 %v2657, %v2654
        %v2730 = vpack.c.b16 %v2658, %v2655
        %2803 = vmatprep.subr.bf16.mxu0 %v2660
        %2804 = vmatpush1.bf16.msra.mxu0 %v2659
        %2805 = vmatprep.subr.bf16.mxu0 %v2663
        %2806 = vmatpush1.bf16.msra.mxu0 %v2662
        %2807 = vmatprep.subr.bf16.mxu0 %v2666
        %2808 = vmatpush1.bf16.msra.mxu0 %v2665
        %2809 = vmatprep.subr.bf16.mxu0 %v2669
        %2810 = vmatpush1.bf16.msra.mxu0 %v2668
        %2811 = vmatprep.subr.bf16.mxu0 %v2672
        %2812 = vmatpush1.bf16.msra.mxu0 %v2671
        %2813 = vmatprep.subr.bf16.mxu0 %v2675
        %2814 = vmatpush1.bf16.msra.mxu0 %v2674
        %2815 = vmatprep.subr.bf16.mxu0 %v2678
        %2816 = vmatpush1.bf16.msra.mxu0 %v2677
        %2817 = vmatprep.subr.bf16.mxu0 %v2681
        %2818 = vmatpush1.bf16.msra.mxu0 %v2680
        %2819 = vmatprep.subr.bf16.mxu0 %v2684
        %2820 = vmatpush1.bf16.msra.mxu0 %v2683
        %2821 = vmatprep.subr.bf16.mxu0 %v2687
        %2822 = vmatpush1.bf16.msra.mxu0 %v2686
        %2823 = vmatprep.subr.bf16.mxu0 %v2690
        %2824 = vmatpush1.bf16.msra.mxu0 %v2689
        %2825 = vmatprep.subr.bf16.mxu0 %v2693
        %2826 = vmatpush1.bf16.msra.mxu0 %v2692
        %2827 = vmatprep.subr.bf16.mxu0 %v2696
        %2828 = vmatpush1.bf16.msra.mxu0 %v2695
        %2829 = vmatprep.subr.bf16.mxu0 %v2699
        %2830 = vmatpush1.bf16.msra.mxu0 %v2698
        %2831 = vmatprep.subr.bf16.mxu0 %v2702
        %2832 = vmatpush1.bf16.msra.mxu0 %v2701
        %2833 = vmatprep.subr.bf16.mxu0 %v2705
        %2834 = vmatpush1.bf16.msra.mxu0 %v2704
        %2835 = vmatprep.mubr.bf16.mxu0 %v2318
        %2836 = vmatmul.mubr.bf16.gmra.mrb[0].mxu0 %v2317
        %v2837 = vpop.f32.mrb[0].mxu0
        %v2838 = vadd.f32 0.0, %v2837
        %v2839 = vpop.f32.mrb[0].mxu0
        %v2840 = vadd.f32 0.0, %v2839
        %v2841 = vpop.f32.mrb[0].mxu0
        %v2842 = vadd.f32 0.0, %v2841
        %v2843 = vpop.f32.mrb[0].mxu0
        %v2844 = vadd.f32 0.0, %v2843
        %2845 = vmatprep.mubr.bf16.mxu0 %v2321
        %2846 = vmatmul.mubr.bf16.gmra.mrb[0].mxu0 %v2320
        %v2847 = vpop.f32.mrb[0].mxu0
        %v2848 = vadd.f32 0.0, %v2847
        %v2849 = vpop.f32.mrb[0].mxu0
        %v2850 = vadd.f32 0.0, %v2849
        %v2851 = vpop.f32.mrb[0].mxu0
        %v2852 = vadd.f32 0.0, %v2851
        %v2853 = vpop.f32.mrb[0].mxu0
        %v2854 = vadd.f32 0.0, %v2853
        %2855 = vdwg.mxu0
        %2856 = vmatprep.subr.bf16.mxu0 %v2708
        %2857 = vmatpush1.bf16.msra.mxu0 %v2707
        %2858 = vmatprep.subr.bf16.mxu0 %v2711
        %2859 = vmatpush1.bf16.msra.mxu0 %v2710
        %2860 = vmatprep.subr.bf16.mxu0 %v2714
        %2861 = vmatpush1.bf16.msra.mxu0 %v2713
        %2862 = vmatprep.subr.bf16.mxu0 %v2717
        %2863 = vmatpush1.bf16.msra.mxu0 %v2716
        %2864 = vmatprep.subr.bf16.mxu0 %v2720
        %2865 = vmatpush1.bf16.msra.mxu0 %v2719
        %2866 = vmatprep.subr.bf16.mxu0 %v2723
        %2867 = vmatpush1.bf16.msra.mxu0 %v2722
        %2868 = vmatprep.subr.bf16.mxu0 %v2726
        %2869 = vmatpush1.bf16.msra.mxu0 %v2725
        %2870 = vmatprep.subr.bf16.mxu0 %v2729
        %2871 = vmatpush1.bf16.msra.mxu0 %v2728
        %2872 = vmatprep.subr.bf16.mxu0 0
        %2873 = vmatpush1.bf16.msra.mxu0 0
        %2874 = vmatprep.subr.bf16.mxu0 0
        %2875 = vmatpush1.bf16.msra.mxu0 0
        %2876 = vmatprep.subr.bf16.mxu0 0
        %2877 = vmatpush1.bf16.msra.mxu0 0
        %2878 = vmatprep.subr.bf16.mxu0 0
        %2879 = vmatpush1.bf16.msra.mxu0 0
        %2880 = vmatprep.subr.bf16.mxu0 0
        %2881 = vmatpush1.bf16.msra.mxu0 0
        %2882 = vmatprep.subr.bf16.mxu0 0
        %2883 = vmatpush1.bf16.msra.mxu0 0
        %2884 = vmatprep.subr.bf16.mxu0 0
        %2885 = vmatpush1.bf16.msra.mxu0 0
        %2886 = vmatprep.subr.bf16.mxu0 0
        %2887 = vmatpush1.bf16.msra.mxu0 0
        %2888 = vmatprep.mubr.bf16.mxu0 0
        %2889 = vmatmul.mubr.bf16.gmra.mrb[0].mxu0 %v2319
        %v2890 = vpop.f32.mrb[0].mxu0
        %v2891 = vadd.f32 %v2838, %v2890
        %v2892 = vpop.f32.mrb[0].mxu0
        %v2893 = vadd.f32 %v2840, %v2892
        %v2894 = vpop.f32.mrb[0].mxu0
        %v2895 = vadd.f32 %v2842, %v2894
        %v2896 = vpop.f32.mrb[0].mxu0
        %v2897 = vadd.f32 %v2844, %v2896
        %2898 = vmatprep.mubr.bf16.mxu0 0
        %2899 = vmatmul.mubr.bf16.gmra.mrb[0].mxu0 %v2322
        %v2900 = vpop.f32.mrb[0].mxu0
        %v2901 = vadd.f32 %v2848, %v2900
        %v2902 = vpop.f32.mrb[0].mxu0
        %v2903 = vadd.f32 %v2850, %v2902
        %v2904 = vpop.f32.mrb[0].mxu0
        %v2905 = vadd.f32 %v2852, %v2904
        %v2906 = vpop.f32.mrb[0].mxu0
        %v2907 = vadd.f32 %v2854, %v2906
        %2908 = vdwg.mxu0
        %2909 = vmatprep.subr.bf16.mxu0 0
        %2910 = vmatpush1.bf16.msra.mxu0 %v2661
        %2911 = vmatprep.subr.bf16.mxu0 0
        %2912 = vmatpush1.bf16.msra.mxu0 %v2664
        %2913 = vmatprep.subr.bf16.mxu0 0
        %2914 = vmatpush1.bf16.msra.mxu0 %v2667
        %2915 = vmatprep.subr.bf16.mxu0 0
        %2916 = vmatpush1.bf16.msra.mxu0 %v2670
        %2917 = vmatprep.subr.bf16.mxu0 0
        %2918 = vmatpush1.bf16.msra.mxu0 %v2673
        %2919 = vmatprep.subr.bf16.mxu0 0
        %2920 = vmatpush1.bf16.msra.mxu0 %v2676
        %2921 = vmatprep.subr.bf16.mxu0 0
        %2922 = vmatpush1.bf16.msra.mxu0 %v2679
        %2923 = vmatprep.subr.bf16.mxu0 0
        %2924 = vmatpush1.bf16.msra.mxu0 %v2682
        %2925 = vmatprep.subr.bf16.mxu0 0
        %2926 = vmatpush1.bf16.msra.mxu0 %v2685
        %2927 = vmatprep.subr.bf16.mxu0 0
        %2928 = vmatpush1.bf16.msra.mxu0 %v2688
        %2929 = vmatprep.subr.bf16.mxu0 0
        %2930 = vmatpush1.bf16.msra.mxu0 %v2691
        %2931 = vmatprep.subr.bf16.mxu0 0
        %2932 = vmatpush1.bf16.msra.mxu0 %v2694
        %2933 = vmatprep.subr.bf16.mxu0 0
        %2934 = vmatpush1.bf16.msra.mxu0 %v2697
        %2935 = vmatprep.subr.bf16.mxu0 0
        %2936 = vmatpush1.bf16.msra.mxu0 %v2700
        %2937 = vmatprep.subr.bf16.mxu0 0
        %2938 = vmatpush1.bf16.msra.mxu0 %v2703
        %2939 = vmatprep.subr.bf16.mxu0 0
        %2940 = vmatpush1.bf16.msra.mxu0 %v2706
        %2941 = vmatprep.mubr.bf16.mxu0 %v2318
        %2942 = vmatmul.mubr.bf16.gmra.mrb[0].mxu0 %v2317
        %v2943 = vpop.f32.mrb[0].mxu0
        %v2944 = vadd.f32 0.0, %v2943
        %v2945 = vpop.f32.mrb[0].mxu0
        %v2946 = vpop.f32.mrb[0].mxu0
        %v2947 = vadd.f32 0.0, %v2946
        %v2948 = vpop.f32.mrb[0].mxu0
        %2949 = vmatprep.mubr.bf16.mxu0 %v2321
        %2950 = vmatmul.mubr.bf16.gmra.mrb[0].mxu0 %v2320
        %v2951 = vpop.f32.mrb[0].mxu0
        %v2952 = vadd.f32 0.0, %v2951
        %v2953 = vpop.f32.mrb[0].mxu0
        %v2954 = vpop.f32.mrb[0].mxu0
        %v2955 = vadd.f32 0.0, %v2954
        %v2956 = vpop.f32.mrb[0].mxu0
        %2957 = vdwg.mxu0
        %2958 = vmatprep.subr.bf16.mxu0 0
        %2959 = vmatpush1.bf16.msra.mxu0 %v2709
        %2960 = vmatprep.subr.bf16.mxu0 0
        %2961 = vmatpush1.bf16.msra.mxu0 %v2712
        %2962 = vmatprep.subr.bf16.mxu0 0
        %2963 = vmatpush1.bf16.msra.mxu0 %v2715
        %2964 = vmatprep.subr.bf16.mxu0 0
        %2965 = vmatpush1.bf16.msra.mxu0 %v2718
        %2966 = vmatprep.subr.bf16.mxu0 0
        %2967 = vmatpush1.bf16.msra.mxu0 %v2721
        %2968 = vmatprep.subr.bf16.mxu0 0
        %2969 = vmatpush1.bf16.msra.mxu0 %v2724
        %2970 = vmatprep.subr.bf16.mxu0 0
        %2971 = vmatpush1.bf16.msra.mxu0 %v2727
        %2972 = vmatprep.subr.bf16.mxu0 0
        %2973 = vmatpush1.bf16.msra.mxu0 %v2730
        %2974 = vmatprep.subr.bf16.mxu0 0
        %2975 = vmatpush1.bf16.msra.mxu0 0
        %2976 = vmatprep.subr.bf16.mxu0 0
        %2977 = vmatpush1.bf16.msra.mxu0 0
        %2978 = vmatprep.subr.bf16.mxu0 0
        %2979 = vmatpush1.bf16.msra.mxu0 0
        %2980 = vmatprep.subr.bf16.mxu0 0
        %2981 = vmatpush1.bf16.msra.mxu0 0
        %2982 = vmatprep.subr.bf16.mxu0 0
        %2983 = vmatpush1.bf16.msra.mxu0 0
        %2984 = vmatprep.subr.bf16.mxu0 0
        %2985 = vmatpush1.bf16.msra.mxu0 0
        %2986 = vmatprep.subr.bf16.mxu0 0
        %2987 = vmatpush1.bf16.msra.mxu0 0
        %2988 = vmatprep.subr.bf16.mxu0 0
        %2989 = vmatpush1.bf16.msra.mxu0 0
        %2990 = vmatprep.mubr.bf16.mxu0 0
        %2991 = vmatmul.mubr.bf16.gmra.mrb[0].mxu0 %v2319
        %v2992 = vpop.f32.mrb[0].mxu0
        %v2993 = vadd.f32 %v2944, %v2992
        %v2994 = vpop.f32.mrb[0].mxu0
        %v2995 = vpop.f32.mrb[0].mxu0
        %v2996 = vadd.f32 %v2947, %v2995
        %v2997 = vpop.f32.mrb[0].mxu0
        %2998 = vmatprep.mubr.bf16.mxu0 0
        %2999 = vmatmul.mubr.bf16.gmra.mrb[0].mxu0 %v2322
        %v3000 = vpop.f32.mrb[0].mxu0
        %v3001 = vadd.f32 %v2952, %v3000
        %v3002 = vpop.f32.mrb[0].mxu0
        %v3003 = vpop.f32.mrb[0].mxu0
        %v3004 = vadd.f32 %v2955, %v3003
        %v3005 = vpop.f32.mrb[0].mxu0
        %3006 = vdwg.mxu0
        %v3007 = vld [vmem:[%s4] sm:$0xf]
        %v3008 = vld [vmem:[%s4 + $0x4] sm:$0xf]
        %v3009 = vld [vmem:[%s4 + $0x8] sm:$0xf]
        %v3010 = vld [vmem:[%s4 + $0xc] sm:$0xf]
        %v3011 = vld [vmem:[%s4 + $0x10] sm:$0xf]
        %v3012 = vld [vmem:[%s4 + $0x14] sm:$0xf]
        %v3013 = vld [vmem:[%s4 + $0x18] sm:$0xf]
        %v3014 = vld [vmem:[%s4 + $0x1c] sm:$0xf]
        %v3015 = vld [vmem:[%s5] sm:$0xf]
        %v3016 = vld [vmem:[%s5 + $0x4] sm:$0xf]
        %v3017 = vld [vmem:[%s5 + $0x8] sm:$0xf]
        %v3018 = vld [vmem:[%s5 + $0xc] sm:$0xf]
        %v3019 = vld [vmem:[%s5 + $0x10] sm:$0xf]
        %v3020 = vld [vmem:[%s5 + $0x14] sm:$0xf]
        %v3021 = vld [vmem:[%s5 + $0x18] sm:$0xf]
        %v3022 = vld [vmem:[%s5 + $0x1c] sm:$0xf]
        %v3023 = vpack.c.bf16 %v2895, %v2891
        %v3024 = vpack.c.bf16 %v2897, %v2893
        %v3025 = vpack.c.bf16 %v2996, %v2993
        %v3026 = vpack.c.bf16 %v2905, %v2901
        %v3027 = vpack.c.bf16 %v2907, %v2903
        %v3028 = vpack.c.bf16 %v3004, %v3001
        %v3037 = vunpack.c.l.b16 %v3015
        %v3038 = vunpack.c.l.b16 %v3016
        %v3039 = vunpack.c.l.b16 %v3017
        %v3040 = vunpack.c.l.b16 %v3018
        %v3041 = vunpack.c.l.b16 %v3019
        %v3042 = vunpack.c.l.b16 %v3020
        %v3043 = vunpack.c.l.b16 %v3021
        %v3044 = vunpack.c.l.b16 %v3022
        %v3045 = vpack.c.b16 %v3038, %v3037
        %v3046 = vpack.c.b16 %v3040, %v3039
        %v3047 = vpack.c.b16 %v3042, %v3041
        %v3048 = vpack.c.b16 %v3044, %v3043
        %v3050 = vsel %vm2086, %v3045, 0
        %v3053 = vsel %vm2086, %v3046, 0
        %v3056 = vsel %vm2086, %v3047, 0
        %v3059 = vsel %vm2086, %v3048, 0
        %3061 = vmatprep.subr.bf16.mxu0 %v3024
        %3062 = vmatpush1.bf16.msra.mxu0 %v3023
        %3063 = vmatprep.subr.bf16.mxu0 %v3027
        %3064 = vmatpush1.bf16.msra.mxu0 %v3026
        %3065 = vmatprep.subr.bf16.mxu0 0
        %3066 = vmatpush1.bf16.msra.mxu0 0
        %3067 = vmatprep.subr.bf16.mxu0 0
        %3068 = vmatpush1.bf16.msra.mxu0 0
        %3069 = vmatprep.subr.bf16.mxu0 0
        %3070 = vmatpush1.bf16.msra.mxu0 0
        %3071 = vmatprep.subr.bf16.mxu0 0
        %3072 = vmatpush1.bf16.msra.mxu0 0
        %3073 = vmatprep.subr.bf16.mxu0 0
        %3074 = vmatpush1.bf16.msra.mxu0 0
        %3075 = vmatprep.subr.bf16.mxu0 0
        %3076 = vmatpush1.bf16.msra.mxu0 0
        %3077 = vmatprep.subr.bf16.mxu0 0
        %3078 = vmatpush1.bf16.msra.mxu0 0
        %3079 = vmatprep.subr.bf16.mxu0 0
        %3080 = vmatpush1.bf16.msra.mxu0 0
        %3081 = vmatprep.subr.bf16.mxu0 0
        %3082 = vmatpush1.bf16.msra.mxu0 0
        %3083 = vmatprep.subr.bf16.mxu0 0
        %3084 = vmatpush1.bf16.msra.mxu0 0
        %3085 = vmatprep.subr.bf16.mxu0 0
        %3086 = vmatpush1.bf16.msra.mxu0 0
        %3087 = vmatprep.subr.bf16.mxu0 0
        %3088 = vmatpush1.bf16.msra.mxu0 0
        %3089 = vmatprep.subr.bf16.mxu0 0
        %3090 = vmatpush1.bf16.msra.mxu0 0
        %3091 = vmatprep.subr.bf16.mxu0 0
        %3092 = vmatpush1.bf16.msra.mxu0 0
        %3093 = vmatprep.mubr.bf16.mxu0 0
        %3094 = vmatmul.mubr.bf16.gmra.mrb[0].mxu0 %v3050
        %v3095 = vpop.f32.mrb[0].mxu0
        %v3096 = vadd.f32 0.0, %v3095
        %v3097 = vpop.f32.mrb[0].mxu0
        %v3098 = vadd.f32 0.0, %v3097
        %v3099 = vpop.f32.mrb[0].mxu0
        %v3100 = vadd.f32 0.0, %v3099
        %v3101 = vpop.f32.mrb[0].mxu0
        %v3102 = vadd.f32 0.0, %v3101
        %3103 = vmatprep.mubr.bf16.mxu0 0
        %3104 = vmatmul.mubr.bf16.gmra.mrb[0].mxu0 %v3053
        %v3105 = vpop.f32.mrb[0].mxu0
        %v3106 = vadd.f32 0.0, %v3105
        %v3107 = vpop.f32.mrb[0].mxu0
        %v3108 = vadd.f32 0.0, %v3107
        %v3109 = vpop.f32.mrb[0].mxu0
        %v3110 = vadd.f32 0.0, %v3109
        %v3111 = vpop.f32.mrb[0].mxu0
        %v3112 = vadd.f32 0.0, %v3111
        %3113 = vmatprep.mubr.bf16.mxu0 0
        %3114 = vmatmul.mubr.bf16.gmra.mrb[0].mxu0 %v3056
        %v3115 = vpop.f32.mrb[0].mxu0
        %v3116 = vadd.f32 0.0, %v3115
        %v3117 = vpop.f32.mrb[0].mxu0
        %v3118 = vadd.f32 0.0, %v3117
        %v3119 = vpop.f32.mrb[0].mxu0
        %v3120 = vadd.f32 0.0, %v3119
        %v3121 = vpop.f32.mrb[0].mxu0
        %v3122 = vadd.f32 0.0, %v3121
        %3123 = vmatprep.mubr.bf16.mxu0 0
        %3124 = vmatmul.mubr.bf16.gmra.mrb[0].mxu0 %v3059
        %v3125 = vpop.f32.mrb[0].mxu0
        %v3126 = vadd.f32 0.0, %v3125
        %v3127 = vpop.f32.mrb[0].mxu0
        %v3128 = vadd.f32 0.0, %v3127
        %v3129 = vpop.f32.mrb[0].mxu0
        %v3130 = vadd.f32 0.0, %v3129
        %v3131 = vpop.f32.mrb[0].mxu0
        %v3132 = vadd.f32 0.0, %v3131
        %3133 = vdwg.mxu0
        %3134 = vmatprep.subr.bf16.mxu0 0
        %3135 = vmatpush1.bf16.msra.mxu0 %v3025
        %3136 = vmatprep.subr.bf16.mxu0 0
        %3137 = vmatpush1.bf16.msra.mxu0 %v3028
        %3138 = vmatprep.subr.bf16.mxu0 0
        %3139 = vmatpush1.bf16.msra.mxu0 0
        %3140 = vmatprep.subr.bf16.mxu0 0
        %3141 = vmatpush1.bf16.msra.mxu0 0
        %3142 = vmatprep.subr.bf16.mxu0 0
        %3143 = vmatpush1.bf16.msra.mxu0 0
        %3144 = vmatprep.subr.bf16.mxu0 0
        %3145 = vmatpush1.bf16.msra.mxu0 0
        %3146 = vmatprep.subr.bf16.mxu0 0
        %3147 = vmatpush1.bf16.msra.mxu0 0
        %3148 = vmatprep.subr.bf16.mxu0 0
        %3149 = vmatpush1.bf16.msra.mxu0 0
        %3150 = vmatprep.subr.bf16.mxu0 0
        %3151 = vmatpush1.bf16.msra.mxu0 0
        %3152 = vmatprep.subr.bf16.mxu0 0
        %3153 = vmatpush1.bf16.msra.mxu0 0
        %3154 = vmatprep.subr.bf16.mxu0 0
        %3155 = vmatpush1.bf16.msra.mxu0 0
        %3156 = vmatprep.subr.bf16.mxu0 0
        %3157 = vmatpush1.bf16.msra.mxu0 0
        %3158 = vmatprep.subr.bf16.mxu0 0
        %3159 = vmatpush1.bf16.msra.mxu0 0
        %3160 = vmatprep.subr.bf16.mxu0 0
        %3161 = vmatpush1.bf16.msra.mxu0 0
        %3162 = vmatprep.subr.bf16.mxu0 0
        %3163 = vmatpush1.bf16.msra.mxu0 0
        %3164 = vmatprep.subr.bf16.mxu0 0
        %3165 = vmatpush1.bf16.msra.mxu0 0
        %3166 = vmatprep.mubr.bf16.mxu0 0
        %3167 = vmatmul.mubr.bf16.gmra.mrb[0].mxu0 %v3050
        %v3168 = vpop.f32.mrb[0].mxu0
        %v3169 = vadd.f32 0.0, %v3168
        %v3170 = vpop.f32.mrb[0].mxu0
        %v3171 = vpop.f32.mrb[0].mxu0
        %v3172 = vadd.f32 0.0, %v3171
        %v3173 = vpop.f32.mrb[0].mxu0
        %3174 = vmatprep.mubr.bf16.mxu0 0
        %3175 = vmatmul.mubr.bf16.gmra.mrb[0].mxu0 %v3053
        %v3176 = vpop.f32.mrb[0].mxu0
        %v3177 = vadd.f32 0.0, %v3176
        %v3178 = vpop.f32.mrb[0].mxu0
        %v3179 = vpop.f32.mrb[0].mxu0
        %v3180 = vadd.f32 0.0, %v3179
        %v3181 = vpop.f32.mrb[0].mxu0
        %3182 = vmatprep.mubr.bf16.mxu0 0
        %3183 = vmatmul.mubr.bf16.gmra.mrb[0].mxu0 %v3056
        %v3184 = vpop.f32.mrb[0].mxu0
        %v3185 = vadd.f32 0.0, %v3184
        %v3186 = vpop.f32.mrb[0].mxu0
        %v3187 = vpop.f32.mrb[0].mxu0
        %v3188 = vadd.f32 0.0, %v3187
        %v3189 = vpop.f32.mrb[0].mxu0
        %3190 = vmatprep.mubr.bf16.mxu0 0
        %3191 = vmatmul.mubr.bf16.gmra.mrb[0].mxu0 %v3059
        %v3192 = vpop.f32.mrb[0].mxu0
        %v3193 = vadd.f32 0.0, %v3192
        %v3194 = vpop.f32.mrb[0].mxu0
        %v3195 = vpop.f32.mrb[0].mxu0
        %v3196 = vadd.f32 0.0, %v3195
        %v3197 = vpop.f32.mrb[0].mxu0
        %3198 = vdwg.mxu0
        %v3199 = vmul.f32 %v3096, 0.015625
        %v3200 = vmul.f32 %v3098, 0.015625
        %v3201 = vmul.f32 %v3169, 0.015625
        %v3202 = vmul.f32 %v3100, 0.015625
        %v3203 = vmul.f32 %v3102, 0.015625
        %v3204 = vmul.f32 %v3172, 0.015625
        %v3205 = vmul.f32 %v3106, 0.015625
        %v3206 = vmul.f32 %v3108, 0.015625
        %v3207 = vmul.f32 %v3177, 0.015625
        %v3208 = vmul.f32 %v3110, 0.015625
        %v3209 = vmul.f32 %v3112, 0.015625
        %v3210 = vmul.f32 %v3180, 0.015625
        %v3211 = vmul.f32 %v3116, 0.015625
        %v3212 = vmul.f32 %v3118, 0.015625
        %v3213 = vmul.f32 %v3185, 0.015625
        %v3214 = vmul.f32 %v3120, 0.015625
        %v3215 = vmul.f32 %v3122, 0.015625
        %v3216 = vmul.f32 %v3188, 0.015625
        %v3217 = vmul.f32 %v3126, 0.015625
        %v3218 = vmul.f32 %v3128, 0.015625
        %v3219 = vmul.f32 %v3193, 0.015625
        %v3220 = vmul.f32 %v3130, 0.015625
        %v3221 = vmul.f32 %v3132, 0.015625
        %v3222 = vmul.f32 %v3196, 0.015625
        %v3231 = vunpack.c.l.b16 %v3007
        %v3232 = vunpack.c.l.b16 %v3008
        %v3233 = vunpack.c.l.b16 %v3009
        %v3234 = vunpack.c.l.b16 %v3010
        %v3235 = vunpack.c.l.b16 %v3011
        %v3236 = vunpack.c.l.b16 %v3012
        %v3237 = vunpack.c.l.b16 %v3013
        %v3238 = vunpack.c.l.b16 %v3014
        %v3239 = vpack.c.b16 %v3232, %v3231
        %v3240 = vpack.c.b16 %v3234, %v3233
        %v3241 = vpack.c.b16 %v3236, %v3235
        %v3242 = vpack.c.b16 %v3238, %v3237
        %v3244 = vsel %vm2086, %v3239, 0
        %v3247 = vsel %vm2086, %v3240, 0
        %v3250 = vsel %vm2086, %v3241, 0
        %v3253 = vsel %vm2086, %v3242, 0
        %3255 = vmatprep.subr.bf16.mxu0 %v2318
        %3256 = vmatpush1.bf16.msra.mxu0 %v2317
        %3257 = vmatprep.subr.bf16.mxu0 %v2321
        %3258 = vmatpush1.bf16.msra.mxu0 %v2320
        %3259 = vmatprep.subr.bf16.mxu0 0
        %3260 = vmatpush1.bf16.msra.mxu0 0
        %3261 = vmatprep.subr.bf16.mxu0 0
        %3262 = vmatpush1.bf16.msra.mxu0 0
        %3263 = vmatprep.subr.bf16.mxu0 0
        %3264 = vmatpush1.bf16.msra.mxu0 0
        %3265 = vmatprep.subr.bf16.mxu0 0
        %3266 = vmatpush1.bf16.msra.mxu0 0
        %3267 = vmatprep.subr.bf16.mxu0 0
        %3268 = vmatpush1.bf16.msra.mxu0 0
        %3269 = vmatprep.subr.bf16.mxu0 0
        %3270 = vmatpush1.bf16.msra.mxu0 0
        %3271 = vmatprep.subr.bf16.mxu0 0
        %3272 = vmatpush1.bf16.msra.mxu0 0
        %3273 = vmatprep.subr.bf16.mxu0 0
        %3274 = vmatpush1.bf16.msra.mxu0 0
        %3275 = vmatprep.subr.bf16.mxu0 0
        %3276 = vmatpush1.bf16.msra.mxu0 0
        %3277 = vmatprep.subr.bf16.mxu0 0
        %3278 = vmatpush1.bf16.msra.mxu0 0
        %3279 = vmatprep.subr.bf16.mxu0 0
        %3280 = vmatpush1.bf16.msra.mxu0 0
        %3281 = vmatprep.subr.bf16.mxu0 0
        %3282 = vmatpush1.bf16.msra.mxu0 0
        %3283 = vmatprep.subr.bf16.mxu0 0
        %3284 = vmatpush1.bf16.msra.mxu0 0
        %3285 = vmatprep.subr.bf16.mxu0 0
        %3286 = vmatpush1.bf16.msra.mxu0 0
        %3287 = vmatprep.mubr.bf16.mxu0 0
        %3288 = vmatmul.mubr.bf16.gmra.mrb[0].mxu0 %v3244
        %v3289 = vpop.f32.mrb[0].mxu0
        %v3290 = vadd.f32 %v3199, %v3289
        %v3291 = vpop.f32.mrb[0].mxu0
        %v3292 = vadd.f32 %v3200, %v3291
        %v3293 = vpop.f32.mrb[0].mxu0
        %v3294 = vadd.f32 %v3202, %v3293
        %v3295 = vpop.f32.mrb[0].mxu0
        %v3296 = vadd.f32 %v3203, %v3295
        %3297 = vmatprep.mubr.bf16.mxu0 0
        %3298 = vmatmul.mubr.bf16.gmra.mrb[0].mxu0 %v3247
        %v3299 = vpop.f32.mrb[0].mxu0
        %v3300 = vadd.f32 %v3205, %v3299
        %v3301 = vpop.f32.mrb[0].mxu0
        %v3302 = vadd.f32 %v3206, %v3301
        %v3303 = vpop.f32.mrb[0].mxu0
        %v3304 = vadd.f32 %v3208, %v3303
        %v3305 = vpop.f32.mrb[0].mxu0
        %v3306 = vadd.f32 %v3209, %v3305
        %3307 = vmatprep.mubr.bf16.mxu0 0
        %3308 = vmatmul.mubr.bf16.gmra.mrb[0].mxu0 %v3250
        %v3309 = vpop.f32.mrb[0].mxu0
        %v3310 = vadd.f32 %v3211, %v3309
        %v3311 = vpop.f32.mrb[0].mxu0
        %v3312 = vadd.f32 %v3212, %v3311
        %v3313 = vpop.f32.mrb[0].mxu0
        %v3314 = vadd.f32 %v3214, %v3313
        %v3315 = vpop.f32.mrb[0].mxu0
        %v3316 = vadd.f32 %v3215, %v3315
        %3317 = vmatprep.mubr.bf16.mxu0 0
        %3318 = vmatmul.mubr.bf16.gmra.mrb[0].mxu0 %v3253
        %v3319 = vpop.f32.mrb[0].mxu0
        %v3320 = vadd.f32 %v3217, %v3319
        %v3321 = vpop.f32.mrb[0].mxu0
        %v3322 = vadd.f32 %v3218, %v3321
        %v3323 = vpop.f32.mrb[0].mxu0
        %v3324 = vadd.f32 %v3220, %v3323
        %v3325 = vpop.f32.mrb[0].mxu0
        %v3326 = vadd.f32 %v3221, %v3325
        %3327 = vdwg.mxu0
        %3328 = vmatprep.subr.bf16.mxu0 0
        %3329 = vmatpush1.bf16.msra.mxu0 %v2319
        %3330 = vmatprep.subr.bf16.mxu0 0
        %3331 = vmatpush1.bf16.msra.mxu0 %v2322
        %3332 = vmatprep.subr.bf16.mxu0 0
        %3333 = vmatpush1.bf16.msra.mxu0 0
        %3334 = vmatprep.subr.bf16.mxu0 0
        %3335 = vmatpush1.bf16.msra.mxu0 0
        %3336 = vmatprep.subr.bf16.mxu0 0
        %3337 = vmatpush1.bf16.msra.mxu0 0
        %3338 = vmatprep.subr.bf16.mxu0 0
        %3339 = vmatpush1.bf16.msra.mxu0 0
        %3340 = vmatprep.subr.bf16.mxu0 0
        %3341 = vmatpush1.bf16.msra.mxu0 0
        %3342 = vmatprep.subr.bf16.mxu0 0
        %3343 = vmatpush1.bf16.msra.mxu0 0
        %3344 = vmatprep.subr.bf16.mxu0 0
        %3345 = vmatpush1.bf16.msra.mxu0 0
        %3346 = vmatprep.subr.bf16.mxu0 0
        %3347 = vmatpush1.bf16.msra.mxu0 0
        %3348 = vmatprep.subr.bf16.mxu0 0
        %3349 = vmatpush1.bf16.msra.mxu0 0
        %3350 = vmatprep.subr.bf16.mxu0 0
        %3351 = vmatpush1.bf16.msra.mxu0 0
        %3352 = vmatprep.subr.bf16.mxu0 0
        %3353 = vmatpush1.bf16.msra.mxu0 0
        %3354 = vmatprep.subr.bf16.mxu0 0
        %3355 = vmatpush1.bf16.msra.mxu0 0
        %3356 = vmatprep.subr.bf16.mxu0 0
        %3357 = vmatpush1.bf16.msra.mxu0 0
        %3358 = vmatprep.subr.bf16.mxu0 0
        %3359 = vmatpush1.bf16.msra.mxu0 0
        %3360 = vmatprep.mubr.bf16.mxu0 0
        %3361 = vmatmul.mubr.bf16.gmra.mrb[0].mxu0 %v3244
        %v3362 = vpop.f32.mrb[0].mxu0
        %v3363 = vadd.f32 %v3201, %v3362
        %v3364 = vpop.f32.mrb[0].mxu0
        %v3365 = vpop.f32.mrb[0].mxu0
        %v3366 = vadd.f32 %v3204, %v3365
        %v3367 = vpop.f32.mrb[0].mxu0
        %3368 = vmatprep.mubr.bf16.mxu0 0
        %3369 = vmatmul.mubr.bf16.gmra.mrb[0].mxu0 %v3247
        %v3370 = vpop.f32.mrb[0].mxu0
        %v3371 = vadd.f32 %v3207, %v3370
        %v3372 = vpop.f32.mrb[0].mxu0
        %v3373 = vpop.f32.mrb[0].mxu0
        %v3374 = vadd.f32 %v3210, %v3373
        %v3375 = vpop.f32.mrb[0].mxu0
        %3376 = vmatprep.mubr.bf16.mxu0 0
        %3377 = vmatmul.mubr.bf16.gmra.mrb[0].mxu0 %v3250
        %v3378 = vpop.f32.mrb[0].mxu0
        %v3379 = vadd.f32 %v3213, %v3378
        %v3380 = vpop.f32.mrb[0].mxu0
        %v3381 = vpop.f32.mrb[0].mxu0
        %v3382 = vadd.f32 %v3216, %v3381
        %v3383 = vpop.f32.mrb[0].mxu0
        %3384 = vmatprep.mubr.bf16.mxu0 0
        %3385 = vmatmul.mubr.bf16.gmra.mrb[0].mxu0 %v3253
        %v3386 = vpop.f32.mrb[0].mxu0
        %v3387 = vadd.f32 %v3219, %v3386
        %v3388 = vpop.f32.mrb[0].mxu0
        %v3389 = vpop.f32.mrb[0].mxu0
        %v3390 = vadd.f32 %v3222, %v3389
        %v3391 = vpop.f32.mrb[0].mxu0
        %3392 = vdwg.mxu0
        %v3393 = vmul.f32 %v3290, %v3310
        %v3394 = vmul.f32 %v3294, %v3314
        %v3395 = vmul.f32 %v3300, %v3320
        %v3396 = vmul.f32 %v3304, %v3324
        %v3397 = vmul.f32 %v3292, %v3312
        %v3398 = vmul.f32 %v3296, %v3316
        %v3399 = vmul.f32 %v3302, %v3322
        %v3400 = vmul.f32 %v3306, %v3326
        %v3401 = vadd.f32 %v3393, %v3397
        %v3402 = vadd.f32 %v3394, %v3398
        %v3403 = vadd.f32 %v3395, %v3399
        %v3404 = vadd.f32 %v3396, %v3400
        %v3405 = vmul.f32 %v3363, %v3379
        %v3406 = vmul.f32 %v3366, %v3382
        %v3407 = vmul.f32 %v3371, %v3387
        %v3408 = vmul.f32 %v3374, %v3390
        %v3409 = vadd.f32 %v3401, %v3405
        %v3410 = vadd.f32 %v3402, %v3406
        %v3411 = vadd.f32 %v3403, %v3407
        %v3412 = vadd.f32 %v3404, %v3408
        %v3413 = vmul.f32 %v3310, %v3310
        %v3414 = vmul.f32 %v3314, %v3314
        %v3415 = vmul.f32 %v3320, %v3320
        %v3416 = vmul.f32 %v3324, %v3324
        %v3417 = vmul.f32 %v3312, %v3312
        %v3418 = vmul.f32 %v3316, %v3316
        %v3419 = vmul.f32 %v3322, %v3322
        %v3420 = vmul.f32 %v3326, %v3326
        %v3421 = vadd.f32 %v3413, %v3417
        %v3422 = vadd.f32 %v3414, %v3418
        %v3423 = vadd.f32 %v3415, %v3419
        %v3424 = vadd.f32 %v3416, %v3420
        %v3425 = vmul.f32 %v3379, %v3379
        %v3426 = vmul.f32 %v3382, %v3382
        %v3427 = vmul.f32 %v3387, %v3387
        %v3428 = vmul.f32 %v3390, %v3390
        %v3429 = vadd.f32 %v3421, %v3425
        %v3430 = vadd.f32 %v3422, %v3426
        %v3431 = vadd.f32 %v3423, %v3427
        %v3432 = vadd.f32 %v3424, %v3428
        %v3433 = vmin.f32 %v3409, 0.0
        %v3434 = vmin.f32 %v3410, 0.0
        %v3435 = vmin.f32 %v3411, 0.0
        %v3436 = vmin.f32 %v3412, 0.0
        %v3437 = vmax.f32 %v3429, 1e-06
        %v3438 = vmax.f32 %v3430, 1e-06
        %v3439 = vmax.f32 %v3431, 1e-06
        %v3440 = vmax.f32 %v3432, 1e-06
        %v3441 = vrcp.pop %v3437
        %v3442 = vrcp.pop %v3438
        %v3443 = vrcp.pop %v3439
        %v3444 = vrcp.pop %v3440
        %v3445 = vmul.f32 %v3433, %v3441
        %v3446 = vmul.f32 %v3434, %v3442
        %v3447 = vmul.f32 %v3435, %v3443
        %v3448 = vmul.f32 %v3436, %v3444
        %v3449 = vmul.f32 %v3445, %v3310
        %v3450 = vmul.f32 %v3446, %v3314
        %v3451 = vmul.f32 %v3447, %v3320
        %v3452 = vmul.f32 %v3448, %v3324
        %v3453 = vsub.f32 %v3290, %v3449
        %v3454 = vsub.f32 %v3294, %v3450
        %v3455 = vsub.f32 %v3300, %v3451
        %v3456 = vsub.f32 %v3304, %v3452
        %v3457 = vmul.f32 %v3445, %v3312
        %v3458 = vmul.f32 %v3446, %v3316
        %v3459 = vmul.f32 %v3447, %v3322
        %v3460 = vmul.f32 %v3448, %v3326
        %v3461 = vsub.f32 %v3292, %v3457
        %v3462 = vsub.f32 %v3296, %v3458
        %v3463 = vsub.f32 %v3302, %v3459
        %v3464 = vsub.f32 %v3306, %v3460
        %v3465 = vmul.f32 %v3445, %v3379
        %v3466 = vmul.f32 %v3446, %v3382
        %v3467 = vmul.f32 %v3447, %v3387
        %v3468 = vmul.f32 %v3448, %v3390
        %v3469 = vsub.f32 %v3363, %v3465
        %v3470 = vsub.f32 %v3366, %v3466
        %v3471 = vsub.f32 %v3371, %v3467
        %v3472 = vsub.f32 %v3374, %v3468
        %v3473 = vld [vmem:[#allocation5] sm:$0xf]
        %v3474 = vld [vmem:[#allocation5 + $0x4] sm:$0xf]
        %v3475 = vld [vmem:[#allocation5 + $0x8] sm:$0xf]
        %v3476 = vld [vmem:[#allocation5 + $0xc] sm:$0xf]
        %v3477 = vpack.c.bf16 %v3454, %v3453
        %v3478 = vpack.c.bf16 %v3462, %v3461
        %v3479 = vpack.c.bf16 %v3470, %v3469
        %v3480 = vpack.c.bf16 %v3456, %v3455
        %v3481 = vpack.c.bf16 %v3464, %v3463
        %v3482 = vpack.c.bf16 %v3472, %v3471
        %s3483 = scalar_lea.vmem %s3, 32
        %v3484 = vld [vmem:[%s3483] sm:$0xf]
        %v3485 = vld [vmem:[%s3483 + $0x4] sm:$0xf]
        %v3486 = vld [vmem:[%s3483 + $0x8] sm:$0xf]
        %v3487 = vld [vmem:[%s3483 + $0xc] sm:$0xf]
        %v3488 = vld [vmem:[%s3483 + $0x10] sm:$0xf]
        %v3489 = vld [vmem:[%s3483 + $0x14] sm:$0xf]
        %v3490 = vld [vmem:[%s3483 + $0x18] sm:$0xf]
        %v3491 = vld [vmem:[%s3483 + $0x1c] sm:$0xf]
        %v3500 = vunpack.c.l.b16 %v3484
        %v3501 = vunpack.c.l.b16 %v3485
        %v3502 = vunpack.c.l.b16 %v3486
        %v3503 = vunpack.c.l.b16 %v3487
        %v3504 = vunpack.c.l.b16 %v3488
        %v3505 = vunpack.c.l.b16 %v3489
        %v3506 = vunpack.c.l.b16 %v3490
        %v3507 = vunpack.c.l.b16 %v3491
        %v3508 = vpack.c.b16 %v3501, %v3500
        %v3509 = vpack.c.b16 %v3503, %v3502
        %v3510 = vpack.c.b16 %v3505, %v3504
        %v3511 = vpack.c.b16 %v3507, %v3506
        %v3513 = vsel %vm2086, %v3508, 0
        %v3516 = vsel %vm2086, %v3509, 0
        %v3519 = vsel %vm2086, %v3510, 0
        %v3522 = vsel %vm2086, %v3511, 0
        %3524 = vmatprep.subr.bf16.mxu0 %v3478
        %3525 = vmatpush1.bf16.msra.mxu0 %v3477
        %3526 = vmatprep.subr.bf16.mxu0 %v3481
        %3527 = vmatpush1.bf16.msra.mxu0 %v3480
        %3528 = vmatprep.subr.bf16.mxu0 0
        %3529 = vmatpush1.bf16.msra.mxu0 0
        %3530 = vmatprep.subr.bf16.mxu0 0
        %3531 = vmatpush1.bf16.msra.mxu0 0
        %3532 = vmatprep.subr.bf16.mxu0 0
        %3533 = vmatpush1.bf16.msra.mxu0 0
        %3534 = vmatprep.subr.bf16.mxu0 0
        %3535 = vmatpush1.bf16.msra.mxu0 0
        %3536 = vmatprep.subr.bf16.mxu0 0
        %3537 = vmatpush1.bf16.msra.mxu0 0
        %3538 = vmatprep.subr.bf16.mxu0 0
        %3539 = vmatpush1.bf16.msra.mxu0 0
        %3540 = vmatprep.subr.bf16.mxu0 0
        %3541 = vmatpush1.bf16.msra.mxu0 0
        %3542 = vmatprep.subr.bf16.mxu0 0
        %3543 = vmatpush1.bf16.msra.mxu0 0
        %3544 = vmatprep.subr.bf16.mxu0 0
        %3545 = vmatpush1.bf16.msra.mxu0 0
        %3546 = vmatprep.subr.bf16.mxu0 0
        %3547 = vmatpush1.bf16.msra.mxu0 0
        %3548 = vmatprep.subr.bf16.mxu0 0
        %3549 = vmatpush1.bf16.msra.mxu0 0
        %3550 = vmatprep.subr.bf16.mxu0 0
        %3551 = vmatpush1.bf16.msra.mxu0 0
        %3552 = vmatprep.subr.bf16.mxu0 0
        %3553 = vmatpush1.bf16.msra.mxu0 0
        %3554 = vmatprep.subr.bf16.mxu0 0
        %3555 = vmatpush1.bf16.msra.mxu0 0
        %3556 = vmatprep.mubr.bf16.mxu0 0
        %3557 = vmatmul.mubr.bf16.gmra.mrb[0].mxu0 %v3513
        %v3558 = vpop.f32.mrb[0].mxu0
        %v3559 = vadd.f32 0.0, %v3558
        %v3560 = vpop.f32.mrb[0].mxu0
        %v3561 = vadd.f32 0.0, %v3560
        %v3562 = vpop.f32.mrb[0].mxu0
        %v3563 = vadd.f32 0.0, %v3562
        %v3564 = vpop.f32.mrb[0].mxu0
        %v3565 = vadd.f32 0.0, %v3564
        %3566 = vmatprep.mubr.bf16.mxu0 0
        %3567 = vmatmul.mubr.bf16.gmra.mrb[0].mxu0 %v3516
        %v3568 = vpop.f32.mrb[0].mxu0
        %v3569 = vadd.f32 0.0, %v3568
        %v3570 = vpop.f32.mrb[0].mxu0
        %v3571 = vadd.f32 0.0, %v3570
        %v3572 = vpop.f32.mrb[0].mxu0
        %v3573 = vadd.f32 0.0, %v3572
        %v3574 = vpop.f32.mrb[0].mxu0
        %v3575 = vadd.f32 0.0, %v3574
        %3576 = vmatprep.mubr.bf16.mxu0 0
        %3577 = vmatmul.mubr.bf16.gmra.mrb[0].mxu0 %v3519
        %v3578 = vpop.f32.mrb[0].mxu0
        %v3579 = vadd.f32 0.0, %v3578
        %v3580 = vpop.f32.mrb[0].mxu0
        %v3581 = vadd.f32 0.0, %v3580
        %v3582 = vpop.f32.mrb[0].mxu0
        %v3583 = vadd.f32 0.0, %v3582
        %v3584 = vpop.f32.mrb[0].mxu0
        %v3585 = vadd.f32 0.0, %v3584
        %3586 = vmatprep.mubr.bf16.mxu0 0
        %3587 = vmatmul.mubr.bf16.gmra.mrb[0].mxu0 %v3522
        %v3588 = vpop.f32.mrb[0].mxu0
        %v3589 = vadd.f32 0.0, %v3588
        %v3590 = vpop.f32.mrb[0].mxu0
        %v3591 = vadd.f32 0.0, %v3590
        %v3592 = vpop.f32.mrb[0].mxu0
        %v3593 = vadd.f32 0.0, %v3592
        %v3594 = vpop.f32.mrb[0].mxu0
        %v3595 = vadd.f32 0.0, %v3594
        %3596 = vdwg.mxu0
        %3597 = vmatprep.subr.bf16.mxu0 0
        %3598 = vmatpush1.bf16.msra.mxu0 %v3479
        %3599 = vmatprep.subr.bf16.mxu0 0
        %3600 = vmatpush1.bf16.msra.mxu0 %v3482
        %3601 = vmatprep.subr.bf16.mxu0 0
        %3602 = vmatpush1.bf16.msra.mxu0 0
        %3603 = vmatprep.subr.bf16.mxu0 0
        %3604 = vmatpush1.bf16.msra.mxu0 0
        %3605 = vmatprep.subr.bf16.mxu0 0
        %3606 = vmatpush1.bf16.msra.mxu0 0
        %3607 = vmatprep.subr.bf16.mxu0 0
        %3608 = vmatpush1.bf16.msra.mxu0 0
        %3609 = vmatprep.subr.bf16.mxu0 0
        %3610 = vmatpush1.bf16.msra.mxu0 0
        %3611 = vmatprep.subr.bf16.mxu0 0
        %3612 = vmatpush1.bf16.msra.mxu0 0
        %3613 = vmatprep.subr.bf16.mxu0 0
        %3614 = vmatpush1.bf16.msra.mxu0 0
        %3615 = vmatprep.subr.bf16.mxu0 0
        %3616 = vmatpush1.bf16.msra.mxu0 0
        %3617 = vmatprep.subr.bf16.mxu0 0
        %3618 = vmatpush1.bf16.msra.mxu0 0
        %3619 = vmatprep.subr.bf16.mxu0 0
        %3620 = vmatpush1.bf16.msra.mxu0 0
        %3621 = vmatprep.subr.bf16.mxu0 0
        %3622 = vmatpush1.bf16.msra.mxu0 0
        %3623 = vmatprep.subr.bf16.mxu0 0
        %3624 = vmatpush1.bf16.msra.mxu0 0
        %3625 = vmatprep.subr.bf16.mxu0 0
        %3626 = vmatpush1.bf16.msra.mxu0 0
        %3627 = vmatprep.subr.bf16.mxu0 0
        %3628 = vmatpush1.bf16.msra.mxu0 0
        %3629 = vmatprep.mubr.bf16.mxu0 0
        %3630 = vmatmul.mubr.bf16.gmra.mrb[0].mxu0 %v3513
        %v3631 = vpop.f32.mrb[0].mxu0
        %v3632 = vadd.f32 0.0, %v3631
        %v3633 = vpop.f32.mrb[0].mxu0
        %v3634 = vpop.f32.mrb[0].mxu0
        %v3635 = vadd.f32 0.0, %v3634
        %v3636 = vpop.f32.mrb[0].mxu0
        %3637 = vmatprep.mubr.bf16.mxu0 0
        %3638 = vmatmul.mubr.bf16.gmra.mrb[0].mxu0 %v3516
        %v3639 = vpop.f32.mrb[0].mxu0
        %v3640 = vadd.f32 0.0, %v3639
        %v3641 = vpop.f32.mrb[0].mxu0
        %v3642 = vpop.f32.mrb[0].mxu0
        %v3643 = vadd.f32 0.0, %v3642
        %v3644 = vpop.f32.mrb[0].mxu0
        %3645 = vmatprep.mubr.bf16.mxu0 0
        %3646 = vmatmul.mubr.bf16.gmra.mrb[0].mxu0 %v3519
        %v3647 = vpop.f32.mrb[0].mxu0
        %v3648 = vadd.f32 0.0, %v3647
        %v3649 = vpop.f32.mrb[0].mxu0
        %v3650 = vpop.f32.mrb[0].mxu0
        %v3651 = vadd.f32 0.0, %v3650
        %v3652 = vpop.f32.mrb[0].mxu0
        %3653 = vmatprep.mubr.bf16.mxu0 0
        %3654 = vmatmul.mubr.bf16.gmra.mrb[0].mxu0 %v3522
        %v3655 = vpop.f32.mrb[0].mxu0
        %v3656 = vadd.f32 0.0, %v3655
        %v3657 = vpop.f32.mrb[0].mxu0
        %v3658 = vpop.f32.mrb[0].mxu0
        %v3659 = vadd.f32 0.0, %v3658
        %v3660 = vpop.f32.mrb[0].mxu0
        %3661 = vdwg.mxu0
        %v3662 = vmul.f32 %v3559, %v3579
        %v3663 = vmul.f32 %v3563, %v3583
        %v3664 = vmul.f32 %v3569, %v3589
        %v3665 = vmul.f32 %v3573, %v3593
        %v3666 = vmul.f32 %v3561, %v3581
        %v3667 = vmul.f32 %v3565, %v3585
        %v3668 = vmul.f32 %v3571, %v3591
        %v3669 = vmul.f32 %v3575, %v3595
        %v3670 = vadd.f32 %v3662, %v3666
        %v3671 = vadd.f32 %v3663, %v3667
        %v3672 = vadd.f32 %v3664, %v3668
        %v3673 = vadd.f32 %v3665, %v3669
        %v3674 = vmul.f32 %v3632, %v3648
        %v3675 = vmul.f32 %v3635, %v3651
        %v3676 = vmul.f32 %v3640, %v3656
        %v3677 = vmul.f32 %v3643, %v3659
        %v3678 = vadd.f32 %v3670, %v3674
        %v3679 = vadd.f32 %v3671, %v3675
        %v3680 = vadd.f32 %v3672, %v3676
        %v3681 = vadd.f32 %v3673, %v3677
        %v3682 = vmul.f32 %v3579, %v3579
        %v3683 = vmul.f32 %v3583, %v3583
        %v3684 = vmul.f32 %v3589, %v3589
        %v3685 = vmul.f32 %v3593, %v3593
        %v3686 = vmul.f32 %v3581, %v3581
        %v3687 = vmul.f32 %v3585, %v3585
        %v3688 = vmul.f32 %v3591, %v3591
        %v3689 = vmul.f32 %v3595, %v3595
        %v3690 = vadd.f32 %v3682, %v3686
        %v3691 = vadd.f32 %v3683, %v3687
        %v3692 = vadd.f32 %v3684, %v3688
        %v3693 = vadd.f32 %v3685, %v3689
        %v3694 = vmul.f32 %v3648, %v3648
        %v3695 = vmul.f32 %v3651, %v3651
        %v3696 = vmul.f32 %v3656, %v3656
        %v3697 = vmul.f32 %v3659, %v3659
        %v3698 = vadd.f32 %v3690, %v3694
        %v3699 = vadd.f32 %v3691, %v3695
        %v3700 = vadd.f32 %v3692, %v3696
        %v3701 = vadd.f32 %v3693, %v3697
        %v3702 = vmin.f32 %v3678, 0.0
        %v3703 = vmin.f32 %v3679, 0.0
        %v3704 = vmin.f32 %v3680, 0.0
        %v3705 = vmin.f32 %v3681, 0.0
        %v3706 = vmax.f32 %v3698, 1e-06
        %v3707 = vmax.f32 %v3699, 1e-06
        %v3708 = vmax.f32 %v3700, 1e-06
        %v3709 = vmax.f32 %v3701, 1e-06
        %v3710 = vrcp.pop %v3706
        %v3711 = vrcp.pop %v3707
        %v3712 = vrcp.pop %v3708
        %v3713 = vrcp.pop %v3709
        %v3714 = vmul.f32 %v3702, %v3710
        %v3715 = vmul.f32 %v3703, %v3711
        %v3716 = vmul.f32 %v3704, %v3712
        %v3717 = vmul.f32 %v3705, %v3713
        %v3718 = vmul.f32 %v3714, %v3579
        %v3719 = vmul.f32 %v3715, %v3583
        %v3720 = vmul.f32 %v3716, %v3589
        %v3721 = vmul.f32 %v3717, %v3593
        %v3722 = vsub.f32 %v3559, %v3718
        %v3723 = vsub.f32 %v3563, %v3719
        %v3724 = vsub.f32 %v3569, %v3720
        %v3725 = vsub.f32 %v3573, %v3721
        %v3726 = vmul.f32 %v3714, %v3581
        %v3727 = vmul.f32 %v3715, %v3585
        %v3728 = vmul.f32 %v3716, %v3591
        %v3729 = vmul.f32 %v3717, %v3595
        %v3730 = vsub.f32 %v3561, %v3726
        %v3731 = vsub.f32 %v3565, %v3727
        %v3732 = vsub.f32 %v3571, %v3728
        %v3733 = vsub.f32 %v3575, %v3729
        %v3734 = vmul.f32 %v3714, %v3648
        %v3735 = vmul.f32 %v3715, %v3651
        %v3736 = vmul.f32 %v3716, %v3656
        %v3737 = vmul.f32 %v3717, %v3659
        %v3738 = vsub.f32 %v3632, %v3734
        %v3739 = vsub.f32 %v3635, %v3735
        %v3740 = vsub.f32 %v3640, %v3736
        %v3741 = vsub.f32 %v3643, %v3737
        %v3742 = vpack.c.bf16 %v3723, %v3722
        %v3743 = vpack.c.bf16 %v3731, %v3730
        %v3744 = vpack.c.bf16 %v3739, %v3738
        %v3745 = vpack.c.bf16 %v3725, %v3724
        %v3746 = vpack.c.bf16 %v3733, %v3732
        %v3747 = vpack.c.bf16 %v3741, %v3740
        %3748 = vmatprep.subr.bf16.mxu0 %v2660
        %3749 = vmatpush1.bf16.msra.mxu0 %v2659
        %3750 = vmatprep.subr.bf16.mxu0 %v2663
        %3751 = vmatpush1.bf16.msra.mxu0 %v2662
        %3752 = vmatprep.subr.bf16.mxu0 %v2666
        %3753 = vmatpush1.bf16.msra.mxu0 %v2665
        %3754 = vmatprep.subr.bf16.mxu0 %v2669
        %3755 = vmatpush1.bf16.msra.mxu0 %v2668
        %3756 = vmatprep.subr.bf16.mxu0 %v2672
        %3757 = vmatpush1.bf16.msra.mxu0 %v2671
        %3758 = vmatprep.subr.bf16.mxu0 %v2675
        %3759 = vmatpush1.bf16.msra.mxu0 %v2674
        %3760 = vmatprep.subr.bf16.mxu0 %v2678
        %3761 = vmatpush1.bf16.msra.mxu0 %v2677
        %3762 = vmatprep.subr.bf16.mxu0 %v2681
        %3763 = vmatpush1.bf16.msra.mxu0 %v2680
        %3764 = vmatprep.subr.bf16.mxu0 %v2684
        %3765 = vmatpush1.bf16.msra.mxu0 %v2683
        %3766 = vmatprep.subr.bf16.mxu0 %v2687
        %3767 = vmatpush1.bf16.msra.mxu0 %v2686
        %3768 = vmatprep.subr.bf16.mxu0 %v2690
        %3769 = vmatpush1.bf16.msra.mxu0 %v2689
        %3770 = vmatprep.subr.bf16.mxu0 %v2693
        %3771 = vmatpush1.bf16.msra.mxu0 %v2692
        %3772 = vmatprep.subr.bf16.mxu0 %v2696
        %3773 = vmatpush1.bf16.msra.mxu0 %v2695
        %3774 = vmatprep.subr.bf16.mxu0 %v2699
        %3775 = vmatpush1.bf16.msra.mxu0 %v2698
        %3776 = vmatprep.subr.bf16.mxu0 %v2702
        %3777 = vmatpush1.bf16.msra.mxu0 %v2701
        %3778 = vmatprep.subr.bf16.mxu0 %v2705
        %3779 = vmatpush1.bf16.msra.mxu0 %v2704
        %3780 = vmatprep.mubr.bf16.mxu0 %v3743
        %3781 = vmatmul.mubr.bf16.gmra.mrb[0].mxu0 %v3742
        %v3782 = vpop.f32.mrb[0].mxu0
        %v3783 = vadd.f32 0.0, %v3782
        %v3784 = vpop.f32.mrb[0].mxu0
        %v3785 = vadd.f32 0.0, %v3784
        %v3786 = vpop.f32.mrb[0].mxu0
        %v3787 = vadd.f32 0.0, %v3786
        %v3788 = vpop.f32.mrb[0].mxu0
        %v3789 = vadd.f32 0.0, %v3788
        %3790 = vmatprep.mubr.bf16.mxu0 %v3746
        %3791 = vmatmul.mubr.bf16.gmra.mrb[0].mxu0 %v3745
        %v3792 = vpop.f32.mrb[0].mxu0
        %v3793 = vadd.f32 0.0, %v3792
        %v3794 = vpop.f32.mrb[0].mxu0
        %v3795 = vadd.f32 0.0, %v3794
        %v3796 = vpop.f32.mrb[0].mxu0
        %v3797 = vadd.f32 0.0, %v3796
        %v3798 = vpop.f32.mrb[0].mxu0
        %v3799 = vadd.f32 0.0, %v3798
        %3800 = vdwg.mxu0
        %3801 = vmatprep.subr.bf16.mxu0 %v2708
        %3802 = vmatpush1.bf16.msra.mxu0 %v2707
        %3803 = vmatprep.subr.bf16.mxu0 %v2711
        %3804 = vmatpush1.bf16.msra.mxu0 %v2710
        %3805 = vmatprep.subr.bf16.mxu0 %v2714
        %3806 = vmatpush1.bf16.msra.mxu0 %v2713
        %3807 = vmatprep.subr.bf16.mxu0 %v2717
        %3808 = vmatpush1.bf16.msra.mxu0 %v2716
        %3809 = vmatprep.subr.bf16.mxu0 %v2720
        %3810 = vmatpush1.bf16.msra.mxu0 %v2719
        %3811 = vmatprep.subr.bf16.mxu0 %v2723
        %3812 = vmatpush1.bf16.msra.mxu0 %v2722
        %3813 = vmatprep.subr.bf16.mxu0 %v2726
        %3814 = vmatpush1.bf16.msra.mxu0 %v2725
        %3815 = vmatprep.subr.bf16.mxu0 %v2729
        %3816 = vmatpush1.bf16.msra.mxu0 %v2728
        %3817 = vmatprep.subr.bf16.mxu0 0
        %3818 = vmatpush1.bf16.msra.mxu0 0
        %3819 = vmatprep.subr.bf16.mxu0 0
        %3820 = vmatpush1.bf16.msra.mxu0 0
        %3821 = vmatprep.subr.bf16.mxu0 0
        %3822 = vmatpush1.bf16.msra.mxu0 0
        %3823 = vmatprep.subr.bf16.mxu0 0
        %3824 = vmatpush1.bf16.msra.mxu0 0
        %3825 = vmatprep.subr.bf16.mxu0 0
        %3826 = vmatpush1.bf16.msra.mxu0 0
        %3827 = vmatprep.subr.bf16.mxu0 0
        %3828 = vmatpush1.bf16.msra.mxu0 0
        %3829 = vmatprep.subr.bf16.mxu0 0
        %3830 = vmatpush1.bf16.msra.mxu0 0
        %3831 = vmatprep.subr.bf16.mxu0 0
        %3832 = vmatpush1.bf16.msra.mxu0 0
        %3833 = vmatprep.mubr.bf16.mxu0 0
        %3834 = vmatmul.mubr.bf16.gmra.mrb[0].mxu0 %v3744
        %v3835 = vpop.f32.mrb[0].mxu0
        %v3836 = vadd.f32 %v3783, %v3835
        %v3837 = vpop.f32.mrb[0].mxu0
        %v3838 = vadd.f32 %v3785, %v3837
        %v3839 = vpop.f32.mrb[0].mxu0
        %v3840 = vadd.f32 %v3787, %v3839
        %v3841 = vpop.f32.mrb[0].mxu0
        %v3842 = vadd.f32 %v3789, %v3841
        %3843 = vmatprep.mubr.bf16.mxu0 0
        %3844 = vmatmul.mubr.bf16.gmra.mrb[0].mxu0 %v3747
        %v3845 = vpop.f32.mrb[0].mxu0
        %v3846 = vadd.f32 %v3793, %v3845
        %v3847 = vpop.f32.mrb[0].mxu0
        %v3848 = vadd.f32 %v3795, %v3847
        %v3849 = vpop.f32.mrb[0].mxu0
        %v3850 = vadd.f32 %v3797, %v3849
        %v3851 = vpop.f32.mrb[0].mxu0
        %v3852 = vadd.f32 %v3799, %v3851
        %3853 = vdwg.mxu0
        %3854 = vmatprep.subr.bf16.mxu0 0
        %3855 = vmatpush1.bf16.msra.mxu0 %v2661
        %3856 = vmatprep.subr.bf16.mxu0 0
        %3857 = vmatpush1.bf16.msra.mxu0 %v2664
        %3858 = vmatprep.subr.bf16.mxu0 0
        %3859 = vmatpush1.bf16.msra.mxu0 %v2667
        %3860 = vmatprep.subr.bf16.mxu0 0
        %3861 = vmatpush1.bf16.msra.mxu0 %v2670
        %3862 = vmatprep.subr.bf16.mxu0 0
        %3863 = vmatpush1.bf16.msra.mxu0 %v2673
        %3864 = vmatprep.subr.bf16.mxu0 0
        %3865 = vmatpush1.bf16.msra.mxu0 %v2676
        %3866 = vmatprep.subr.bf16.mxu0 0
        %3867 = vmatpush1.bf16.msra.mxu0 %v2679
        %3868 = vmatprep.subr.bf16.mxu0 0
        %3869 = vmatpush1.bf16.msra.mxu0 %v2682
        %3870 = vmatprep.subr.bf16.mxu0 0
        %3871 = vmatpush1.bf16.msra.mxu0 %v2685
        %3872 = vmatprep.subr.bf16.mxu0 0
        %3873 = vmatpush1.bf16.msra.mxu0 %v2688
        %3874 = vmatprep.subr.bf16.mxu0 0
        %3875 = vmatpush1.bf16.msra.mxu0 %v2691
        %3876 = vmatprep.subr.bf16.mxu0 0
        %3877 = vmatpush1.bf16.msra.mxu0 %v2694
        %3878 = vmatprep.subr.bf16.mxu0 0
        %3879 = vmatpush1.bf16.msra.mxu0 %v2697
        %3880 = vmatprep.subr.bf16.mxu0 0
        %3881 = vmatpush1.bf16.msra.mxu0 %v2700
        %3882 = vmatprep.subr.bf16.mxu0 0
        %3883 = vmatpush1.bf16.msra.mxu0 %v2703
        %3884 = vmatprep.subr.bf16.mxu0 0
        %3885 = vmatpush1.bf16.msra.mxu0 %v2706
        %3886 = vmatprep.mubr.bf16.mxu0 %v3743
        %3887 = vmatmul.mubr.bf16.gmra.mrb[0].mxu0 %v3742
        %v3888 = vpop.f32.mrb[0].mxu0
        %v3889 = vadd.f32 0.0, %v3888
        %v3890 = vpop.f32.mrb[0].mxu0
        %v3891 = vpop.f32.mrb[0].mxu0
        %v3892 = vadd.f32 0.0, %v3891
        %v3893 = vpop.f32.mrb[0].mxu0
        %3894 = vmatprep.mubr.bf16.mxu0 %v3746
        %3895 = vmatmul.mubr.bf16.gmra.mrb[0].mxu0 %v3745
        %v3896 = vpop.f32.mrb[0].mxu0
        %v3897 = vadd.f32 0.0, %v3896
        %v3898 = vpop.f32.mrb[0].mxu0
        %v3899 = vpop.f32.mrb[0].mxu0
        %v3900 = vadd.f32 0.0, %v3899
        %v3901 = vpop.f32.mrb[0].mxu0
        %3902 = vdwg.mxu0
        %3903 = vmatprep.subr.bf16.mxu0 0
        %3904 = vmatpush1.bf16.msra.mxu0 %v2709
        %3905 = vmatprep.subr.bf16.mxu0 0
        %3906 = vmatpush1.bf16.msra.mxu0 %v2712
        %3907 = vmatprep.subr.bf16.mxu0 0
        %3908 = vmatpush1.bf16.msra.mxu0 %v2715
        %3909 = vmatprep.subr.bf16.mxu0 0
        %3910 = vmatpush1.bf16.msra.mxu0 %v2718
        %3911 = vmatprep.subr.bf16.mxu0 0
        %3912 = vmatpush1.bf16.msra.mxu0 %v2721
        %3913 = vmatprep.subr.bf16.mxu0 0
        %3914 = vmatpush1.bf16.msra.mxu0 %v2724
        %3915 = vmatprep.subr.bf16.mxu0 0
        %3916 = vmatpush1.bf16.msra.mxu0 %v2727
        %3917 = vmatprep.subr.bf16.mxu0 0
        %3918 = vmatpush1.bf16.msra.mxu0 %v2730
        %3919 = vmatprep.subr.bf16.mxu0 0
        %3920 = vmatpush1.bf16.msra.mxu0 0
        %3921 = vmatprep.subr.bf16.mxu0 0
        %3922 = vmatpush1.bf16.msra.mxu0 0
        %3923 = vmatprep.subr.bf16.mxu0 0
        %3924 = vmatpush1.bf16.msra.mxu0 0
        %3925 = vmatprep.subr.bf16.mxu0 0
        %3926 = vmatpush1.bf16.msra.mxu0 0
        %3927 = vmatprep.subr.bf16.mxu0 0
        %3928 = vmatpush1.bf16.msra.mxu0 0
        %3929 = vmatprep.subr.bf16.mxu0 0
        %3930 = vmatpush1.bf16.msra.mxu0 0
        %3931 = vmatprep.subr.bf16.mxu0 0
        %3932 = vmatpush1.bf16.msra.mxu0 0
        %3933 = vmatprep.subr.bf16.mxu0 0
        %3934 = vmatpush1.bf16.msra.mxu0 0
        %3935 = vmatprep.mubr.bf16.mxu0 0
        %3936 = vmatmul.mubr.bf16.gmra.mrb[0].mxu0 %v3744
        %v3937 = vpop.f32.mrb[0].mxu0
        %v3938 = vadd.f32 %v3889, %v3937
        %v3939 = vpop.f32.mrb[0].mxu0
        %v3940 = vpop.f32.mrb[0].mxu0
        %v3941 = vadd.f32 %v3892, %v3940
        %v3942 = vpop.f32.mrb[0].mxu0
        %3943 = vmatprep.mubr.bf16.mxu0 0
        %3944 = vmatmul.mubr.bf16.gmra.mrb[0].mxu0 %v3747
        %v3945 = vpop.f32.mrb[0].mxu0
        %v3946 = vadd.f32 %v3897, %v3945
        %v3947 = vpop.f32.mrb[0].mxu0
        %v3948 = vpop.f32.mrb[0].mxu0
        %v3949 = vadd.f32 %v3900, %v3948
        %v3950 = vpop.f32.mrb[0].mxu0
        %3951 = vdwg.mxu0
        %s3952 = scalar_lea.vmem %s4, 32
        %v3953 = vld [vmem:[%s3952] sm:$0xf]
        %v3954 = vld [vmem:[%s3952 + $0x4] sm:$0xf]
        %v3955 = vld [vmem:[%s3952 + $0x8] sm:$0xf]
        %v3956 = vld [vmem:[%s3952 + $0xc] sm:$0xf]
        %v3957 = vld [vmem:[%s3952 + $0x10] sm:$0xf]
        %v3958 = vld [vmem:[%s3952 + $0x14] sm:$0xf]
        %v3959 = vld [vmem:[%s3952 + $0x18] sm:$0xf]
        %v3960 = vld [vmem:[%s3952 + $0x1c] sm:$0xf]
        %s3961 = scalar_lea.vmem %s5, 32
        %v3962 = vld [vmem:[%s3961] sm:$0xf]
        %v3963 = vld [vmem:[%s3961 + $0x4] sm:$0xf]
        %v3964 = vld [vmem:[%s3961 + $0x8] sm:$0xf]
        %v3965 = vld [vmem:[%s3961 + $0xc] sm:$0xf]
        %v3966 = vld [vmem:[%s3961 + $0x10] sm:$0xf]
        %v3967 = vld [vmem:[%s3961 + $0x14] sm:$0xf]
        %v3968 = vld [vmem:[%s3961 + $0x18] sm:$0xf]
        %v3969 = vld [vmem:[%s3961 + $0x1c] sm:$0xf]
        %v3970 = vpack.c.bf16 %v3840, %v3836
        %v3971 = vpack.c.bf16 %v3842, %v3838
        %v3972 = vpack.c.bf16 %v3941, %v3938
        %v3973 = vpack.c.bf16 %v3850, %v3846
        %v3974 = vpack.c.bf16 %v3852, %v3848
        %v3975 = vpack.c.bf16 %v3949, %v3946
        %v3984 = vunpack.c.l.b16 %v3962
        %v3985 = vunpack.c.l.b16 %v3963
        %v3986 = vunpack.c.l.b16 %v3964
        %v3987 = vunpack.c.l.b16 %v3965
        %v3988 = vunpack.c.l.b16 %v3966
        %v3989 = vunpack.c.l.b16 %v3967
        %v3990 = vunpack.c.l.b16 %v3968
        %v3991 = vunpack.c.l.b16 %v3969
        %v3992 = vpack.c.b16 %v3985, %v3984
        %v3993 = vpack.c.b16 %v3987, %v3986
        %v3994 = vpack.c.b16 %v3989, %v3988
        %v3995 = vpack.c.b16 %v3991, %v3990
        %v3997 = vsel %vm2086, %v3992, 0
        %v4000 = vsel %vm2086, %v3993, 0
        %v4003 = vsel %vm2086, %v3994, 0
        %v4006 = vsel %vm2086, %v3995, 0
        %4008 = vmatprep.subr.bf16.mxu0 %v3971
        %4009 = vmatpush1.bf16.msra.mxu0 %v3970
        %4010 = vmatprep.subr.bf16.mxu0 %v3974
        %4011 = vmatpush1.bf16.msra.mxu0 %v3973
        %4012 = vmatprep.subr.bf16.mxu0 0
        %4013 = vmatpush1.bf16.msra.mxu0 0
        %4014 = vmatprep.subr.bf16.mxu0 0
        %4015 = vmatpush1.bf16.msra.mxu0 0
        %4016 = vmatprep.subr.bf16.mxu0 0
        %4017 = vmatpush1.bf16.msra.mxu0 0
        %4018 = vmatprep.subr.bf16.mxu0 0
        %4019 = vmatpush1.bf16.msra.mxu0 0
        %4020 = vmatprep.subr.bf16.mxu0 0
        %4021 = vmatpush1.bf16.msra.mxu0 0
        %4022 = vmatprep.subr.bf16.mxu0 0
        %4023 = vmatpush1.bf16.msra.mxu0 0
        %4024 = vmatprep.subr.bf16.mxu0 0
        %4025 = vmatpush1.bf16.msra.mxu0 0
        %4026 = vmatprep.subr.bf16.mxu0 0
        %4027 = vmatpush1.bf16.msra.mxu0 0
        %4028 = vmatprep.subr.bf16.mxu0 0
        %4029 = vmatpush1.bf16.msra.mxu0 0
        %4030 = vmatprep.subr.bf16.mxu0 0
        %4031 = vmatpush1.bf16.msra.mxu0 0
        %4032 = vmatprep.subr.bf16.mxu0 0
        %4033 = vmatpush1.bf16.msra.mxu0 0
        %4034 = vmatprep.subr.bf16.mxu0 0
        %4035 = vmatpush1.bf16.msra.mxu0 0
        %4036 = vmatprep.subr.bf16.mxu0 0
        %4037 = vmatpush1.bf16.msra.mxu0 0
        %4038 = vmatprep.subr.bf16.mxu0 0
        %4039 = vmatpush1.bf16.msra.mxu0 0
        %4040 = vmatprep.mubr.bf16.mxu0 0
        %4041 = vmatmul.mubr.bf16.gmra.mrb[0].mxu0 %v3997
        %v4042 = vpop.f32.mrb[0].mxu0
        %v4043 = vadd.f32 0.0, %v4042
        %v4044 = vpop.f32.mrb[0].mxu0
        %v4045 = vadd.f32 0.0, %v4044
        %v4046 = vpop.f32.mrb[0].mxu0
        %v4047 = vadd.f32 0.0, %v4046
        %v4048 = vpop.f32.mrb[0].mxu0
        %v4049 = vadd.f32 0.0, %v4048
        %4050 = vmatprep.mubr.bf16.mxu0 0
        %4051 = vmatmul.mubr.bf16.gmra.mrb[0].mxu0 %v4000
        %v4052 = vpop.f32.mrb[0].mxu0
        %v4053 = vadd.f32 0.0, %v4052
        %v4054 = vpop.f32.mrb[0].mxu0
        %v4055 = vadd.f32 0.0, %v4054
        %v4056 = vpop.f32.mrb[0].mxu0
        %v4057 = vadd.f32 0.0, %v4056
        %v4058 = vpop.f32.mrb[0].mxu0
        %v4059 = vadd.f32 0.0, %v4058
        %4060 = vmatprep.mubr.bf16.mxu0 0
        %4061 = vmatmul.mubr.bf16.gmra.mrb[0].mxu0 %v4003
        %v4062 = vpop.f32.mrb[0].mxu0
        %v4063 = vadd.f32 0.0, %v4062
        %v4064 = vpop.f32.mrb[0].mxu0
        %v4065 = vadd.f32 0.0, %v4064
        %v4066 = vpop.f32.mrb[0].mxu0
        %v4067 = vadd.f32 0.0, %v4066
        %v4068 = vpop.f32.mrb[0].mxu0
        %v4069 = vadd.f32 0.0, %v4068
        %4070 = vmatprep.mubr.bf16.mxu0 0
        %4071 = vmatmul.mubr.bf16.gmra.mrb[0].mxu0 %v4006
        %v4072 = vpop.f32.mrb[0].mxu0
        %v4073 = vadd.f32 0.0, %v4072
        %v4074 = vpop.f32.mrb[0].mxu0
        %v4075 = vadd.f32 0.0, %v4074
        %v4076 = vpop.f32.mrb[0].mxu0
        %v4077 = vadd.f32 0.0, %v4076
        %v4078 = vpop.f32.mrb[0].mxu0
        %v4079 = vadd.f32 0.0, %v4078
        %4080 = vdwg.mxu0
        %4081 = vmatprep.subr.bf16.mxu0 0
        %4082 = vmatpush1.bf16.msra.mxu0 %v3972
        %4083 = vmatprep.subr.bf16.mxu0 0
        %4084 = vmatpush1.bf16.msra.mxu0 %v3975
        %4085 = vmatprep.subr.bf16.mxu0 0
        %4086 = vmatpush1.bf16.msra.mxu0 0
        %4087 = vmatprep.subr.bf16.mxu0 0
        %4088 = vmatpush1.bf16.msra.mxu0 0
        %4089 = vmatprep.subr.bf16.mxu0 0
        %4090 = vmatpush1.bf16.msra.mxu0 0
        %4091 = vmatprep.subr.bf16.mxu0 0
        %4092 = vmatpush1.bf16.msra.mxu0 0
        %4093 = vmatprep.subr.bf16.mxu0 0
        %4094 = vmatpush1.bf16.msra.mxu0 0
        %4095 = vmatprep.subr.bf16.mxu0 0
        %4096 = vmatpush1.bf16.msra.mxu0 0
        %4097 = vmatprep.subr.bf16.mxu0 0
        %4098 = vmatpush1.bf16.msra.mxu0 0
        %4099 = vmatprep.subr.bf16.mxu0 0
        %4100 = vmatpush1.bf16.msra.mxu0 0
        %4101 = vmatprep.subr.bf16.mxu0 0
        %4102 = vmatpush1.bf16.msra.mxu0 0
        %4103 = vmatprep.subr.bf16.mxu0 0
        %4104 = vmatpush1.bf16.msra.mxu0 0
        %4105 = vmatprep.subr.bf16.mxu0 0
        %4106 = vmatpush1.bf16.msra.mxu0 0
        %4107 = vmatprep.subr.bf16.mxu0 0
        %4108 = vmatpush1.bf16.msra.mxu0 0
        %4109 = vmatprep.subr.bf16.mxu0 0
        %4110 = vmatpush1.bf16.msra.mxu0 0
        %4111 = vmatprep.subr.bf16.mxu0 0
        %4112 = vmatpush1.bf16.msra.mxu0 0
        %4113 = vmatprep.mubr.bf16.mxu0 0
        %4114 = vmatmul.mubr.bf16.gmra.mrb[0].mxu0 %v3997
        %v4115 = vpop.f32.mrb[0].mxu0
        %v4116 = vadd.f32 0.0, %v4115
        %v4117 = vpop.f32.mrb[0].mxu0
        %v4118 = vpop.f32.mrb[0].mxu0
        %v4119 = vadd.f32 0.0, %v4118
        %v4120 = vpop.f32.mrb[0].mxu0
        %4121 = vmatprep.mubr.bf16.mxu0 0
        %4122 = vmatmul.mubr.bf16.gmra.mrb[0].mxu0 %v4000
        %v4123 = vpop.f32.mrb[0].mxu0
        %v4124 = vadd.f32 0.0, %v4123
        %v4125 = vpop.f32.mrb[0].mxu0
        %v4126 = vpop.f32.mrb[0].mxu0
        %v4127 = vadd.f32 0.0, %v4126
        %v4128 = vpop.f32.mrb[0].mxu0
        %4129 = vmatprep.mubr.bf16.mxu0 0
        %4130 = vmatmul.mubr.bf16.gmra.mrb[0].mxu0 %v4003
        %v4131 = vpop.f32.mrb[0].mxu0
        %v4132 = vadd.f32 0.0, %v4131
        %v4133 = vpop.f32.mrb[0].mxu0
        %v4134 = vpop.f32.mrb[0].mxu0
        %v4135 = vadd.f32 0.0, %v4134
        %v4136 = vpop.f32.mrb[0].mxu0
        %4137 = vmatprep.mubr.bf16.mxu0 0
        %4138 = vmatmul.mubr.bf16.gmra.mrb[0].mxu0 %v4006
        %v4139 = vpop.f32.mrb[0].mxu0
        %v4140 = vadd.f32 0.0, %v4139
        %v4141 = vpop.f32.mrb[0].mxu0
        %v4142 = vpop.f32.mrb[0].mxu0
        %v4143 = vadd.f32 0.0, %v4142
        %v4144 = vpop.f32.mrb[0].mxu0
        %4145 = vdwg.mxu0
        %v4146 = vmul.f32 %v4043, 0.015625
        %v4147 = vmul.f32 %v4045, 0.015625
        %v4148 = vmul.f32 %v4116, 0.015625
        %v4149 = vmul.f32 %v4047, 0.015625
        %v4150 = vmul.f32 %v4049, 0.015625
        %v4151 = vmul.f32 %v4119, 0.015625
        %v4152 = vmul.f32 %v4053, 0.015625
        %v4153 = vmul.f32 %v4055, 0.015625
        %v4154 = vmul.f32 %v4124, 0.015625
        %v4155 = vmul.f32 %v4057, 0.015625
        %v4156 = vmul.f32 %v4059, 0.015625
        %v4157 = vmul.f32 %v4127, 0.015625
        %v4158 = vmul.f32 %v4063, 0.015625
        %v4159 = vmul.f32 %v4065, 0.015625
        %v4160 = vmul.f32 %v4132, 0.015625
        %v4161 = vmul.f32 %v4067, 0.015625
        %v4162 = vmul.f32 %v4069, 0.015625
        %v4163 = vmul.f32 %v4135, 0.015625
        %v4164 = vmul.f32 %v4073, 0.015625
        %v4165 = vmul.f32 %v4075, 0.015625
        %v4166 = vmul.f32 %v4140, 0.015625
        %v4167 = vmul.f32 %v4077, 0.015625
        %v4168 = vmul.f32 %v4079, 0.015625
        %v4169 = vmul.f32 %v4143, 0.015625
        %v4178 = vunpack.c.l.b16 %v3953
        %v4179 = vunpack.c.l.b16 %v3954
        %v4180 = vunpack.c.l.b16 %v3955
        %v4181 = vunpack.c.l.b16 %v3956
        %v4182 = vunpack.c.l.b16 %v3957
        %v4183 = vunpack.c.l.b16 %v3958
        %v4184 = vunpack.c.l.b16 %v3959
        %v4185 = vunpack.c.l.b16 %v3960
        %v4186 = vpack.c.b16 %v4179, %v4178
        %v4187 = vpack.c.b16 %v4181, %v4180
        %v4188 = vpack.c.b16 %v4183, %v4182
        %v4189 = vpack.c.b16 %v4185, %v4184
        %v4191 = vsel %vm2086, %v4186, 0
        %v4194 = vsel %vm2086, %v4187, 0
        %v4197 = vsel %vm2086, %v4188, 0
        %v4200 = vsel %vm2086, %v4189, 0
        %4202 = vmatprep.subr.bf16.mxu0 %v3743
        %4203 = vmatpush1.bf16.msra.mxu0 %v3742
        %4204 = vmatprep.subr.bf16.mxu0 %v3746
        %4205 = vmatpush1.bf16.msra.mxu0 %v3745
        %4206 = vmatprep.subr.bf16.mxu0 0
        %4207 = vmatpush1.bf16.msra.mxu0 0
        %4208 = vmatprep.subr.bf16.mxu0 0
        %4209 = vmatpush1.bf16.msra.mxu0 0
        %4210 = vmatprep.subr.bf16.mxu0 0
        %4211 = vmatpush1.bf16.msra.mxu0 0
        %4212 = vmatprep.subr.bf16.mxu0 0
        %4213 = vmatpush1.bf16.msra.mxu0 0
        %4214 = vmatprep.subr.bf16.mxu0 0
        %4215 = vmatpush1.bf16.msra.mxu0 0
        %4216 = vmatprep.subr.bf16.mxu0 0
        %4217 = vmatpush1.bf16.msra.mxu0 0
        %4218 = vmatprep.subr.bf16.mxu0 0
        %4219 = vmatpush1.bf16.msra.mxu0 0
        %4220 = vmatprep.subr.bf16.mxu0 0
        %4221 = vmatpush1.bf16.msra.mxu0 0
        %4222 = vmatprep.subr.bf16.mxu0 0
        %4223 = vmatpush1.bf16.msra.mxu0 0
        %4224 = vmatprep.subr.bf16.mxu0 0
        %4225 = vmatpush1.bf16.msra.mxu0 0
        %4226 = vmatprep.subr.bf16.mxu0 0
        %4227 = vmatpush1.bf16.msra.mxu0 0
        %4228 = vmatprep.subr.bf16.mxu0 0
        %4229 = vmatpush1.bf16.msra.mxu0 0
        %4230 = vmatprep.subr.bf16.mxu0 0
        %4231 = vmatpush1.bf16.msra.mxu0 0
        %4232 = vmatprep.subr.bf16.mxu0 0
        %4233 = vmatpush1.bf16.msra.mxu0 0
        %4234 = vmatprep.mubr.bf16.mxu0 0
        %4235 = vmatmul.mubr.bf16.gmra.mrb[0].mxu0 %v4191
        %v4236 = vpop.f32.mrb[0].mxu0
        %v4237 = vadd.f32 %v4146, %v4236
        %v4238 = vpop.f32.mrb[0].mxu0
        %v4239 = vadd.f32 %v4147, %v4238
        %v4240 = vpop.f32.mrb[0].mxu0
        %v4241 = vadd.f32 %v4149, %v4240
        %v4242 = vpop.f32.mrb[0].mxu0
        %v4243 = vadd.f32 %v4150, %v4242
        %4244 = vmatprep.mubr.bf16.mxu0 0
        %4245 = vmatmul.mubr.bf16.gmra.mrb[0].mxu0 %v4194
        %v4246 = vpop.f32.mrb[0].mxu0
        %v4247 = vadd.f32 %v4152, %v4246
        %v4248 = vpop.f32.mrb[0].mxu0
        %v4249 = vadd.f32 %v4153, %v4248
        %v4250 = vpop.f32.mrb[0].mxu0
        %v4251 = vadd.f32 %v4155, %v4250
        %v4252 = vpop.f32.mrb[0].mxu0
        %v4253 = vadd.f32 %v4156, %v4252
        %4254 = vmatprep.mubr.bf16.mxu0 0
        %4255 = vmatmul.mubr.bf16.gmra.mrb[0].mxu0 %v4197
        %v4256 = vpop.f32.mrb[0].mxu0
        %v4257 = vadd.f32 %v4158, %v4256
        %v4258 = vpop.f32.mrb[0].mxu0
        %v4259 = vadd.f32 %v4159, %v4258
        %v4260 = vpop.f32.mrb[0].mxu0
        %v4261 = vadd.f32 %v4161, %v4260
        %v4262 = vpop.f32.mrb[0].mxu0
        %v4263 = vadd.f32 %v4162, %v4262
        %4264 = vmatprep.mubr.bf16.mxu0 0
        %4265 = vmatmul.mubr.bf16.gmra.mrb[0].mxu0 %v4200
        %v4266 = vpop.f32.mrb[0].mxu0
        %v4267 = vadd.f32 %v4164, %v4266
        %v4268 = vpop.f32.mrb[0].mxu0
        %v4269 = vadd.f32 %v4165, %v4268
        %v4270 = vpop.f32.mrb[0].mxu0
        %v4271 = vadd.f32 %v4167, %v4270
        %v4272 = vpop.f32.mrb[0].mxu0
        %v4273 = vadd.f32 %v4168, %v4272
        %4274 = vdwg.mxu0
        %4275 = vmatprep.subr.bf16.mxu0 0
        %4276 = vmatpush1.bf16.msra.mxu0 %v3744
        %4277 = vmatprep.subr.bf16.mxu0 0
        %4278 = vmatpush1.bf16.msra.mxu0 %v3747
        %4279 = vmatprep.subr.bf16.mxu0 0
        %4280 = vmatpush1.bf16.msra.mxu0 0
        %4281 = vmatprep.subr.bf16.mxu0 0
        %4282 = vmatpush1.bf16.msra.mxu0 0
        %4283 = vmatprep.subr.bf16.mxu0 0
        %4284 = vmatpush1.bf16.msra.mxu0 0
        %4285 = vmatprep.subr.bf16.mxu0 0
        %4286 = vmatpush1.bf16.msra.mxu0 0
        %4287 = vmatprep.subr.bf16.mxu0 0
        %4288 = vmatpush1.bf16.msra.mxu0 0
        %4289 = vmatprep.subr.bf16.mxu0 0
        %4290 = vmatpush1.bf16.msra.mxu0 0
        %4291 = vmatprep.subr.bf16.mxu0 0
        %4292 = vmatpush1.bf16.msra.mxu0 0
        %4293 = vmatprep.subr.bf16.mxu0 0
        %4294 = vmatpush1.bf16.msra.mxu0 0
        %4295 = vmatprep.subr.bf16.mxu0 0
        %4296 = vmatpush1.bf16.msra.mxu0 0
        %4297 = vmatprep.subr.bf16.mxu0 0
        %4298 = vmatpush1.bf16.msra.mxu0 0
        %4299 = vmatprep.subr.bf16.mxu0 0
        %4300 = vmatpush1.bf16.msra.mxu0 0
        %4301 = vmatprep.subr.bf16.mxu0 0
        %4302 = vmatpush1.bf16.msra.mxu0 0
        %4303 = vmatprep.subr.bf16.mxu0 0
        %4304 = vmatpush1.bf16.msra.mxu0 0
        %4305 = vmatprep.subr.bf16.mxu0 0
        %4306 = vmatpush1.bf16.msra.mxu0 0
        %4307 = vmatprep.mubr.bf16.mxu0 0
        %4308 = vmatmul.mubr.bf16.gmra.mrb[0].mxu0 %v4191
        %v4309 = vpop.f32.mrb[0].mxu0
        %v4310 = vadd.f32 %v4148, %v4309
        %v4311 = vpop.f32.mrb[0].mxu0
        %v4312 = vpop.f32.mrb[0].mxu0
        %v4313 = vadd.f32 %v4151, %v4312
        %v4314 = vpop.f32.mrb[0].mxu0
        %4315 = vmatprep.mubr.bf16.mxu0 0
        %4316 = vmatmul.mubr.bf16.gmra.mrb[0].mxu0 %v4194
        %v4317 = vpop.f32.mrb[0].mxu0
        %v4318 = vadd.f32 %v4154, %v4317
        %v4319 = vpop.f32.mrb[0].mxu0
        %v4320 = vpop.f32.mrb[0].mxu0
        %v4321 = vadd.f32 %v4157, %v4320
        %v4322 = vpop.f32.mrb[0].mxu0
        %4323 = vmatprep.mubr.bf16.mxu0 0
        %4324 = vmatmul.mubr.bf16.gmra.mrb[0].mxu0 %v4197
        %v4325 = vpop.f32.mrb[0].mxu0
        %v4326 = vadd.f32 %v4160, %v4325
        %v4327 = vpop.f32.mrb[0].mxu0
        %v4328 = vpop.f32.mrb[0].mxu0
        %v4329 = vadd.f32 %v4163, %v4328
        %v4330 = vpop.f32.mrb[0].mxu0
        %4331 = vmatprep.mubr.bf16.mxu0 0
        %4332 = vmatmul.mubr.bf16.gmra.mrb[0].mxu0 %v4200
        %v4333 = vpop.f32.mrb[0].mxu0
        %v4334 = vadd.f32 %v4166, %v4333
        %v4335 = vpop.f32.mrb[0].mxu0
        %v4336 = vpop.f32.mrb[0].mxu0
        %v4337 = vadd.f32 %v4169, %v4336
        %v4338 = vpop.f32.mrb[0].mxu0
        %4339 = vdwg.mxu0
        %v4340 = vmul.f32 %v4237, %v4257
        %v4341 = vmul.f32 %v4241, %v4261
        %v4342 = vmul.f32 %v4247, %v4267
        %v4343 = vmul.f32 %v4251, %v4271
        %v4344 = vmul.f32 %v4239, %v4259
        %v4345 = vmul.f32 %v4243, %v4263
        %v4346 = vmul.f32 %v4249, %v4269
        %v4347 = vmul.f32 %v4253, %v4273
        %v4348 = vadd.f32 %v4340, %v4344
        %v4349 = vadd.f32 %v4341, %v4345
        %v4350 = vadd.f32 %v4342, %v4346
        %v4351 = vadd.f32 %v4343, %v4347
        %v4352 = vmul.f32 %v4310, %v4326
        %v4353 = vmul.f32 %v4313, %v4329
        %v4354 = vmul.f32 %v4318, %v4334
        %v4355 = vmul.f32 %v4321, %v4337
        %v4356 = vadd.f32 %v4348, %v4352
        %v4357 = vadd.f32 %v4349, %v4353
        %v4358 = vadd.f32 %v4350, %v4354
        %v4359 = vadd.f32 %v4351, %v4355
        %v4360 = vmul.f32 %v4257, %v4257
        %v4361 = vmul.f32 %v4261, %v4261
        %v4362 = vmul.f32 %v4267, %v4267
        %v4363 = vmul.f32 %v4271, %v4271
        %v4364 = vmul.f32 %v4259, %v4259
        %v4365 = vmul.f32 %v4263, %v4263
        %v4366 = vmul.f32 %v4269, %v4269
        %v4367 = vmul.f32 %v4273, %v4273
        %v4368 = vadd.f32 %v4360, %v4364
        %v4369 = vadd.f32 %v4361, %v4365
        %v4370 = vadd.f32 %v4362, %v4366
        %v4371 = vadd.f32 %v4363, %v4367
        %v4372 = vmul.f32 %v4326, %v4326
        %v4373 = vmul.f32 %v4329, %v4329
        %v4374 = vmul.f32 %v4334, %v4334
        %v4375 = vmul.f32 %v4337, %v4337
        %v4376 = vadd.f32 %v4368, %v4372
        %v4377 = vadd.f32 %v4369, %v4373
        %v4378 = vadd.f32 %v4370, %v4374
        %v4379 = vadd.f32 %v4371, %v4375
        %v4380 = vmin.f32 %v4356, 0.0
        %v4381 = vmin.f32 %v4357, 0.0
        %v4382 = vmin.f32 %v4358, 0.0
        %v4383 = vmin.f32 %v4359, 0.0
        %v4384 = vmax.f32 %v4376, 1e-06
        %v4385 = vmax.f32 %v4377, 1e-06
        %v4386 = vmax.f32 %v4378, 1e-06
        %v4387 = vmax.f32 %v4379, 1e-06
        %v4388 = vrcp.pop %v4384
        %v4389 = vrcp.pop %v4385
        %v4390 = vrcp.pop %v4386
        %v4391 = vrcp.pop %v4387
        %v4392 = vmul.f32 %v4380, %v4388
        %v4393 = vmul.f32 %v4381, %v4389
        %v4394 = vmul.f32 %v4382, %v4390
        %v4395 = vmul.f32 %v4383, %v4391
        %v4396 = vmul.f32 %v4392, %v4257
        %v4397 = vmul.f32 %v4393, %v4261
        %v4398 = vmul.f32 %v4394, %v4267
        %v4399 = vmul.f32 %v4395, %v4271
        %v4400 = vsub.f32 %v4237, %v4396
        %v4401 = vsub.f32 %v4241, %v4397
        %v4402 = vsub.f32 %v4247, %v4398
        %v4403 = vsub.f32 %v4251, %v4399
        %v4404 = vmul.f32 %v4392, %v4259
        %v4405 = vmul.f32 %v4393, %v4263
        %v4406 = vmul.f32 %v4394, %v4269
        %v4407 = vmul.f32 %v4395, %v4273
        %v4408 = vsub.f32 %v4239, %v4404
        %v4409 = vsub.f32 %v4243, %v4405
        %v4410 = vsub.f32 %v4249, %v4406
        %v4411 = vsub.f32 %v4253, %v4407
        %v4412 = vmul.f32 %v4392, %v4326
        %v4413 = vmul.f32 %v4393, %v4329
        %v4414 = vmul.f32 %v4394, %v4334
        %v4415 = vmul.f32 %v4395, %v4337
        %v4416 = vsub.f32 %v4310, %v4412
        %v4417 = vsub.f32 %v4313, %v4413
        %v4418 = vsub.f32 %v4318, %v4414
        %v4419 = vsub.f32 %v4321, %v4415
        %s4420 = scalar_lea.vmem [#allocation5], 16
        %v4421 = vld [vmem:[%s4420] sm:$0xf]
        %v4422 = vld [vmem:[%s4420 + $0x4] sm:$0xf]
        %v4423 = vld [vmem:[%s4420 + $0x8] sm:$0xf]
        %v4424 = vld [vmem:[%s4420 + $0xc] sm:$0xf]
        %v4425 = vpack.c.bf16 %v4401, %v4400
        %v4426 = vpack.c.bf16 %v4409, %v4408
        %v4427 = vpack.c.bf16 %v4417, %v4416
        %v4428 = vpack.c.bf16 %v4403, %v4402
        %v4429 = vpack.c.bf16 %v4411, %v4410
        %v4430 = vpack.c.bf16 %v4419, %v4418
        %v4435 = vunpack.c.l.b16 %v4421
        %v4436 = vunpack.c.l.b16 %v4422
        %v4437 = vunpack.c.l.b16 %v4423
        %v4438 = vunpack.c.l.b16 %v4424
        %v4439 = vpack.c.b16 %v4436, %v4435
        %v4440 = vpack.c.b16 %v4438, %v4437
        %v4442 = vsel %vm2086, %v4439, 0
        %v4445 = vsel %vm2086, %v4440, 0
        %4447 = vmatprep.subr.bf16.mxu0 %v4426
        %4448 = vmatpush1.bf16.msra.mxu0 %v4425
        %4449 = vmatprep.subr.bf16.mxu0 %v4429
        %4450 = vmatpush1.bf16.msra.mxu0 %v4428
        %4451 = vmatprep.subr.bf16.mxu0 0
        %4452 = vmatpush1.bf16.msra.mxu0 0
        %4453 = vmatprep.subr.bf16.mxu0 0
        %4454 = vmatpush1.bf16.msra.mxu0 0
        %4455 = vmatprep.subr.bf16.mxu0 0
        %4456 = vmatpush1.bf16.msra.mxu0 0
        %4457 = vmatprep.subr.bf16.mxu0 0
        %4458 = vmatpush1.bf16.msra.mxu0 0
        %4459 = vmatprep.subr.bf16.mxu0 0
        %4460 = vmatpush1.bf16.msra.mxu0 0
        %4461 = vmatprep.subr.bf16.mxu0 0
        %4462 = vmatpush1.bf16.msra.mxu0 0
        %4463 = vmatprep.subr.bf16.mxu0 0
        %4464 = vmatpush1.bf16.msra.mxu0 0
        %4465 = vmatprep.subr.bf16.mxu0 0
        %4466 = vmatpush1.bf16.msra.mxu0 0
        %4467 = vmatprep.subr.bf16.mxu0 0
        %4468 = vmatpush1.bf16.msra.mxu0 0
        %4469 = vmatprep.subr.bf16.mxu0 0
        %4470 = vmatpush1.bf16.msra.mxu0 0
        %4471 = vmatprep.subr.bf16.mxu0 0
        %4472 = vmatpush1.bf16.msra.mxu0 0
        %4473 = vmatprep.subr.bf16.mxu0 0
        %4474 = vmatpush1.bf16.msra.mxu0 0
        %4475 = vmatprep.subr.bf16.mxu0 0
        %4476 = vmatpush1.bf16.msra.mxu0 0
        %4477 = vmatprep.subr.bf16.mxu0 0
        %4478 = vmatpush1.bf16.msra.mxu0 0
        %4479 = vmatprep.mubr.bf16.mxu0 0
        %4480 = vmatmul.mubr.bf16.gmra.mrb[0].mxu0 %v4442
        %v4481 = vpop.f32.mrb[0].mxu0
        %v4482 = vadd.f32 0.0, %v4481
        %v4483 = vpop.f32.mrb[0].mxu0
        %v4484 = vadd.f32 0.0, %v4483
        %v4485 = vpop.f32.mrb[0].mxu0
        %v4486 = vadd.f32 0.0, %v4485
        %v4487 = vpop.f32.mrb[0].mxu0
        %v4488 = vadd.f32 0.0, %v4487
        %4489 = vmatprep.mubr.bf16.mxu0 0
        %4490 = vmatmul.mubr.bf16.gmra.mrb[0].mxu0 %v4445
        %v4491 = vpop.f32.mrb[0].mxu0
        %v4492 = vadd.f32 0.0, %v4491
        %v4493 = vpop.f32.mrb[0].mxu0
        %v4494 = vadd.f32 0.0, %v4493
        %v4495 = vpop.f32.mrb[0].mxu0
        %v4496 = vadd.f32 0.0, %v4495
        %v4497 = vpop.f32.mrb[0].mxu0
        %v4498 = vadd.f32 0.0, %v4497
        %4499 = vdwg.mxu0
        %4500 = vmatprep.subr.bf16.mxu0 0
        %4501 = vmatpush1.bf16.msra.mxu0 %v4427
        %4502 = vmatprep.subr.bf16.mxu0 0
        %4503 = vmatpush1.bf16.msra.mxu0 %v4430
        %4504 = vmatprep.subr.bf16.mxu0 0
        %4505 = vmatpush1.bf16.msra.mxu0 0
        %4506 = vmatprep.subr.bf16.mxu0 0
        %4507 = vmatpush1.bf16.msra.mxu0 0
        %4508 = vmatprep.subr.bf16.mxu0 0
        %4509 = vmatpush1.bf16.msra.mxu0 0
        %4510 = vmatprep.subr.bf16.mxu0 0
        %4511 = vmatpush1.bf16.msra.mxu0 0
        %4512 = vmatprep.subr.bf16.mxu0 0
        %4513 = vmatpush1.bf16.msra.mxu0 0
        %4514 = vmatprep.subr.bf16.mxu0 0
        %4515 = vmatpush1.bf16.msra.mxu0 0
        %4516 = vmatprep.subr.bf16.mxu0 0
        %4517 = vmatpush1.bf16.msra.mxu0 0
        %4518 = vmatprep.subr.bf16.mxu0 0
        %4519 = vmatpush1.bf16.msra.mxu0 0
        %4520 = vmatprep.subr.bf16.mxu0 0
        %4521 = vmatpush1.bf16.msra.mxu0 0
        %4522 = vmatprep.subr.bf16.mxu0 0
        %4523 = vmatpush1.bf16.msra.mxu0 0
        %4524 = vmatprep.subr.bf16.mxu0 0
        %4525 = vmatpush1.bf16.msra.mxu0 0
        %4526 = vmatprep.subr.bf16.mxu0 0
        %4527 = vmatpush1.bf16.msra.mxu0 0
        %4528 = vmatprep.subr.bf16.mxu0 0
        %4529 = vmatpush1.bf16.msra.mxu0 0
        %4530 = vmatprep.subr.bf16.mxu0 0
        %4531 = vmatpush1.bf16.msra.mxu0 0
        %4532 = vmatprep.mubr.bf16.mxu0 0
        %4533 = vmatmul.mubr.bf16.gmra.mrb[0].mxu0 %v4442
        %v4534 = vpop.f32.mrb[0].mxu0
        %v4535 = vadd.f32 0.0, %v4534
        %v4536 = vpop.f32.mrb[0].mxu0
        %v4537 = vpop.f32.mrb[0].mxu0
        %v4538 = vadd.f32 0.0, %v4537
        %v4539 = vpop.f32.mrb[0].mxu0
        %4540 = vmatprep.mubr.bf16.mxu0 0
        %4541 = vmatmul.mubr.bf16.gmra.mrb[0].mxu0 %v4445
        %v4542 = vpop.f32.mrb[0].mxu0
        %v4543 = vadd.f32 0.0, %v4542
        %v4544 = vpop.f32.mrb[0].mxu0
        %v4545 = vpop.f32.mrb[0].mxu0
        %v4546 = vadd.f32 0.0, %v4545
        %v4547 = vpop.f32.mrb[0].mxu0
        %4548 = vdwg.mxu0
        %v4553 = vunpack.c.l.b16 %v3473
        %v4554 = vunpack.c.l.b16 %v3474
        %v4555 = vunpack.c.l.b16 %v3475
        %v4556 = vunpack.c.l.b16 %v3476
        %v4557 = vpack.c.b16 %v4554, %v4553
        %v4558 = vpack.c.b16 %v4556, %v4555
        %v4560 = vsel %vm2086, %v4557, 0
        %v4563 = vsel %vm2086, %v4558, 0
        %4565 = vmatprep.subr.bf16.mxu0 %v3478
        %4566 = vmatpush1.bf16.msra.mxu0 %v3477
        %4567 = vmatprep.subr.bf16.mxu0 %v3481
        %4568 = vmatpush1.bf16.msra.mxu0 %v3480
        %4569 = vmatprep.subr.bf16.mxu0 0
        %4570 = vmatpush1.bf16.msra.mxu0 0
        %4571 = vmatprep.subr.bf16.mxu0 0
        %4572 = vmatpush1.bf16.msra.mxu0 0
        %4573 = vmatprep.subr.bf16.mxu0 0
        %4574 = vmatpush1.bf16.msra.mxu0 0
        %4575 = vmatprep.subr.bf16.mxu0 0
        %4576 = vmatpush1.bf16.msra.mxu0 0
        %4577 = vmatprep.subr.bf16.mxu0 0
        %4578 = vmatpush1.bf16.msra.mxu0 0
        %4579 = vmatprep.subr.bf16.mxu0 0
        %4580 = vmatpush1.bf16.msra.mxu0 0
        %4581 = vmatprep.subr.bf16.mxu0 0
        %4582 = vmatpush1.bf16.msra.mxu0 0
        %4583 = vmatprep.subr.bf16.mxu0 0
        %4584 = vmatpush1.bf16.msra.mxu0 0
        %4585 = vmatprep.subr.bf16.mxu0 0
        %4586 = vmatpush1.bf16.msra.mxu0 0
        %4587 = vmatprep.subr.bf16.mxu0 0
        %4588 = vmatpush1.bf16.msra.mxu0 0
        %4589 = vmatprep.subr.bf16.mxu0 0
        %4590 = vmatpush1.bf16.msra.mxu0 0
        %4591 = vmatprep.subr.bf16.mxu0 0
        %4592 = vmatpush1.bf16.msra.mxu0 0
        %4593 = vmatprep.subr.bf16.mxu0 0
        %4594 = vmatpush1.bf16.msra.mxu0 0
        %4595 = vmatprep.subr.bf16.mxu0 0
        %4596 = vmatpush1.bf16.msra.mxu0 0
        %4597 = vmatprep.mubr.bf16.mxu0 0
        %4598 = vmatmul.mubr.bf16.gmra.mrb[0].mxu0 %v4560
        %v4599 = vpop.f32.mrb[0].mxu0
        %v4600 = vadd.f32 %v4482, %v4599
        %v4601 = vpop.f32.mrb[0].mxu0
        %v4602 = vadd.f32 %v4484, %v4601
        %v4603 = vpop.f32.mrb[0].mxu0
        %v4604 = vadd.f32 %v4486, %v4603
        %v4605 = vpop.f32.mrb[0].mxu0
        %v4606 = vadd.f32 %v4488, %v4605
        %4607 = vmatprep.mubr.bf16.mxu0 0
        %4608 = vmatmul.mubr.bf16.gmra.mrb[0].mxu0 %v4563
        %v4609 = vpop.f32.mrb[0].mxu0
        %v4610 = vadd.f32 %v4492, %v4609
        %v4611 = vpop.f32.mrb[0].mxu0
        %v4612 = vadd.f32 %v4494, %v4611
        %v4613 = vpop.f32.mrb[0].mxu0
        %v4614 = vadd.f32 %v4496, %v4613
        %v4615 = vpop.f32.mrb[0].mxu0
        %v4616 = vadd.f32 %v4498, %v4615
        %4617 = vdwg.mxu0
        %4618 = vmatprep.subr.bf16.mxu0 0
        %4619 = vmatpush1.bf16.msra.mxu0 %v3479
        %4620 = vmatprep.subr.bf16.mxu0 0
        %4621 = vmatpush1.bf16.msra.mxu0 %v3482
        %4622 = vmatprep.subr.bf16.mxu0 0
        %4623 = vmatpush1.bf16.msra.mxu0 0
        %4624 = vmatprep.subr.bf16.mxu0 0
        %4625 = vmatpush1.bf16.msra.mxu0 0
        %4626 = vmatprep.subr.bf16.mxu0 0
        %4627 = vmatpush1.bf16.msra.mxu0 0
        %4628 = vmatprep.subr.bf16.mxu0 0
        %4629 = vmatpush1.bf16.msra.mxu0 0
        %4630 = vmatprep.subr.bf16.mxu0 0
        %4631 = vmatpush1.bf16.msra.mxu0 0
        %4632 = vmatprep.subr.bf16.mxu0 0
        %4633 = vmatpush1.bf16.msra.mxu0 0
        %4634 = vmatprep.subr.bf16.mxu0 0
        %4635 = vmatpush1.bf16.msra.mxu0 0
        %4636 = vmatprep.subr.bf16.mxu0 0
        %4637 = vmatpush1.bf16.msra.mxu0 0
        %4638 = vmatprep.subr.bf16.mxu0 0
        %4639 = vmatpush1.bf16.msra.mxu0 0
        %4640 = vmatprep.subr.bf16.mxu0 0
        %4641 = vmatpush1.bf16.msra.mxu0 0
        %4642 = vmatprep.subr.bf16.mxu0 0
        %4643 = vmatpush1.bf16.msra.mxu0 0
        %4644 = vmatprep.subr.bf16.mxu0 0
        %4645 = vmatpush1.bf16.msra.mxu0 0
        %4646 = vmatprep.subr.bf16.mxu0 0
        %4647 = vmatpush1.bf16.msra.mxu0 0
        %4648 = vmatprep.subr.bf16.mxu0 0
        %4649 = vmatpush1.bf16.msra.mxu0 0
        %4650 = vmatprep.mubr.bf16.mxu0 0
        %4651 = vmatmul.mubr.bf16.gmra.mrb[0].mxu0 %v4560
        %v4652 = vpop.f32.mrb[0].mxu0
        %v4653 = vadd.f32 %v4535, %v4652
        %v4654 = vpop.f32.mrb[0].mxu0
        %v4655 = vpop.f32.mrb[0].mxu0
        %v4656 = vadd.f32 %v4538, %v4655
        %v4657 = vpop.f32.mrb[0].mxu0
        %4658 = vmatprep.mubr.bf16.mxu0 0
        %4659 = vmatmul.mubr.bf16.gmra.mrb[0].mxu0 %v4563
        %v4660 = vpop.f32.mrb[0].mxu0
        %v4661 = vadd.f32 %v4543, %v4660
        %v4662 = vpop.f32.mrb[0].mxu0
        %v4663 = vpop.f32.mrb[0].mxu0
        %v4664 = vadd.f32 %v4546, %v4663
        %v4665 = vpop.f32.mrb[0].mxu0
        %4666 = vdwg.mxu0
        %4667 = vst [vmem:[%s311] sm:$0xff] %v4600
        %4668 = vst [vmem:[%s311 + $0x8] sm:$0xff] %v4602
        %4669 = vst [vmem:[%s311 + $0x10] sm:$0xff] %v4653
        %4670 = vst [vmem:[%s311 + $0x18] sm:$0xff] %v4604
        %4671 = vst [vmem:[%s311 + $0x20] sm:$0xff] %v4606
        %4672 = vst [vmem:[%s311 + $0x28] sm:$0xff] %v4656
        %4673 = vst [vmem:[%s311 + $0x30] sm:$0xff] %v4610
        %4674 = vst [vmem:[%s311 + $0x38] sm:$0xff] %v4612
        %4675 = vst [vmem:[%s311 + $0x40] sm:$0xff] %v4661
        %4676 = vst [vmem:[%s311 + $0x48] sm:$0xff] %v4614
        %4677 = vst [vmem:[%s311 + $0x50] sm:$0xff] %v4616
        %4678 = vst [vmem:[%s311 + $0x58] sm:$0xff] %v4664
        %s4679 = sand.u32 %s185, 1
        %s4680 = scalar_lea.sflag [#allocation4], %s4679
        %s4681 = sand.u32 %s185, 1
        %s4682 = smul.addr %s4681, 96
        %s4683 = scalar_lea.vmem [#allocation7], %s4682
        // Predicated region
        $region57: #{tpu_custom_call.1} parent=47 // pred_check
          %p4684 = pneg %p195
        $region58: #{tpu_custom_call.1} parent=47 // pred_check_branch
          %4686 = sbr.rel (%p4684) target = $region60
        $region59: #{tpu_custom_call.1} parent=47 // pred_region
          %s4688 = ssub.s32 1536, 1536
          %4689 = vsyncadd %s4680, %s4688
          %s4690 = smul.addr %s25, 12
          %s4691 = smul.addr %s4690, 128
          %s4692 = scalar_lea.hbm %s7, %s4691
          %s4693 = sshll.u32 %s4683, 4
          %s4694 = int_to_ptr.vmem [resolvable:$true] %s4693
          %4699 = dma.vmem_to_hbm [thread:$0]  %s4694, 1536, %s4692, %s4680, 384, 384, 24
        $region60: #{tpu_custom_call.1} parent=47 // pred_fallthru
          _
      $region48: #{tpu_custom_call.1} parent=5 // pred_fallthru
        _
      %p4700 = scmp.le.s32.totalorder 2, %s20
      // Predicated region
      $region61: #{tpu_custom_call.1} parent=5 // pred_check
        %p4701 = pneg %p4700
      $region62: #{tpu_custom_call.1} parent=5 // pred_check_branch
        %4703 = sbr.rel (%p4701) target = $region64
      $region63: #{tpu_custom_call.1} parent=5 // pred_region
        %s4704 = ssub.s32 %s20, 2
        // Predicated region
        $region65: #{tpu_custom_call.1} parent=63 // pred_check
          %p4705 = pneg %p201
        $region66: #{tpu_custom_call.1} parent=63 // pred_check_branch
          %4707 = sbr.rel (%p4705) target = $region68
        $region67: #{tpu_custom_call.1} parent=63 // pred_region
          %s4708 = sand.u32 %s186, 1
          %s4709 = scalar_lea.sflag [#allocation4], %s4708
          %s4710 = sand.u32 %s186, 1
          %s4711 = smul.addr %s4710, 96
          %s4712 = scalar_lea.vmem [#allocation7], %s4711
          %4713 = dma.done %s4709, 1536
        $region68: #{tpu_custom_call.1} parent=63 // pred_fallthru
          _
      $region64: #{tpu_custom_call.1} parent=5 // pred_fallthru
        _
    $region6: #{tpu_custom_call.1} parent=1 // loop_footer
      %s24 = sadd.s32 1, %s20
    $region7: #{tpu_custom_call.1} parent=1 // loop_footer_branch
      %19 = sbr.rel target = $region3
    $region8: #{tpu_custom_call.1} parent=1 // loop_exit
      _
    %4714 = vsyncpa [#allocation3], 1
    %s4715 = scalar_lea.sflag [#allocation3], 1
    %4716 = vsyncpa %s4715, 1
    %4717 = vsyncpa [#allocation6], 1
    %4718 = vsyncpa [#allocation4], 1
    %s4719 = scalar_lea.sflag [#allocation4], 1
    %4720 = vsyncpa %s4719, 1

</llo_original>
